<compile_context>
chip_gen: v6e
topology: v6e:2x2x1
jax: 0.10.0
libtpu: 0.0.40
codegen_flags: <defaults>
</compile_context>

<pallas_src>
import functools
import math

import jax
import jax.numpy as jnp
from jax.experimental import pallas as pl
from jax.experimental.pallas import tpu as pltpu


def _round_up(x, m):
    return (x + m - 1) // m * m


# ---------------------------------------------------------------------------
# Pallas kernel 1: tiled matmul (+ optional folded-BN affine + SiLU)
# ---------------------------------------------------------------------------
def _mm_kernel(*refs, act, affine):
    if affine:
        x_ref, w_ref, s_ref, b_ref, o_ref, acc_ref = refs
    else:
        x_ref, w_ref, o_ref, acc_ref = refs
        s_ref = b_ref = None

    k = pl.program_id(2)

    @pl.when(k == 0)
    def _():
        acc_ref[...] = jnp.zeros_like(acc_ref)

    acc_ref[...] += jnp.dot(x_ref[...], w_ref[...],
                            preferred_element_type=jnp.float32)

    @pl.when(k == pl.num_programs(2) - 1)
    def _():
        y = acc_ref[...]
        if affine:
            y = y * s_ref[...] + b_ref[...]
        if act:
            # SiLU: y * sigmoid(y); division on the EUP via approx reciprocal.
            z = jnp.clip(y, -30.0, 30.0)
            y = y * pl.reciprocal(1.0 + jnp.exp(-z), approx=True)
        o_ref[...] = y.astype(o_ref.dtype)


def matmul_act(x, w, scale=None, bias=None, *, act=False,
               out_dtype=jnp.float32, tm=256, tn=256, tk=512):
    """y = act((x @ w) * scale + bias).  x:(M,K), w:(K,N).  bf16 MXU operands, f32 acc."""
    M, K = x.shape
    Kw, N = w.shape
    assert K == Kw
    affine = scale is not None

    # Tile sizes: a single full-dim block when it fits, else aligned tiles + zero padding.
    if M <= tm:
        tm = Mp = _round_up(M, 8)
    else:
        Mp = _round_up(M, tm)
    if K <= tk:
        tk = Kp = K
    else:
        Kp = _round_up(K, tk)
    if N <= tn:
        tn = Np = N
    else:
        Np = _round_up(N, tn)

    xb = x.astype(jnp.bfloat16)
    wb = w.astype(jnp.bfloat16)
    if (Mp, Kp) != (M, K):
        xb = jnp.pad(xb, ((0, Mp - M), (0, Kp - K)))
    if (Kp, Np) != (K, N):
        wb = jnp.pad(wb, ((0, Kp - K), (0, Np - N)))

    in_arrays = [xb, wb]
    in_specs = [
        pl.BlockSpec((tm, tk), lambda i, j, k: (i, k)),
        pl.BlockSpec((tk, tn), lambda i, j, k: (k, j)),
    ]
    if affine:
        s = scale.astype(jnp.float32).reshape(1, N)
        b = bias.astype(jnp.float32).reshape(1, N)
        if Np != N:
            s = jnp.pad(s, ((0, 0), (0, Np - N)))
            b = jnp.pad(b, ((0, 0), (0, Np - N)))
        in_arrays += [s, b]
        in_specs += [
            pl.BlockSpec((1, tn), lambda i, j, k: (0, j)),
            pl.BlockSpec((1, tn), lambda i, j, k: (0, j)),
        ]

    cost = pl.CostEstimate(
        flops=int(2 * M * N * K + (4 * M * N if affine else 0)),
        transcendentals=int(M * N if act else 0),
        bytes_accessed=int(2 * (xb.size + wb.size)
                           + Mp * Np * jnp.dtype(out_dtype).itemsize))

    out = pl.pallas_call(
        functools.partial(_mm_kernel, act=act, affine=affine),
        out_shape=jax.ShapeDtypeStruct((Mp, Np), out_dtype),
        grid=(Mp // tm, Np // tn, Kp // tk),
        in_specs=in_specs,
        out_specs=pl.BlockSpec((tm, tn), lambda i, j, k: (i, j)),
        scratch_shapes=[pltpu.VMEM((tm, tn), jnp.float32)],
        compiler_params=pltpu.CompilerParams(
            dimension_semantics=("parallel", "parallel", "arbitrary"),
            vmem_limit_bytes=32 * 1024 * 1024),
        cost_estimate=cost,
    )(*in_arrays)

    if (Mp, Np) != (M, N):
        out = out[:M, :N]
    return out


# ---------------------------------------------------------------------------
# Pallas kernel 2: Multi-Head Differential Attention (all heads per grid step,
# query-row tiled, causal mask, RMS norm)
# ---------------------------------------------------------------------------
def _mhda_attn_kernel(lam_ref, g_ref, q1_ref, q2_ref, k1_ref, k2_ref, v_ref,
                      o_ref, *, d_head, lambda_init, eps, n_keys):
    q1 = q1_ref[...]                    # (nh, tq, d_head)   bf16
    q2 = q2_ref[...]
    k1 = k1_ref[...]                    # (nh, N,  d_head)   bf16
    k2 = k2_ref[...]
    v = v_ref[...]                      # (nh, N,  2*d_head) bf16
    lam = lam_ref[...]                  # (nh, 1, 1)         f32
    g = g_ref[...]                      # (1, 1, 2*d_head)   f32

    tq = q1.shape[1]
    scaling = jnp.float32(1.0 / math.sqrt(d_head))

    # Two differential score matmuls, all heads batched; contraction on the shared
    # last dim (no explicit K transpose).
    a1 = jnp.einsum("hqd,hkd->hqk", q1, k1,
                    preferred_element_type=jnp.float32) * scaling
    a2 = jnp.einsum("hqd,hkd->hqk", q2, k2,
                    preferred_element_type=jnp.float32) * scaling

    # Single shared causal mask for this query tile (global query offset).
    q0 = pl.program_id(1) * tq
    row = jax.lax.broadcasted_iota(jnp.int32, (tq, n_keys), 0) + q0
    col = jax.lax.broadcasted_iota(jnp.int32, (tq, n_keys), 1)
    keep = (row >= col)[None, :, :]
    neg = jnp.float32(-1e30)
    a1 = jnp.where(keep, a1, neg)
    a2 = jnp.where(keep, a2, neg)

    # Softmaxes; the divide goes to the EUP via approx reciprocal.
    e1 = jnp.exp(a1 - jnp.max(a1, axis=-1, keepdims=True))
    e2 = jnp.exp(a2 - jnp.max(a2, axis=-1, keepdims=True))
    p1 = e1 * pl.reciprocal(jnp.sum(e1, axis=-1, keepdims=True), approx=True)
    p2 = e2 * pl.reciprocal(jnp.sum(e2, axis=-1, keepdims=True), approx=True)
    att = p1 - lam * p2                 # (nh, tq, N) f32

    o = jnp.einsum("hqk,hkd->hqd", att.astype(v.dtype), v,
                   preferred_element_type=jnp.float32)   # (nh, tq, 2*d_head) f32

    # RMS norm over the 2*d_head features, scale by rms_scale and (1 - lambda_init).
    inv_rms = jax.lax.rsqrt(jnp.mean(o * o, axis=-1, keepdims=True) + eps)
    o = o * inv_rms * g * (1.0 - lambda_init)
    o_ref[...] = o.astype(o_ref.dtype)


def mhda_attention(q1, q2, k1, k2, v, lam, rms_scale, *, d_head, lambda_init,
                   eps=1e-5, tq=128):
    """q1,q2,k1,k2: (B, nh, N, d_head); v: (B, nh, N, 2*d_head); lam: (nh,)."""
    B, nh, N, _ = q1.shape
    two_d = 2 * d_head
    tq = min(tq, _round_up(N, 8))
    Nq = _round_up(N, tq)
    if Nq != N:
        pad = ((0, 0), (0, 0), (0, Nq - N), (0, 0))
        q1 = jnp.pad(q1, pad)
        q2 = jnp.pad(q2, pad)
    # TODO(synk): for very large N (e.g. 80x80 feature maps on v7x) add flash-style
    # online-softmax KV tiling; query tiling alone bounds VMEM to O(nh * tq * N).

    lam3 = lam.astype(jnp.float32).reshape(nh, 1, 1)
    g3 = rms_scale.astype(jnp.float32).reshape(1, 1, two_d)

    q_spec = pl.BlockSpec((pl.Squeezed(), nh, tq, d_head),
                          lambda b, qi: (b, 0, qi, 0))
    k_spec = pl.BlockSpec((pl.Squeezed(), nh, N, d_head),
                          lambda b, qi: (b, 0, 0, 0))
    v_spec = pl.BlockSpec((pl.Squeezed(), nh, N, two_d),
                          lambda b, qi: (b, 0, 0, 0))
    o_spec = pl.BlockSpec((pl.Squeezed(), nh, tq, two_d),
                          lambda b, qi: (b, 0, qi, 0))

    cost = pl.CostEstimate(
        flops=int(B * nh * Nq * N * (4 * d_head + 2 * two_d)),
        transcendentals=int(2 * B * nh * Nq * N),
        bytes_accessed=int(2 * (q1.size + q2.size + k1.size + k2.size + v.size)
                           + 2 * B * nh * Nq * two_d))

    out = pl.pallas_call(
        functools.partial(_mhda_attn_kernel, d_head=d_head,
                          lambda_init=lambda_init, eps=eps, n_keys=N),
        out_shape=jax.ShapeDtypeStruct((B, nh, Nq, two_d), jnp.bfloat16),
        grid=(B, Nq // tq),
        in_specs=[
            pl.BlockSpec((nh, 1, 1), lambda b, qi: (0, 0, 0)),    # per-head lambda
            pl.BlockSpec((1, 1, two_d), lambda b, qi: (0, 0, 0)),  # rms_scale
            q_spec, q_spec, k_spec, k_spec, v_spec,
        ],
        out_specs=o_spec,
        compiler_params=pltpu.CompilerParams(
            dimension_semantics=("parallel", "parallel"),
            vmem_limit_bytes=32 * 1024 * 1024),
        cost_estimate=cost,
    )(lam3, g3, q1, q2, k1, k2, v)

    if Nq != N:
        out = out[:, :, :N, :]
    return out


# ---------------------------------------------------------------------------
# Conv wrappers (NHWC channels-last rows; matmul in Pallas)
# ---------------------------------------------------------------------------
def conv1x1(x_flat, p, act=True, out_dtype=jnp.bfloat16):
    """x_flat: (B*H*W, Cin) NHWC rows; 1x1 conv + folded BN + SiLU."""
    cout, cin = p["w"].shape[:2]
    wm = p["w"].reshape(cout, cin).T
    return matmul_act(x_flat, wm, p["scale"], p["bias"], act=act,
                      out_dtype=out_dtype)


def conv3x3(x_flat, p, B, H, W, act=True, out_dtype=jnp.bfloat16):
    """x_flat: (B*H*W, Cin) NHWC rows; 3x3 'same' conv + folded BN + SiLU."""
    cout, cin = p["w"].shape[:2]
    x4 = x_flat.reshape(B, H, W, cin)
    xp = jnp.pad(x4, ((0, 0), (1, 1), (1, 1), (0, 0)))
    # TODO(synk): fuse the im2col into the matmul kernel via shifted-window BlockSpecs
    # (9 accumulated taps) instead of materializing the 9x patch tensor in HBM.
    patches = jnp.concatenate(
        [xp[:, kh:kh + H, kw:kw + W, :] for kh in range(3) for kw in range(3)],
        axis=-1)                                                 # (B, H, W, 9*Cin)
    xm = patches.reshape(B * H * W, 9 * cin)
    wm = p["w"].transpose(2, 3, 1, 0).reshape(9 * cin, cout)     # (kh, kw, Cin) -> rows
    return matmul_act(xm, wm, p["scale"], p["bias"], act=act,
                      out_dtype=out_dtype)


# ---------------------------------------------------------------------------
# MHDA module forward
# ---------------------------------------------------------------------------
def mhda_forward(x_flat, p, B, H, W, num_heads, lambda_init):
    """x_flat: (B*H*W, d_model) NHWC rows (== the reference's (B, N, d_model) tokens)."""
    N = H * W
    d_model = x_flat.shape[1]
    d_head = d_model // num_heads
    two_d = 2 * d_head
    inner = two_d * num_heads            # == 2 * d_model

    # Fused Q|K|V projection: one lane-dense matmul instead of three.
    qkv = matmul_act(x_flat, p["wqkv"], act=False, out_dtype=jnp.bfloat16)
    qkv = qkv.reshape(B, N, 3, num_heads, two_d)

    def heads(t):                         # (B, N, nh, D) -> (B, nh, N, D)
        return t.transpose(0, 2, 1, 3)

    q = qkv[:, :, 0]
    k = qkv[:, :, 1]
    q1, q2 = heads(q[..., :d_head]), heads(q[..., d_head:])
    k1, k2 = heads(k[..., :d_head]), heads(k[..., d_head:])
    v = heads(qkv[:, :, 2])

    lam = (jnp.exp(jnp.sum(p["lq1"] * p["lk1"], axis=-1))
           - jnp.exp(jnp.sum(p["lq2"] * p["lk2"], axis=-1)) + lambda_init)   # (nh,)

    o = mhda_attention(q1, q2, k1, k2, v, lam, p["rms_scale"],
                       d_head=d_head, lambda_init=lambda_init)   # (B, nh, N, 2d) bf16

    o_cat = o.transpose(0, 2, 1, 3).reshape(B * N, inner)
    out = matmul_act(o_cat, p["wo"], act=False, out_dtype=jnp.bfloat16)      # (B*N, C)

    # Reference does out.view(B, C, H, W) on the contiguous (B, N, C) tensor — a raw
    # row-major reinterpretation; reproduce it, then return to NHWC rows for downstream.
    out_nchw = out.reshape(B, d_model, H, W)
    return out_nchw.transpose(0, 2, 3, 1).reshape(B * N, d_model)


# ---------------------------------------------------------------------------
# C2f_MHDA forward  (shortcut=False, g=1, e=0.5 — reference defaults)
# ---------------------------------------------------------------------------
def c2f_mhda_forward(x, params, c, num_heads=8, lambda_init=0.8):
    """x: (B, c1, H, W) NCHW float32.  Returns (B, c2, H, W) float32."""
    B, c1, H, W = x.shape
    # One NCHW -> NHWC transpose at the module boundary; everything inside stays
    # channels-last so every conv is a plain row matmul (no per-conv transposes).
    xr = x.transpose(0, 2, 3, 1).reshape(B * H * W, c1)

    y = conv1x1(xr, params["cv1"], act=True)                     # (B*H*W, 2c) bf16
    y1, y2 = y[:, :c], y[:, c:]
    ys = [y1, y2]
    cur = y2
    for blk in params["m"]:
        t = conv3x3(cur, blk["cv1"], B, H, W, act=True)
        t = conv3x3(t, blk["cv2"], B, H, W, act=True)
        cur = mhda_forward(t, blk["attn"], B, H, W, num_heads, lambda_init)
        ys.append(cur)                                            # shortcut=False
    cat = jnp.concatenate(ys, axis=-1)                            # (B*H*W, (2+n)*c)
    out = conv1x1(cat, params["cv2"], act=True, out_dtype=jnp.float32)
    c2 = out.shape[1]
    return out.reshape(B, H, W, c2).transpose(0, 3, 1, 2)


# ---------------------------------------------------------------------------
# Deterministic parameter initialization (synthetic; no checkpoint loading)
# ---------------------------------------------------------------------------
def init_params(key, c1, c2, n=1, e=0.5, num_heads=8):
    c = int(c2 * e)
    keys = iter(jax.random.split(key, 128))

    def nk():
        return next(keys)

    def conv_bn(cin, cout, k):
        w = jax.random.normal(nk(), (cout, cin, k, k), jnp.float32) / math.sqrt(cin * k * k)
        gamma = 1.0 + 0.1 * jax.random.normal(nk(), (cout,), jnp.float32)
        beta = 0.1 * jax.random.normal(nk(), (cout,), jnp.float32)
        mean = 0.1 * jax.random.normal(nk(), (cout,), jnp.float32)
        var = 1.0 + 0.1 * jax.random.uniform(nk(), (cout,), jnp.float32)
        scale = gamma / jnp.sqrt(var + 1e-5)         # BatchNorm2d eps
        bias = beta - mean * scale
        return dict(w=w, scale=scale, bias=bias)

    def mhda(d_model):
        d_head = d_model // num_heads
        inner = 2 * d_head * num_heads

        def lin(fi, fo):
            bound = math.sqrt(6.0 / (fi + fo))       # xavier_uniform
            return jax.random.uniform(nk(), (fi, fo), jnp.float32,
                                      minval=-bound, maxval=bound)

        wq, wk, wv = lin(d_model, inner), lin(d_model, inner), lin(d_model, inner)
        return dict(
            wqkv=jnp.concatenate([wq, wk, wv], axis=1),   # fused Q|K|V weights
            wo=lin(inner, d_model),
            lq1=jax.random.normal(nk(), (num_heads, d_head), jnp.float32),
            lk1=jax.random.normal(nk(), (num_heads, d_head), jnp.float32),
            lq2=jax.random.normal(nk(), (num_heads, d_head), jnp.float32),
            lk2=jax.random.normal(nk(), (num_heads, d_head), jnp.float32),
            rms_scale=jnp.ones((2 * d_head,), jnp.float32),
        )

    params = dict(
        cv1=conv_bn(c1, 2 * c, 1),
        cv2=conv_bn((2 + n) * c, c2, 1),
        m=[dict(cv1=conv_bn(c, c, 3), cv2=conv_bn(c, c, 3), attn=mhda(c))
           for _ in range(n)],
    )
    return params, c


if __name__ == "__main__":
    key = jax.random.PRNGKey(0)
    kx, kp = jax.random.split(key)

    # Small shapes: x is NCHW (B=2, c1=8, H=W=8); C2f_MHDA(c1=8, c2=32, n=1)
    # -> hidden c=16, MHDA(d_model=16, heads=8, d_head=2), attention seq N=64.
    B, c1, H, W = 2, 8, 8, 8
    c2, n = 32, 1

    x = jax.random.normal(kx, (B, c1, H, W), jnp.float32)
    params, c = init_params(kp, c1, c2, n=n)

    fwd = jax.jit(functools.partial(c2f_mhda_forward, c=c))
    out = fwd(x, params)
    out = jax.block_until_ready(out)
    assert out.shape == (B, c2, H, W), out.shape
    assert bool(jnp.all(jnp.isfinite(out)))
    print("KERNEL_OK")
</pallas_src>

<mosaic_0001>
module attributes {stable_mosaic.version = 11 : i64} {
  func.func @_mm_kernel(%arg0: i32, %arg1: i32, %arg2: i32, %arg3: memref<128x8xbf16, #tpu.memory_space<vmem>>, %arg4: memref<8x32xbf16, #tpu.memory_space<vmem>>, %arg5: memref<1x32xf32, #tpu.memory_space<vmem>>, %arg6: memref<1x32xf32, #tpu.memory_space<vmem>>, %arg7: memref<128x32xbf16, #tpu.memory_space<vmem>>, %arg8: memref<128x32xf32, #tpu.memory_space<vmem>>) attributes {dimension_semantics = [#tpu.dimension_semantics<parallel>, #tpu.dimension_semantics<parallel>, #tpu.dimension_semantics<arbitrary>], iteration_bounds = array<i64: 1, 1, 1>, scalar_prefetch = 0 : i64, scratch_operands = 1 : i64, tpu.core_type = #tpu.core_type<tc>, window_params = [{transform_indices = @transform_0, window_bounds = array<i64: 128, 8>}, {transform_indices = @transform_1, window_bounds = array<i64: 8, 32>}, {transform_indices = @transform_2, window_bounds = array<i64: 1, 32>}, {transform_indices = @transform_3, window_bounds = array<i64: 1, 32>}, {transform_indices = @transform_4, window_bounds = array<i64: 128, 32>}]} {
    %c0_i32 = arith.constant 0 : i32
    %0 = arith.cmpi eq, %arg2, %c0_i32 : i32
    %1 = arith.extui %0 : i1 to i32
    %c0_i32_0 = arith.constant 0 : i32
    %2 = arith.cmpi ne, %1, %c0_i32_0 : i32
    scf.if %2 {
      %cst_10 = arith.constant 0.000000e+00 : f32
      %12 = vector.broadcast %cst_10 : f32 to vector<128x32xf32>
      %c0_11 = arith.constant 0 : index
      %c0_12 = arith.constant 0 : index
      %13 = vector.load %arg8[%c0_11, %c0_12] : memref<128x32xf32, #tpu.memory_space<vmem>>, vector<128x32xf32>
      tpu.vector_store %arg8[%c0_11, %c0_12], %12 {strides = array<i32>} : memref<128x32xf32, #tpu.memory_space<vmem>>, vector<128x32xf32>,
    } else {
    }
    %c0 = arith.constant 0 : index
    %c0_1 = arith.constant 0 : index
    %3 = vector.load %arg8[%c0, %c0_1] : memref<128x32xf32, #tpu.memory_space<vmem>>, vector<128x32xf32>
    %c0_2 = arith.constant 0 : index
    %c0_3 = arith.constant 0 : index
    %4 = vector.load %arg3[%c0_2, %c0_3] : memref<128x8xbf16, #tpu.memory_space<vmem>>, vector<128x8xbf16>
    %c0_4 = arith.constant 0 : index
    %c0_5 = arith.constant 0 : index
    %5 = vector.load %arg4[%c0_4, %c0_5] : memref<8x32xbf16, #tpu.memory_space<vmem>>, vector<8x32xbf16>
    %cst = arith.constant dense<0.000000e+00> : vector<128x32xf32>
    %6 = tpu.matmul %4, %5, %cst {dimension_numbers = #tpu.dot_dimension_numbers<[1], [0], [0], [1], [0, 0, 1, 1], [], []>} : vector<128x8xbf16>, vector<8x32xbf16>, vector<128x32xf32> -> vector<128x32xf32>
    %7 = arith.addf %3, %6 : vector<128x32xf32>
    %c0_6 = arith.constant 0 : index
    %c0_7 = arith.constant 0 : index
    %8 = vector.load %arg8[%c0_6, %c0_7] : memref<128x32xf32, #tpu.memory_space<vmem>>, vector<128x32xf32>
    tpu.vector_store %arg8[%c0_6, %c0_7], %7 {strides = array<i32>} : memref<128x32xf32, #tpu.memory_space<vmem>>, vector<128x32xf32>,
    %c0_i32_8 = arith.constant 0 : i32
    %9 = arith.cmpi eq, %arg2, %c0_i32_8 : i32
    %10 = arith.extui %9 : i1 to i32
    %c0_i32_9 = arith.constant 0 : i32
    %11 = arith.cmpi ne, %10, %c0_i32_9 : i32
    scf.if %11 {
      %c0_10 = arith.constant 0 : index
      %c0_11 = arith.constant 0 : index
      %12 = vector.load %arg8[%c0_10, %c0_11] : memref<128x32xf32, #tpu.memory_space<vmem>>, vector<128x32xf32>
      %c0_12 = arith.constant 0 : index
      %c0_13 = arith.constant 0 : index
      %13 = vector.load %arg5[%c0_12, %c0_13] : memref<1x32xf32, #tpu.memory_space<vmem>>, vector<1x32xf32>
      %14 = vector.broadcast %13 : vector<1x32xf32> to vector<128x32xf32>
      %15 = arith.mulf %12, %14 : vector<128x32xf32>
      %c0_14 = arith.constant 0 : index
      %c0_15 = arith.constant 0 : index
      %16 = vector.load %arg6[%c0_14, %c0_15] : memref<1x32xf32, #tpu.memory_space<vmem>>, vector<1x32xf32>
      %17 = vector.broadcast %16 : vector<1x32xf32> to vector<128x32xf32>
      %18 = arith.addf %15, %17 : vector<128x32xf32>
      %cst_16 = arith.constant -3.000000e+01 : f32
      %cst_17 = arith.constant 3.000000e+01 : f32
      %19 = vector.broadcast %cst_16 : f32 to vector<128x32xf32>
      %20 = arith.maximumf %19, %18 : vector<128x32xf32>
      %21 = vector.broadcast %cst_17 : f32 to vector<128x32xf32>
      %22 = arith.minimumf %21, %20 : vector<128x32xf32>
      %cst_18 = arith.constant 0.000000e+00 : f32
      %23 = vector.broadcast %cst_18 : f32 to vector<128x32xf32>
      %24 = arith.subf %23, %22 : vector<128x32xf32>
      %25 = math.exp %24 : vector<128x32xf32>
      %cst_19 = arith.constant 1.000000e+00 : f32
      %26 = vector.broadcast %cst_19 : f32 to vector<128x32xf32>
      %27 = arith.addf %26, %25 : vector<128x32xf32>
      %28 = tpu.reciprocal %27 {approx = true} : vector<128x32xf32> -> vector<128x32xf32>
      %29 = arith.mulf %18, %28 : vector<128x32xf32>
      %30 = arith.truncf %29 : vector<128x32xf32> to vector<128x32xbf16>
      %c0_20 = arith.constant 0 : index
      %c0_21 = arith.constant 0 : index
      %31 = vector.load %arg7[%c0_20, %c0_21] : memref<128x32xbf16, #tpu.memory_space<vmem>>, vector<128x32xbf16>
      tpu.vector_store %arg7[%c0_20, %c0_21], %30 {strides = array<i32>} : memref<128x32xbf16, #tpu.memory_space<vmem>>, vector<128x32xbf16>,
    } else {
    }
    return
  }
  func.func @transform_0(%arg0: i32, %arg1: i32, %arg2: i32) -> (i32, i32) {
    %c0_i32 = arith.constant 0 : i32
    return %arg0, %arg2 : i32, i32
  }
  func.func @transform_1(%arg0: i32, %arg1: i32, %arg2: i32) -> (i32, i32) {
    %c0_i32 = arith.constant 0 : i32
    return %arg2, %arg1 : i32, i32
  }
  func.func @transform_2(%arg0: i32, %arg1: i32, %arg2: i32) -> (i32, i32) {
    %c0_i32 = arith.constant 0 : i32
    %c0_i32_0 = arith.constant 0 : i32
    return %c0_i32, %arg1 : i32, i32
  }
  func.func @transform_3(%arg0: i32, %arg1: i32, %arg2: i32) -> (i32, i32) {
    %c0_i32 = arith.constant 0 : i32
    %c0_i32_0 = arith.constant 0 : i32
    return %c0_i32, %arg1 : i32, i32
  }
  func.func @transform_4(%arg0: i32, %arg1: i32, %arg2: i32) -> (i32, i32) {
    %c0_i32 = arith.constant 0 : i32
    return %arg0, %arg1 : i32, i32
  }
}

module attributes {stable_mosaic.version = 11 : i64} {
  func.func @_mm_kernel(%arg0: i32, %arg1: i32, %arg2: i32, %arg3: memref<128x144xbf16, #tpu.memory_space<vmem>>, %arg4: memref<144x16xbf16, #tpu.memory_space<vmem>>, %arg5: memref<1x16xf32, #tpu.memory_space<vmem>>, %arg6: memref<1x16xf32, #tpu.memory_space<vmem>>, %arg7: memref<128x16xbf16, #tpu.memory_space<vmem>>, %arg8: memref<128x16xf32, #tpu.memory_space<vmem>>) attributes {dimension_semantics = [#tpu.dimension_semantics<parallel>, #tpu.dimension_semantics<parallel>, #tpu.dimension_semantics<arbitrary>], iteration_bounds = array<i64: 1, 1, 1>, scalar_prefetch = 0 : i64, scratch_operands = 1 : i64, tpu.core_type = #tpu.core_type<tc>, window_params = [{transform_indices = @transform_0, window_bounds = array<i64: 128, 144>}, {transform_indices = @transform_1, window_bounds = array<i64: 144, 16>}, {transform_indices = @transform_2, window_bounds = array<i64: 1, 16>}, {transform_indices = @transform_3, window_bounds = array<i64: 1, 16>}, {transform_indices = @transform_4, window_bounds = array<i64: 128, 16>}]} {
    %c0_i32 = arith.constant 0 : i32
    %0 = arith.cmpi eq, %arg2, %c0_i32 : i32
    %1 = arith.extui %0 : i1 to i32
    %c0_i32_0 = arith.constant 0 : i32
    %2 = arith.cmpi ne, %1, %c0_i32_0 : i32
    scf.if %2 {
      %cst_10 = arith.constant 0.000000e+00 : f32
      %12 = vector.broadcast %cst_10 : f32 to vector<128x16xf32>
      %c0_11 = arith.constant 0 : index
      %c0_12 = arith.constant 0 : index
      %13 = vector.load %arg8[%c0_11, %c0_12] : memref<128x16xf32, #tpu.memory_space<vmem>>, vector<128x16xf32>
      tpu.vector_store %arg8[%c0_11, %c0_12], %12 {strides = array<i32>} : memref<128x16xf32, #tpu.memory_space<vmem>>, vector<128x16xf32>,
    } else {
    }
    %c0 = arith.constant 0 : index
    %c0_1 = arith.constant 0 : index
    %3 = vector.load %arg8[%c0, %c0_1] : memref<128x16xf32, #tpu.memory_space<vmem>>, vector<128x16xf32>
    %c0_2 = arith.constant 0 : index
    %c0_3 = arith.constant 0 : index
    %4 = vector.load %arg3[%c0_2, %c0_3] : memref<128x144xbf16, #tpu.memory_space<vmem>>, vector<128x144xbf16>
    %c0_4 = arith.constant 0 : index
    %c0_5 = arith.constant 0 : index
    %5 = vector.load %arg4[%c0_4, %c0_5] : memref<144x16xbf16, #tpu.memory_space<vmem>>, vector<144x16xbf16>
    %cst = arith.constant dense<0.000000e+00> : vector<128x16xf32>
    %6 = tpu.matmul %4, %5, %cst {dimension_numbers = #tpu.dot_dimension_numbers<[1], [0], [0], [1], [0, 0, 1, 1], [], []>} : vector<128x144xbf16>, vector<144x16xbf16>, vector<128x16xf32> -> vector<128x16xf32>
    %7 = arith.addf %3, %6 : vector<128x16xf32>
    %c0_6 = arith.constant 0 : index
    %c0_7 = arith.constant 0 : index
    %8 = vector.load %arg8[%c0_6, %c0_7] : memref<128x16xf32, #tpu.memory_space<vmem>>, vector<128x16xf32>
    tpu.vector_store %arg8[%c0_6, %c0_7], %7 {strides = array<i32>} : memref<128x16xf32, #tpu.memory_space<vmem>>, vector<128x16xf32>,
    %c0_i32_8 = arith.constant 0 : i32
    %9 = arith.cmpi eq, %arg2, %c0_i32_8 : i32
    %10 = arith.extui %9 : i1 to i32
    %c0_i32_9 = arith.constant 0 : i32
    %11 = arith.cmpi ne, %10, %c0_i32_9 : i32
    scf.if %11 {
      %c0_10 = arith.constant 0 : index
      %c0_11 = arith.constant 0 : index
      %12 = vector.load %arg8[%c0_10, %c0_11] : memref<128x16xf32, #tpu.memory_space<vmem>>, vector<128x16xf32>
      %c0_12 = arith.constant 0 : index
      %c0_13 = arith.constant 0 : index
      %13 = vector.load %arg5[%c0_12, %c0_13] : memref<1x16xf32, #tpu.memory_space<vmem>>, vector<1x16xf32>
      %14 = vector.broadcast %13 : vector<1x16xf32> to vector<128x16xf32>
      %15 = arith.mulf %12, %14 : vector<128x16xf32>
      %c0_14 = arith.constant 0 : index
      %c0_15 = arith.constant 0 : index
      %16 = vector.load %arg6[%c0_14, %c0_15] : memref<1x16xf32, #tpu.memory_space<vmem>>, vector<1x16xf32>
      %17 = vector.broadcast %16 : vector<1x16xf32> to vector<128x16xf32>
      %18 = arith.addf %15, %17 : vector<128x16xf32>
      %cst_16 = arith.constant -3.000000e+01 : f32
      %cst_17 = arith.constant 3.000000e+01 : f32
      %19 = vector.broadcast %cst_16 : f32 to vector<128x16xf32>
      %20 = arith.maximumf %19, %18 : vector<128x16xf32>
      %21 = vector.broadcast %cst_17 : f32 to vector<128x16xf32>
      %22 = arith.minimumf %21, %20 : vector<128x16xf32>
      %cst_18 = arith.constant 0.000000e+00 : f32
      %23 = vector.broadcast %cst_18 : f32 to vector<128x16xf32>
      %24 = arith.subf %23, %22 : vector<128x16xf32>
      %25 = math.exp %24 : vector<128x16xf32>
      %cst_19 = arith.constant 1.000000e+00 : f32
      %26 = vector.broadcast %cst_19 : f32 to vector<128x16xf32>
      %27 = arith.addf %26, %25 : vector<128x16xf32>
      %28 = tpu.reciprocal %27 {approx = true} : vector<128x16xf32> -> vector<128x16xf32>
      %29 = arith.mulf %18, %28 : vector<128x16xf32>
      %30 = arith.truncf %29 : vector<128x16xf32> to vector<128x16xbf16>
      %c0_20 = arith.constant 0 : index
      %c0_21 = arith.constant 0 : index
      %31 = vector.load %arg7[%c0_20, %c0_21] : memref<128x16xbf16, #tpu.memory_space<vmem>>, vector<128x16xbf16>
      tpu.vector_store %arg7[%c0_20, %c0_21], %30 {strides = array<i32>} : memref<128x16xbf16, #tpu.memory_space<vmem>>, vector<128x16xbf16>,
    } else {
    }
    return
  }
  func.func @transform_0(%arg0: i32, %arg1: i32, %arg2: i32) -> (i32, i32) {
    %c0_i32 = arith.constant 0 : i32
    return %arg0, %arg2 : i32, i32
  }
  func.func @transform_1(%arg0: i32, %arg1: i32, %arg2: i32) -> (i32, i32) {
    %c0_i32 = arith.constant 0 : i32
    return %arg2, %arg1 : i32, i32
  }
  func.func @transform_2(%arg0: i32, %arg1: i32, %arg2: i32) -> (i32, i32) {
    %c0_i32 = arith.constant 0 : i32
    %c0_i32_0 = arith.constant 0 : i32
    return %c0_i32, %arg1 : i32, i32
  }
  func.func @transform_3(%arg0: i32, %arg1: i32, %arg2: i32) -> (i32, i32) {
    %c0_i32 = arith.constant 0 : i32
    %c0_i32_0 = arith.constant 0 : i32
    return %c0_i32, %arg1 : i32, i32
  }
  func.func @transform_4(%arg0: i32, %arg1: i32, %arg2: i32) -> (i32, i32) {
    %c0_i32 = arith.constant 0 : i32
    return %arg0, %arg1 : i32, i32
  }
}

module attributes {stable_mosaic.version = 11 : i64} {
  func.func @_mm_kernel(%arg0: i32, %arg1: i32, %arg2: i32, %arg3: memref<128x16xbf16, #tpu.memory_space<vmem>>, %arg4: memref<16x96xbf16, #tpu.memory_space<vmem>>, %arg5: memref<128x96xbf16, #tpu.memory_space<vmem>>, %arg6: memref<128x96xf32, #tpu.memory_space<vmem>>) attributes {dimension_semantics = [#tpu.dimension_semantics<parallel>, #tpu.dimension_semantics<parallel>, #tpu.dimension_semantics<arbitrary>], iteration_bounds = array<i64: 1, 1, 1>, scalar_prefetch = 0 : i64, scratch_operands = 1 : i64, tpu.core_type = #tpu.core_type<tc>, window_params = [{transform_indices = @transform_0, window_bounds = array<i64: 128, 16>}, {transform_indices = @transform_1, window_bounds = array<i64: 16, 96>}, {transform_indices = @transform_2, window_bounds = array<i64: 128, 96>}]} {
    %c0_i32 = arith.constant 0 : i32
    %0 = arith.cmpi eq, %arg2, %c0_i32 : i32
    %1 = arith.extui %0 : i1 to i32
    %c0_i32_0 = arith.constant 0 : i32
    %2 = arith.cmpi ne, %1, %c0_i32_0 : i32
    scf.if %2 {
      %cst_10 = arith.constant 0.000000e+00 : f32
      %12 = vector.broadcast %cst_10 : f32 to vector<128x96xf32>
      %c0_11 = arith.constant 0 : index
      %c0_12 = arith.constant 0 : index
      %13 = vector.load %arg6[%c0_11, %c0_12] : memref<128x96xf32, #tpu.memory_space<vmem>>, vector<128x96xf32>
      tpu.vector_store %arg6[%c0_11, %c0_12], %12 {strides = array<i32>} : memref<128x96xf32, #tpu.memory_space<vmem>>, vector<128x96xf32>,
    } else {
    }
    %c0 = arith.constant 0 : index
    %c0_1 = arith.constant 0 : index
    %3 = vector.load %arg6[%c0, %c0_1] : memref<128x96xf32, #tpu.memory_space<vmem>>, vector<128x96xf32>
    %c0_2 = arith.constant 0 : index
    %c0_3 = arith.constant 0 : index
    %4 = vector.load %arg3[%c0_2, %c0_3] : memref<128x16xbf16, #tpu.memory_space<vmem>>, vector<128x16xbf16>
    %c0_4 = arith.constant 0 : index
    %c0_5 = arith.constant 0 : index
    %5 = vector.load %arg4[%c0_4, %c0_5] : memref<16x96xbf16, #tpu.memory_space<vmem>>, vector<16x96xbf16>
    %cst = arith.constant dense<0.000000e+00> : vector<128x96xf32>
    %6 = tpu.matmul %4, %5, %cst {dimension_numbers = #tpu.dot_dimension_numbers<[1], [0], [0], [1], [0, 0, 1, 1], [], []>} : vector<128x16xbf16>, vector<16x96xbf16>, vector<128x96xf32> -> vector<128x96xf32>
    %7 = arith.addf %3, %6 : vector<128x96xf32>
    %c0_6 = arith.constant 0 : index
    %c0_7 = arith.constant 0 : index
    %8 = vector.load %arg6[%c0_6, %c0_7] : memref<128x96xf32, #tpu.memory_space<vmem>>, vector<128x96xf32>
    tpu.vector_store %arg6[%c0_6, %c0_7], %7 {strides = array<i32>} : memref<128x96xf32, #tpu.memory_space<vmem>>, vector<128x96xf32>,
    %c0_i32_8 = arith.constant 0 : i32
    %9 = arith.cmpi eq, %arg2, %c0_i32_8 : i32
    %10 = arith.extui %9 : i1 to i32
    %c0_i32_9 = arith.constant 0 : i32
    %11 = arith.cmpi ne, %10, %c0_i32_9 : i32
    scf.if %11 {
      %c0_10 = arith.constant 0 : index
      %c0_11 = arith.constant 0 : index
      %12 = vector.load %arg6[%c0_10, %c0_11] : memref<128x96xf32, #tpu.memory_space<vmem>>, vector<128x96xf32>
      %13 = arith.truncf %12 : vector<128x96xf32> to vector<128x96xbf16>
      %c0_12 = arith.constant 0 : index
      %c0_13 = arith.constant 0 : index
      %14 = vector.load %arg5[%c0_12, %c0_13] : memref<128x96xbf16, #tpu.memory_space<vmem>>, vector<128x96xbf16>
      tpu.vector_store %arg5[%c0_12, %c0_13], %13 {strides = array<i32>} : memref<128x96xbf16, #tpu.memory_space<vmem>>, vector<128x96xbf16>,
    } else {
    }
    return
  }
  func.func @transform_0(%arg0: i32, %arg1: i32, %arg2: i32) -> (i32, i32) {
    %c0_i32 = arith.constant 0 : i32
    return %arg0, %arg2 : i32, i32
  }
  func.func @transform_1(%arg0: i32, %arg1: i32, %arg2: i32) -> (i32, i32) {
    %c0_i32 = arith.constant 0 : i32
    return %arg2, %arg1 : i32, i32
  }
  func.func @transform_2(%arg0: i32, %arg1: i32, %arg2: i32) -> (i32, i32) {
    %c0_i32 = arith.constant 0 : i32
    return %arg0, %arg1 : i32, i32
  }
}

module attributes {stable_mosaic.version = 11 : i64} {
  func.func @_mhda_attn_kernel(%arg0: i32, %arg1: i32, %arg2: memref<8x1x1xf32, #tpu.memory_space<vmem>>, %arg3: memref<1x1x4xf32, #tpu.memory_space<vmem>>, %arg4: memref<1x8x64x2xbf16, #tpu.memory_space<vmem>>, %arg5: memref<1x8x64x2xbf16, #tpu.memory_space<vmem>>, %arg6: memref<1x8x64x2xbf16, #tpu.memory_space<vmem>>, %arg7: memref<1x8x64x2xbf16, #tpu.memory_space<vmem>>, %arg8: memref<1x8x64x4xbf16, #tpu.memory_space<vmem>>, %arg9: memref<1x8x64x4xbf16, #tpu.memory_space<vmem>>) attributes {dimension_semantics = [#tpu.dimension_semantics<parallel>, #tpu.dimension_semantics<parallel>], iteration_bounds = array<i64: 2, 1>, scalar_prefetch = 0 : i64, scratch_operands = 0 : i64, tpu.core_type = #tpu.core_type<tc>, window_params = [{pipeline_mode = #tpu.pipeline_mode<synchronous>, transform_indices = @transform_0, window_bounds = array<i64: 8, 1, 1>}, {pipeline_mode = #tpu.pipeline_mode<synchronous>, transform_indices = @transform_1, window_bounds = array<i64: 1, 1, 4>}, {transform_indices = @transform_2, window_bounds = array<i64: 1, 8, 64, 2>}, {transform_indices = @transform_3, window_bounds = array<i64: 1, 8, 64, 2>}, {transform_indices = @transform_4, window_bounds = array<i64: 1, 8, 64, 2>}, {transform_indices = @transform_5, window_bounds = array<i64: 1, 8, 64, 2>}, {transform_indices = @transform_6, window_bounds = array<i64: 1, 8, 64, 4>}, {transform_indices = @transform_7, window_bounds = array<i64: 1, 8, 64, 4>}]} {
    %c0 = arith.constant 0 : index
    %c0_0 = arith.constant 0 : index
    %c0_1 = arith.constant 0 : index
    %c0_2 = arith.constant 0 : index
    %0 = vector.load %arg4[%c0, %c0_0, %c0_1, %c0_2] : memref<1x8x64x2xbf16, #tpu.memory_space<vmem>>, vector<1x8x64x2xbf16>
    %1 = vector.shape_cast %0 : vector<1x8x64x2xbf16> to vector<8x64x2xbf16>
    %c0_3 = arith.constant 0 : index
    %c0_4 = arith.constant 0 : index
    %c0_5 = arith.constant 0 : index
    %c0_6 = arith.constant 0 : index
    %2 = vector.load %arg5[%c0_3, %c0_4, %c0_5, %c0_6] : memref<1x8x64x2xbf16, #tpu.memory_space<vmem>>, vector<1x8x64x2xbf16>
    %3 = vector.shape_cast %2 : vector<1x8x64x2xbf16> to vector<8x64x2xbf16>
    %c0_7 = arith.constant 0 : index
    %c0_8 = arith.constant 0 : index
    %c0_9 = arith.constant 0 : index
    %c0_10 = arith.constant 0 : index
    %4 = vector.load %arg6[%c0_7, %c0_8, %c0_9, %c0_10] : memref<1x8x64x2xbf16, #tpu.memory_space<vmem>>, vector<1x8x64x2xbf16>
    %5 = vector.shape_cast %4 : vector<1x8x64x2xbf16> to vector<8x64x2xbf16>
    %c0_11 = arith.constant 0 : index
    %c0_12 = arith.constant 0 : index
    %c0_13 = arith.constant 0 : index
    %c0_14 = arith.constant 0 : index
    %6 = vector.load %arg7[%c0_11, %c0_12, %c0_13, %c0_14] : memref<1x8x64x2xbf16, #tpu.memory_space<vmem>>, vector<1x8x64x2xbf16>
    %7 = vector.shape_cast %6 : vector<1x8x64x2xbf16> to vector<8x64x2xbf16>
    %c0_15 = arith.constant 0 : index
    %c0_16 = arith.constant 0 : index
    %c0_17 = arith.constant 0 : index
    %c0_18 = arith.constant 0 : index
    %8 = vector.load %arg8[%c0_15, %c0_16, %c0_17, %c0_18] : memref<1x8x64x4xbf16, #tpu.memory_space<vmem>>, vector<1x8x64x4xbf16>
    %9 = vector.shape_cast %8 : vector<1x8x64x4xbf16> to vector<8x64x4xbf16>
    %c0_19 = arith.constant 0 : index
    %c0_20 = arith.constant 0 : index
    %c0_21 = arith.constant 0 : index
    %10 = vector.load %arg2[%c0_19, %c0_20, %c0_21] : memref<8x1x1xf32, #tpu.memory_space<vmem>>, vector<8x1x1xf32>
    %c0_22 = arith.constant 0 : index
    %c0_23 = arith.constant 0 : index
    %c0_24 = arith.constant 0 : index
    %11 = vector.load %arg3[%c0_22, %c0_23, %c0_24] : memref<1x1x4xf32, #tpu.memory_space<vmem>>, vector<1x1x4xf32>
    "tpu.trace_start"() <{level = 10 : i32, message = "hqd,hkd->hqk"}> : () -> ()
    %cst = arith.constant dense<0.000000e+00> : vector<8x64x64xf32>
    %12 = tpu.matmul %1, %5, %cst {dimension_numbers = #tpu.dot_dimension_numbers<[2], [2], [1], [1], [0, 0, 0, 1, 1, 1], [0], [0]>} : vector<8x64x2xbf16>, vector<8x64x2xbf16>, vector<8x64x64xf32> -> vector<8x64x64xf32>
    "tpu.trace_stop"() : () -> ()
    %cst_25 = arith.constant 0.707106769 : f32
    %13 = vector.broadcast %cst_25 : f32 to vector<8x64x64xf32>
    %14 = arith.mulf %12, %13 : vector<8x64x64xf32>
    "tpu.trace_start"() <{level = 10 : i32, message = "hqd,hkd->hqk"}> : () -> ()
    %cst_26 = arith.constant dense<0.000000e+00> : vector<8x64x64xf32>
    %15 = tpu.matmul %3, %7, %cst_26 {dimension_numbers = #tpu.dot_dimension_numbers<[2], [2], [1], [1], [0, 0, 0, 1, 1, 1], [0], [0]>} : vector<8x64x2xbf16>, vector<8x64x2xbf16>, vector<8x64x64xf32> -> vector<8x64x64xf32>
    "tpu.trace_stop"() : () -> ()
    %cst_27 = arith.constant 0.707106769 : f32
    %16 = vector.broadcast %cst_27 : f32 to vector<8x64x64xf32>
    %17 = arith.mulf %15, %16 : vector<8x64x64xf32>
    %c64_i32 = arith.constant 64 : i32
    %18 = arith.muli %arg1, %c64_i32 : i32
    %19 = tpu.iota {dimensions = array<i32: 0>} : vector<64x64xi32>
    %20 = vector.broadcast %18 : i32 to vector<64x64xi32>
    %21 = arith.addi %19, %20 : vector<64x64xi32>
    %22 = tpu.iota {dimensions = array<i32: 1>} : vector<64x64xi32>
    %23 = arith.cmpi sge, %21, %22 : vector<64x64xi32>
    %24 = vector.shape_cast %23 : vector<64x64xi1> to vector<1x64x64xi1>
    %cst_28 = arith.constant -1.000000e+30 : f32
    %25 = vector.shape_cast %24 : vector<1x64x64xi1> to vector<1x64x64xi1>
    %26 = vector.broadcast %25 : vector<1x64x64xi1> to vector<8x64x64xi1>
    %27 = vector.broadcast %cst_28 : f32 to vector<8x64x64xf32>
    %28 = arith.select %26, %14, %27 : vector<8x64x64xi1>, vector<8x64x64xf32>
    %cst_29 = arith.constant -1.000000e+30 : f32
    %29 = vector.shape_cast %24 : vector<1x64x64xi1> to vector<1x64x64xi1>
    %30 = vector.broadcast %29 : vector<1x64x64xi1> to vector<8x64x64xi1>
    %31 = vector.broadcast %cst_29 : f32 to vector<8x64x64xf32>
    %32 = arith.select %30, %17, %31 : vector<8x64x64xi1>, vector<8x64x64xf32>
    %cst_30 = arith.constant dense<0xFF800000> : vector<8x64xf32>
    %33 = vector.multi_reduction <maximumf>, %28, %cst_30 [2] : vector<8x64x64xf32> to vector<8x64xf32>
    %34 = vector.shape_cast %33 : vector<8x64xf32> to vector<8x64x1xf32>
    %35 = vector.broadcast %34 : vector<8x64x1xf32> to vector<8x64x64xf32>
    %36 = arith.subf %28, %35 : vector<8x64x64xf32>
    %37 = math.exp %36 : vector<8x64x64xf32>
    %cst_31 = arith.constant dense<0xFF800000> : vector<8x64xf32>
    %38 = vector.multi_reduction <maximumf>, %32, %cst_31 [2] : vector<8x64x64xf32> to vector<8x64xf32>
    %39 = vector.shape_cast %38 : vector<8x64xf32> to vector<8x64x1xf32>
    %40 = vector.broadcast %39 : vector<8x64x1xf32> to vector<8x64x64xf32>
    %41 = arith.subf %32, %40 : vector<8x64x64xf32>
    %42 = math.exp %41 : vector<8x64x64xf32>
    %cst_32 = arith.constant dense<0.000000e+00> : vector<8x64xf32>
    %43 = vector.multi_reduction <add>, %37, %cst_32 [2] : vector<8x64x64xf32> to vector<8x64xf32>
    %44 = vector.shape_cast %43 : vector<8x64xf32> to vector<8x64x1xf32>
    %45 = tpu.reciprocal %44 {approx = true} : vector<8x64x1xf32> -> vector<8x64x1xf32>
    %46 = vector.broadcast %45 : vector<8x64x1xf32> to vector<8x64x64xf32>
    %47 = arith.mulf %37, %46 : vector<8x64x64xf32>
    %cst_33 = arith.constant dense<0.000000e+00> : vector<8x64xf32>
    %48 = vector.multi_reduction <add>, %42, %cst_33 [2] : vector<8x64x64xf32> to vector<8x64xf32>
    %49 = vector.shape_cast %48 : vector<8x64xf32> to vector<8x64x1xf32>
    %50 = tpu.reciprocal %49 {approx = true} : vector<8x64x1xf32> -> vector<8x64x1xf32>
    %51 = vector.broadcast %50 : vector<8x64x1xf32> to vector<8x64x64xf32>
    %52 = arith.mulf %42, %51 : vector<8x64x64xf32>
    %53 = vector.broadcast %10 : vector<8x1x1xf32> to vector<8x64x64xf32>
    %54 = arith.mulf %53, %52 : vector<8x64x64xf32>
    %55 = arith.subf %47, %54 : vector<8x64x64xf32>
    %56 = arith.truncf %55 : vector<8x64x64xf32> to vector<8x64x64xbf16>
    "tpu.trace_start"() <{level = 10 : i32, message = "hqk,hkd->hqd"}> : () -> ()
    %cst_34 = arith.constant dense<0.000000e+00> : vector<8x64x4xf32>
    %57 = tpu.matmul %56, %9, %cst_34 {dimension_numbers = #tpu.dot_dimension_numbers<[2], [1], [1], [2], [0, 0, 0, 1, 1, 2], [0], [0]>} : vector<8x64x64xbf16>, vector<8x64x4xbf16>, vector<8x64x4xf32> -> vector<8x64x4xf32>
    "tpu.trace_stop"() : () -> ()
    %58 = arith.mulf %57, %57 : vector<8x64x4xf32>
    %cst_35 = arith.constant dense<0.000000e+00> : vector<8x64xf32>
    %59 = vector.multi_reduction <add>, %58, %cst_35 [2] : vector<8x64x4xf32> to vector<8x64xf32>
    %60 = vector.shape_cast %59 : vector<8x64xf32> to vector<8x64x1xf32>
    %cst_36 = arith.constant 4.000000e+00 : f32
    %61 = vector.broadcast %cst_36 : f32 to vector<8x64x1xf32>
    %62 = arith.divf %60, %61 : vector<8x64x1xf32>
    %cst_37 = arith.constant 9.99999974E-6 : f32
    %63 = vector.broadcast %cst_37 : f32 to vector<8x64x1xf32>
    %64 = arith.addf %62, %63 : vector<8x64x1xf32>
    %65 = math.rsqrt %64 : vector<8x64x1xf32>
    %66 = vector.broadcast %65 : vector<8x64x1xf32> to vector<8x64x4xf32>
    %67 = arith.mulf %57, %66 : vector<8x64x4xf32>
    %68 = vector.broadcast %11 : vector<1x1x4xf32> to vector<8x64x4xf32>
    %69 = arith.mulf %67, %68 : vector<8x64x4xf32>
    %cst_38 = arith.constant 2.000000e-01 : f32
    %70 = vector.broadcast %cst_38 : f32 to vector<8x64x4xf32>
    %71 = arith.mulf %69, %70 : vector<8x64x4xf32>
    %72 = arith.truncf %71 : vector<8x64x4xf32> to vector<8x64x4xbf16>
    %c0_39 = arith.constant 0 : index
    %c0_40 = arith.constant 0 : index
    %c0_41 = arith.constant 0 : index
    %c0_42 = arith.constant 0 : index
    %73 = vector.load %arg9[%c0_39, %c0_40, %c0_41, %c0_42] : memref<1x8x64x4xbf16, #tpu.memory_space<vmem>>, vector<1x8x64x4xbf16>
    %74 = vector.shape_cast %73 : vector<1x8x64x4xbf16> to vector<8x64x4xbf16>
    %75 = vector.shape_cast %72 : vector<8x64x4xbf16> to vector<1x8x64x4xbf16>
    tpu.vector_store %arg9[%c0_39, %c0_40, %c0_41, %c0_42], %75 {strides = array<i32>} : memref<1x8x64x4xbf16, #tpu.memory_space<vmem>>, vector<1x8x64x4xbf16>,
    return
  }
  func.func @transform_0(%arg0: i32, %arg1: i32) -> (i32, i32, i32) {
    %c0_i32 = arith.constant 0 : i32
    %c0_i32_0 = arith.constant 0 : i32
    %c0_i32_1 = arith.constant 0 : i32
    %c0_i32_2 = arith.constant 0 : i32
    return %c0_i32, %c0_i32_0, %c0_i32_1 : i32, i32, i32
  }
  func.func @transform_1(%arg0: i32, %arg1: i32) -> (i32, i32, i32) {
    %c0_i32 = arith.constant 0 : i32
    %c0_i32_0 = arith.constant 0 : i32
    %c0_i32_1 = arith.constant 0 : i32
    %c0_i32_2 = arith.constant 0 : i32
    return %c0_i32, %c0_i32_0, %c0_i32_1 : i32, i32, i32
  }
  func.func @transform_2(%arg0: i32, %arg1: i32) -> (i32, i32, i32, i32) {
    %c0_i32 = arith.constant 0 : i32
    %c0_i32_0 = arith.constant 0 : i32
    %c0_i32_1 = arith.constant 0 : i32
    return %arg0, %c0_i32, %arg1, %c0_i32_0 : i32, i32, i32, i32
  }
  func.func @transform_3(%arg0: i32, %arg1: i32) -> (i32, i32, i32, i32) {
    %c0_i32 = arith.constant 0 : i32
    %c0_i32_0 = arith.constant 0 : i32
    %c0_i32_1 = arith.constant 0 : i32
    return %arg0, %c0_i32, %arg1, %c0_i32_0 : i32, i32, i32, i32
  }
  func.func @transform_4(%arg0: i32, %arg1: i32) -> (i32, i32, i32, i32) {
    %c0_i32 = arith.constant 0 : i32
    %c0_i32_0 = arith.constant 0 : i32
    %c0_i32_1 = arith.constant 0 : i32
    %c0_i32_2 = arith.constant 0 : i32
    return %arg0, %c0_i32, %c0_i32_0, %c0_i32_1 : i32, i32, i32, i32
  }
  func.func @transform_5(%arg0: i32, %arg1: i32) -> (i32, i32, i32, i32) {
    %c0_i32 = arith.constant 0 : i32
    %c0_i32_0 = arith.constant 0 : i32
    %c0_i32_1 = arith.constant 0 : i32
    %c0_i32_2 = arith.constant 0 : i32
    return %arg0, %c0_i32, %c0_i32_0, %c0_i32_1 : i32, i32, i32, i32
  }
  func.func @transform_6(%arg0: i32, %arg1: i32) -> (i32, i32, i32, i32) {
    %c0_i32 = arith.constant 0 : i32
    %c0_i32_0 = arith.constant 0 : i32
    %c0_i32_1 = arith.constant 0 : i32
    %c0_i32_2 = arith.constant 0 : i32
    return %arg0, %c0_i32, %c0_i32_0, %c0_i32_1 : i32, i32, i32, i32
  }
  func.func @transform_7(%arg0: i32, %arg1: i32) -> (i32, i32, i32, i32) {
    %c0_i32 = arith.constant 0 : i32
    %c0_i32_0 = arith.constant 0 : i32
    %c0_i32_1 = arith.constant 0 : i32
    return %arg0, %c0_i32, %arg1, %c0_i32_0 : i32, i32, i32, i32
  }
}

module attributes {stable_mosaic.version = 11 : i64} {
  func.func @_mm_kernel(%arg0: i32, %arg1: i32, %arg2: i32, %arg3: memref<128x32xbf16, #tpu.memory_space<vmem>>, %arg4: memref<32x16xbf16, #tpu.memory_space<vmem>>, %arg5: memref<128x16xbf16, #tpu.memory_space<vmem>>, %arg6: memref<128x16xf32, #tpu.memory_space<vmem>>) attributes {dimension_semantics = [#tpu.dimension_semantics<parallel>, #tpu.dimension_semantics<parallel>, #tpu.dimension_semantics<arbitrary>], iteration_bounds = array<i64: 1, 1, 1>, scalar_prefetch = 0 : i64, scratch_operands = 1 : i64, tpu.core_type = #tpu.core_type<tc>, window_params = [{transform_indices = @transform_0, window_bounds = array<i64: 128, 32>}, {transform_indices = @transform_1, window_bounds = array<i64: 32, 16>}, {transform_indices = @transform_2, window_bounds = array<i64: 128, 16>}]} {
    %c0_i32 = arith.constant 0 : i32
    %0 = arith.cmpi eq, %arg2, %c0_i32 : i32
    %1 = arith.extui %0 : i1 to i32
    %c0_i32_0 = arith.constant 0 : i32
    %2 = arith.cmpi ne, %1, %c0_i32_0 : i32
    scf.if %2 {
      %cst_10 = arith.constant 0.000000e+00 : f32
      %12 = vector.broadcast %cst_10 : f32 to vector<128x16xf32>
      %c0_11 = arith.constant 0 : index
      %c0_12 = arith.constant 0 : index
      %13 = vector.load %arg6[%c0_11, %c0_12] : memref<128x16xf32, #tpu.memory_space<vmem>>, vector<128x16xf32>
      tpu.vector_store %arg6[%c0_11, %c0_12], %12 {strides = array<i32>} : memref<128x16xf32, #tpu.memory_space<vmem>>, vector<128x16xf32>,
    } else {
    }
    %c0 = arith.constant 0 : index
    %c0_1 = arith.constant 0 : index
    %3 = vector.load %arg6[%c0, %c0_1] : memref<128x16xf32, #tpu.memory_space<vmem>>, vector<128x16xf32>
    %c0_2 = arith.constant 0 : index
    %c0_3 = arith.constant 0 : index
    %4 = vector.load %arg3[%c0_2, %c0_3] : memref<128x32xbf16, #tpu.memory_space<vmem>>, vector<128x32xbf16>
    %c0_4 = arith.constant 0 : index
    %c0_5 = arith.constant 0 : index
    %5 = vector.load %arg4[%c0_4, %c0_5] : memref<32x16xbf16, #tpu.memory_space<vmem>>, vector<32x16xbf16>
    %cst = arith.constant dense<0.000000e+00> : vector<128x16xf32>
    %6 = tpu.matmul %4, %5, %cst {dimension_numbers = #tpu.dot_dimension_numbers<[1], [0], [0], [1], [0, 0, 1, 1], [], []>} : vector<128x32xbf16>, vector<32x16xbf16>, vector<128x16xf32> -> vector<128x16xf32>
    %7 = arith.addf %3, %6 : vector<128x16xf32>
    %c0_6 = arith.constant 0 : index
    %c0_7 = arith.constant 0 : index
    %8 = vector.load %arg6[%c0_6, %c0_7] : memref<128x16xf32, #tpu.memory_space<vmem>>, vector<128x16xf32>
    tpu.vector_store %arg6[%c0_6, %c0_7], %7 {strides = array<i32>} : memref<128x16xf32, #tpu.memory_space<vmem>>, vector<128x16xf32>,
    %c0_i32_8 = arith.constant 0 : i32
    %9 = arith.cmpi eq, %arg2, %c0_i32_8 : i32
    %10 = arith.extui %9 : i1 to i32
    %c0_i32_9 = arith.constant 0 : i32
    %11 = arith.cmpi ne, %10, %c0_i32_9 : i32
    scf.if %11 {
      %c0_10 = arith.constant 0 : index
      %c0_11 = arith.constant 0 : index
      %12 = vector.load %arg6[%c0_10, %c0_11] : memref<128x16xf32, #tpu.memory_space<vmem>>, vector<128x16xf32>
      %13 = arith.truncf %12 : vector<128x16xf32> to vector<128x16xbf16>
      %c0_12 = arith.constant 0 : index
      %c0_13 = arith.constant 0 : index
      %14 = vector.load %arg5[%c0_12, %c0_13] : memref<128x16xbf16, #tpu.memory_space<vmem>>, vector<128x16xbf16>
      tpu.vector_store %arg5[%c0_12, %c0_13], %13 {strides = array<i32>} : memref<128x16xbf16, #tpu.memory_space<vmem>>, vector<128x16xbf16>,
    } else {
    }
    return
  }
  func.func @transform_0(%arg0: i32, %arg1: i32, %arg2: i32) -> (i32, i32) {
    %c0_i32 = arith.constant 0 : i32
    return %arg0, %arg2 : i32, i32
  }
  func.func @transform_1(%arg0: i32, %arg1: i32, %arg2: i32) -> (i32, i32) {
    %c0_i32 = arith.constant 0 : i32
    return %arg2, %arg1 : i32, i32
  }
  func.func @transform_2(%arg0: i32, %arg1: i32, %arg2: i32) -> (i32, i32) {
    %c0_i32 = arith.constant 0 : i32
    return %arg0, %arg1 : i32, i32
  }
}

module attributes {stable_mosaic.version = 11 : i64} {
  func.func @_mm_kernel(%arg0: i32, %arg1: i32, %arg2: i32, %arg3: memref<128x48xbf16, #tpu.memory_space<vmem>>, %arg4: memref<48x32xbf16, #tpu.memory_space<vmem>>, %arg5: memref<1x32xf32, #tpu.memory_space<vmem>>, %arg6: memref<1x32xf32, #tpu.memory_space<vmem>>, %arg7: memref<128x32xf32, #tpu.memory_space<vmem>>, %arg8: memref<128x32xf32, #tpu.memory_space<vmem>>) attributes {dimension_semantics = [#tpu.dimension_semantics<parallel>, #tpu.dimension_semantics<parallel>, #tpu.dimension_semantics<arbitrary>], iteration_bounds = array<i64: 1, 1, 1>, scalar_prefetch = 0 : i64, scratch_operands = 1 : i64, tpu.core_type = #tpu.core_type<tc>, window_params = [{transform_indices = @transform_0, window_bounds = array<i64: 128, 48>}, {transform_indices = @transform_1, window_bounds = array<i64: 48, 32>}, {transform_indices = @transform_2, window_bounds = array<i64: 1, 32>}, {transform_indices = @transform_3, window_bounds = array<i64: 1, 32>}, {transform_indices = @transform_4, window_bounds = array<i64: 128, 32>}]} {
    %c0_i32 = arith.constant 0 : i32
    %0 = arith.cmpi eq, %arg2, %c0_i32 : i32
    %1 = arith.extui %0 : i1 to i32
    %c0_i32_0 = arith.constant 0 : i32
    %2 = arith.cmpi ne, %1, %c0_i32_0 : i32
    scf.if %2 {
      %cst_10 = arith.constant 0.000000e+00 : f32
      %12 = vector.broadcast %cst_10 : f32 to vector<128x32xf32>
      %c0_11 = arith.constant 0 : index
      %c0_12 = arith.constant 0 : index
      %13 = vector.load %arg8[%c0_11, %c0_12] : memref<128x32xf32, #tpu.memory_space<vmem>>, vector<128x32xf32>
      tpu.vector_store %arg8[%c0_11, %c0_12], %12 {strides = array<i32>} : memref<128x32xf32, #tpu.memory_space<vmem>>, vector<128x32xf32>,
    } else {
    }
    %c0 = arith.constant 0 : index
    %c0_1 = arith.constant 0 : index
    %3 = vector.load %arg8[%c0, %c0_1] : memref<128x32xf32, #tpu.memory_space<vmem>>, vector<128x32xf32>
    %c0_2 = arith.constant 0 : index
    %c0_3 = arith.constant 0 : index
    %4 = vector.load %arg3[%c0_2, %c0_3] : memref<128x48xbf16, #tpu.memory_space<vmem>>, vector<128x48xbf16>
    %c0_4 = arith.constant 0 : index
    %c0_5 = arith.constant 0 : index
    %5 = vector.load %arg4[%c0_4, %c0_5] : memref<48x32xbf16, #tpu.memory_space<vmem>>, vector<48x32xbf16>
    %cst = arith.constant dense<0.000000e+00> : vector<128x32xf32>
    %6 = tpu.matmul %4, %5, %cst {dimension_numbers = #tpu.dot_dimension_numbers<[1], [0], [0], [1], [0, 0, 1, 1], [], []>} : vector<128x48xbf16>, vector<48x32xbf16>, vector<128x32xf32> -> vector<128x32xf32>
    %7 = arith.addf %3, %6 : vector<128x32xf32>
    %c0_6 = arith.constant 0 : index
    %c0_7 = arith.constant 0 : index
    %8 = vector.load %arg8[%c0_6, %c0_7] : memref<128x32xf32, #tpu.memory_space<vmem>>, vector<128x32xf32>
    tpu.vector_store %arg8[%c0_6, %c0_7], %7 {strides = array<i32>} : memref<128x32xf32, #tpu.memory_space<vmem>>, vector<128x32xf32>,
    %c0_i32_8 = arith.constant 0 : i32
    %9 = arith.cmpi eq, %arg2, %c0_i32_8 : i32
    %10 = arith.extui %9 : i1 to i32
    %c0_i32_9 = arith.constant 0 : i32
    %11 = arith.cmpi ne, %10, %c0_i32_9 : i32
    scf.if %11 {
      %c0_10 = arith.constant 0 : index
      %c0_11 = arith.constant 0 : index
      %12 = vector.load %arg8[%c0_10, %c0_11] : memref<128x32xf32, #tpu.memory_space<vmem>>, vector<128x32xf32>
      %c0_12 = arith.constant 0 : index
      %c0_13 = arith.constant 0 : index
      %13 = vector.load %arg5[%c0_12, %c0_13] : memref<1x32xf32, #tpu.memory_space<vmem>>, vector<1x32xf32>
      %14 = vector.broadcast %13 : vector<1x32xf32> to vector<128x32xf32>
      %15 = arith.mulf %12, %14 : vector<128x32xf32>
      %c0_14 = arith.constant 0 : index
      %c0_15 = arith.constant 0 : index
      %16 = vector.load %arg6[%c0_14, %c0_15] : memref<1x32xf32, #tpu.memory_space<vmem>>, vector<1x32xf32>
      %17 = vector.broadcast %16 : vector<1x32xf32> to vector<128x32xf32>
      %18 = arith.addf %15, %17 : vector<128x32xf32>
      %cst_16 = arith.constant -3.000000e+01 : f32
      %cst_17 = arith.constant 3.000000e+01 : f32
      %19 = vector.broadcast %cst_16 : f32 to vector<128x32xf32>
      %20 = arith.maximumf %19, %18 : vector<128x32xf32>
      %21 = vector.broadcast %cst_17 : f32 to vector<128x32xf32>
      %22 = arith.minimumf %21, %20 : vector<128x32xf32>
      %cst_18 = arith.constant 0.000000e+00 : f32
      %23 = vector.broadcast %cst_18 : f32 to vector<128x32xf32>
      %24 = arith.subf %23, %22 : vector<128x32xf32>
      %25 = math.exp %24 : vector<128x32xf32>
      %cst_19 = arith.constant 1.000000e+00 : f32
      %26 = vector.broadcast %cst_19 : f32 to vector<128x32xf32>
      %27 = arith.addf %26, %25 : vector<128x32xf32>
      %28 = tpu.reciprocal %27 {approx = true} : vector<128x32xf32> -> vector<128x32xf32>
      %29 = arith.mulf %18, %28 : vector<128x32xf32>
      %c0_20 = arith.constant 0 : index
      %c0_21 = arith.constant 0 : index
      %30 = vector.load %arg7[%c0_20, %c0_21] : memref<128x32xf32, #tpu.memory_space<vmem>>, vector<128x32xf32>
      tpu.vector_store %arg7[%c0_20, %c0_21], %29 {strides = array<i32>} : memref<128x32xf32, #tpu.memory_space<vmem>>, vector<128x32xf32>,
    } else {
    }
    return
  }
  func.func @transform_0(%arg0: i32, %arg1: i32, %arg2: i32) -> (i32, i32) {
    %c0_i32 = arith.constant 0 : i32
    return %arg0, %arg2 : i32, i32
  }
  func.func @transform_1(%arg0: i32, %arg1: i32, %arg2: i32) -> (i32, i32) {
    %c0_i32 = arith.constant 0 : i32
    return %arg2, %arg1 : i32, i32
  }
  func.func @transform_2(%arg0: i32, %arg1: i32, %arg2: i32) -> (i32, i32) {
    %c0_i32 = arith.constant 0 : i32
    %c0_i32_0 = arith.constant 0 : i32
    return %c0_i32, %arg1 : i32, i32
  }
  func.func @transform_3(%arg0: i32, %arg1: i32, %arg2: i32) -> (i32, i32) {
    %c0_i32 = arith.constant 0 : i32
    %c0_i32_0 = arith.constant 0 : i32
    return %c0_i32, %arg1 : i32, i32
  }
  func.func @transform_4(%arg0: i32, %arg1: i32, %arg2: i32) -> (i32, i32) {
    %c0_i32 = arith.constant 0 : i32
    return %arg0, %arg1 : i32, i32
  }
}

</mosaic_0001>

<llo_original>
// kernel: c2f_mhda_forward.7
$region0: #{c2f_mhda_forward.7}
  #allocation0 [shape = 'u32[]', space=smem, size = 0x4, offset = 0x4, fixed_abs, tag = 'smem constant byte address 0x4 - core index']
  #allocation1 [shape = 'u32[144,128]{1,0:T(1,128)}', space=vmem, size = 0x12000, scoped, tag = 'internal scratch']
  #allocation2 [shape = 'f32[128,32]{1,0:T(8,128)}', space=vmem, size = 0x10000, scoped, tag = 'scratch operand']
  %s0 = inlined_call_operand.vmem [shape: bf16[128,8], index: 0, kind: input, shape index: {}]
  %s1 = inlined_call_operand.vmem [shape: bf16[8,32], index: 1, kind: input, shape index: {}]
  %s2 = inlined_call_operand.vmem [shape: f32[1,32], index: 2, kind: input, shape index: {}]
  %s3 = inlined_call_operand.vmem [shape: f32[1,32], index: 3, kind: input, shape index: {}]
  %s4 = inlined_call_operand.vmem [shape: bf16[128,32], index: 4, kind: output, shape index: {}]
  %s5 = sld [smem:[#allocation0]]
  $region34: #{c2f_mhda_forward.7} parent=0
    _
  %s7 = ssub.s32 1, %s5
  %s8 = scalar_select 0, %s7, %s5
  // Predicated region
  $region2: #{c2f_mhda_forward.7} parent=0 // pred_check
    _
  $region3: #{c2f_mhda_forward.7} parent=0 // pred_check_branch
    %10 = sbr.rel (0) target = $region5
  $region4: #{c2f_mhda_forward.7} parent=0 // pred_region
    _
  $region5: #{c2f_mhda_forward.7} parent=0 // pred_fallthru
    _
  // Predicated region
  $region6: #{c2f_mhda_forward.7} parent=0 // pred_check
    _
  $region7: #{c2f_mhda_forward.7} parent=0 // pred_check_branch
    %12 = sbr.rel (0) target = $region9
  $region8: #{c2f_mhda_forward.7} parent=0 // pred_region
    _
  $region9: #{c2f_mhda_forward.7} parent=0 // pred_fallthru
    _
  // Predicated region
  $region10: #{c2f_mhda_forward.7} parent=0 // pred_check
    _
  $region11: #{c2f_mhda_forward.7} parent=0 // pred_check_branch
    %14 = sbr.rel (0) target = $region13
  $region12: #{c2f_mhda_forward.7} parent=0 // pred_region
    _
  $region13: #{c2f_mhda_forward.7} parent=0 // pred_fallthru
    _
  // Predicated region
  $region14: #{c2f_mhda_forward.7} parent=0 // pred_check
    _
  $region15: #{c2f_mhda_forward.7} parent=0 // pred_check_branch
    %16 = sbr.rel (0) target = $region17
  $region16: #{c2f_mhda_forward.7} parent=0 // pred_region
    _
  $region17: #{c2f_mhda_forward.7} parent=0 // pred_fallthru
    _
  %p18 = scmp.eq.s32.totalorder 0, 0
  // Predicated region
  $region18: #{c2f_mhda_forward.7} parent=0 // pred_check
    %p19 = pneg %p18
  $region19: #{c2f_mhda_forward.7} parent=0 // pred_check_branch
    %21 = sbr.rel (%p19) target = $region21
  $region20: #{c2f_mhda_forward.7} parent=0 // pred_region
    %vm22 = vcmask 261120
    %23 = vst.msk [vmem:[#allocation2] sm:$0xff] %vm22, 0.0
    %24 = vst.msk [vmem:[#allocation2 + $0x8] sm:$0xff] %vm22, 0.0
    %25 = vst.msk [vmem:[#allocation2 + $0x10] sm:$0xff] %vm22, 0.0
    %26 = vst.msk [vmem:[#allocation2 + $0x18] sm:$0xff] %vm22, 0.0
    %27 = vst.msk [vmem:[#allocation2 + $0x20] sm:$0xff] %vm22, 0.0
    %28 = vst.msk [vmem:[#allocation2 + $0x28] sm:$0xff] %vm22, 0.0
    %29 = vst.msk [vmem:[#allocation2 + $0x30] sm:$0xff] %vm22, 0.0
    %30 = vst.msk [vmem:[#allocation2 + $0x38] sm:$0xff] %vm22, 0.0
    %31 = vst.msk [vmem:[#allocation2 + $0x40] sm:$0xff] %vm22, 0.0
    %32 = vst.msk [vmem:[#allocation2 + $0x48] sm:$0xff] %vm22, 0.0
    %33 = vst.msk [vmem:[#allocation2 + $0x50] sm:$0xff] %vm22, 0.0
    %34 = vst.msk [vmem:[#allocation2 + $0x58] sm:$0xff] %vm22, 0.0
    %35 = vst.msk [vmem:[#allocation2 + $0x60] sm:$0xff] %vm22, 0.0
    %36 = vst.msk [vmem:[#allocation2 + $0x68] sm:$0xff] %vm22, 0.0
    %37 = vst.msk [vmem:[#allocation2 + $0x70] sm:$0xff] %vm22, 0.0
    %38 = vst.msk [vmem:[#allocation2 + $0x78] sm:$0xff] %vm22, 0.0
  $region21: #{c2f_mhda_forward.7} parent=0 // pred_fallthru
    _
  %v39 = vld [vmem:[#allocation2] sm:$0xff]
  %v40 = vld [vmem:[#allocation2 + $0x8] sm:$0xff]
  %v41 = vld [vmem:[#allocation2 + $0x10] sm:$0xff]
  %v42 = vld [vmem:[#allocation2 + $0x18] sm:$0xff]
  %v43 = vld [vmem:[#allocation2 + $0x20] sm:$0xff]
  %v44 = vld [vmem:[#allocation2 + $0x28] sm:$0xff]
  %v45 = vld [vmem:[#allocation2 + $0x30] sm:$0xff]
  %v46 = vld [vmem:[#allocation2 + $0x38] sm:$0xff]
  %v47 = vld [vmem:[#allocation2 + $0x40] sm:$0xff]
  %v48 = vld [vmem:[#allocation2 + $0x48] sm:$0xff]
  %v49 = vld [vmem:[#allocation2 + $0x50] sm:$0xff]
  %v50 = vld [vmem:[#allocation2 + $0x58] sm:$0xff]
  %v51 = vld [vmem:[#allocation2 + $0x60] sm:$0xff]
  %v52 = vld [vmem:[#allocation2 + $0x68] sm:$0xff]
  %v53 = vld [vmem:[#allocation2 + $0x70] sm:$0xff]
  %v54 = vld [vmem:[#allocation2 + $0x78] sm:$0xff]
  %v55 = vld [vmem:[%s0] sm:$0xf]
  %v56 = vld [vmem:[%s0 + $0x4] sm:$0xf]
  %v57 = vld [vmem:[%s0 + $0x8] sm:$0xf]
  %v58 = vld [vmem:[%s0 + $0xc] sm:$0xf]
  %v59 = vld [vmem:[%s0 + $0x10] sm:$0xf]
  %v60 = vld [vmem:[%s0 + $0x14] sm:$0xf]
  %v61 = vld [vmem:[%s0 + $0x18] sm:$0xf]
  %v62 = vld [vmem:[%s0 + $0x1c] sm:$0xf]
  %v63 = vld [vmem:[%s0 + $0x20] sm:$0xf]
  %v64 = vld [vmem:[%s0 + $0x24] sm:$0xf]
  %v65 = vld [vmem:[%s0 + $0x28] sm:$0xf]
  %v66 = vld [vmem:[%s0 + $0x2c] sm:$0xf]
  %v67 = vld [vmem:[%s0 + $0x30] sm:$0xf]
  %v68 = vld [vmem:[%s0 + $0x34] sm:$0xf]
  %v69 = vld [vmem:[%s0 + $0x38] sm:$0xf]
  %v70 = vld [vmem:[%s0 + $0x3c] sm:$0xf]
  %v71 = vld [vmem:[%s1] sm:$0xf]
  %v88 = vunpack.c.l.b16 %v55
  %v89 = vunpack.c.l.b16 %v56
  %v90 = vunpack.c.l.b16 %v57
  %v91 = vunpack.c.l.b16 %v58
  %v92 = vunpack.c.l.b16 %v59
  %v93 = vunpack.c.l.b16 %v60
  %v94 = vunpack.c.l.b16 %v61
  %v95 = vunpack.c.l.b16 %v62
  %v96 = vunpack.c.l.b16 %v63
  %v97 = vunpack.c.l.b16 %v64
  %v98 = vunpack.c.l.b16 %v65
  %v99 = vunpack.c.l.b16 %v66
  %v100 = vunpack.c.l.b16 %v67
  %v101 = vunpack.c.l.b16 %v68
  %v102 = vunpack.c.l.b16 %v69
  %v103 = vunpack.c.l.b16 %v70
  %v104 = vpack.c.b16 %v89, %v88
  %v105 = vpack.c.b16 %v91, %v90
  %v106 = vpack.c.b16 %v93, %v92
  %v107 = vpack.c.b16 %v95, %v94
  %v108 = vpack.c.b16 %v97, %v96
  %v109 = vpack.c.b16 %v99, %v98
  %v110 = vpack.c.b16 %v101, %v100
  %v111 = vpack.c.b16 %v103, %v102
  %vm112 = vcmask 64512
  %v114 = vsel %vm112, %v104, 0
  %v117 = vsel %vm112, %v105, 0
  %v120 = vsel %vm112, %v106, 0
  %v123 = vsel %vm112, %v107, 0
  %v126 = vsel %vm112, %v108, 0
  %v129 = vsel %vm112, %v109, 0
  %v132 = vsel %vm112, %v110, 0
  %v135 = vsel %vm112, %v111, 0
  %vm137 = vcmask 1043456
  %v139 = vsel %vm137, %v71, 0
  %141 = vmatprep.subr.bf16.mxu0 0
  %142 = vmatpush1.bf16.msra.mxu0 0
  %143 = vmatprep.subr.bf16.mxu0 0
  %144 = vmatpush1.bf16.msra.mxu0 0
  %145 = vmatprep.subr.bf16.mxu0 0
  %146 = vmatpush1.bf16.msra.mxu0 0
  %147 = vmatprep.subr.bf16.mxu0 0
  %148 = vmatpush1.bf16.msra.mxu0 0
  %149 = vmatprep.subr.bf16.mxu0 0
  %150 = vmatpush1.bf16.msra.mxu0 0
  %151 = vmatprep.subr.bf16.mxu0 0
  %152 = vmatpush1.bf16.msra.mxu0 0
  %153 = vmatprep.subr.bf16.mxu0 0
  %154 = vmatpush1.bf16.msra.mxu0 0
  %155 = vmatprep.subr.bf16.mxu0 0
  %156 = vmatpush1.bf16.msra.mxu0 %v139
  %157 = vmatprep.subr.bf16.mxu0 0
  %158 = vmatpush2.bf16.msra.mxu0 0
  %159 = vmatprep.subr.bf16.mxu0 0
  %160 = vmatpush2.bf16.msra.mxu0 0
  %161 = vmatprep.subr.bf16.mxu0 0
  %162 = vmatpush2.bf16.msra.mxu0 0
  %163 = vmatprep.subr.bf16.mxu0 0
  %164 = vmatpush2.bf16.msra.mxu0 0
  %165 = vmatprep.subr.bf16.mxu0 0
  %166 = vmatpush2.bf16.msra.mxu0 0
  %167 = vmatprep.subr.bf16.mxu0 0
  %168 = vmatpush2.bf16.msra.mxu0 0
  %169 = vmatprep.subr.bf16.mxu0 0
  %170 = vmatpush2.bf16.msra.mxu0 0
  %171 = vmatprep.subr.bf16.mxu0 0
  %172 = vmatpush2.bf16.msra.mxu0 0
  %173 = vmatprep.mubr.bf16.mxu0 0
  %174 = vmatmul.mubr.bf16.gmra.mxu0 %v114
  %v175 = vpop.f32.mrf.mxu0
  %v176 = vadd.f32 0.0, %v175
  %v177 = vpop.f32.mrf.mxu0
  %v178 = vpop.f32.mrf.mxu0
  %v179 = vadd.f32 0.0, %v178
  %v180 = vpop.f32.mrf.mxu0
  %181 = vmatprep.mubr.bf16.mxu0 0
  %182 = vmatmul.mubr.bf16.gmra.mxu0 %v117
  %v183 = vpop.f32.mrf.mxu0
  %v184 = vadd.f32 0.0, %v183
  %v185 = vpop.f32.mrf.mxu0
  %v186 = vpop.f32.mrf.mxu0
  %v187 = vadd.f32 0.0, %v186
  %v188 = vpop.f32.mrf.mxu0
  %189 = vmatprep.mubr.bf16.mxu0 0
  %190 = vmatmul.mubr.bf16.gmra.mxu0 %v120
  %v191 = vpop.f32.mrf.mxu0
  %v192 = vadd.f32 0.0, %v191
  %v193 = vpop.f32.mrf.mxu0
  %v194 = vpop.f32.mrf.mxu0
  %v195 = vadd.f32 0.0, %v194
  %v196 = vpop.f32.mrf.mxu0
  %197 = vmatprep.mubr.bf16.mxu0 0
  %198 = vmatmul.mubr.bf16.gmra.mxu0 %v123
  %v199 = vpop.f32.mrf.mxu0
  %v200 = vadd.f32 0.0, %v199
  %v201 = vpop.f32.mrf.mxu0
  %v202 = vpop.f32.mrf.mxu0
  %v203 = vadd.f32 0.0, %v202
  %v204 = vpop.f32.mrf.mxu0
  %205 = vmatprep.mubr.bf16.mxu0 0
  %206 = vmatmul.mubr.bf16.gmra.mxu0 %v126
  %v207 = vpop.f32.mrf.mxu0
  %v208 = vadd.f32 0.0, %v207
  %v209 = vpop.f32.mrf.mxu0
  %v210 = vpop.f32.mrf.mxu0
  %v211 = vadd.f32 0.0, %v210
  %v212 = vpop.f32.mrf.mxu0
  %213 = vmatprep.mubr.bf16.mxu0 0
  %214 = vmatmul.mubr.bf16.gmra.mxu0 %v129
  %v215 = vpop.f32.mrf.mxu0
  %v216 = vadd.f32 0.0, %v215
  %v217 = vpop.f32.mrf.mxu0
  %v218 = vpop.f32.mrf.mxu0
  %v219 = vadd.f32 0.0, %v218
  %v220 = vpop.f32.mrf.mxu0
  %221 = vmatprep.mubr.bf16.mxu0 0
  %222 = vmatmul.mubr.bf16.gmra.mxu0 %v132
  %v223 = vpop.f32.mrf.mxu0
  %v224 = vadd.f32 0.0, %v223
  %v225 = vpop.f32.mrf.mxu0
  %v226 = vpop.f32.mrf.mxu0
  %v227 = vadd.f32 0.0, %v226
  %v228 = vpop.f32.mrf.mxu0
  %229 = vmatprep.mubr.bf16.mxu0 0
  %230 = vmatmul.mubr.bf16.gmra.mxu0 %v135
  %v231 = vpop.f32.mrf.mxu0
  %v232 = vadd.f32 0.0, %v231
  %v233 = vpop.f32.mrf.mxu0
  %v234 = vpop.f32.mrf.mxu0
  %v235 = vadd.f32 0.0, %v234
  %v236 = vpop.f32.mrf.mxu0
  %237 = vdwg.mxu0
  %v238 = vadd.f32 %v39, %v176
  %v239 = vadd.f32 %v40, %v179
  %v240 = vadd.f32 %v41, %v184
  %v241 = vadd.f32 %v42, %v187
  %v242 = vadd.f32 %v43, %v192
  %v243 = vadd.f32 %v44, %v195
  %v244 = vadd.f32 %v45, %v200
  %v245 = vadd.f32 %v46, %v203
  %v246 = vadd.f32 %v47, %v208
  %v247 = vadd.f32 %v48, %v211
  %v248 = vadd.f32 %v49, %v216
  %v249 = vadd.f32 %v50, %v219
  %v250 = vadd.f32 %v51, %v224
  %v251 = vadd.f32 %v52, %v227
  %v252 = vadd.f32 %v53, %v232
  %v253 = vadd.f32 %v54, %v235
  %vm254 = vcmask 261120
  %255 = vst.msk [vmem:[#allocation2] sm:$0xff] %vm254, %v238
  %256 = vst.msk [vmem:[#allocation2 + $0x8] sm:$0xff] %vm254, %v239
  %257 = vst.msk [vmem:[#allocation2 + $0x10] sm:$0xff] %vm254, %v240
  %258 = vst.msk [vmem:[#allocation2 + $0x18] sm:$0xff] %vm254, %v241
  %259 = vst.msk [vmem:[#allocation2 + $0x20] sm:$0xff] %vm254, %v242
  %260 = vst.msk [vmem:[#allocation2 + $0x28] sm:$0xff] %vm254, %v243
  %261 = vst.msk [vmem:[#allocation2 + $0x30] sm:$0xff] %vm254, %v244
  %262 = vst.msk [vmem:[#allocation2 + $0x38] sm:$0xff] %vm254, %v245
  %263 = vst.msk [vmem:[#allocation2 + $0x40] sm:$0xff] %vm254, %v246
  %264 = vst.msk [vmem:[#allocation2 + $0x48] sm:$0xff] %vm254, %v247
  %265 = vst.msk [vmem:[#allocation2 + $0x50] sm:$0xff] %vm254, %v248
  %266 = vst.msk [vmem:[#allocation2 + $0x58] sm:$0xff] %vm254, %v249
  %267 = vst.msk [vmem:[#allocation2 + $0x60] sm:$0xff] %vm254, %v250
  %268 = vst.msk [vmem:[#allocation2 + $0x68] sm:$0xff] %vm254, %v251
  %269 = vst.msk [vmem:[#allocation2 + $0x70] sm:$0xff] %vm254, %v252
  %270 = vst.msk [vmem:[#allocation2 + $0x78] sm:$0xff] %vm254, %v253
  // Predicated region
  $region22: #{c2f_mhda_forward.7} parent=0 // pred_check
    %p271 = pneg %p18
  $region23: #{c2f_mhda_forward.7} parent=0 // pred_check_branch
    %273 = sbr.rel (%p271) target = $region25
  $region24: #{c2f_mhda_forward.7} parent=0 // pred_region
    %v274 = vld [vmem:[#allocation2] sm:$0xff]
    %v275 = vld [vmem:[#allocation2 + $0x8] sm:$0xff]
    %v276 = vld [vmem:[#allocation2 + $0x10] sm:$0xff]
    %v277 = vld [vmem:[#allocation2 + $0x18] sm:$0xff]
    %v278 = vld [vmem:[#allocation2 + $0x20] sm:$0xff]
    %v279 = vld [vmem:[#allocation2 + $0x28] sm:$0xff]
    %v280 = vld [vmem:[#allocation2 + $0x30] sm:$0xff]
    %v281 = vld [vmem:[#allocation2 + $0x38] sm:$0xff]
    %v282 = vld [vmem:[#allocation2 + $0x40] sm:$0xff]
    %v283 = vld [vmem:[#allocation2 + $0x48] sm:$0xff]
    %v284 = vld [vmem:[#allocation2 + $0x50] sm:$0xff]
    %v285 = vld [vmem:[#allocation2 + $0x58] sm:$0xff]
    %v286 = vld [vmem:[#allocation2 + $0x60] sm:$0xff]
    %v287 = vld [vmem:[#allocation2 + $0x68] sm:$0xff]
    %v288 = vld [vmem:[#allocation2 + $0x70] sm:$0xff]
    %v289 = vld [vmem:[#allocation2 + $0x78] sm:$0xff]
    %v290 = vld [vmem:[%s2] sm:$0x1]
    %v292 = vlaneseq
    %v293 = vshrl.u32 %v292, 7
    %v294 = vsub.s32 0, %v293
    %v295 = vrot.slane %v290, %v294
    %v297 = vmul.f32 %v274, %v295
    %v298 = vmul.f32 %v275, %v295
    %v299 = vmul.f32 %v276, %v295
    %v300 = vmul.f32 %v277, %v295
    %v301 = vmul.f32 %v278, %v295
    %v302 = vmul.f32 %v279, %v295
    %v303 = vmul.f32 %v280, %v295
    %v304 = vmul.f32 %v281, %v295
    %v305 = vmul.f32 %v282, %v295
    %v306 = vmul.f32 %v283, %v295
    %v307 = vmul.f32 %v284, %v295
    %v308 = vmul.f32 %v285, %v295
    %v309 = vmul.f32 %v286, %v295
    %v310 = vmul.f32 %v287, %v295
    %v311 = vmul.f32 %v288, %v295
    %v312 = vmul.f32 %v289, %v295
    %v313 = vld [vmem:[%s3] sm:$0x1]
    %v315 = vlaneseq
    %v316 = vshrl.u32 %v315, 7
    %v317 = vsub.s32 0, %v316
    %v318 = vrot.slane %v313, %v317
    %v320 = vadd.f32 %v297, %v318
    %v321 = vadd.f32 %v298, %v318
    %v322 = vadd.f32 %v299, %v318
    %v323 = vadd.f32 %v300, %v318
    %v324 = vadd.f32 %v301, %v318
    %v325 = vadd.f32 %v302, %v318
    %v326 = vadd.f32 %v303, %v318
    %v327 = vadd.f32 %v304, %v318
    %v328 = vadd.f32 %v305, %v318
    %v329 = vadd.f32 %v306, %v318
    %v330 = vadd.f32 %v307, %v318
    %v331 = vadd.f32 %v308, %v318
    %v332 = vadd.f32 %v309, %v318
    %v333 = vadd.f32 %v310, %v318
    %v334 = vadd.f32 %v311, %v318
    %v335 = vadd.f32 %v312, %v318
    %v336 = vmax.f32 %v320, -30.0
    %v337 = vmax.f32 %v321, -30.0
    %v338 = vmax.f32 %v322, -30.0
    %v339 = vmax.f32 %v323, -30.0
    %v340 = vmax.f32 %v324, -30.0
    %v341 = vmax.f32 %v325, -30.0
    %v342 = vmax.f32 %v326, -30.0
    %v343 = vmax.f32 %v327, -30.0
    %v344 = vmax.f32 %v328, -30.0
    %v345 = vmax.f32 %v329, -30.0
    %v346 = vmax.f32 %v330, -30.0
    %v347 = vmax.f32 %v331, -30.0
    %v348 = vmax.f32 %v332, -30.0
    %v349 = vmax.f32 %v333, -30.0
    %v350 = vmax.f32 %v334, -30.0
    %v351 = vmax.f32 %v335, -30.0
    %v352 = vmin.f32 %v336, 30.0
    %v353 = vmin.f32 %v337, 30.0
    %v354 = vmin.f32 %v338, 30.0
    %v355 = vmin.f32 %v339, 30.0
    %v356 = vmin.f32 %v340, 30.0
    %v357 = vmin.f32 %v341, 30.0
    %v358 = vmin.f32 %v342, 30.0
    %v359 = vmin.f32 %v343, 30.0
    %v360 = vmin.f32 %v344, 30.0
    %v361 = vmin.f32 %v345, 30.0
    %v362 = vmin.f32 %v346, 30.0
    %v363 = vmin.f32 %v347, 30.0
    %v364 = vmin.f32 %v348, 30.0
    %v365 = vmin.f32 %v349, 30.0
    %v366 = vmin.f32 %v350, 30.0
    %v367 = vmin.f32 %v351, 30.0
    %v368 = vsub.f32 0.0, %v352
    %v369 = vsub.f32 0.0, %v353
    %v370 = vsub.f32 0.0, %v354
    %v371 = vsub.f32 0.0, %v355
    %v372 = vsub.f32 0.0, %v356
    %v373 = vsub.f32 0.0, %v357
    %v374 = vsub.f32 0.0, %v358
    %v375 = vsub.f32 0.0, %v359
    %v376 = vsub.f32 0.0, %v360
    %v377 = vsub.f32 0.0, %v361
    %v378 = vsub.f32 0.0, %v362
    %v379 = vsub.f32 0.0, %v363
    %v380 = vsub.f32 0.0, %v364
    %v381 = vsub.f32 0.0, %v365
    %v382 = vsub.f32 0.0, %v366
    %v383 = vsub.f32 0.0, %v367
    %v384 = vmul.f32 %v368, 1.442695
    %v385 = vpow.pop %v384
    %v386 = vmul.f32 %v369, 1.442695
    %v387 = vpow.pop %v386
    %v388 = vmul.f32 %v370, 1.442695
    %v389 = vpow.pop %v388
    %v390 = vmul.f32 %v371, 1.442695
    %v391 = vpow.pop %v390
    %v392 = vmul.f32 %v372, 1.442695
    %v393 = vpow.pop %v392
    %v394 = vmul.f32 %v373, 1.442695
    %v395 = vpow.pop %v394
    %v396 = vmul.f32 %v374, 1.442695
    %v397 = vpow.pop %v396
    %v398 = vmul.f32 %v375, 1.442695
    %v399 = vpow.pop %v398
    %v400 = vmul.f32 %v376, 1.442695
    %v401 = vpow.pop %v400
    %v402 = vmul.f32 %v377, 1.442695
    %v403 = vpow.pop %v402
    %v404 = vmul.f32 %v378, 1.442695
    %v405 = vpow.pop %v404
    %v406 = vmul.f32 %v379, 1.442695
    %v407 = vpow.pop %v406
    %v408 = vmul.f32 %v380, 1.442695
    %v409 = vpow.pop %v408
    %v410 = vmul.f32 %v381, 1.442695
    %v411 = vpow.pop %v410
    %v412 = vmul.f32 %v382, 1.442695
    %v413 = vpow.pop %v412
    %v414 = vmul.f32 %v383, 1.442695
    %v415 = vpow.pop %v414
    %v416 = vadd.f32 %v385, 1.0
    %v417 = vadd.f32 %v387, 1.0
    %v418 = vadd.f32 %v389, 1.0
    %v419 = vadd.f32 %v391, 1.0
    %v420 = vadd.f32 %v393, 1.0
    %v421 = vadd.f32 %v395, 1.0
    %v422 = vadd.f32 %v397, 1.0
    %v423 = vadd.f32 %v399, 1.0
    %v424 = vadd.f32 %v401, 1.0
    %v425 = vadd.f32 %v403, 1.0
    %v426 = vadd.f32 %v405, 1.0
    %v427 = vadd.f32 %v407, 1.0
    %v428 = vadd.f32 %v409, 1.0
    %v429 = vadd.f32 %v411, 1.0
    %v430 = vadd.f32 %v413, 1.0
    %v431 = vadd.f32 %v415, 1.0
    %v432 = vrcp.pop %v416
    %v433 = vrcp.pop %v417
    %v434 = vrcp.pop %v418
    %v435 = vrcp.pop %v419
    %v436 = vrcp.pop %v420
    %v437 = vrcp.pop %v421
    %v438 = vrcp.pop %v422
    %v439 = vrcp.pop %v423
    %v440 = vrcp.pop %v424
    %v441 = vrcp.pop %v425
    %v442 = vrcp.pop %v426
    %v443 = vrcp.pop %v427
    %v444 = vrcp.pop %v428
    %v445 = vrcp.pop %v429
    %v446 = vrcp.pop %v430
    %v447 = vrcp.pop %v431
    %v448 = vmul.f32 %v320, %v432
    %v449 = vmul.f32 %v321, %v433
    %v450 = vmul.f32 %v322, %v434
    %v451 = vmul.f32 %v323, %v435
    %v452 = vmul.f32 %v324, %v436
    %v453 = vmul.f32 %v325, %v437
    %v454 = vmul.f32 %v326, %v438
    %v455 = vmul.f32 %v327, %v439
    %v456 = vmul.f32 %v328, %v440
    %v457 = vmul.f32 %v329, %v441
    %v458 = vmul.f32 %v330, %v442
    %v459 = vmul.f32 %v331, %v443
    %v460 = vmul.f32 %v332, %v444
    %v461 = vmul.f32 %v333, %v445
    %v462 = vmul.f32 %v334, %v446
    %v463 = vmul.f32 %v335, %v447
    %v464 = vpack.c.bf16 %v449, %v448
    %v465 = vpack.c.bf16 %v451, %v450
    %v466 = vpack.c.bf16 %v453, %v452
    %v467 = vpack.c.bf16 %v455, %v454
    %v468 = vpack.c.bf16 %v457, %v456
    %v469 = vpack.c.bf16 %v459, %v458
    %v470 = vpack.c.bf16 %v461, %v460
    %v471 = vpack.c.bf16 %v463, %v462
    %v480 = vunpack.c.l.b16 %v464
    %v481 = vunpack.c.h.b16 %v464
    %v482 = vunpack.c.l.b16 %v465
    %v483 = vunpack.c.h.b16 %v465
    %v484 = vunpack.c.l.b16 %v466
    %v485 = vunpack.c.h.b16 %v466
    %v486 = vunpack.c.l.b16 %v467
    %v487 = vunpack.c.h.b16 %v467
    %v488 = vunpack.c.l.b16 %v468
    %v489 = vunpack.c.h.b16 %v468
    %v490 = vunpack.c.l.b16 %v469
    %v491 = vunpack.c.h.b16 %v469
    %v492 = vunpack.c.l.b16 %v470
    %v493 = vunpack.c.h.b16 %v470
    %v494 = vunpack.c.l.b16 %v471
    %v495 = vunpack.c.h.b16 %v471
    %v496 = vpack.c.b16 %v480, %v480
    %v497 = vpack.c.b16 %v481, %v481
    %v498 = vpack.c.b16 %v482, %v482
    %v499 = vpack.c.b16 %v483, %v483
    %v500 = vpack.c.b16 %v484, %v484
    %v501 = vpack.c.b16 %v485, %v485
    %v502 = vpack.c.b16 %v486, %v486
    %v503 = vpack.c.b16 %v487, %v487
    %v504 = vpack.c.b16 %v488, %v488
    %v505 = vpack.c.b16 %v489, %v489
    %v506 = vpack.c.b16 %v490, %v490
    %v507 = vpack.c.b16 %v491, %v491
    %v508 = vpack.c.b16 %v492, %v492
    %v509 = vpack.c.b16 %v493, %v493
    %v510 = vpack.c.b16 %v494, %v494
    %v511 = vpack.c.b16 %v495, %v495
    %vm528 = vcmask 257024
    %529 = vst.msk [vmem:[%s4] sm:$0xf] %vm528, %v496
    %530 = vst.msk [vmem:[%s4 + $0x4] sm:$0xf] %vm528, %v497
    %531 = vst.msk [vmem:[%s4 + $0x8] sm:$0xf] %vm528, %v498
    %532 = vst.msk [vmem:[%s4 + $0xc] sm:$0xf] %vm528, %v499
    %533 = vst.msk [vmem:[%s4 + $0x10] sm:$0xf] %vm528, %v500
    %534 = vst.msk [vmem:[%s4 + $0x14] sm:$0xf] %vm528, %v501
    %535 = vst.msk [vmem:[%s4 + $0x18] sm:$0xf] %vm528, %v502
    %536 = vst.msk [vmem:[%s4 + $0x1c] sm:$0xf] %vm528, %v503
    %537 = vst.msk [vmem:[%s4 + $0x20] sm:$0xf] %vm528, %v504
    %538 = vst.msk [vmem:[%s4 + $0x24] sm:$0xf] %vm528, %v505
    %539 = vst.msk [vmem:[%s4 + $0x28] sm:$0xf] %vm528, %v506
    %540 = vst.msk [vmem:[%s4 + $0x2c] sm:$0xf] %vm528, %v507
    %541 = vst.msk [vmem:[%s4 + $0x30] sm:$0xf] %vm528, %v508
    %542 = vst.msk [vmem:[%s4 + $0x34] sm:$0xf] %vm528, %v509
    %543 = vst.msk [vmem:[%s4 + $0x38] sm:$0xf] %vm528, %v510
    %544 = vst.msk [vmem:[%s4 + $0x3c] sm:$0xf] %vm528, %v511
  $region25: #{c2f_mhda_forward.7} parent=0 // pred_fallthru
    _
  // Predicated region
  $region26: #{c2f_mhda_forward.7} parent=0 // pred_check
    _
  $region27: #{c2f_mhda_forward.7} parent=0 // pred_check_branch
    %546 = sbr.rel (0) target = $region29
  $region28: #{c2f_mhda_forward.7} parent=0 // pred_region
    _
  $region29: #{c2f_mhda_forward.7} parent=0 // pred_fallthru
    _
  // Predicated region
  $region30: #{c2f_mhda_forward.7} parent=0 // pred_check
    _
  $region31: #{c2f_mhda_forward.7} parent=0 // pred_check_branch
    %548 = sbr.rel (0) target = $region33
  $region32: #{c2f_mhda_forward.7} parent=0 // pred_region
    _
  $region33: #{c2f_mhda_forward.7} parent=0 // pred_fallthru
    _

// kernel: c2f_mhda_forward.10
$region0: #{c2f_mhda_forward.10}
  #allocation0 [shape = 'u32[]', space=smem, size = 0x4, offset = 0x4, fixed_abs, tag = 'smem constant byte address 0x4 - core index']
  #allocation1 [shape = 'u32[144,128]{1,0:T(1,128)}', space=vmem, size = 0x12000, scoped, tag = 'internal scratch']
  #allocation2 [shape = 'f32[128,96]{1,0:T(8,128)}', space=vmem, size = 0x10000, scoped, tag = 'scratch operand']
  %s0 = inlined_call_operand.vmem [shape: bf16[128,16], index: 0, kind: input, shape index: {}]
  %s1 = inlined_call_operand.vmem [shape: bf16[16,96], index: 1, kind: input, shape index: {}]
  %s2 = inlined_call_operand.vmem [shape: bf16[128,96], index: 2, kind: output, shape index: {}]
  %s3 = sld [smem:[#allocation0]]
  $region26: #{c2f_mhda_forward.10} parent=0
    _
  %s5 = ssub.s32 1, %s3
  %s6 = scalar_select 0, %s5, %s3
  // Predicated region
  $region2: #{c2f_mhda_forward.10} parent=0 // pred_check
    _
  $region3: #{c2f_mhda_forward.10} parent=0 // pred_check_branch
    %8 = sbr.rel (0) target = $region5
  $region4: #{c2f_mhda_forward.10} parent=0 // pred_region
    _
  $region5: #{c2f_mhda_forward.10} parent=0 // pred_fallthru
    _
  // Predicated region
  $region6: #{c2f_mhda_forward.10} parent=0 // pred_check
    _
  $region7: #{c2f_mhda_forward.10} parent=0 // pred_check_branch
    %10 = sbr.rel (0) target = $region9
  $region8: #{c2f_mhda_forward.10} parent=0 // pred_region
    _
  $region9: #{c2f_mhda_forward.10} parent=0 // pred_fallthru
    _
  %p12 = scmp.eq.s32.totalorder 0, 0
  // Predicated region
  $region10: #{c2f_mhda_forward.10} parent=0 // pred_check
    %p13 = pneg %p12
  $region11: #{c2f_mhda_forward.10} parent=0 // pred_check_branch
    %15 = sbr.rel (%p13) target = $region13
  $region12: #{c2f_mhda_forward.10} parent=0 // pred_region
    %vm16 = vcmask 785408
    %17 = vst.msk [vmem:[#allocation2] sm:$0xff] %vm16, 0.0
    %18 = vst.msk [vmem:[#allocation2 + $0x8] sm:$0xff] %vm16, 0.0
    %19 = vst.msk [vmem:[#allocation2 + $0x10] sm:$0xff] %vm16, 0.0
    %20 = vst.msk [vmem:[#allocation2 + $0x18] sm:$0xff] %vm16, 0.0
    %21 = vst.msk [vmem:[#allocation2 + $0x20] sm:$0xff] %vm16, 0.0
    %22 = vst.msk [vmem:[#allocation2 + $0x28] sm:$0xff] %vm16, 0.0
    %23 = vst.msk [vmem:[#allocation2 + $0x30] sm:$0xff] %vm16, 0.0
    %24 = vst.msk [vmem:[#allocation2 + $0x38] sm:$0xff] %vm16, 0.0
    %25 = vst.msk [vmem:[#allocation2 + $0x40] sm:$0xff] %vm16, 0.0
    %26 = vst.msk [vmem:[#allocation2 + $0x48] sm:$0xff] %vm16, 0.0
    %27 = vst.msk [vmem:[#allocation2 + $0x50] sm:$0xff] %vm16, 0.0
    %28 = vst.msk [vmem:[#allocation2 + $0x58] sm:$0xff] %vm16, 0.0
    %29 = vst.msk [vmem:[#allocation2 + $0x60] sm:$0xff] %vm16, 0.0
    %30 = vst.msk [vmem:[#allocation2 + $0x68] sm:$0xff] %vm16, 0.0
    %31 = vst.msk [vmem:[#allocation2 + $0x70] sm:$0xff] %vm16, 0.0
    %32 = vst.msk [vmem:[#allocation2 + $0x78] sm:$0xff] %vm16, 0.0
  $region13: #{c2f_mhda_forward.10} parent=0 // pred_fallthru
    _
  %v33 = vld [vmem:[#allocation2] sm:$0xff]
  %v34 = vld [vmem:[#allocation2 + $0x8] sm:$0xff]
  %v35 = vld [vmem:[#allocation2 + $0x10] sm:$0xff]
  %v36 = vld [vmem:[#allocation2 + $0x18] sm:$0xff]
  %v37 = vld [vmem:[#allocation2 + $0x20] sm:$0xff]
  %v38 = vld [vmem:[#allocation2 + $0x28] sm:$0xff]
  %v39 = vld [vmem:[#allocation2 + $0x30] sm:$0xff]
  %v40 = vld [vmem:[#allocation2 + $0x38] sm:$0xff]
  %v41 = vld [vmem:[#allocation2 + $0x40] sm:$0xff]
  %v42 = vld [vmem:[#allocation2 + $0x48] sm:$0xff]
  %v43 = vld [vmem:[#allocation2 + $0x50] sm:$0xff]
  %v44 = vld [vmem:[#allocation2 + $0x58] sm:$0xff]
  %v45 = vld [vmem:[#allocation2 + $0x60] sm:$0xff]
  %v46 = vld [vmem:[#allocation2 + $0x68] sm:$0xff]
  %v47 = vld [vmem:[#allocation2 + $0x70] sm:$0xff]
  %v48 = vld [vmem:[#allocation2 + $0x78] sm:$0xff]
  %v49 = vld [vmem:[%s0] sm:$0xf]
  %v50 = vld [vmem:[%s0 + $0x4] sm:$0xf]
  %v51 = vld [vmem:[%s0 + $0x8] sm:$0xf]
  %v52 = vld [vmem:[%s0 + $0xc] sm:$0xf]
  %v53 = vld [vmem:[%s0 + $0x10] sm:$0xf]
  %v54 = vld [vmem:[%s0 + $0x14] sm:$0xf]
  %v55 = vld [vmem:[%s0 + $0x18] sm:$0xf]
  %v56 = vld [vmem:[%s0 + $0x1c] sm:$0xf]
  %v57 = vld [vmem:[%s0 + $0x20] sm:$0xf]
  %v58 = vld [vmem:[%s0 + $0x24] sm:$0xf]
  %v59 = vld [vmem:[%s0 + $0x28] sm:$0xf]
  %v60 = vld [vmem:[%s0 + $0x2c] sm:$0xf]
  %v61 = vld [vmem:[%s0 + $0x30] sm:$0xf]
  %v62 = vld [vmem:[%s0 + $0x34] sm:$0xf]
  %v63 = vld [vmem:[%s0 + $0x38] sm:$0xf]
  %v64 = vld [vmem:[%s0 + $0x3c] sm:$0xf]
  %v65 = vld [vmem:[%s1] sm:$0xf]
  %v66 = vld [vmem:[%s1 + $0x4] sm:$0xf]
  %v83 = vunpack.c.l.b16 %v49
  %v84 = vunpack.c.l.b16 %v50
  %v85 = vunpack.c.l.b16 %v51
  %v86 = vunpack.c.l.b16 %v52
  %v87 = vunpack.c.l.b16 %v53
  %v88 = vunpack.c.l.b16 %v54
  %v89 = vunpack.c.l.b16 %v55
  %v90 = vunpack.c.l.b16 %v56
  %v91 = vunpack.c.l.b16 %v57
  %v92 = vunpack.c.l.b16 %v58
  %v93 = vunpack.c.l.b16 %v59
  %v94 = vunpack.c.l.b16 %v60
  %v95 = vunpack.c.l.b16 %v61
  %v96 = vunpack.c.l.b16 %v62
  %v97 = vunpack.c.l.b16 %v63
  %v98 = vunpack.c.l.b16 %v64
  %v99 = vpack.c.b16 %v84, %v83
  %v100 = vpack.c.b16 %v86, %v85
  %v101 = vpack.c.b16 %v88, %v87
  %v102 = vpack.c.b16 %v90, %v89
  %v103 = vpack.c.b16 %v92, %v91
  %v104 = vpack.c.b16 %v94, %v93
  %v105 = vpack.c.b16 %v96, %v95
  %v106 = vpack.c.b16 %v98, %v97
  %v109 = vunpack.c.l.b16 %v65
  %v110 = vunpack.c.l.b16 %v66
  %v111 = vpack.c.b16 %v110, %v109
  %vm113 = vcmask 130048
  %v115 = vsel %vm113, %v99, 0
  %v118 = vsel %vm113, %v100, 0
  %v121 = vsel %vm113, %v101, 0
  %v124 = vsel %vm113, %v102, 0
  %v127 = vsel %vm113, %v103, 0
  %v130 = vsel %vm113, %v104, 0
  %v133 = vsel %vm113, %v105, 0
  %v136 = vsel %vm113, %v106, 0
  %138 = vmatprep.subr.bf16.mxu0 0
  %139 = vmatpush1.bf16.msra.mxu0 0
  %140 = vmatprep.subr.bf16.mxu0 0
  %141 = vmatpush1.bf16.msra.mxu0 0
  %142 = vmatprep.subr.bf16.mxu0 0
  %143 = vmatpush1.bf16.msra.mxu0 0
  %144 = vmatprep.subr.bf16.mxu0 0
  %145 = vmatpush1.bf16.msra.mxu0 0
  %146 = vmatprep.subr.bf16.mxu0 0
  %147 = vmatpush1.bf16.msra.mxu0 0
  %148 = vmatprep.subr.bf16.mxu0 0
  %149 = vmatpush1.bf16.msra.mxu0 0
  %150 = vmatprep.subr.bf16.mxu0 0
  %151 = vmatpush1.bf16.msra.mxu0 0
  %152 = vmatprep.subr.bf16.mxu0 0
  %153 = vmatpush1.bf16.msra.mxu0 %v111
  %154 = vmatprep.subr.bf16.mxu0 0
  %155 = vmatpush2.bf16.msra.mxu0 0
  %156 = vmatprep.subr.bf16.mxu0 0
  %157 = vmatpush2.bf16.msra.mxu0 0
  %158 = vmatprep.subr.bf16.mxu0 0
  %159 = vmatpush2.bf16.msra.mxu0 0
  %160 = vmatprep.subr.bf16.mxu0 0
  %161 = vmatpush2.bf16.msra.mxu0 0
  %162 = vmatprep.subr.bf16.mxu0 0
  %163 = vmatpush2.bf16.msra.mxu0 0
  %164 = vmatprep.subr.bf16.mxu0 0
  %165 = vmatpush2.bf16.msra.mxu0 0
  %166 = vmatprep.subr.bf16.mxu0 0
  %167 = vmatpush2.bf16.msra.mxu0 0
  %168 = vmatprep.subr.bf16.mxu0 0
  %169 = vmatpush2.bf16.msra.mxu0 0
  %170 = vmatprep.mubr.bf16.mxu0 0
  %171 = vmatmul.mubr.bf16.gmra.mxu0 %v115
  %v172 = vpop.f32.mrf.mxu0
  %v173 = vadd.f32 0.0, %v172
  %v174 = vpop.f32.mrf.mxu0
  %v175 = vpop.f32.mrf.mxu0
  %v176 = vadd.f32 0.0, %v175
  %v177 = vpop.f32.mrf.mxu0
  %178 = vmatprep.mubr.bf16.mxu0 0
  %179 = vmatmul.mubr.bf16.gmra.mxu0 %v118
  %v180 = vpop.f32.mrf.mxu0
  %v181 = vadd.f32 0.0, %v180
  %v182 = vpop.f32.mrf.mxu0
  %v183 = vpop.f32.mrf.mxu0
  %v184 = vadd.f32 0.0, %v183
  %v185 = vpop.f32.mrf.mxu0
  %186 = vmatprep.mubr.bf16.mxu0 0
  %187 = vmatmul.mubr.bf16.gmra.mxu0 %v121
  %v188 = vpop.f32.mrf.mxu0
  %v189 = vadd.f32 0.0, %v188
  %v190 = vpop.f32.mrf.mxu0
  %v191 = vpop.f32.mrf.mxu0
  %v192 = vadd.f32 0.0, %v191
  %v193 = vpop.f32.mrf.mxu0
  %194 = vmatprep.mubr.bf16.mxu0 0
  %195 = vmatmul.mubr.bf16.gmra.mxu0 %v124
  %v196 = vpop.f32.mrf.mxu0
  %v197 = vadd.f32 0.0, %v196
  %v198 = vpop.f32.mrf.mxu0
  %v199 = vpop.f32.mrf.mxu0
  %v200 = vadd.f32 0.0, %v199
  %v201 = vpop.f32.mrf.mxu0
  %202 = vmatprep.mubr.bf16.mxu0 0
  %203 = vmatmul.mubr.bf16.gmra.mxu0 %v127
  %v204 = vpop.f32.mrf.mxu0
  %v205 = vadd.f32 0.0, %v204
  %v206 = vpop.f32.mrf.mxu0
  %v207 = vpop.f32.mrf.mxu0
  %v208 = vadd.f32 0.0, %v207
  %v209 = vpop.f32.mrf.mxu0
  %210 = vmatprep.mubr.bf16.mxu0 0
  %211 = vmatmul.mubr.bf16.gmra.mxu0 %v130
  %v212 = vpop.f32.mrf.mxu0
  %v213 = vadd.f32 0.0, %v212
  %v214 = vpop.f32.mrf.mxu0
  %v215 = vpop.f32.mrf.mxu0
  %v216 = vadd.f32 0.0, %v215
  %v217 = vpop.f32.mrf.mxu0
  %218 = vmatprep.mubr.bf16.mxu0 0
  %219 = vmatmul.mubr.bf16.gmra.mxu0 %v133
  %v220 = vpop.f32.mrf.mxu0
  %v221 = vadd.f32 0.0, %v220
  %v222 = vpop.f32.mrf.mxu0
  %v223 = vpop.f32.mrf.mxu0
  %v224 = vadd.f32 0.0, %v223
  %v225 = vpop.f32.mrf.mxu0
  %226 = vmatprep.mubr.bf16.mxu0 0
  %227 = vmatmul.mubr.bf16.gmra.mxu0 %v136
  %v228 = vpop.f32.mrf.mxu0
  %v229 = vadd.f32 0.0, %v228
  %v230 = vpop.f32.mrf.mxu0
  %v231 = vpop.f32.mrf.mxu0
  %v232 = vadd.f32 0.0, %v231
  %v233 = vpop.f32.mrf.mxu0
  %234 = vdwg.mxu0
  %v235 = vadd.f32 %v33, %v173
  %v236 = vadd.f32 %v34, %v176
  %v237 = vadd.f32 %v35, %v181
  %v238 = vadd.f32 %v36, %v184
  %v239 = vadd.f32 %v37, %v189
  %v240 = vadd.f32 %v38, %v192
  %v241 = vadd.f32 %v39, %v197
  %v242 = vadd.f32 %v40, %v200
  %v243 = vadd.f32 %v41, %v205
  %v244 = vadd.f32 %v42, %v208
  %v245 = vadd.f32 %v43, %v213
  %v246 = vadd.f32 %v44, %v216
  %v247 = vadd.f32 %v45, %v221
  %v248 = vadd.f32 %v46, %v224
  %v249 = vadd.f32 %v47, %v229
  %v250 = vadd.f32 %v48, %v232
  %vm251 = vcmask 785408
  %252 = vst.msk [vmem:[#allocation2] sm:$0xff] %vm251, %v235
  %253 = vst.msk [vmem:[#allocation2 + $0x8] sm:$0xff] %vm251, %v236
  %254 = vst.msk [vmem:[#allocation2 + $0x10] sm:$0xff] %vm251, %v237
  %255 = vst.msk [vmem:[#allocation2 + $0x18] sm:$0xff] %vm251, %v238
  %256 = vst.msk [vmem:[#allocation2 + $0x20] sm:$0xff] %vm251, %v239
  %257 = vst.msk [vmem:[#allocation2 + $0x28] sm:$0xff] %vm251, %v240
  %258 = vst.msk [vmem:[#allocation2 + $0x30] sm:$0xff] %vm251, %v241
  %259 = vst.msk [vmem:[#allocation2 + $0x38] sm:$0xff] %vm251, %v242
  %260 = vst.msk [vmem:[#allocation2 + $0x40] sm:$0xff] %vm251, %v243
  %261 = vst.msk [vmem:[#allocation2 + $0x48] sm:$0xff] %vm251, %v244
  %262 = vst.msk [vmem:[#allocation2 + $0x50] sm:$0xff] %vm251, %v245
  %263 = vst.msk [vmem:[#allocation2 + $0x58] sm:$0xff] %vm251, %v246
  %264 = vst.msk [vmem:[#allocation2 + $0x60] sm:$0xff] %vm251, %v247
  %265 = vst.msk [vmem:[#allocation2 + $0x68] sm:$0xff] %vm251, %v248
  %266 = vst.msk [vmem:[#allocation2 + $0x70] sm:$0xff] %vm251, %v249
  %267 = vst.msk [vmem:[#allocation2 + $0x78] sm:$0xff] %vm251, %v250
  // Predicated region
  $region14: #{c2f_mhda_forward.10} parent=0 // pred_check
    %p268 = pneg %p12
  $region15: #{c2f_mhda_forward.10} parent=0 // pred_check_branch
    %270 = sbr.rel (%p268) target = $region17
  $region16: #{c2f_mhda_forward.10} parent=0 // pred_region
    %v271 = vld [vmem:[#allocation2] sm:$0xff]
    %v272 = vld [vmem:[#allocation2 + $0x8] sm:$0xff]
    %v273 = vld [vmem:[#allocation2 + $0x10] sm:$0xff]
    %v274 = vld [vmem:[#allocation2 + $0x18] sm:$0xff]
    %v275 = vld [vmem:[#allocation2 + $0x20] sm:$0xff]
    %v276 = vld [vmem:[#allocation2 + $0x28] sm:$0xff]
    %v277 = vld [vmem:[#allocation2 + $0x30] sm:$0xff]
    %v278 = vld [vmem:[#allocation2 + $0x38] sm:$0xff]
    %v279 = vld [vmem:[#allocation2 + $0x40] sm:$0xff]
    %v280 = vld [vmem:[#allocation2 + $0x48] sm:$0xff]
    %v281 = vld [vmem:[#allocation2 + $0x50] sm:$0xff]
    %v282 = vld [vmem:[#allocation2 + $0x58] sm:$0xff]
    %v283 = vld [vmem:[#allocation2 + $0x60] sm:$0xff]
    %v284 = vld [vmem:[#allocation2 + $0x68] sm:$0xff]
    %v285 = vld [vmem:[#allocation2 + $0x70] sm:$0xff]
    %v286 = vld [vmem:[#allocation2 + $0x78] sm:$0xff]
    %v287 = vpack.c.bf16 %v272, %v271
    %v288 = vpack.c.bf16 %v274, %v273
    %v289 = vpack.c.bf16 %v276, %v275
    %v290 = vpack.c.bf16 %v278, %v277
    %v291 = vpack.c.bf16 %v280, %v279
    %v292 = vpack.c.bf16 %v282, %v281
    %v293 = vpack.c.bf16 %v284, %v283
    %v294 = vpack.c.bf16 %v286, %v285
    %v303 = vunpack.c.l.b16 %v287
    %v304 = vunpack.c.h.b16 %v287
    %v305 = vunpack.c.l.b16 %v288
    %v306 = vunpack.c.h.b16 %v288
    %v307 = vunpack.c.l.b16 %v289
    %v308 = vunpack.c.h.b16 %v289
    %v309 = vunpack.c.l.b16 %v290
    %v310 = vunpack.c.h.b16 %v290
    %v311 = vunpack.c.l.b16 %v291
    %v312 = vunpack.c.h.b16 %v291
    %v313 = vunpack.c.l.b16 %v292
    %v314 = vunpack.c.h.b16 %v292
    %v315 = vunpack.c.l.b16 %v293
    %v316 = vunpack.c.h.b16 %v293
    %v317 = vunpack.c.l.b16 %v294
    %v318 = vunpack.c.h.b16 %v294
    %v319 = vpack.c.b16 %v303, %v303
    %v320 = vpack.c.b16 %v304, %v304
    %v321 = vpack.c.b16 %v305, %v305
    %v322 = vpack.c.b16 %v306, %v306
    %v323 = vpack.c.b16 %v307, %v307
    %v324 = vpack.c.b16 %v308, %v308
    %v325 = vpack.c.b16 %v309, %v309
    %v326 = vpack.c.b16 %v310, %v310
    %v327 = vpack.c.b16 %v311, %v311
    %v328 = vpack.c.b16 %v312, %v312
    %v329 = vpack.c.b16 %v313, %v313
    %v330 = vpack.c.b16 %v314, %v314
    %v331 = vpack.c.b16 %v315, %v315
    %v332 = vpack.c.b16 %v316, %v316
    %v333 = vpack.c.b16 %v317, %v317
    %v334 = vpack.c.b16 %v318, %v318
    %vm351 = vcmask 781312
    %352 = vst.msk [vmem:[%s2] sm:$0xf] %vm351, %v319
    %353 = vst.msk [vmem:[%s2 + $0x4] sm:$0xf] %vm351, %v320
    %354 = vst.msk [vmem:[%s2 + $0x8] sm:$0xf] %vm351, %v321
    %355 = vst.msk [vmem:[%s2 + $0xc] sm:$0xf] %vm351, %v322
    %356 = vst.msk [vmem:[%s2 + $0x10] sm:$0xf] %vm351, %v323
    %357 = vst.msk [vmem:[%s2 + $0x14] sm:$0xf] %vm351, %v324
    %358 = vst.msk [vmem:[%s2 + $0x18] sm:$0xf] %vm351, %v325
    %359 = vst.msk [vmem:[%s2 + $0x1c] sm:$0xf] %vm351, %v326
    %360 = vst.msk [vmem:[%s2 + $0x20] sm:$0xf] %vm351, %v327
    %361 = vst.msk [vmem:[%s2 + $0x24] sm:$0xf] %vm351, %v328
    %362 = vst.msk [vmem:[%s2 + $0x28] sm:$0xf] %vm351, %v329
    %363 = vst.msk [vmem:[%s2 + $0x2c] sm:$0xf] %vm351, %v330
    %364 = vst.msk [vmem:[%s2 + $0x30] sm:$0xf] %vm351, %v331
    %365 = vst.msk [vmem:[%s2 + $0x34] sm:$0xf] %vm351, %v332
    %366 = vst.msk [vmem:[%s2 + $0x38] sm:$0xf] %vm351, %v333
    %367 = vst.msk [vmem:[%s2 + $0x3c] sm:$0xf] %vm351, %v334
  $region17: #{c2f_mhda_forward.10} parent=0 // pred_fallthru
    _
  // Predicated region
  $region18: #{c2f_mhda_forward.10} parent=0 // pred_check
    _
  $region19: #{c2f_mhda_forward.10} parent=0 // pred_check_branch
    %369 = sbr.rel (0) target = $region21
  $region20: #{c2f_mhda_forward.10} parent=0 // pred_region
    _
  $region21: #{c2f_mhda_forward.10} parent=0 // pred_fallthru
    _
  // Predicated region
  $region22: #{c2f_mhda_forward.10} parent=0 // pred_check
    _
  $region23: #{c2f_mhda_forward.10} parent=0 // pred_check_branch
    %371 = sbr.rel (0) target = $region25
  $region24: #{c2f_mhda_forward.10} parent=0 // pred_region
    _
  $region25: #{c2f_mhda_forward.10} parent=0 // pred_fallthru
    _

// kernel: c2f_mhda_forward.8
$region0: #{c2f_mhda_forward.8}
  #allocation0 [shape = 'u32[]', space=smem, size = 0x4, offset = 0x4, fixed_abs, tag = 'smem constant byte address 0x4 - core index']
  #allocation1 [shape = 'u32[144,128]{1,0:T(1,128)}', space=vmem, size = 0x12000, scoped, tag = 'internal scratch']
  #allocation2 [shape = 'f32[128,16]{1,0:T(8,128)}', space=vmem, size = 0x10000, scoped, tag = 'scratch operand']
  %s0 = inlined_call_operand.vmem [shape: bf16[128,144], index: 0, kind: input, shape index: {}]
  %s1 = inlined_call_operand.vmem [shape: bf16[144,16], index: 1, kind: input, shape index: {}]
  %s2 = inlined_call_operand.vmem [shape: f32[1,16], index: 2, kind: input, shape index: {}]
  %s3 = inlined_call_operand.vmem [shape: f32[1,16], index: 3, kind: input, shape index: {}]
  %s4 = inlined_call_operand.vmem [shape: bf16[128,16], index: 4, kind: output, shape index: {}]
  %s5 = sld [smem:[#allocation0]]
  $region34: #{c2f_mhda_forward.8} parent=0
    _
  %s7 = ssub.s32 1, %s5
  %s8 = scalar_select 0, %s7, %s5
  // Predicated region
  $region2: #{c2f_mhda_forward.8} parent=0 // pred_check
    _
  $region3: #{c2f_mhda_forward.8} parent=0 // pred_check_branch
    %10 = sbr.rel (0) target = $region5
  $region4: #{c2f_mhda_forward.8} parent=0 // pred_region
    _
  $region5: #{c2f_mhda_forward.8} parent=0 // pred_fallthru
    _
  // Predicated region
  $region6: #{c2f_mhda_forward.8} parent=0 // pred_check
    _
  $region7: #{c2f_mhda_forward.8} parent=0 // pred_check_branch
    %12 = sbr.rel (0) target = $region9
  $region8: #{c2f_mhda_forward.8} parent=0 // pred_region
    _
  $region9: #{c2f_mhda_forward.8} parent=0 // pred_fallthru
    _
  // Predicated region
  $region10: #{c2f_mhda_forward.8} parent=0 // pred_check
    _
  $region11: #{c2f_mhda_forward.8} parent=0 // pred_check_branch
    %14 = sbr.rel (0) target = $region13
  $region12: #{c2f_mhda_forward.8} parent=0 // pred_region
    _
  $region13: #{c2f_mhda_forward.8} parent=0 // pred_fallthru
    _
  // Predicated region
  $region14: #{c2f_mhda_forward.8} parent=0 // pred_check
    _
  $region15: #{c2f_mhda_forward.8} parent=0 // pred_check_branch
    %16 = sbr.rel (0) target = $region17
  $region16: #{c2f_mhda_forward.8} parent=0 // pred_region
    _
  $region17: #{c2f_mhda_forward.8} parent=0 // pred_fallthru
    _
  %p18 = scmp.eq.s32.totalorder 0, 0
  // Predicated region
  $region18: #{c2f_mhda_forward.8} parent=0 // pred_check
    %p19 = pneg %p18
  $region19: #{c2f_mhda_forward.8} parent=0 // pred_check_branch
    %21 = sbr.rel (%p19) target = $region21
  $region20: #{c2f_mhda_forward.8} parent=0 // pred_region
    %vm22 = vcmask 130048
    %23 = vst.msk [vmem:[#allocation2] sm:$0xff] %vm22, 0.0
    %24 = vst.msk [vmem:[#allocation2 + $0x8] sm:$0xff] %vm22, 0.0
    %25 = vst.msk [vmem:[#allocation2 + $0x10] sm:$0xff] %vm22, 0.0
    %26 = vst.msk [vmem:[#allocation2 + $0x18] sm:$0xff] %vm22, 0.0
    %27 = vst.msk [vmem:[#allocation2 + $0x20] sm:$0xff] %vm22, 0.0
    %28 = vst.msk [vmem:[#allocation2 + $0x28] sm:$0xff] %vm22, 0.0
    %29 = vst.msk [vmem:[#allocation2 + $0x30] sm:$0xff] %vm22, 0.0
    %30 = vst.msk [vmem:[#allocation2 + $0x38] sm:$0xff] %vm22, 0.0
    %31 = vst.msk [vmem:[#allocation2 + $0x40] sm:$0xff] %vm22, 0.0
    %32 = vst.msk [vmem:[#allocation2 + $0x48] sm:$0xff] %vm22, 0.0
    %33 = vst.msk [vmem:[#allocation2 + $0x50] sm:$0xff] %vm22, 0.0
    %34 = vst.msk [vmem:[#allocation2 + $0x58] sm:$0xff] %vm22, 0.0
    %35 = vst.msk [vmem:[#allocation2 + $0x60] sm:$0xff] %vm22, 0.0
    %36 = vst.msk [vmem:[#allocation2 + $0x68] sm:$0xff] %vm22, 0.0
    %37 = vst.msk [vmem:[#allocation2 + $0x70] sm:$0xff] %vm22, 0.0
    %38 = vst.msk [vmem:[#allocation2 + $0x78] sm:$0xff] %vm22, 0.0
  $region21: #{c2f_mhda_forward.8} parent=0 // pred_fallthru
    _
  %v39 = vld [vmem:[#allocation2] sm:$0xff]
  %v40 = vld [vmem:[#allocation2 + $0x8] sm:$0xff]
  %v41 = vld [vmem:[#allocation2 + $0x10] sm:$0xff]
  %v42 = vld [vmem:[#allocation2 + $0x18] sm:$0xff]
  %v43 = vld [vmem:[#allocation2 + $0x20] sm:$0xff]
  %v44 = vld [vmem:[#allocation2 + $0x28] sm:$0xff]
  %v45 = vld [vmem:[#allocation2 + $0x30] sm:$0xff]
  %v46 = vld [vmem:[#allocation2 + $0x38] sm:$0xff]
  %v47 = vld [vmem:[#allocation2 + $0x40] sm:$0xff]
  %v48 = vld [vmem:[#allocation2 + $0x48] sm:$0xff]
  %v49 = vld [vmem:[#allocation2 + $0x50] sm:$0xff]
  %v50 = vld [vmem:[#allocation2 + $0x58] sm:$0xff]
  %v51 = vld [vmem:[#allocation2 + $0x60] sm:$0xff]
  %v52 = vld [vmem:[#allocation2 + $0x68] sm:$0xff]
  %v53 = vld [vmem:[#allocation2 + $0x70] sm:$0xff]
  %v54 = vld [vmem:[#allocation2 + $0x78] sm:$0xff]
  %v55 = vld [vmem:[%s0] sm:$0xff]
  %v56 = vld [vmem:[%s0 + $0x8] sm:$0xff]
  %v57 = vld [vmem:[%s0 + $0x10] sm:$0xff]
  %v58 = vld [vmem:[%s0 + $0x18] sm:$0xff]
  %v59 = vld [vmem:[%s0 + $0x20] sm:$0xff]
  %v60 = vld [vmem:[%s0 + $0x28] sm:$0xff]
  %v61 = vld [vmem:[%s0 + $0x30] sm:$0xff]
  %v62 = vld [vmem:[%s0 + $0x38] sm:$0xff]
  %v63 = vld [vmem:[%s0 + $0x40] sm:$0xff]
  %v64 = vld [vmem:[%s0 + $0x48] sm:$0xff]
  %v65 = vld [vmem:[%s0 + $0x50] sm:$0xff]
  %v66 = vld [vmem:[%s0 + $0x58] sm:$0xff]
  %v67 = vld [vmem:[%s0 + $0x60] sm:$0xff]
  %v68 = vld [vmem:[%s0 + $0x68] sm:$0xff]
  %v69 = vld [vmem:[%s0 + $0x70] sm:$0xff]
  %v70 = vld [vmem:[%s0 + $0x78] sm:$0xff]
  %v71 = vld [vmem:[%s1] sm:$0xf]
  %v72 = vld [vmem:[%s1 + $0x4] sm:$0xf]
  %v73 = vld [vmem:[%s1 + $0x8] sm:$0xf]
  %v74 = vld [vmem:[%s1 + $0xc] sm:$0xf]
  %v75 = vld [vmem:[%s1 + $0x10] sm:$0xf]
  %v76 = vld [vmem:[%s1 + $0x14] sm:$0xf]
  %v77 = vld [vmem:[%s1 + $0x18] sm:$0xf]
  %v78 = vld [vmem:[%s1 + $0x1c] sm:$0xf]
  %v79 = vld [vmem:[%s1 + $0x20] sm:$0xf]
  %v80 = vld [vmem:[%s1 + $0x24] sm:$0xf]
  %v81 = vld [vmem:[%s1 + $0x28] sm:$0xf]
  %v82 = vld [vmem:[%s1 + $0x2c] sm:$0xf]
  %v83 = vld [vmem:[%s1 + $0x30] sm:$0xf]
  %v84 = vld [vmem:[%s1 + $0x34] sm:$0xf]
  %v85 = vld [vmem:[%s1 + $0x38] sm:$0xf]
  %v86 = vld [vmem:[%s1 + $0x3c] sm:$0xf]
  %v87 = vld [vmem:[%s1 + $0x40] sm:$0xf]
  %v88 = vld [vmem:[%s1 + $0x44] sm:$0xf]
  %v105 = vunpack.c.l.b16 %v55
  %v106 = vunpack.c.h.b16 %v55
  %v107 = vunpack.c.l.b16 %v56
  %v108 = vunpack.c.h.b16 %v56
  %v109 = vunpack.c.l.b16 %v57
  %v110 = vunpack.c.h.b16 %v57
  %v111 = vunpack.c.l.b16 %v58
  %v112 = vunpack.c.h.b16 %v58
  %v113 = vunpack.c.l.b16 %v59
  %v114 = vunpack.c.h.b16 %v59
  %v115 = vunpack.c.l.b16 %v60
  %v116 = vunpack.c.h.b16 %v60
  %v117 = vunpack.c.l.b16 %v61
  %v118 = vunpack.c.h.b16 %v61
  %v119 = vunpack.c.l.b16 %v62
  %v120 = vunpack.c.h.b16 %v62
  %v121 = vunpack.c.l.b16 %v63
  %v122 = vunpack.c.h.b16 %v63
  %v123 = vunpack.c.l.b16 %v64
  %v124 = vunpack.c.h.b16 %v64
  %v125 = vunpack.c.l.b16 %v65
  %v126 = vunpack.c.h.b16 %v65
  %v127 = vunpack.c.l.b16 %v66
  %v128 = vunpack.c.h.b16 %v66
  %v129 = vunpack.c.l.b16 %v67
  %v130 = vunpack.c.h.b16 %v67
  %v131 = vunpack.c.l.b16 %v68
  %v132 = vunpack.c.h.b16 %v68
  %v133 = vunpack.c.l.b16 %v69
  %v134 = vunpack.c.h.b16 %v69
  %v135 = vunpack.c.l.b16 %v70
  %v136 = vunpack.c.h.b16 %v70
  %v137 = vpack.c.b16 %v107, %v105
  %v138 = vpack.c.b16 %v108, %v106
  %v139 = vpack.c.b16 %v111, %v109
  %v140 = vpack.c.b16 %v112, %v110
  %v141 = vpack.c.b16 %v115, %v113
  %v142 = vpack.c.b16 %v116, %v114
  %v143 = vpack.c.b16 %v119, %v117
  %v144 = vpack.c.b16 %v120, %v118
  %v145 = vpack.c.b16 %v123, %v121
  %v146 = vpack.c.b16 %v124, %v122
  %v147 = vpack.c.b16 %v127, %v125
  %v148 = vpack.c.b16 %v128, %v126
  %v149 = vpack.c.b16 %v131, %v129
  %v150 = vpack.c.b16 %v132, %v130
  %v151 = vpack.c.b16 %v135, %v133
  %v152 = vpack.c.b16 %v136, %v134
  %v179 = vunpack.c.l.b16 %v71
  %v180 = vunpack.c.l.b16 %v72
  %v181 = vunpack.c.l.b16 %v73
  %v182 = vunpack.c.l.b16 %v74
  %v183 = vunpack.c.l.b16 %v75
  %v184 = vunpack.c.l.b16 %v76
  %v185 = vunpack.c.l.b16 %v77
  %v186 = vunpack.c.l.b16 %v78
  %v187 = vunpack.c.l.b16 %v79
  %v188 = vunpack.c.l.b16 %v80
  %v189 = vunpack.c.l.b16 %v81
  %v190 = vunpack.c.l.b16 %v82
  %v191 = vunpack.c.l.b16 %v83
  %v192 = vunpack.c.l.b16 %v84
  %v193 = vunpack.c.l.b16 %v85
  %v194 = vunpack.c.l.b16 %v86
  %v195 = vunpack.c.l.b16 %v87
  %v196 = vunpack.c.l.b16 %v88
  %v197 = vpack.c.b16 %v180, %v179
  %v198 = vpack.c.b16 %v182, %v181
  %v199 = vpack.c.b16 %v184, %v183
  %v200 = vpack.c.b16 %v186, %v185
  %v201 = vpack.c.b16 %v188, %v187
  %v202 = vpack.c.b16 %v190, %v189
  %v203 = vpack.c.b16 %v192, %v191
  %v204 = vpack.c.b16 %v194, %v193
  %v205 = vpack.c.b16 %v196, %v195
  %vm215 = vcmask 130048
  %v217 = vsel %vm215, %v138, 0
  %v220 = vsel %vm215, %v140, 0
  %v223 = vsel %vm215, %v142, 0
  %v226 = vsel %vm215, %v144, 0
  %v229 = vsel %vm215, %v146, 0
  %v232 = vsel %vm215, %v148, 0
  %v235 = vsel %vm215, %v150, 0
  %v238 = vsel %vm215, %v152, 0
  %240 = vmatprep.subr.bf16.mxu0 0
  %241 = vmatpush1.bf16.msra.mxu0 %v204
  %242 = vmatprep.subr.bf16.mxu0 0
  %243 = vmatpush1.bf16.msra.mxu0 %v203
  %244 = vmatprep.subr.bf16.mxu0 0
  %245 = vmatpush1.bf16.msra.mxu0 %v202
  %246 = vmatprep.subr.bf16.mxu0 0
  %247 = vmatpush1.bf16.msra.mxu0 %v201
  %248 = vmatprep.subr.bf16.mxu0 0
  %249 = vmatpush1.bf16.msra.mxu0 %v200
  %250 = vmatprep.subr.bf16.mxu0 0
  %251 = vmatpush1.bf16.msra.mxu0 %v199
  %252 = vmatprep.subr.bf16.mxu0 0
  %253 = vmatpush1.bf16.msra.mxu0 %v198
  %254 = vmatprep.subr.bf16.mxu0 0
  %255 = vmatpush1.bf16.msra.mxu0 %v197
  %256 = vmatprep.subr.bf16.mxu0 0
  %257 = vmatpush2.bf16.msra.mxu0 0
  %258 = vmatprep.subr.bf16.mxu0 0
  %259 = vmatpush2.bf16.msra.mxu0 0
  %260 = vmatprep.subr.bf16.mxu0 0
  %261 = vmatpush2.bf16.msra.mxu0 0
  %262 = vmatprep.subr.bf16.mxu0 0
  %263 = vmatpush2.bf16.msra.mxu0 0
  %264 = vmatprep.subr.bf16.mxu0 0
  %265 = vmatpush2.bf16.msra.mxu0 0
  %266 = vmatprep.subr.bf16.mxu0 0
  %267 = vmatpush2.bf16.msra.mxu0 0
  %268 = vmatprep.subr.bf16.mxu0 0
  %269 = vmatpush2.bf16.msra.mxu0 0
  %270 = vmatprep.subr.bf16.mxu0 0
  %271 = vmatpush2.bf16.msra.mxu0 %v205
  %272 = vmatprep.mubr.bf16.mxu0 %v217
  %273 = vmatmul.mubr.bf16.gmra.mxu0 %v137
  %v274 = vpop.f32.mrf.mxu0
  %v275 = vadd.f32 0.0, %v274
  %v276 = vpop.f32.mrf.mxu0
  %v277 = vpop.f32.mrf.mxu0
  %v278 = vadd.f32 0.0, %v277
  %v279 = vpop.f32.mrf.mxu0
  %280 = vmatprep.mubr.bf16.mxu0 %v220
  %281 = vmatmul.mubr.bf16.gmra.mxu0 %v139
  %v282 = vpop.f32.mrf.mxu0
  %v283 = vadd.f32 0.0, %v282
  %v284 = vpop.f32.mrf.mxu0
  %v285 = vpop.f32.mrf.mxu0
  %v286 = vadd.f32 0.0, %v285
  %v287 = vpop.f32.mrf.mxu0
  %288 = vmatprep.mubr.bf16.mxu0 %v223
  %289 = vmatmul.mubr.bf16.gmra.mxu0 %v141
  %v290 = vpop.f32.mrf.mxu0
  %v291 = vadd.f32 0.0, %v290
  %v292 = vpop.f32.mrf.mxu0
  %v293 = vpop.f32.mrf.mxu0
  %v294 = vadd.f32 0.0, %v293
  %v295 = vpop.f32.mrf.mxu0
  %296 = vmatprep.mubr.bf16.mxu0 %v226
  %297 = vmatmul.mubr.bf16.gmra.mxu0 %v143
  %v298 = vpop.f32.mrf.mxu0
  %v299 = vadd.f32 0.0, %v298
  %v300 = vpop.f32.mrf.mxu0
  %v301 = vpop.f32.mrf.mxu0
  %v302 = vadd.f32 0.0, %v301
  %v303 = vpop.f32.mrf.mxu0
  %304 = vmatprep.mubr.bf16.mxu0 %v229
  %305 = vmatmul.mubr.bf16.gmra.mxu0 %v145
  %v306 = vpop.f32.mrf.mxu0
  %v307 = vadd.f32 0.0, %v306
  %v308 = vpop.f32.mrf.mxu0
  %v309 = vpop.f32.mrf.mxu0
  %v310 = vadd.f32 0.0, %v309
  %v311 = vpop.f32.mrf.mxu0
  %312 = vmatprep.mubr.bf16.mxu0 %v232
  %313 = vmatmul.mubr.bf16.gmra.mxu0 %v147
  %v314 = vpop.f32.mrf.mxu0
  %v315 = vadd.f32 0.0, %v314
  %v316 = vpop.f32.mrf.mxu0
  %v317 = vpop.f32.mrf.mxu0
  %v318 = vadd.f32 0.0, %v317
  %v319 = vpop.f32.mrf.mxu0
  %320 = vmatprep.mubr.bf16.mxu0 %v235
  %321 = vmatmul.mubr.bf16.gmra.mxu0 %v149
  %v322 = vpop.f32.mrf.mxu0
  %v323 = vadd.f32 0.0, %v322
  %v324 = vpop.f32.mrf.mxu0
  %v325 = vpop.f32.mrf.mxu0
  %v326 = vadd.f32 0.0, %v325
  %v327 = vpop.f32.mrf.mxu0
  %328 = vmatprep.mubr.bf16.mxu0 %v238
  %329 = vmatmul.mubr.bf16.gmra.mxu0 %v151
  %v330 = vpop.f32.mrf.mxu0
  %v331 = vadd.f32 0.0, %v330
  %v332 = vpop.f32.mrf.mxu0
  %v333 = vpop.f32.mrf.mxu0
  %v334 = vadd.f32 0.0, %v333
  %v335 = vpop.f32.mrf.mxu0
  %336 = vdwg.mxu0
  %v337 = vadd.f32 %v39, %v275
  %v338 = vadd.f32 %v40, %v278
  %v339 = vadd.f32 %v41, %v283
  %v340 = vadd.f32 %v42, %v286
  %v341 = vadd.f32 %v43, %v291
  %v342 = vadd.f32 %v44, %v294
  %v343 = vadd.f32 %v45, %v299
  %v344 = vadd.f32 %v46, %v302
  %v345 = vadd.f32 %v47, %v307
  %v346 = vadd.f32 %v48, %v310
  %v347 = vadd.f32 %v49, %v315
  %v348 = vadd.f32 %v50, %v318
  %v349 = vadd.f32 %v51, %v323
  %v350 = vadd.f32 %v52, %v326
  %v351 = vadd.f32 %v53, %v331
  %v352 = vadd.f32 %v54, %v334
  %353 = vst.msk [vmem:[#allocation2] sm:$0xff] %vm215, %v337
  %354 = vst.msk [vmem:[#allocation2 + $0x8] sm:$0xff] %vm215, %v338
  %355 = vst.msk [vmem:[#allocation2 + $0x10] sm:$0xff] %vm215, %v339
  %356 = vst.msk [vmem:[#allocation2 + $0x18] sm:$0xff] %vm215, %v340
  %357 = vst.msk [vmem:[#allocation2 + $0x20] sm:$0xff] %vm215, %v341
  %358 = vst.msk [vmem:[#allocation2 + $0x28] sm:$0xff] %vm215, %v342
  %359 = vst.msk [vmem:[#allocation2 + $0x30] sm:$0xff] %vm215, %v343
  %360 = vst.msk [vmem:[#allocation2 + $0x38] sm:$0xff] %vm215, %v344
  %361 = vst.msk [vmem:[#allocation2 + $0x40] sm:$0xff] %vm215, %v345
  %362 = vst.msk [vmem:[#allocation2 + $0x48] sm:$0xff] %vm215, %v346
  %363 = vst.msk [vmem:[#allocation2 + $0x50] sm:$0xff] %vm215, %v347
  %364 = vst.msk [vmem:[#allocation2 + $0x58] sm:$0xff] %vm215, %v348
  %365 = vst.msk [vmem:[#allocation2 + $0x60] sm:$0xff] %vm215, %v349
  %366 = vst.msk [vmem:[#allocation2 + $0x68] sm:$0xff] %vm215, %v350
  %367 = vst.msk [vmem:[#allocation2 + $0x70] sm:$0xff] %vm215, %v351
  %368 = vst.msk [vmem:[#allocation2 + $0x78] sm:$0xff] %vm215, %v352
  // Predicated region
  $region22: #{c2f_mhda_forward.8} parent=0 // pred_check
    %p369 = pneg %p18
  $region23: #{c2f_mhda_forward.8} parent=0 // pred_check_branch
    %371 = sbr.rel (%p369) target = $region25
  $region24: #{c2f_mhda_forward.8} parent=0 // pred_region
    %v372 = vld [vmem:[#allocation2] sm:$0xff]
    %v373 = vld [vmem:[#allocation2 + $0x8] sm:$0xff]
    %v374 = vld [vmem:[#allocation2 + $0x10] sm:$0xff]
    %v375 = vld [vmem:[#allocation2 + $0x18] sm:$0xff]
    %v376 = vld [vmem:[#allocation2 + $0x20] sm:$0xff]
    %v377 = vld [vmem:[#allocation2 + $0x28] sm:$0xff]
    %v378 = vld [vmem:[#allocation2 + $0x30] sm:$0xff]
    %v379 = vld [vmem:[#allocation2 + $0x38] sm:$0xff]
    %v380 = vld [vmem:[#allocation2 + $0x40] sm:$0xff]
    %v381 = vld [vmem:[#allocation2 + $0x48] sm:$0xff]
    %v382 = vld [vmem:[#allocation2 + $0x50] sm:$0xff]
    %v383 = vld [vmem:[#allocation2 + $0x58] sm:$0xff]
    %v384 = vld [vmem:[#allocation2 + $0x60] sm:$0xff]
    %v385 = vld [vmem:[#allocation2 + $0x68] sm:$0xff]
    %v386 = vld [vmem:[#allocation2 + $0x70] sm:$0xff]
    %v387 = vld [vmem:[#allocation2 + $0x78] sm:$0xff]
    %v388 = vld [vmem:[%s2] sm:$0x1]
    %v390 = vlaneseq
    %v391 = vshrl.u32 %v390, 7
    %v392 = vsub.s32 0, %v391
    %v393 = vrot.slane %v388, %v392
    %v395 = vmul.f32 %v372, %v393
    %v396 = vmul.f32 %v373, %v393
    %v397 = vmul.f32 %v374, %v393
    %v398 = vmul.f32 %v375, %v393
    %v399 = vmul.f32 %v376, %v393
    %v400 = vmul.f32 %v377, %v393
    %v401 = vmul.f32 %v378, %v393
    %v402 = vmul.f32 %v379, %v393
    %v403 = vmul.f32 %v380, %v393
    %v404 = vmul.f32 %v381, %v393
    %v405 = vmul.f32 %v382, %v393
    %v406 = vmul.f32 %v383, %v393
    %v407 = vmul.f32 %v384, %v393
    %v408 = vmul.f32 %v385, %v393
    %v409 = vmul.f32 %v386, %v393
    %v410 = vmul.f32 %v387, %v393
    %v411 = vld [vmem:[%s3] sm:$0x1]
    %v413 = vlaneseq
    %v414 = vshrl.u32 %v413, 7
    %v415 = vsub.s32 0, %v414
    %v416 = vrot.slane %v411, %v415
    %v418 = vadd.f32 %v395, %v416
    %v419 = vadd.f32 %v396, %v416
    %v420 = vadd.f32 %v397, %v416
    %v421 = vadd.f32 %v398, %v416
    %v422 = vadd.f32 %v399, %v416
    %v423 = vadd.f32 %v400, %v416
    %v424 = vadd.f32 %v401, %v416
    %v425 = vadd.f32 %v402, %v416
    %v426 = vadd.f32 %v403, %v416
    %v427 = vadd.f32 %v404, %v416
    %v428 = vadd.f32 %v405, %v416
    %v429 = vadd.f32 %v406, %v416
    %v430 = vadd.f32 %v407, %v416
    %v431 = vadd.f32 %v408, %v416
    %v432 = vadd.f32 %v409, %v416
    %v433 = vadd.f32 %v410, %v416
    %v434 = vmax.f32 %v418, -30.0
    %v435 = vmax.f32 %v419, -30.0
    %v436 = vmax.f32 %v420, -30.0
    %v437 = vmax.f32 %v421, -30.0
    %v438 = vmax.f32 %v422, -30.0
    %v439 = vmax.f32 %v423, -30.0
    %v440 = vmax.f32 %v424, -30.0
    %v441 = vmax.f32 %v425, -30.0
    %v442 = vmax.f32 %v426, -30.0
    %v443 = vmax.f32 %v427, -30.0
    %v444 = vmax.f32 %v428, -30.0
    %v445 = vmax.f32 %v429, -30.0
    %v446 = vmax.f32 %v430, -30.0
    %v447 = vmax.f32 %v431, -30.0
    %v448 = vmax.f32 %v432, -30.0
    %v449 = vmax.f32 %v433, -30.0
    %v450 = vmin.f32 %v434, 30.0
    %v451 = vmin.f32 %v435, 30.0
    %v452 = vmin.f32 %v436, 30.0
    %v453 = vmin.f32 %v437, 30.0
    %v454 = vmin.f32 %v438, 30.0
    %v455 = vmin.f32 %v439, 30.0
    %v456 = vmin.f32 %v440, 30.0
    %v457 = vmin.f32 %v441, 30.0
    %v458 = vmin.f32 %v442, 30.0
    %v459 = vmin.f32 %v443, 30.0
    %v460 = vmin.f32 %v444, 30.0
    %v461 = vmin.f32 %v445, 30.0
    %v462 = vmin.f32 %v446, 30.0
    %v463 = vmin.f32 %v447, 30.0
    %v464 = vmin.f32 %v448, 30.0
    %v465 = vmin.f32 %v449, 30.0
    %v466 = vsub.f32 0.0, %v450
    %v467 = vsub.f32 0.0, %v451
    %v468 = vsub.f32 0.0, %v452
    %v469 = vsub.f32 0.0, %v453
    %v470 = vsub.f32 0.0, %v454
    %v471 = vsub.f32 0.0, %v455
    %v472 = vsub.f32 0.0, %v456
    %v473 = vsub.f32 0.0, %v457
    %v474 = vsub.f32 0.0, %v458
    %v475 = vsub.f32 0.0, %v459
    %v476 = vsub.f32 0.0, %v460
    %v477 = vsub.f32 0.0, %v461
    %v478 = vsub.f32 0.0, %v462
    %v479 = vsub.f32 0.0, %v463
    %v480 = vsub.f32 0.0, %v464
    %v481 = vsub.f32 0.0, %v465
    %v482 = vmul.f32 %v466, 1.442695
    %v483 = vpow.pop %v482
    %v484 = vmul.f32 %v467, 1.442695
    %v485 = vpow.pop %v484
    %v486 = vmul.f32 %v468, 1.442695
    %v487 = vpow.pop %v486
    %v488 = vmul.f32 %v469, 1.442695
    %v489 = vpow.pop %v488
    %v490 = vmul.f32 %v470, 1.442695
    %v491 = vpow.pop %v490
    %v492 = vmul.f32 %v471, 1.442695
    %v493 = vpow.pop %v492
    %v494 = vmul.f32 %v472, 1.442695
    %v495 = vpow.pop %v494
    %v496 = vmul.f32 %v473, 1.442695
    %v497 = vpow.pop %v496
    %v498 = vmul.f32 %v474, 1.442695
    %v499 = vpow.pop %v498
    %v500 = vmul.f32 %v475, 1.442695
    %v501 = vpow.pop %v500
    %v502 = vmul.f32 %v476, 1.442695
    %v503 = vpow.pop %v502
    %v504 = vmul.f32 %v477, 1.442695
    %v505 = vpow.pop %v504
    %v506 = vmul.f32 %v478, 1.442695
    %v507 = vpow.pop %v506
    %v508 = vmul.f32 %v479, 1.442695
    %v509 = vpow.pop %v508
    %v510 = vmul.f32 %v480, 1.442695
    %v511 = vpow.pop %v510
    %v512 = vmul.f32 %v481, 1.442695
    %v513 = vpow.pop %v512
    %v514 = vadd.f32 %v483, 1.0
    %v515 = vadd.f32 %v485, 1.0
    %v516 = vadd.f32 %v487, 1.0
    %v517 = vadd.f32 %v489, 1.0
    %v518 = vadd.f32 %v491, 1.0
    %v519 = vadd.f32 %v493, 1.0
    %v520 = vadd.f32 %v495, 1.0
    %v521 = vadd.f32 %v497, 1.0
    %v522 = vadd.f32 %v499, 1.0
    %v523 = vadd.f32 %v501, 1.0
    %v524 = vadd.f32 %v503, 1.0
    %v525 = vadd.f32 %v505, 1.0
    %v526 = vadd.f32 %v507, 1.0
    %v527 = vadd.f32 %v509, 1.0
    %v528 = vadd.f32 %v511, 1.0
    %v529 = vadd.f32 %v513, 1.0
    %v530 = vrcp.pop %v514
    %v531 = vrcp.pop %v515
    %v532 = vrcp.pop %v516
    %v533 = vrcp.pop %v517
    %v534 = vrcp.pop %v518
    %v535 = vrcp.pop %v519
    %v536 = vrcp.pop %v520
    %v537 = vrcp.pop %v521
    %v538 = vrcp.pop %v522
    %v539 = vrcp.pop %v523
    %v540 = vrcp.pop %v524
    %v541 = vrcp.pop %v525
    %v542 = vrcp.pop %v526
    %v543 = vrcp.pop %v527
    %v544 = vrcp.pop %v528
    %v545 = vrcp.pop %v529
    %v546 = vmul.f32 %v418, %v530
    %v547 = vmul.f32 %v419, %v531
    %v548 = vmul.f32 %v420, %v532
    %v549 = vmul.f32 %v421, %v533
    %v550 = vmul.f32 %v422, %v534
    %v551 = vmul.f32 %v423, %v535
    %v552 = vmul.f32 %v424, %v536
    %v553 = vmul.f32 %v425, %v537
    %v554 = vmul.f32 %v426, %v538
    %v555 = vmul.f32 %v427, %v539
    %v556 = vmul.f32 %v428, %v540
    %v557 = vmul.f32 %v429, %v541
    %v558 = vmul.f32 %v430, %v542
    %v559 = vmul.f32 %v431, %v543
    %v560 = vmul.f32 %v432, %v544
    %v561 = vmul.f32 %v433, %v545
    %v562 = vpack.c.bf16 %v547, %v546
    %v563 = vpack.c.bf16 %v549, %v548
    %v564 = vpack.c.bf16 %v551, %v550
    %v565 = vpack.c.bf16 %v553, %v552
    %v566 = vpack.c.bf16 %v555, %v554
    %v567 = vpack.c.bf16 %v557, %v556
    %v568 = vpack.c.bf16 %v559, %v558
    %v569 = vpack.c.bf16 %v561, %v560
    %v578 = vunpack.c.l.b16 %v562
    %v579 = vunpack.c.h.b16 %v562
    %v580 = vunpack.c.l.b16 %v563
    %v581 = vunpack.c.h.b16 %v563
    %v582 = vunpack.c.l.b16 %v564
    %v583 = vunpack.c.h.b16 %v564
    %v584 = vunpack.c.l.b16 %v565
    %v585 = vunpack.c.h.b16 %v565
    %v586 = vunpack.c.l.b16 %v566
    %v587 = vunpack.c.h.b16 %v566
    %v588 = vunpack.c.l.b16 %v567
    %v589 = vunpack.c.h.b16 %v567
    %v590 = vunpack.c.l.b16 %v568
    %v591 = vunpack.c.h.b16 %v568
    %v592 = vunpack.c.l.b16 %v569
    %v593 = vunpack.c.h.b16 %v569
    %v594 = vpack.c.b16 %v578, %v578
    %v595 = vpack.c.b16 %v579, %v579
    %v596 = vpack.c.b16 %v580, %v580
    %v597 = vpack.c.b16 %v581, %v581
    %v598 = vpack.c.b16 %v582, %v582
    %v599 = vpack.c.b16 %v583, %v583
    %v600 = vpack.c.b16 %v584, %v584
    %v601 = vpack.c.b16 %v585, %v585
    %v602 = vpack.c.b16 %v586, %v586
    %v603 = vpack.c.b16 %v587, %v587
    %v604 = vpack.c.b16 %v588, %v588
    %v605 = vpack.c.b16 %v589, %v589
    %v606 = vpack.c.b16 %v590, %v590
    %v607 = vpack.c.b16 %v591, %v591
    %v608 = vpack.c.b16 %v592, %v592
    %v609 = vpack.c.b16 %v593, %v593
    %vm626 = vcmask 125952
    %627 = vst.msk [vmem:[%s4] sm:$0xf] %vm626, %v594
    %628 = vst.msk [vmem:[%s4 + $0x4] sm:$0xf] %vm626, %v595
    %629 = vst.msk [vmem:[%s4 + $0x8] sm:$0xf] %vm626, %v596
    %630 = vst.msk [vmem:[%s4 + $0xc] sm:$0xf] %vm626, %v597
    %631 = vst.msk [vmem:[%s4 + $0x10] sm:$0xf] %vm626, %v598
    %632 = vst.msk [vmem:[%s4 + $0x14] sm:$0xf] %vm626, %v599
    %633 = vst.msk [vmem:[%s4 + $0x18] sm:$0xf] %vm626, %v600
    %634 = vst.msk [vmem:[%s4 + $0x1c] sm:$0xf] %vm626, %v601
    %635 = vst.msk [vmem:[%s4 + $0x20] sm:$0xf] %vm626, %v602
    %636 = vst.msk [vmem:[%s4 + $0x24] sm:$0xf] %vm626, %v603
    %637 = vst.msk [vmem:[%s4 + $0x28] sm:$0xf] %vm626, %v604
    %638 = vst.msk [vmem:[%s4 + $0x2c] sm:$0xf] %vm626, %v605
    %639 = vst.msk [vmem:[%s4 + $0x30] sm:$0xf] %vm626, %v606
    %640 = vst.msk [vmem:[%s4 + $0x34] sm:$0xf] %vm626, %v607
    %641 = vst.msk [vmem:[%s4 + $0x38] sm:$0xf] %vm626, %v608
    %642 = vst.msk [vmem:[%s4 + $0x3c] sm:$0xf] %vm626, %v609
  $region25: #{c2f_mhda_forward.8} parent=0 // pred_fallthru
    _
  // Predicated region
  $region26: #{c2f_mhda_forward.8} parent=0 // pred_check
    _
  $region27: #{c2f_mhda_forward.8} parent=0 // pred_check_branch
    %644 = sbr.rel (0) target = $region29
  $region28: #{c2f_mhda_forward.8} parent=0 // pred_region
    _
  $region29: #{c2f_mhda_forward.8} parent=0 // pred_fallthru
    _
  // Predicated region
  $region30: #{c2f_mhda_forward.8} parent=0 // pred_check
    _
  $region31: #{c2f_mhda_forward.8} parent=0 // pred_check_branch
    %646 = sbr.rel (0) target = $region33
  $region32: #{c2f_mhda_forward.8} parent=0 // pred_region
    _
  $region33: #{c2f_mhda_forward.8} parent=0 // pred_fallthru
    _

// kernel: c2f_mhda_forward.12
$region0: #{c2f_mhda_forward.12}
  #allocation0 [shape = 'u32[]', space=smem, size = 0x4, offset = 0x4, fixed_abs, tag = 'smem constant byte address 0x4 - core index']
  #allocation1 [shape = 'u32[144,128]{1,0:T(1,128)}', space=vmem, size = 0x12000, scoped, tag = 'internal scratch']
  #allocation2 [shape = 'f32[128,16]{1,0:T(8,128)}', space=vmem, size = 0x10000, scoped, tag = 'scratch operand']
  %s0 = inlined_call_operand.vmem [shape: bf16[128,32], index: 0, kind: input, shape index: {}]
  %s1 = inlined_call_operand.vmem [shape: bf16[32,16], index: 1, kind: input, shape index: {}]
  %s2 = inlined_call_operand.vmem [shape: bf16[128,16], index: 2, kind: output, shape index: {}]
  %s3 = sld [smem:[#allocation0]]
  $region26: #{c2f_mhda_forward.12} parent=0
    _
  %s5 = ssub.s32 1, %s3
  %s6 = scalar_select 0, %s5, %s3
  // Predicated region
  $region2: #{c2f_mhda_forward.12} parent=0 // pred_check
    _
  $region3: #{c2f_mhda_forward.12} parent=0 // pred_check_branch
    %8 = sbr.rel (0) target = $region5
  $region4: #{c2f_mhda_forward.12} parent=0 // pred_region
    _
  $region5: #{c2f_mhda_forward.12} parent=0 // pred_fallthru
    _
  // Predicated region
  $region6: #{c2f_mhda_forward.12} parent=0 // pred_check
    _
  $region7: #{c2f_mhda_forward.12} parent=0 // pred_check_branch
    %10 = sbr.rel (0) target = $region9
  $region8: #{c2f_mhda_forward.12} parent=0 // pred_region
    _
  $region9: #{c2f_mhda_forward.12} parent=0 // pred_fallthru
    _
  %p12 = scmp.eq.s32.totalorder 0, 0
  // Predicated region
  $region10: #{c2f_mhda_forward.12} parent=0 // pred_check
    %p13 = pneg %p12
  $region11: #{c2f_mhda_forward.12} parent=0 // pred_check_branch
    %15 = sbr.rel (%p13) target = $region13
  $region12: #{c2f_mhda_forward.12} parent=0 // pred_region
    %vm16 = vcmask 130048
    %17 = vst.msk [vmem:[#allocation2] sm:$0xff] %vm16, 0.0
    %18 = vst.msk [vmem:[#allocation2 + $0x8] sm:$0xff] %vm16, 0.0
    %19 = vst.msk [vmem:[#allocation2 + $0x10] sm:$0xff] %vm16, 0.0
    %20 = vst.msk [vmem:[#allocation2 + $0x18] sm:$0xff] %vm16, 0.0
    %21 = vst.msk [vmem:[#allocation2 + $0x20] sm:$0xff] %vm16, 0.0
    %22 = vst.msk [vmem:[#allocation2 + $0x28] sm:$0xff] %vm16, 0.0
    %23 = vst.msk [vmem:[#allocation2 + $0x30] sm:$0xff] %vm16, 0.0
    %24 = vst.msk [vmem:[#allocation2 + $0x38] sm:$0xff] %vm16, 0.0
    %25 = vst.msk [vmem:[#allocation2 + $0x40] sm:$0xff] %vm16, 0.0
    %26 = vst.msk [vmem:[#allocation2 + $0x48] sm:$0xff] %vm16, 0.0
    %27 = vst.msk [vmem:[#allocation2 + $0x50] sm:$0xff] %vm16, 0.0
    %28 = vst.msk [vmem:[#allocation2 + $0x58] sm:$0xff] %vm16, 0.0
    %29 = vst.msk [vmem:[#allocation2 + $0x60] sm:$0xff] %vm16, 0.0
    %30 = vst.msk [vmem:[#allocation2 + $0x68] sm:$0xff] %vm16, 0.0
    %31 = vst.msk [vmem:[#allocation2 + $0x70] sm:$0xff] %vm16, 0.0
    %32 = vst.msk [vmem:[#allocation2 + $0x78] sm:$0xff] %vm16, 0.0
  $region13: #{c2f_mhda_forward.12} parent=0 // pred_fallthru
    _
  %v33 = vld [vmem:[#allocation2] sm:$0xff]
  %v34 = vld [vmem:[#allocation2 + $0x8] sm:$0xff]
  %v35 = vld [vmem:[#allocation2 + $0x10] sm:$0xff]
  %v36 = vld [vmem:[#allocation2 + $0x18] sm:$0xff]
  %v37 = vld [vmem:[#allocation2 + $0x20] sm:$0xff]
  %v38 = vld [vmem:[#allocation2 + $0x28] sm:$0xff]
  %v39 = vld [vmem:[#allocation2 + $0x30] sm:$0xff]
  %v40 = vld [vmem:[#allocation2 + $0x38] sm:$0xff]
  %v41 = vld [vmem:[#allocation2 + $0x40] sm:$0xff]
  %v42 = vld [vmem:[#allocation2 + $0x48] sm:$0xff]
  %v43 = vld [vmem:[#allocation2 + $0x50] sm:$0xff]
  %v44 = vld [vmem:[#allocation2 + $0x58] sm:$0xff]
  %v45 = vld [vmem:[#allocation2 + $0x60] sm:$0xff]
  %v46 = vld [vmem:[#allocation2 + $0x68] sm:$0xff]
  %v47 = vld [vmem:[#allocation2 + $0x70] sm:$0xff]
  %v48 = vld [vmem:[#allocation2 + $0x78] sm:$0xff]
  %v49 = vld [vmem:[%s0] sm:$0xf]
  %v50 = vld [vmem:[%s0 + $0x4] sm:$0xf]
  %v51 = vld [vmem:[%s0 + $0x8] sm:$0xf]
  %v52 = vld [vmem:[%s0 + $0xc] sm:$0xf]
  %v53 = vld [vmem:[%s0 + $0x10] sm:$0xf]
  %v54 = vld [vmem:[%s0 + $0x14] sm:$0xf]
  %v55 = vld [vmem:[%s0 + $0x18] sm:$0xf]
  %v56 = vld [vmem:[%s0 + $0x1c] sm:$0xf]
  %v57 = vld [vmem:[%s0 + $0x20] sm:$0xf]
  %v58 = vld [vmem:[%s0 + $0x24] sm:$0xf]
  %v59 = vld [vmem:[%s0 + $0x28] sm:$0xf]
  %v60 = vld [vmem:[%s0 + $0x2c] sm:$0xf]
  %v61 = vld [vmem:[%s0 + $0x30] sm:$0xf]
  %v62 = vld [vmem:[%s0 + $0x34] sm:$0xf]
  %v63 = vld [vmem:[%s0 + $0x38] sm:$0xf]
  %v64 = vld [vmem:[%s0 + $0x3c] sm:$0xf]
  %v65 = vld [vmem:[%s1] sm:$0xf]
  %v66 = vld [vmem:[%s1 + $0x4] sm:$0xf]
  %v67 = vld [vmem:[%s1 + $0x8] sm:$0xf]
  %v68 = vld [vmem:[%s1 + $0xc] sm:$0xf]
  %v85 = vunpack.c.l.b16 %v49
  %v86 = vunpack.c.l.b16 %v50
  %v87 = vunpack.c.l.b16 %v51
  %v88 = vunpack.c.l.b16 %v52
  %v89 = vunpack.c.l.b16 %v53
  %v90 = vunpack.c.l.b16 %v54
  %v91 = vunpack.c.l.b16 %v55
  %v92 = vunpack.c.l.b16 %v56
  %v93 = vunpack.c.l.b16 %v57
  %v94 = vunpack.c.l.b16 %v58
  %v95 = vunpack.c.l.b16 %v59
  %v96 = vunpack.c.l.b16 %v60
  %v97 = vunpack.c.l.b16 %v61
  %v98 = vunpack.c.l.b16 %v62
  %v99 = vunpack.c.l.b16 %v63
  %v100 = vunpack.c.l.b16 %v64
  %v101 = vpack.c.b16 %v86, %v85
  %v102 = vpack.c.b16 %v88, %v87
  %v103 = vpack.c.b16 %v90, %v89
  %v104 = vpack.c.b16 %v92, %v91
  %v105 = vpack.c.b16 %v94, %v93
  %v106 = vpack.c.b16 %v96, %v95
  %v107 = vpack.c.b16 %v98, %v97
  %v108 = vpack.c.b16 %v100, %v99
  %v113 = vunpack.c.l.b16 %v65
  %v114 = vunpack.c.l.b16 %v66
  %v115 = vunpack.c.l.b16 %v67
  %v116 = vunpack.c.l.b16 %v68
  %v117 = vpack.c.b16 %v114, %v113
  %v118 = vpack.c.b16 %v116, %v115
  %vm121 = vcmask 261120
  %v123 = vsel %vm121, %v101, 0
  %v126 = vsel %vm121, %v102, 0
  %v129 = vsel %vm121, %v103, 0
  %v132 = vsel %vm121, %v104, 0
  %v135 = vsel %vm121, %v105, 0
  %v138 = vsel %vm121, %v106, 0
  %v141 = vsel %vm121, %v107, 0
  %v144 = vsel %vm121, %v108, 0
  %146 = vmatprep.subr.bf16.mxu0 0
  %147 = vmatpush1.bf16.msra.mxu0 0
  %148 = vmatprep.subr.bf16.mxu0 0
  %149 = vmatpush1.bf16.msra.mxu0 0
  %150 = vmatprep.subr.bf16.mxu0 0
  %151 = vmatpush1.bf16.msra.mxu0 0
  %152 = vmatprep.subr.bf16.mxu0 0
  %153 = vmatpush1.bf16.msra.mxu0 0
  %154 = vmatprep.subr.bf16.mxu0 0
  %155 = vmatpush1.bf16.msra.mxu0 0
  %156 = vmatprep.subr.bf16.mxu0 0
  %157 = vmatpush1.bf16.msra.mxu0 0
  %158 = vmatprep.subr.bf16.mxu0 0
  %159 = vmatpush1.bf16.msra.mxu0 %v118
  %160 = vmatprep.subr.bf16.mxu0 0
  %161 = vmatpush1.bf16.msra.mxu0 %v117
  %162 = vmatprep.subr.bf16.mxu0 0
  %163 = vmatpush2.bf16.msra.mxu0 0
  %164 = vmatprep.subr.bf16.mxu0 0
  %165 = vmatpush2.bf16.msra.mxu0 0
  %166 = vmatprep.subr.bf16.mxu0 0
  %167 = vmatpush2.bf16.msra.mxu0 0
  %168 = vmatprep.subr.bf16.mxu0 0
  %169 = vmatpush2.bf16.msra.mxu0 0
  %170 = vmatprep.subr.bf16.mxu0 0
  %171 = vmatpush2.bf16.msra.mxu0 0
  %172 = vmatprep.subr.bf16.mxu0 0
  %173 = vmatpush2.bf16.msra.mxu0 0
  %174 = vmatprep.subr.bf16.mxu0 0
  %175 = vmatpush2.bf16.msra.mxu0 0
  %176 = vmatprep.subr.bf16.mxu0 0
  %177 = vmatpush2.bf16.msra.mxu0 0
  %178 = vmatprep.mubr.bf16.mxu0 0
  %179 = vmatmul.mubr.bf16.gmra.mxu0 %v123
  %v180 = vpop.f32.mrf.mxu0
  %v181 = vadd.f32 0.0, %v180
  %v182 = vpop.f32.mrf.mxu0
  %v183 = vpop.f32.mrf.mxu0
  %v184 = vadd.f32 0.0, %v183
  %v185 = vpop.f32.mrf.mxu0
  %186 = vmatprep.mubr.bf16.mxu0 0
  %187 = vmatmul.mubr.bf16.gmra.mxu0 %v126
  %v188 = vpop.f32.mrf.mxu0
  %v189 = vadd.f32 0.0, %v188
  %v190 = vpop.f32.mrf.mxu0
  %v191 = vpop.f32.mrf.mxu0
  %v192 = vadd.f32 0.0, %v191
  %v193 = vpop.f32.mrf.mxu0
  %194 = vmatprep.mubr.bf16.mxu0 0
  %195 = vmatmul.mubr.bf16.gmra.mxu0 %v129
  %v196 = vpop.f32.mrf.mxu0
  %v197 = vadd.f32 0.0, %v196
  %v198 = vpop.f32.mrf.mxu0
  %v199 = vpop.f32.mrf.mxu0
  %v200 = vadd.f32 0.0, %v199
  %v201 = vpop.f32.mrf.mxu0
  %202 = vmatprep.mubr.bf16.mxu0 0
  %203 = vmatmul.mubr.bf16.gmra.mxu0 %v132
  %v204 = vpop.f32.mrf.mxu0
  %v205 = vadd.f32 0.0, %v204
  %v206 = vpop.f32.mrf.mxu0
  %v207 = vpop.f32.mrf.mxu0
  %v208 = vadd.f32 0.0, %v207
  %v209 = vpop.f32.mrf.mxu0
  %210 = vmatprep.mubr.bf16.mxu0 0
  %211 = vmatmul.mubr.bf16.gmra.mxu0 %v135
  %v212 = vpop.f32.mrf.mxu0
  %v213 = vadd.f32 0.0, %v212
  %v214 = vpop.f32.mrf.mxu0
  %v215 = vpop.f32.mrf.mxu0
  %v216 = vadd.f32 0.0, %v215
  %v217 = vpop.f32.mrf.mxu0
  %218 = vmatprep.mubr.bf16.mxu0 0
  %219 = vmatmul.mubr.bf16.gmra.mxu0 %v138
  %v220 = vpop.f32.mrf.mxu0
  %v221 = vadd.f32 0.0, %v220
  %v222 = vpop.f32.mrf.mxu0
  %v223 = vpop.f32.mrf.mxu0
  %v224 = vadd.f32 0.0, %v223
  %v225 = vpop.f32.mrf.mxu0
  %226 = vmatprep.mubr.bf16.mxu0 0
  %227 = vmatmul.mubr.bf16.gmra.mxu0 %v141
  %v228 = vpop.f32.mrf.mxu0
  %v229 = vadd.f32 0.0, %v228
  %v230 = vpop.f32.mrf.mxu0
  %v231 = vpop.f32.mrf.mxu0
  %v232 = vadd.f32 0.0, %v231
  %v233 = vpop.f32.mrf.mxu0
  %234 = vmatprep.mubr.bf16.mxu0 0
  %235 = vmatmul.mubr.bf16.gmra.mxu0 %v144
  %v236 = vpop.f32.mrf.mxu0
  %v237 = vadd.f32 0.0, %v236
  %v238 = vpop.f32.mrf.mxu0
  %v239 = vpop.f32.mrf.mxu0
  %v240 = vadd.f32 0.0, %v239
  %v241 = vpop.f32.mrf.mxu0
  %242 = vdwg.mxu0
  %v243 = vadd.f32 %v33, %v181
  %v244 = vadd.f32 %v34, %v184
  %v245 = vadd.f32 %v35, %v189
  %v246 = vadd.f32 %v36, %v192
  %v247 = vadd.f32 %v37, %v197
  %v248 = vadd.f32 %v38, %v200
  %v249 = vadd.f32 %v39, %v205
  %v250 = vadd.f32 %v40, %v208
  %v251 = vadd.f32 %v41, %v213
  %v252 = vadd.f32 %v42, %v216
  %v253 = vadd.f32 %v43, %v221
  %v254 = vadd.f32 %v44, %v224
  %v255 = vadd.f32 %v45, %v229
  %v256 = vadd.f32 %v46, %v232
  %v257 = vadd.f32 %v47, %v237
  %v258 = vadd.f32 %v48, %v240
  %vm259 = vcmask 130048
  %260 = vst.msk [vmem:[#allocation2] sm:$0xff] %vm259, %v243
  %261 = vst.msk [vmem:[#allocation2 + $0x8] sm:$0xff] %vm259, %v244
  %262 = vst.msk [vmem:[#allocation2 + $0x10] sm:$0xff] %vm259, %v245
  %263 = vst.msk [vmem:[#allocation2 + $0x18] sm:$0xff] %vm259, %v246
  %264 = vst.msk [vmem:[#allocation2 + $0x20] sm:$0xff] %vm259, %v247
  %265 = vst.msk [vmem:[#allocation2 + $0x28] sm:$0xff] %vm259, %v248
  %266 = vst.msk [vmem:[#allocation2 + $0x30] sm:$0xff] %vm259, %v249
  %267 = vst.msk [vmem:[#allocation2 + $0x38] sm:$0xff] %vm259, %v250
  %268 = vst.msk [vmem:[#allocation2 + $0x40] sm:$0xff] %vm259, %v251
  %269 = vst.msk [vmem:[#allocation2 + $0x48] sm:$0xff] %vm259, %v252
  %270 = vst.msk [vmem:[#allocation2 + $0x50] sm:$0xff] %vm259, %v253
  %271 = vst.msk [vmem:[#allocation2 + $0x58] sm:$0xff] %vm259, %v254
  %272 = vst.msk [vmem:[#allocation2 + $0x60] sm:$0xff] %vm259, %v255
  %273 = vst.msk [vmem:[#allocation2 + $0x68] sm:$0xff] %vm259, %v256
  %274 = vst.msk [vmem:[#allocation2 + $0x70] sm:$0xff] %vm259, %v257
  %275 = vst.msk [vmem:[#allocation2 + $0x78] sm:$0xff] %vm259, %v258
  // Predicated region
  $region14: #{c2f_mhda_forward.12} parent=0 // pred_check
    %p276 = pneg %p12
  $region15: #{c2f_mhda_forward.12} parent=0 // pred_check_branch
    %278 = sbr.rel (%p276) target = $region17
  $region16: #{c2f_mhda_forward.12} parent=0 // pred_region
    %v279 = vld [vmem:[#allocation2] sm:$0xff]
    %v280 = vld [vmem:[#allocation2 + $0x8] sm:$0xff]
    %v281 = vld [vmem:[#allocation2 + $0x10] sm:$0xff]
    %v282 = vld [vmem:[#allocation2 + $0x18] sm:$0xff]
    %v283 = vld [vmem:[#allocation2 + $0x20] sm:$0xff]
    %v284 = vld [vmem:[#allocation2 + $0x28] sm:$0xff]
    %v285 = vld [vmem:[#allocation2 + $0x30] sm:$0xff]
    %v286 = vld [vmem:[#allocation2 + $0x38] sm:$0xff]
    %v287 = vld [vmem:[#allocation2 + $0x40] sm:$0xff]
    %v288 = vld [vmem:[#allocation2 + $0x48] sm:$0xff]
    %v289 = vld [vmem:[#allocation2 + $0x50] sm:$0xff]
    %v290 = vld [vmem:[#allocation2 + $0x58] sm:$0xff]
    %v291 = vld [vmem:[#allocation2 + $0x60] sm:$0xff]
    %v292 = vld [vmem:[#allocation2 + $0x68] sm:$0xff]
    %v293 = vld [vmem:[#allocation2 + $0x70] sm:$0xff]
    %v294 = vld [vmem:[#allocation2 + $0x78] sm:$0xff]
    %v295 = vpack.c.bf16 %v280, %v279
    %v296 = vpack.c.bf16 %v282, %v281
    %v297 = vpack.c.bf16 %v284, %v283
    %v298 = vpack.c.bf16 %v286, %v285
    %v299 = vpack.c.bf16 %v288, %v287
    %v300 = vpack.c.bf16 %v290, %v289
    %v301 = vpack.c.bf16 %v292, %v291
    %v302 = vpack.c.bf16 %v294, %v293
    %v311 = vunpack.c.l.b16 %v295
    %v312 = vunpack.c.h.b16 %v295
    %v313 = vunpack.c.l.b16 %v296
    %v314 = vunpack.c.h.b16 %v296
    %v315 = vunpack.c.l.b16 %v297
    %v316 = vunpack.c.h.b16 %v297
    %v317 = vunpack.c.l.b16 %v298
    %v318 = vunpack.c.h.b16 %v298
    %v319 = vunpack.c.l.b16 %v299
    %v320 = vunpack.c.h.b16 %v299
    %v321 = vunpack.c.l.b16 %v300
    %v322 = vunpack.c.h.b16 %v300
    %v323 = vunpack.c.l.b16 %v301
    %v324 = vunpack.c.h.b16 %v301
    %v325 = vunpack.c.l.b16 %v302
    %v326 = vunpack.c.h.b16 %v302
    %v327 = vpack.c.b16 %v311, %v311
    %v328 = vpack.c.b16 %v312, %v312
    %v329 = vpack.c.b16 %v313, %v313
    %v330 = vpack.c.b16 %v314, %v314
    %v331 = vpack.c.b16 %v315, %v315
    %v332 = vpack.c.b16 %v316, %v316
    %v333 = vpack.c.b16 %v317, %v317
    %v334 = vpack.c.b16 %v318, %v318
    %v335 = vpack.c.b16 %v319, %v319
    %v336 = vpack.c.b16 %v320, %v320
    %v337 = vpack.c.b16 %v321, %v321
    %v338 = vpack.c.b16 %v322, %v322
    %v339 = vpack.c.b16 %v323, %v323
    %v340 = vpack.c.b16 %v324, %v324
    %v341 = vpack.c.b16 %v325, %v325
    %v342 = vpack.c.b16 %v326, %v326
    %vm359 = vcmask 125952
    %360 = vst.msk [vmem:[%s2] sm:$0xf] %vm359, %v327
    %361 = vst.msk [vmem:[%s2 + $0x4] sm:$0xf] %vm359, %v328
    %362 = vst.msk [vmem:[%s2 + $0x8] sm:$0xf] %vm359, %v329
    %363 = vst.msk [vmem:[%s2 + $0xc] sm:$0xf] %vm359, %v330
    %364 = vst.msk [vmem:[%s2 + $0x10] sm:$0xf] %vm359, %v331
    %365 = vst.msk [vmem:[%s2 + $0x14] sm:$0xf] %vm359, %v332
    %366 = vst.msk [vmem:[%s2 + $0x18] sm:$0xf] %vm359, %v333
    %367 = vst.msk [vmem:[%s2 + $0x1c] sm:$0xf] %vm359, %v334
    %368 = vst.msk [vmem:[%s2 + $0x20] sm:$0xf] %vm359, %v335
    %369 = vst.msk [vmem:[%s2 + $0x24] sm:$0xf] %vm359, %v336
    %370 = vst.msk [vmem:[%s2 + $0x28] sm:$0xf] %vm359, %v337
    %371 = vst.msk [vmem:[%s2 + $0x2c] sm:$0xf] %vm359, %v338
    %372 = vst.msk [vmem:[%s2 + $0x30] sm:$0xf] %vm359, %v339
    %373 = vst.msk [vmem:[%s2 + $0x34] sm:$0xf] %vm359, %v340
    %374 = vst.msk [vmem:[%s2 + $0x38] sm:$0xf] %vm359, %v341
    %375 = vst.msk [vmem:[%s2 + $0x3c] sm:$0xf] %vm359, %v342
  $region17: #{c2f_mhda_forward.12} parent=0 // pred_fallthru
    _
  // Predicated region
  $region18: #{c2f_mhda_forward.12} parent=0 // pred_check
    _
  $region19: #{c2f_mhda_forward.12} parent=0 // pred_check_branch
    %377 = sbr.rel (0) target = $region21
  $region20: #{c2f_mhda_forward.12} parent=0 // pred_region
    _
  $region21: #{c2f_mhda_forward.12} parent=0 // pred_fallthru
    _
  // Predicated region
  $region22: #{c2f_mhda_forward.12} parent=0 // pred_check
    _
  $region23: #{c2f_mhda_forward.12} parent=0 // pred_check_branch
    %379 = sbr.rel (0) target = $region25
  $region24: #{c2f_mhda_forward.12} parent=0 // pred_region
    _
  $region25: #{c2f_mhda_forward.12} parent=0 // pred_fallthru
    _

// kernel: c2f_mhda_forward.13
$region0: #{c2f_mhda_forward.13}
  #allocation0 [shape = 'u32[]', space=smem, size = 0x4, offset = 0x4, fixed_abs, tag = 'smem constant byte address 0x4 - core index']
  #allocation1 [shape = 'u32[144,128]{1,0:T(1,128)}', space=vmem, size = 0x12000, scoped, tag = 'internal scratch']
  #allocation2 [shape = 'f32[128,32]{1,0:T(8,128)}', space=vmem, size = 0x10000, scoped, tag = 'scratch operand']
  %s0 = inlined_call_operand.vmem [shape: bf16[128,48], index: 0, kind: input, shape index: {}]
  %s1 = inlined_call_operand.vmem [shape: bf16[48,32], index: 1, kind: input, shape index: {}]
  %s2 = inlined_call_operand.vmem [shape: f32[1,32], index: 2, kind: input, shape index: {}]
  %s3 = inlined_call_operand.vmem [shape: f32[1,32], index: 3, kind: input, shape index: {}]
  %s4 = inlined_call_operand.hbm [shape: f32[128,32], index: 4, kind: output, shape index: {}]
  %s5 = sld [smem:[#allocation0]]
  $region34: #{c2f_mhda_forward.13} parent=0
    _
  %s7 = ssub.s32 1, %s5
  %s8 = scalar_select 0, %s7, %s5
  $region1: #{c2f_mhda_forward.13} parent=0
    #allocation3 [shape = 'u8[65536]{0}', space=vmem, size = 0x10000, scoped, tag = 'output window, operand 0, single buffered']
    #allocation4 [shape = 's32[1]{0}', space=sflag, size = 0x4, scoped, tag = 'scoped memory for c2f_mhda_forward.13']
    %9 = vsyncpa [#allocation4], 0
    // Predicated region
    $region2: #{c2f_mhda_forward.13} parent=1 // pred_check
      _
    $region3: #{c2f_mhda_forward.13} parent=1 // pred_check_branch
      %11 = sbr.rel (0) target = $region5
    $region4: #{c2f_mhda_forward.13} parent=1 // pred_region
      _
    $region5: #{c2f_mhda_forward.13} parent=1 // pred_fallthru
      _
    // Predicated region
    $region6: #{c2f_mhda_forward.13} parent=1 // pred_check
      _
    $region7: #{c2f_mhda_forward.13} parent=1 // pred_check_branch
      %13 = sbr.rel (0) target = $region9
    $region8: #{c2f_mhda_forward.13} parent=1 // pred_region
      _
    $region9: #{c2f_mhda_forward.13} parent=1 // pred_fallthru
      _
    // Predicated region
    $region10: #{c2f_mhda_forward.13} parent=1 // pred_check
      _
    $region11: #{c2f_mhda_forward.13} parent=1 // pred_check_branch
      %15 = sbr.rel (0) target = $region13
    $region12: #{c2f_mhda_forward.13} parent=1 // pred_region
      _
    $region13: #{c2f_mhda_forward.13} parent=1 // pred_fallthru
      _
    // Predicated region
    $region14: #{c2f_mhda_forward.13} parent=1 // pred_check
      _
    $region15: #{c2f_mhda_forward.13} parent=1 // pred_check_branch
      %17 = sbr.rel (0) target = $region17
    $region16: #{c2f_mhda_forward.13} parent=1 // pred_region
      _
    $region17: #{c2f_mhda_forward.13} parent=1 // pred_fallthru
      _
    %p19 = scmp.eq.s32.totalorder 0, 0
    // Predicated region
    $region18: #{c2f_mhda_forward.13} parent=1 // pred_check
      %p20 = pneg %p19
    $region19: #{c2f_mhda_forward.13} parent=1 // pred_check_branch
      %22 = sbr.rel (%p20) target = $region21
    $region20: #{c2f_mhda_forward.13} parent=1 // pred_region
      %vm23 = vcmask 261120
      %24 = vst.msk [vmem:[#allocation2] sm:$0xff] %vm23, 0.0
      %25 = vst.msk [vmem:[#allocation2 + $0x8] sm:$0xff] %vm23, 0.0
      %26 = vst.msk [vmem:[#allocation2 + $0x10] sm:$0xff] %vm23, 0.0
      %27 = vst.msk [vmem:[#allocation2 + $0x18] sm:$0xff] %vm23, 0.0
      %28 = vst.msk [vmem:[#allocation2 + $0x20] sm:$0xff] %vm23, 0.0
      %29 = vst.msk [vmem:[#allocation2 + $0x28] sm:$0xff] %vm23, 0.0
      %30 = vst.msk [vmem:[#allocation2 + $0x30] sm:$0xff] %vm23, 0.0
      %31 = vst.msk [vmem:[#allocation2 + $0x38] sm:$0xff] %vm23, 0.0
      %32 = vst.msk [vmem:[#allocation2 + $0x40] sm:$0xff] %vm23, 0.0
      %33 = vst.msk [vmem:[#allocation2 + $0x48] sm:$0xff] %vm23, 0.0
      %34 = vst.msk [vmem:[#allocation2 + $0x50] sm:$0xff] %vm23, 0.0
      %35 = vst.msk [vmem:[#allocation2 + $0x58] sm:$0xff] %vm23, 0.0
      %36 = vst.msk [vmem:[#allocation2 + $0x60] sm:$0xff] %vm23, 0.0
      %37 = vst.msk [vmem:[#allocation2 + $0x68] sm:$0xff] %vm23, 0.0
      %38 = vst.msk [vmem:[#allocation2 + $0x70] sm:$0xff] %vm23, 0.0
      %39 = vst.msk [vmem:[#allocation2 + $0x78] sm:$0xff] %vm23, 0.0
    $region21: #{c2f_mhda_forward.13} parent=1 // pred_fallthru
      _
    %v40 = vld [vmem:[#allocation2] sm:$0xff]
    %v41 = vld [vmem:[#allocation2 + $0x8] sm:$0xff]
    %v42 = vld [vmem:[#allocation2 + $0x10] sm:$0xff]
    %v43 = vld [vmem:[#allocation2 + $0x18] sm:$0xff]
    %v44 = vld [vmem:[#allocation2 + $0x20] sm:$0xff]
    %v45 = vld [vmem:[#allocation2 + $0x28] sm:$0xff]
    %v46 = vld [vmem:[#allocation2 + $0x30] sm:$0xff]
    %v47 = vld [vmem:[#allocation2 + $0x38] sm:$0xff]
    %v48 = vld [vmem:[#allocation2 + $0x40] sm:$0xff]
    %v49 = vld [vmem:[#allocation2 + $0x48] sm:$0xff]
    %v50 = vld [vmem:[#allocation2 + $0x50] sm:$0xff]
    %v51 = vld [vmem:[#allocation2 + $0x58] sm:$0xff]
    %v52 = vld [vmem:[#allocation2 + $0x60] sm:$0xff]
    %v53 = vld [vmem:[#allocation2 + $0x68] sm:$0xff]
    %v54 = vld [vmem:[#allocation2 + $0x70] sm:$0xff]
    %v55 = vld [vmem:[#allocation2 + $0x78] sm:$0xff]
    %v56 = vld [vmem:[%s0] sm:$0xf]
    %v57 = vld [vmem:[%s0 + $0x4] sm:$0xf]
    %v58 = vld [vmem:[%s0 + $0x8] sm:$0xf]
    %v59 = vld [vmem:[%s0 + $0xc] sm:$0xf]
    %v60 = vld [vmem:[%s0 + $0x10] sm:$0xf]
    %v61 = vld [vmem:[%s0 + $0x14] sm:$0xf]
    %v62 = vld [vmem:[%s0 + $0x18] sm:$0xf]
    %v63 = vld [vmem:[%s0 + $0x1c] sm:$0xf]
    %v64 = vld [vmem:[%s0 + $0x20] sm:$0xf]
    %v65 = vld [vmem:[%s0 + $0x24] sm:$0xf]
    %v66 = vld [vmem:[%s0 + $0x28] sm:$0xf]
    %v67 = vld [vmem:[%s0 + $0x2c] sm:$0xf]
    %v68 = vld [vmem:[%s0 + $0x30] sm:$0xf]
    %v69 = vld [vmem:[%s0 + $0x34] sm:$0xf]
    %v70 = vld [vmem:[%s0 + $0x38] sm:$0xf]
    %v71 = vld [vmem:[%s0 + $0x3c] sm:$0xf]
    %v72 = vld [vmem:[%s1] sm:$0xf]
    %v73 = vld [vmem:[%s1 + $0x4] sm:$0xf]
    %v74 = vld [vmem:[%s1 + $0x8] sm:$0xf]
    %v75 = vld [vmem:[%s1 + $0xc] sm:$0xf]
    %v76 = vld [vmem:[%s1 + $0x10] sm:$0xf]
    %v77 = vld [vmem:[%s1 + $0x14] sm:$0xf]
    %v94 = vunpack.c.l.b16 %v56
    %v95 = vunpack.c.l.b16 %v57
    %v96 = vunpack.c.l.b16 %v58
    %v97 = vunpack.c.l.b16 %v59
    %v98 = vunpack.c.l.b16 %v60
    %v99 = vunpack.c.l.b16 %v61
    %v100 = vunpack.c.l.b16 %v62
    %v101 = vunpack.c.l.b16 %v63
    %v102 = vunpack.c.l.b16 %v64
    %v103 = vunpack.c.l.b16 %v65
    %v104 = vunpack.c.l.b16 %v66
    %v105 = vunpack.c.l.b16 %v67
    %v106 = vunpack.c.l.b16 %v68
    %v107 = vunpack.c.l.b16 %v69
    %v108 = vunpack.c.l.b16 %v70
    %v109 = vunpack.c.l.b16 %v71
    %v110 = vpack.c.b16 %v95, %v94
    %v111 = vpack.c.b16 %v97, %v96
    %v112 = vpack.c.b16 %v99, %v98
    %v113 = vpack.c.b16 %v101, %v100
    %v114 = vpack.c.b16 %v103, %v102
    %v115 = vpack.c.b16 %v105, %v104
    %v116 = vpack.c.b16 %v107, %v106
    %v117 = vpack.c.b16 %v109, %v108
    %v124 = vunpack.c.l.b16 %v72
    %v125 = vunpack.c.l.b16 %v73
    %v126 = vunpack.c.l.b16 %v74
    %v127 = vunpack.c.l.b16 %v75
    %v128 = vunpack.c.l.b16 %v76
    %v129 = vunpack.c.l.b16 %v77
    %v130 = vpack.c.b16 %v125, %v124
    %v131 = vpack.c.b16 %v127, %v126
    %v132 = vpack.c.b16 %v129, %v128
    %vm136 = vcmask 392192
    %v138 = vsel %vm136, %v110, 0
    %v141 = vsel %vm136, %v111, 0
    %v144 = vsel %vm136, %v112, 0
    %v147 = vsel %vm136, %v113, 0
    %v150 = vsel %vm136, %v114, 0
    %v153 = vsel %vm136, %v115, 0
    %v156 = vsel %vm136, %v116, 0
    %v159 = vsel %vm136, %v117, 0
    %161 = vmatprep.subr.bf16.mxu0 0
    %162 = vmatpush1.bf16.msra.mxu0 0
    %163 = vmatprep.subr.bf16.mxu0 0
    %164 = vmatpush1.bf16.msra.mxu0 0
    %165 = vmatprep.subr.bf16.mxu0 0
    %166 = vmatpush1.bf16.msra.mxu0 0
    %167 = vmatprep.subr.bf16.mxu0 0
    %168 = vmatpush1.bf16.msra.mxu0 0
    %169 = vmatprep.subr.bf16.mxu0 0
    %170 = vmatpush1.bf16.msra.mxu0 0
    %171 = vmatprep.subr.bf16.mxu0 0
    %172 = vmatpush1.bf16.msra.mxu0 %v132
    %173 = vmatprep.subr.bf16.mxu0 0
    %174 = vmatpush1.bf16.msra.mxu0 %v131
    %175 = vmatprep.subr.bf16.mxu0 0
    %176 = vmatpush1.bf16.msra.mxu0 %v130
    %177 = vmatprep.subr.bf16.mxu0 0
    %178 = vmatpush2.bf16.msra.mxu0 0
    %179 = vmatprep.subr.bf16.mxu0 0
    %180 = vmatpush2.bf16.msra.mxu0 0
    %181 = vmatprep.subr.bf16.mxu0 0
    %182 = vmatpush2.bf16.msra.mxu0 0
    %183 = vmatprep.subr.bf16.mxu0 0
    %184 = vmatpush2.bf16.msra.mxu0 0
    %185 = vmatprep.subr.bf16.mxu0 0
    %186 = vmatpush2.bf16.msra.mxu0 0
    %187 = vmatprep.subr.bf16.mxu0 0
    %188 = vmatpush2.bf16.msra.mxu0 0
    %189 = vmatprep.subr.bf16.mxu0 0
    %190 = vmatpush2.bf16.msra.mxu0 0
    %191 = vmatprep.subr.bf16.mxu0 0
    %192 = vmatpush2.bf16.msra.mxu0 0
    %193 = vmatprep.mubr.bf16.mxu0 0
    %194 = vmatmul.mubr.bf16.gmra.mxu0 %v138
    %v195 = vpop.f32.mrf.mxu0
    %v196 = vadd.f32 0.0, %v195
    %v197 = vpop.f32.mrf.mxu0
    %v198 = vpop.f32.mrf.mxu0
    %v199 = vadd.f32 0.0, %v198
    %v200 = vpop.f32.mrf.mxu0
    %201 = vmatprep.mubr.bf16.mxu0 0
    %202 = vmatmul.mubr.bf16.gmra.mxu0 %v141
    %v203 = vpop.f32.mrf.mxu0
    %v204 = vadd.f32 0.0, %v203
    %v205 = vpop.f32.mrf.mxu0
    %v206 = vpop.f32.mrf.mxu0
    %v207 = vadd.f32 0.0, %v206
    %v208 = vpop.f32.mrf.mxu0
    %209 = vmatprep.mubr.bf16.mxu0 0
    %210 = vmatmul.mubr.bf16.gmra.mxu0 %v144
    %v211 = vpop.f32.mrf.mxu0
    %v212 = vadd.f32 0.0, %v211
    %v213 = vpop.f32.mrf.mxu0
    %v214 = vpop.f32.mrf.mxu0
    %v215 = vadd.f32 0.0, %v214
    %v216 = vpop.f32.mrf.mxu0
    %217 = vmatprep.mubr.bf16.mxu0 0
    %218 = vmatmul.mubr.bf16.gmra.mxu0 %v147
    %v219 = vpop.f32.mrf.mxu0
    %v220 = vadd.f32 0.0, %v219
    %v221 = vpop.f32.mrf.mxu0
    %v222 = vpop.f32.mrf.mxu0
    %v223 = vadd.f32 0.0, %v222
    %v224 = vpop.f32.mrf.mxu0
    %225 = vmatprep.mubr.bf16.mxu0 0
    %226 = vmatmul.mubr.bf16.gmra.mxu0 %v150
    %v227 = vpop.f32.mrf.mxu0
    %v228 = vadd.f32 0.0, %v227
    %v229 = vpop.f32.mrf.mxu0
    %v230 = vpop.f32.mrf.mxu0
    %v231 = vadd.f32 0.0, %v230
    %v232 = vpop.f32.mrf.mxu0
    %233 = vmatprep.mubr.bf16.mxu0 0
    %234 = vmatmul.mubr.bf16.gmra.mxu0 %v153
    %v235 = vpop.f32.mrf.mxu0
    %v236 = vadd.f32 0.0, %v235
    %v237 = vpop.f32.mrf.mxu0
    %v238 = vpop.f32.mrf.mxu0
    %v239 = vadd.f32 0.0, %v238
    %v240 = vpop.f32.mrf.mxu0
    %241 = vmatprep.mubr.bf16.mxu0 0
    %242 = vmatmul.mubr.bf16.gmra.mxu0 %v156
    %v243 = vpop.f32.mrf.mxu0
    %v244 = vadd.f32 0.0, %v243
    %v245 = vpop.f32.mrf.mxu0
    %v246 = vpop.f32.mrf.mxu0
    %v247 = vadd.f32 0.0, %v246
    %v248 = vpop.f32.mrf.mxu0
    %249 = vmatprep.mubr.bf16.mxu0 0
    %250 = vmatmul.mubr.bf16.gmra.mxu0 %v159
    %v251 = vpop.f32.mrf.mxu0
    %v252 = vadd.f32 0.0, %v251
    %v253 = vpop.f32.mrf.mxu0
    %v254 = vpop.f32.mrf.mxu0
    %v255 = vadd.f32 0.0, %v254
    %v256 = vpop.f32.mrf.mxu0
    %257 = vdwg.mxu0
    %v258 = vadd.f32 %v40, %v196
    %v259 = vadd.f32 %v41, %v199
    %v260 = vadd.f32 %v42, %v204
    %v261 = vadd.f32 %v43, %v207
    %v262 = vadd.f32 %v44, %v212
    %v263 = vadd.f32 %v45, %v215
    %v264 = vadd.f32 %v46, %v220
    %v265 = vadd.f32 %v47, %v223
    %v266 = vadd.f32 %v48, %v228
    %v267 = vadd.f32 %v49, %v231
    %v268 = vadd.f32 %v50, %v236
    %v269 = vadd.f32 %v51, %v239
    %v270 = vadd.f32 %v52, %v244
    %v271 = vadd.f32 %v53, %v247
    %v272 = vadd.f32 %v54, %v252
    %v273 = vadd.f32 %v55, %v255
    %vm274 = vcmask 261120
    %275 = vst.msk [vmem:[#allocation2] sm:$0xff] %vm274, %v258
    %276 = vst.msk [vmem:[#allocation2 + $0x8] sm:$0xff] %vm274, %v259
    %277 = vst.msk [vmem:[#allocation2 + $0x10] sm:$0xff] %vm274, %v260
    %278 = vst.msk [vmem:[#allocation2 + $0x18] sm:$0xff] %vm274, %v261
    %279 = vst.msk [vmem:[#allocation2 + $0x20] sm:$0xff] %vm274, %v262
    %280 = vst.msk [vmem:[#allocation2 + $0x28] sm:$0xff] %vm274, %v263
    %281 = vst.msk [vmem:[#allocation2 + $0x30] sm:$0xff] %vm274, %v264
    %282 = vst.msk [vmem:[#allocation2 + $0x38] sm:$0xff] %vm274, %v265
    %283 = vst.msk [vmem:[#allocation2 + $0x40] sm:$0xff] %vm274, %v266
    %284 = vst.msk [vmem:[#allocation2 + $0x48] sm:$0xff] %vm274, %v267
    %285 = vst.msk [vmem:[#allocation2 + $0x50] sm:$0xff] %vm274, %v268
    %286 = vst.msk [vmem:[#allocation2 + $0x58] sm:$0xff] %vm274, %v269
    %287 = vst.msk [vmem:[#allocation2 + $0x60] sm:$0xff] %vm274, %v270
    %288 = vst.msk [vmem:[#allocation2 + $0x68] sm:$0xff] %vm274, %v271
    %289 = vst.msk [vmem:[#allocation2 + $0x70] sm:$0xff] %vm274, %v272
    %290 = vst.msk [vmem:[#allocation2 + $0x78] sm:$0xff] %vm274, %v273
    // Predicated region
    $region22: #{c2f_mhda_forward.13} parent=1 // pred_check
      %p291 = pneg %p19
    $region23: #{c2f_mhda_forward.13} parent=1 // pred_check_branch
      %293 = sbr.rel (%p291) target = $region25
    $region24: #{c2f_mhda_forward.13} parent=1 // pred_region
      %v294 = vld [vmem:[#allocation2] sm:$0xff]
      %v295 = vld [vmem:[#allocation2 + $0x8] sm:$0xff]
      %v296 = vld [vmem:[#allocation2 + $0x10] sm:$0xff]
      %v297 = vld [vmem:[#allocation2 + $0x18] sm:$0xff]
      %v298 = vld [vmem:[#allocation2 + $0x20] sm:$0xff]
      %v299 = vld [vmem:[#allocation2 + $0x28] sm:$0xff]
      %v300 = vld [vmem:[#allocation2 + $0x30] sm:$0xff]
      %v301 = vld [vmem:[#allocation2 + $0x38] sm:$0xff]
      %v302 = vld [vmem:[#allocation2 + $0x40] sm:$0xff]
      %v303 = vld [vmem:[#allocation2 + $0x48] sm:$0xff]
      %v304 = vld [vmem:[#allocation2 + $0x50] sm:$0xff]
      %v305 = vld [vmem:[#allocation2 + $0x58] sm:$0xff]
      %v306 = vld [vmem:[#allocation2 + $0x60] sm:$0xff]
      %v307 = vld [vmem:[#allocation2 + $0x68] sm:$0xff]
      %v308 = vld [vmem:[#allocation2 + $0x70] sm:$0xff]
      %v309 = vld [vmem:[#allocation2 + $0x78] sm:$0xff]
      %v310 = vld [vmem:[%s2] sm:$0x1]
      %v312 = vlaneseq
      %v313 = vshrl.u32 %v312, 7
      %v314 = vsub.s32 0, %v313
      %v315 = vrot.slane %v310, %v314
      %v317 = vmul.f32 %v294, %v315
      %v318 = vmul.f32 %v295, %v315
      %v319 = vmul.f32 %v296, %v315
      %v320 = vmul.f32 %v297, %v315
      %v321 = vmul.f32 %v298, %v315
      %v322 = vmul.f32 %v299, %v315
      %v323 = vmul.f32 %v300, %v315
      %v324 = vmul.f32 %v301, %v315
      %v325 = vmul.f32 %v302, %v315
      %v326 = vmul.f32 %v303, %v315
      %v327 = vmul.f32 %v304, %v315
      %v328 = vmul.f32 %v305, %v315
      %v329 = vmul.f32 %v306, %v315
      %v330 = vmul.f32 %v307, %v315
      %v331 = vmul.f32 %v308, %v315
      %v332 = vmul.f32 %v309, %v315
      %v333 = vld [vmem:[%s3] sm:$0x1]
      %v335 = vlaneseq
      %v336 = vshrl.u32 %v335, 7
      %v337 = vsub.s32 0, %v336
      %v338 = vrot.slane %v333, %v337
      %v340 = vadd.f32 %v317, %v338
      %v341 = vadd.f32 %v318, %v338
      %v342 = vadd.f32 %v319, %v338
      %v343 = vadd.f32 %v320, %v338
      %v344 = vadd.f32 %v321, %v338
      %v345 = vadd.f32 %v322, %v338
      %v346 = vadd.f32 %v323, %v338
      %v347 = vadd.f32 %v324, %v338
      %v348 = vadd.f32 %v325, %v338
      %v349 = vadd.f32 %v326, %v338
      %v350 = vadd.f32 %v327, %v338
      %v351 = vadd.f32 %v328, %v338
      %v352 = vadd.f32 %v329, %v338
      %v353 = vadd.f32 %v330, %v338
      %v354 = vadd.f32 %v331, %v338
      %v355 = vadd.f32 %v332, %v338
      %v356 = vmax.f32 %v340, -30.0
      %v357 = vmax.f32 %v341, -30.0
      %v358 = vmax.f32 %v342, -30.0
      %v359 = vmax.f32 %v343, -30.0
      %v360 = vmax.f32 %v344, -30.0
      %v361 = vmax.f32 %v345, -30.0
      %v362 = vmax.f32 %v346, -30.0
      %v363 = vmax.f32 %v347, -30.0
      %v364 = vmax.f32 %v348, -30.0
      %v365 = vmax.f32 %v349, -30.0
      %v366 = vmax.f32 %v350, -30.0
      %v367 = vmax.f32 %v351, -30.0
      %v368 = vmax.f32 %v352, -30.0
      %v369 = vmax.f32 %v353, -30.0
      %v370 = vmax.f32 %v354, -30.0
      %v371 = vmax.f32 %v355, -30.0
      %v372 = vmin.f32 %v356, 30.0
      %v373 = vmin.f32 %v357, 30.0
      %v374 = vmin.f32 %v358, 30.0
      %v375 = vmin.f32 %v359, 30.0
      %v376 = vmin.f32 %v360, 30.0
      %v377 = vmin.f32 %v361, 30.0
      %v378 = vmin.f32 %v362, 30.0
      %v379 = vmin.f32 %v363, 30.0
      %v380 = vmin.f32 %v364, 30.0
      %v381 = vmin.f32 %v365, 30.0
      %v382 = vmin.f32 %v366, 30.0
      %v383 = vmin.f32 %v367, 30.0
      %v384 = vmin.f32 %v368, 30.0
      %v385 = vmin.f32 %v369, 30.0
      %v386 = vmin.f32 %v370, 30.0
      %v387 = vmin.f32 %v371, 30.0
      %v388 = vsub.f32 0.0, %v372
      %v389 = vsub.f32 0.0, %v373
      %v390 = vsub.f32 0.0, %v374
      %v391 = vsub.f32 0.0, %v375
      %v392 = vsub.f32 0.0, %v376
      %v393 = vsub.f32 0.0, %v377
      %v394 = vsub.f32 0.0, %v378
      %v395 = vsub.f32 0.0, %v379
      %v396 = vsub.f32 0.0, %v380
      %v397 = vsub.f32 0.0, %v381
      %v398 = vsub.f32 0.0, %v382
      %v399 = vsub.f32 0.0, %v383
      %v400 = vsub.f32 0.0, %v384
      %v401 = vsub.f32 0.0, %v385
      %v402 = vsub.f32 0.0, %v386
      %v403 = vsub.f32 0.0, %v387
      %v404 = vmul.f32 %v388, 1.442695
      %v405 = vpow.pop %v404
      %v406 = vmul.f32 %v389, 1.442695
      %v407 = vpow.pop %v406
      %v408 = vmul.f32 %v390, 1.442695
      %v409 = vpow.pop %v408
      %v410 = vmul.f32 %v391, 1.442695
      %v411 = vpow.pop %v410
      %v412 = vmul.f32 %v392, 1.442695
      %v413 = vpow.pop %v412
      %v414 = vmul.f32 %v393, 1.442695
      %v415 = vpow.pop %v414
      %v416 = vmul.f32 %v394, 1.442695
      %v417 = vpow.pop %v416
      %v418 = vmul.f32 %v395, 1.442695
      %v419 = vpow.pop %v418
      %v420 = vmul.f32 %v396, 1.442695
      %v421 = vpow.pop %v420
      %v422 = vmul.f32 %v397, 1.442695
      %v423 = vpow.pop %v422
      %v424 = vmul.f32 %v398, 1.442695
      %v425 = vpow.pop %v424
      %v426 = vmul.f32 %v399, 1.442695
      %v427 = vpow.pop %v426
      %v428 = vmul.f32 %v400, 1.442695
      %v429 = vpow.pop %v428
      %v430 = vmul.f32 %v401, 1.442695
      %v431 = vpow.pop %v430
      %v432 = vmul.f32 %v402, 1.442695
      %v433 = vpow.pop %v432
      %v434 = vmul.f32 %v403, 1.442695
      %v435 = vpow.pop %v434
      %v436 = vadd.f32 %v405, 1.0
      %v437 = vadd.f32 %v407, 1.0
      %v438 = vadd.f32 %v409, 1.0
      %v439 = vadd.f32 %v411, 1.0
      %v440 = vadd.f32 %v413, 1.0
      %v441 = vadd.f32 %v415, 1.0
      %v442 = vadd.f32 %v417, 1.0
      %v443 = vadd.f32 %v419, 1.0
      %v444 = vadd.f32 %v421, 1.0
      %v445 = vadd.f32 %v423, 1.0
      %v446 = vadd.f32 %v425, 1.0
      %v447 = vadd.f32 %v427, 1.0
      %v448 = vadd.f32 %v429, 1.0
      %v449 = vadd.f32 %v431, 1.0
      %v450 = vadd.f32 %v433, 1.0
      %v451 = vadd.f32 %v435, 1.0
      %v452 = vrcp.pop %v436
      %v453 = vrcp.pop %v437
      %v454 = vrcp.pop %v438
      %v455 = vrcp.pop %v439
      %v456 = vrcp.pop %v440
      %v457 = vrcp.pop %v441
      %v458 = vrcp.pop %v442
      %v459 = vrcp.pop %v443
      %v460 = vrcp.pop %v444
      %v461 = vrcp.pop %v445
      %v462 = vrcp.pop %v446
      %v463 = vrcp.pop %v447
      %v464 = vrcp.pop %v448
      %v465 = vrcp.pop %v449
      %v466 = vrcp.pop %v450
      %v467 = vrcp.pop %v451
      %v468 = vmul.f32 %v340, %v452
      %v469 = vmul.f32 %v341, %v453
      %v470 = vmul.f32 %v342, %v454
      %v471 = vmul.f32 %v343, %v455
      %v472 = vmul.f32 %v344, %v456
      %v473 = vmul.f32 %v345, %v457
      %v474 = vmul.f32 %v346, %v458
      %v475 = vmul.f32 %v347, %v459
      %v476 = vmul.f32 %v348, %v460
      %v477 = vmul.f32 %v349, %v461
      %v478 = vmul.f32 %v350, %v462
      %v479 = vmul.f32 %v351, %v463
      %v480 = vmul.f32 %v352, %v464
      %v481 = vmul.f32 %v353, %v465
      %v482 = vmul.f32 %v354, %v466
      %v483 = vmul.f32 %v355, %v467
      %484 = vst.msk [vmem:[#allocation3] sm:$0xff] %vm274, %v468
      %485 = vst.msk [vmem:[#allocation3 + $0x8] sm:$0xff] %vm274, %v469
      %486 = vst.msk [vmem:[#allocation3 + $0x10] sm:$0xff] %vm274, %v470
      %487 = vst.msk [vmem:[#allocation3 + $0x18] sm:$0xff] %vm274, %v471
      %488 = vst.msk [vmem:[#allocation3 + $0x20] sm:$0xff] %vm274, %v472
      %489 = vst.msk [vmem:[#allocation3 + $0x28] sm:$0xff] %vm274, %v473
      %490 = vst.msk [vmem:[#allocation3 + $0x30] sm:$0xff] %vm274, %v474
      %491 = vst.msk [vmem:[#allocation3 + $0x38] sm:$0xff] %vm274, %v475
      %492 = vst.msk [vmem:[#allocation3 + $0x40] sm:$0xff] %vm274, %v476
      %493 = vst.msk [vmem:[#allocation3 + $0x48] sm:$0xff] %vm274, %v477
      %494 = vst.msk [vmem:[#allocation3 + $0x50] sm:$0xff] %vm274, %v478
      %495 = vst.msk [vmem:[#allocation3 + $0x58] sm:$0xff] %vm274, %v479
      %496 = vst.msk [vmem:[#allocation3 + $0x60] sm:$0xff] %vm274, %v480
      %497 = vst.msk [vmem:[#allocation3 + $0x68] sm:$0xff] %vm274, %v481
      %498 = vst.msk [vmem:[#allocation3 + $0x70] sm:$0xff] %vm274, %v482
      %499 = vst.msk [vmem:[#allocation3 + $0x78] sm:$0xff] %vm274, %v483
    $region25: #{c2f_mhda_forward.13} parent=1 // pred_fallthru
      _
    // Predicated region
    $region26: #{c2f_mhda_forward.13} parent=1 // pred_check
      _
    $region27: #{c2f_mhda_forward.13} parent=1 // pred_check_branch
      %501 = sbr.rel (0) target = $region29
    $region28: #{c2f_mhda_forward.13} parent=1 // pred_region
      %s503 = ssub.s32 2048, 2048
      %504 = vsyncadd [#allocation4], %s503
      %s505 = sshll.u32 [#allocation3], 4
      %s506 = int_to_ptr.vmem [resolvable:$true] %s505
      %511 = dma.vmem_to_hbm [thread:$0]  %s506, 2048, %s4, [#allocation4], 128, 128, 8
    $region29: #{c2f_mhda_forward.13} parent=1 // pred_fallthru
      _
    // Predicated region
    $region30: #{c2f_mhda_forward.13} parent=1 // pred_check
      _
    $region31: #{c2f_mhda_forward.13} parent=1 // pred_check_branch
      %513 = sbr.rel (0) target = $region33
    $region32: #{c2f_mhda_forward.13} parent=1 // pred_region
      %514 = dma.done [#allocation4], 2048
    $region33: #{c2f_mhda_forward.13} parent=1 // pred_fallthru
      _
    %515 = vsyncpa [#allocation4], 1

// kernel: c2f_mhda_forward.11
$region0: #{c2f_mhda_forward.11}
  #allocation0 [shape = 'u32[]', space=smem, size = 0x4, offset = 0x4, fixed_abs, tag = 'smem constant byte address 0x4 - core index']
  #allocation1 [shape = 'u32[144,128]{1,0:T(1,128)}', space=vmem, size = 0x12000, scoped, tag = 'internal scratch']
  %s0 = inlined_call_operand.vmem [shape: f32[8,1,1], index: 0, kind: input, shape index: {}]
  %s1 = inlined_call_operand.vmem [shape: f32[1,1,4], index: 1, kind: input, shape index: {}]
  %s2 = inlined_call_operand.vmem [shape: bf16[2,8,64,2], index: 2, kind: input, shape index: {}]
  %s3 = inlined_call_operand.vmem [shape: bf16[2,8,64,2], index: 3, kind: input, shape index: {}]
  %s4 = inlined_call_operand.vmem [shape: bf16[2,8,64,2], index: 4, kind: input, shape index: {}]
  %s5 = inlined_call_operand.vmem [shape: bf16[2,8,64,2], index: 5, kind: input, shape index: {}]
  %s6 = inlined_call_operand.vmem [shape: bf16[2,8,64,4], index: 6, kind: input, shape index: {}]
  %s7 = inlined_call_operand.vmem [shape: bf16[2,8,64,4], index: 7, kind: output, shape index: {}]
  %s8 = sld [smem:[#allocation0]]
  $region61: #{c2f_mhda_forward.11} parent=0
    _
  %s10 = ssub.s32 1, %s8
  %s11 = scalar_select 0, %s10, %s8
  loop: start=0, step=1, limit=4
  $region2: #{c2f_mhda_forward.11} parent=0 // loop_pre_header
    _
  $region3: #{c2f_mhda_forward.11} parent=0 // loop_header
    %s13 = sphi 0, %s17
    %p14 = scmp.ge.s32.totalorder %s13, 4
    %s20 = sphi 0, %s32
    %s21 = sphi 0, %s28
    %s22 = sphi 0, %s20
    %s23 = sphi 0, %s21
    %s24 = sphi 0, %s22
    %s25 = sphi 0, %s23
    %s33 = sphi 0, %s33
    %s35 = sphi 0, %s33
    %s36 = sphi 0, %s35
    %s50 = sphi 0, %s36
    %s54 = sphi 0, %s54
    %s56 = sphi 0, %s54
    %s57 = sphi 0, %s56
    %s71 = sphi 0, %s57
    %s79 = sphi 0, %s81
    %s82 = sphi 0, %s79
    %s83 = sphi 0, %s82
    %s99 = sphi 0, %s83
    %s107 = sphi 0, %s109
    %s110 = sphi 0, %s107
    %s111 = sphi 0, %s110
    %s127 = sphi 0, %s111
    %s133 = sphi 0, %s135
    %s136 = sphi 0, %s133
    %s137 = sphi 0, %s136
    %s153 = sphi 0, %s137
    %s159 = sphi 0, %s161
    %s162 = sphi 0, %s159
    %s163 = sphi 0, %s162
    %s179 = sphi 0, %s163
    %s185 = sphi 0, %s187
    %s188 = sphi 0, %s185
    %s189 = sphi 0, %s188
    %s205 = sphi 0, %s189
    %s213 = sphi 0, %s215
    %s216 = sphi 0, %s213
    %s217 = sphi 0, %s216
    %s233 = sphi 0, %s217
  $region4: #{c2f_mhda_forward.11} parent=0 // loop_header_branch
    %16 = sbr.rel (%p14) target = $region8
  $region5: #{c2f_mhda_forward.11} parent=0 // loop_body
    %s18 = ssub.s32 %s13, 1
    %s19 = ssub.s32 %s13, 2
    %s26 = sadd.s32 1, %s21
    %p27 = scmp.ge.s32.totalorder %s26, 1
    %s28 = scalar_select %p27, 0, %s26
    %s29 = sadd.s32 1, %s20
    %s30 = scalar_select %p27, %s29, %s20
    %p31 = scmp.ge.s32.totalorder %s30, 2
    %s32 = scalar_select %p31, 0, %s30
    %s34 = sadd.s32 %s33, 1
    %p37 = scmp.eq.s32.totalorder %s13, 1
    %p38 = scmp.ne.s32.totalorder %s33, %s35
    %p39 = scmp.eq.s32.totalorder %s13, 0
    %p40 = por %p38, %p39
    %p41 = scmp.ne.s32.totalorder %s33, %s35
    %p42 = scmp.eq.s32.totalorder %s18, 1
    %p43 = por %p41, %p42
    %p44 = scmp.ne.s32.totalorder %s35, %s36
    %p45 = scmp.eq.s32.totalorder %s18, 0
    %p46 = por %p44, %p45
    %p47 = scmp.ne.s32.totalorder %s35, %s36
    %p48 = scmp.eq.s32.totalorder %s19, 1
    %p49 = por %p47, %p48
    %p51 = scmp.ne.s32.totalorder %s36, %s50
    %p52 = scmp.eq.s32.totalorder %s19, 0
    %p53 = por %p51, %p52
    %s55 = sadd.s32 %s54, 1
    %p58 = scmp.eq.s32.totalorder %s13, 1
    %p59 = scmp.ne.s32.totalorder %s54, %s56
    %p60 = scmp.eq.s32.totalorder %s13, 0
    %p61 = por %p59, %p60
    %p62 = scmp.ne.s32.totalorder %s54, %s56
    %p63 = scmp.eq.s32.totalorder %s18, 1
    %p64 = por %p62, %p63
    %p65 = scmp.ne.s32.totalorder %s56, %s57
    %p66 = scmp.eq.s32.totalorder %s18, 0
    %p67 = por %p65, %p66
    %p68 = scmp.ne.s32.totalorder %s56, %s57
    %p69 = scmp.eq.s32.totalorder %s19, 1
    %p70 = por %p68, %p69
    %p72 = scmp.ne.s32.totalorder %s57, %s71
    %p73 = scmp.eq.s32.totalorder %s19, 0
    %p74 = por %p72, %p73
    %s75 = ssub.s32 %s20, %s32
    %s76 = ssub.s32 %s21, %s28
    %s77 = sor.u32 %s75, %s76
    %p78 = scmp.eq.s32.totalorder %s77, 0
    %s80 = sadd.s32 %s79, 1
    %s81 = scalar_select %p78, %s79, %s80
    %p84 = pneg %p78
    %p85 = scmp.eq.s32.totalorder %s13, 1
    %p86 = por %p84, %p85
    %p87 = scmp.ne.s32.totalorder %s79, %s82
    %p88 = scmp.eq.s32.totalorder %s13, 0
    %p89 = por %p87, %p88
    %p90 = scmp.ne.s32.totalorder %s79, %s82
    %p91 = scmp.eq.s32.totalorder %s18, 1
    %p92 = por %p90, %p91
    %p93 = scmp.ne.s32.totalorder %s82, %s83
    %p94 = scmp.eq.s32.totalorder %s18, 0
    %p95 = por %p93, %p94
    %p96 = scmp.ne.s32.totalorder %s82, %s83
    %p97 = scmp.eq.s32.totalorder %s19, 1
    %p98 = por %p96, %p97
    %p100 = scmp.ne.s32.totalorder %s83, %s99
    %p101 = scmp.eq.s32.totalorder %s19, 0
    %p102 = por %p100, %p101
    %s103 = ssub.s32 %s20, %s32
    %s104 = ssub.s32 %s21, %s28
    %s105 = sor.u32 %s103, %s104
    %p106 = scmp.eq.s32.totalorder %s105, 0
    %s108 = sadd.s32 %s107, 1
    %s109 = scalar_select %p106, %s107, %s108
    %p112 = pneg %p106
    %p113 = scmp.eq.s32.totalorder %s13, 1
    %p114 = por %p112, %p113
    %p115 = scmp.ne.s32.totalorder %s107, %s110
    %p116 = scmp.eq.s32.totalorder %s13, 0
    %p117 = por %p115, %p116
    %p118 = scmp.ne.s32.totalorder %s107, %s110
    %p119 = scmp.eq.s32.totalorder %s18, 1
    %p120 = por %p118, %p119
    %p121 = scmp.ne.s32.totalorder %s110, %s111
    %p122 = scmp.eq.s32.totalorder %s18, 0
    %p123 = por %p121, %p122
    %p124 = scmp.ne.s32.totalorder %s110, %s111
    %p125 = scmp.eq.s32.totalorder %s19, 1
    %p126 = por %p124, %p125
    %p128 = scmp.ne.s32.totalorder %s111, %s127
    %p129 = scmp.eq.s32.totalorder %s19, 0
    %p130 = por %p128, %p129
    %s131 = ssub.s32 %s20, %s32
    %p132 = scmp.eq.s32.totalorder %s131, 0
    %s134 = sadd.s32 %s133, 1
    %s135 = scalar_select %p132, %s133, %s134
    %p138 = pneg %p132
    %p139 = scmp.eq.s32.totalorder %s13, 1
    %p140 = por %p138, %p139
    %p141 = scmp.ne.s32.totalorder %s133, %s136
    %p142 = scmp.eq.s32.totalorder %s13, 0
    %p143 = por %p141, %p142
    %p144 = scmp.ne.s32.totalorder %s133, %s136
    %p145 = scmp.eq.s32.totalorder %s18, 1
    %p146 = por %p144, %p145
    %p147 = scmp.ne.s32.totalorder %s136, %s137
    %p148 = scmp.eq.s32.totalorder %s18, 0
    %p149 = por %p147, %p148
    %p150 = scmp.ne.s32.totalorder %s136, %s137
    %p151 = scmp.eq.s32.totalorder %s19, 1
    %p152 = por %p150, %p151
    %p154 = scmp.ne.s32.totalorder %s137, %s153
    %p155 = scmp.eq.s32.totalorder %s19, 0
    %p156 = por %p154, %p155
    %s157 = ssub.s32 %s20, %s32
    %p158 = scmp.eq.s32.totalorder %s157, 0
    %s160 = sadd.s32 %s159, 1
    %s161 = scalar_select %p158, %s159, %s160
    %p164 = pneg %p158
    %p165 = scmp.eq.s32.totalorder %s13, 1
    %p166 = por %p164, %p165
    %p167 = scmp.ne.s32.totalorder %s159, %s162
    %p168 = scmp.eq.s32.totalorder %s13, 0
    %p169 = por %p167, %p168
    %p170 = scmp.ne.s32.totalorder %s159, %s162
    %p171 = scmp.eq.s32.totalorder %s18, 1
    %p172 = por %p170, %p171
    %p173 = scmp.ne.s32.totalorder %s162, %s163
    %p174 = scmp.eq.s32.totalorder %s18, 0
    %p175 = por %p173, %p174
    %p176 = scmp.ne.s32.totalorder %s162, %s163
    %p177 = scmp.eq.s32.totalorder %s19, 1
    %p178 = por %p176, %p177
    %p180 = scmp.ne.s32.totalorder %s163, %s179
    %p181 = scmp.eq.s32.totalorder %s19, 0
    %p182 = por %p180, %p181
    %s183 = ssub.s32 %s20, %s32
    %p184 = scmp.eq.s32.totalorder %s183, 0
    %s186 = sadd.s32 %s185, 1
    %s187 = scalar_select %p184, %s185, %s186
    %p190 = pneg %p184
    %p191 = scmp.eq.s32.totalorder %s13, 1
    %p192 = por %p190, %p191
    %p193 = scmp.ne.s32.totalorder %s185, %s188
    %p194 = scmp.eq.s32.totalorder %s13, 0
    %p195 = por %p193, %p194
    %p196 = scmp.ne.s32.totalorder %s185, %s188
    %p197 = scmp.eq.s32.totalorder %s18, 1
    %p198 = por %p196, %p197
    %p199 = scmp.ne.s32.totalorder %s188, %s189
    %p200 = scmp.eq.s32.totalorder %s18, 0
    %p201 = por %p199, %p200
    %p202 = scmp.ne.s32.totalorder %s188, %s189
    %p203 = scmp.eq.s32.totalorder %s19, 1
    %p204 = por %p202, %p203
    %p206 = scmp.ne.s32.totalorder %s189, %s205
    %p207 = scmp.eq.s32.totalorder %s19, 0
    %p208 = por %p206, %p207
    %s209 = ssub.s32 %s20, %s32
    %s210 = ssub.s32 %s21, %s28
    %s211 = sor.u32 %s209, %s210
    %p212 = scmp.eq.s32.totalorder %s211, 0
    %s214 = sadd.s32 %s213, 1
    %s215 = scalar_select %p212, %s213, %s214
    %p218 = pneg %p212
    %p219 = scmp.eq.s32.totalorder %s13, 1
    %p220 = por %p218, %p219
    %p221 = scmp.ne.s32.totalorder %s213, %s216
    %p222 = scmp.eq.s32.totalorder %s13, 0
    %p223 = por %p221, %p222
    %p224 = scmp.ne.s32.totalorder %s213, %s216
    %p225 = scmp.eq.s32.totalorder %s18, 1
    %p226 = por %p224, %p225
    %p227 = scmp.ne.s32.totalorder %s216, %s217
    %p228 = scmp.eq.s32.totalorder %s18, 0
    %p229 = por %p227, %p228
    %p230 = scmp.ne.s32.totalorder %s216, %s217
    %p231 = scmp.eq.s32.totalorder %s19, 1
    %p232 = por %p230, %p231
    %p234 = scmp.ne.s32.totalorder %s217, %s233
    %p235 = scmp.eq.s32.totalorder %s19, 0
    %p236 = por %p234, %p235
    %p237 = scmp.le.s32.totalorder 1, %s13
    %p238 = scmp.lt.s32.totalorder %s13, 3
    %p239 = pnand %p237, %p238
    %p240 = pneg %p239
    // Predicated region
    $region9: #{c2f_mhda_forward.11} parent=5 // pred_check
      _
    $region10: #{c2f_mhda_forward.11} parent=5 // pred_check_branch
      %242 = sbr.rel (%p239) target = $region12
    $region11: #{c2f_mhda_forward.11} parent=5 // pred_region
      %s243 = ssub.s32 %s13, 1
      // Predicated region
      $region13: #{c2f_mhda_forward.11} parent=11 // pred_check
        %p244 = pneg %p46
      $region14: #{c2f_mhda_forward.11} parent=11 // pred_check_branch
        %246 = sbr.rel (%p244) target = $region16
      $region15: #{c2f_mhda_forward.11} parent=11 // pred_region
        _
      $region16: #{c2f_mhda_forward.11} parent=11 // pred_fallthru
        _
      // Predicated region
      $region17: #{c2f_mhda_forward.11} parent=11 // pred_check
        %p247 = pneg %p67
      $region18: #{c2f_mhda_forward.11} parent=11 // pred_check_branch
        %249 = sbr.rel (%p247) target = $region20
      $region19: #{c2f_mhda_forward.11} parent=11 // pred_region
        _
      $region20: #{c2f_mhda_forward.11} parent=11 // pred_fallthru
        _
    $region12: #{c2f_mhda_forward.11} parent=5 // pred_fallthru
      _
    %p250 = scmp.lt.s32.totalorder %s13, 2
    // Predicated region
    $region21: #{c2f_mhda_forward.11} parent=5 // pred_check
      %p251 = pneg %p250
    $region22: #{c2f_mhda_forward.11} parent=5 // pred_check_branch
      %253 = sbr.rel (%p251) target = $region24
    $region23: #{c2f_mhda_forward.11} parent=5 // pred_region
      // Predicated region
      $region25: #{c2f_mhda_forward.11} parent=23 // pred_check
        %p254 = pneg %p89
      $region26: #{c2f_mhda_forward.11} parent=23 // pred_check_branch
        %256 = sbr.rel (%p254) target = $region28
      $region27: #{c2f_mhda_forward.11} parent=23 // pred_region
        %s257 = smul.u32 8, %s21
        %p258 = scmp.lt.s32.totalorder %s20, 1
        %s259 = scalar_select %p258, %s20, 1
        %p260 = scmp.lt.s32.totalorder %s257, 7
        %s261 = scalar_select %p260, %s257, 7
        %s262 = smul.addr %s259, 64
        %s263 = sadd.s32 %s261, %s262
        %s264 = smul.addr %s263, 4
        %s265 = scalar_lea.vmem %s2, %s264
        %s266 = smul.u32 8, %s21
      $region28: #{c2f_mhda_forward.11} parent=23 // pred_fallthru
        _
      // Predicated region
      $region29: #{c2f_mhda_forward.11} parent=23 // pred_check
        %p267 = pneg %p117
      $region30: #{c2f_mhda_forward.11} parent=23 // pred_check_branch
        %269 = sbr.rel (%p267) target = $region32
      $region31: #{c2f_mhda_forward.11} parent=23 // pred_region
        %s270 = smul.u32 8, %s21
        %p271 = scmp.lt.s32.totalorder %s20, 1
        %s272 = scalar_select %p271, %s20, 1
        %p273 = scmp.lt.s32.totalorder %s270, 7
        %s274 = scalar_select %p273, %s270, 7
        %s275 = smul.addr %s272, 64
        %s276 = sadd.s32 %s274, %s275
        %s277 = smul.addr %s276, 4
        %s278 = scalar_lea.vmem %s3, %s277
        %s279 = smul.u32 8, %s21
      $region32: #{c2f_mhda_forward.11} parent=23 // pred_fallthru
        _
      // Predicated region
      $region33: #{c2f_mhda_forward.11} parent=23 // pred_check
        %p280 = pneg %p143
      $region34: #{c2f_mhda_forward.11} parent=23 // pred_check_branch
        %282 = sbr.rel (%p280) target = $region36
      $region35: #{c2f_mhda_forward.11} parent=23 // pred_region
        %p283 = scmp.lt.s32.totalorder %s20, 1
        %s284 = scalar_select %p283, %s20, 1
        %s285 = smul.addr %s284, 64
        %s286 = smul.addr %s285, 4
        %s287 = scalar_lea.vmem %s4, %s286
      $region36: #{c2f_mhda_forward.11} parent=23 // pred_fallthru
        _
      // Predicated region
      $region37: #{c2f_mhda_forward.11} parent=23 // pred_check
        %p288 = pneg %p169
      $region38: #{c2f_mhda_forward.11} parent=23 // pred_check_branch
        %290 = sbr.rel (%p288) target = $region40
      $region39: #{c2f_mhda_forward.11} parent=23 // pred_region
        %p291 = scmp.lt.s32.totalorder %s20, 1
        %s292 = scalar_select %p291, %s20, 1
        %s293 = smul.addr %s292, 64
        %s294 = smul.addr %s293, 4
        %s295 = scalar_lea.vmem %s5, %s294
      $region40: #{c2f_mhda_forward.11} parent=23 // pred_fallthru
        _
      // Predicated region
      $region41: #{c2f_mhda_forward.11} parent=23 // pred_check
        %p296 = pneg %p195
      $region42: #{c2f_mhda_forward.11} parent=23 // pred_check_branch
        %298 = sbr.rel (%p296) target = $region44
      $region43: #{c2f_mhda_forward.11} parent=23 // pred_region
        %p299 = scmp.lt.s32.totalorder %s20, 1
        %s300 = scalar_select %p299, %s20, 1
        %s301 = smul.addr %s300, 64
        %s302 = smul.addr %s301, 4
        %s303 = scalar_lea.vmem %s6, %s302
      $region44: #{c2f_mhda_forward.11} parent=23 // pred_fallthru
        _
    $region24: #{c2f_mhda_forward.11} parent=5 // pred_fallthru
      _
    %p304 = scmp.le.s32.totalorder 1, %s13
    %p305 = scmp.lt.s32.totalorder %s13, 3
    %p306 = pnand %p304, %p305
    %p307 = pneg %p306
    // Predicated region
    $region45: #{c2f_mhda_forward.11} parent=5 // pred_check
      _
    $region46: #{c2f_mhda_forward.11} parent=5 // pred_check_branch
      %309 = sbr.rel (%p306) target = $region48
    $region47: #{c2f_mhda_forward.11} parent=5 // pred_region
      %s310 = ssub.s32 %s13, 1
      %p311 = pneg %p46
      %p312 = pneg %p43
      %p313 = pneg %p67
      %p314 = pneg %p64
      %s315 = smul.u32 8, %s23
      %p316 = scmp.lt.s32.totalorder %s22, 1
      %s317 = scalar_select %p316, %s22, 1
      %p318 = scmp.lt.s32.totalorder %s315, 7
      %s319 = scalar_select %p318, %s315, 7
      %s320 = smul.addr %s317, 64
      %s321 = sadd.s32 %s319, %s320
      %s322 = smul.addr %s321, 4
      %s323 = scalar_lea.vmem %s2, %s322
      %p324 = pneg %p95
      %p325 = pneg %p92
      %s326 = smul.u32 8, %s23
      %p327 = scmp.lt.s32.totalorder %s22, 1
      %s328 = scalar_select %p327, %s22, 1
      %p329 = scmp.lt.s32.totalorder %s326, 7
      %s330 = scalar_select %p329, %s326, 7
      %s331 = smul.addr %s328, 64
      %s332 = sadd.s32 %s330, %s331
      %s333 = smul.addr %s332, 4
      %s334 = scalar_lea.vmem %s3, %s333
      %p335 = pneg %p123
      %p336 = pneg %p120
      %p337 = scmp.lt.s32.totalorder %s22, 1
      %s338 = scalar_select %p337, %s22, 1
      %s339 = smul.addr %s338, 64
      %s340 = smul.addr %s339, 4
      %s341 = scalar_lea.vmem %s4, %s340
      %p342 = pneg %p149
      %p343 = pneg %p146
      %p344 = scmp.lt.s32.totalorder %s22, 1
      %s345 = scalar_select %p344, %s22, 1
      %s346 = smul.addr %s345, 64
      %s347 = smul.addr %s346, 4
      %s348 = scalar_lea.vmem %s5, %s347
      %p349 = pneg %p175
      %p350 = pneg %p172
      %p351 = scmp.lt.s32.totalorder %s22, 1
      %s352 = scalar_select %p351, %s22, 1
      %s353 = smul.addr %s352, 64
      %s354 = smul.addr %s353, 4
      %s355 = scalar_lea.vmem %s6, %s354
      %p356 = pneg %p201
      %p357 = pneg %p198
      %p358 = pneg %p229
      %p359 = pneg %p226
      %s360 = smul.u32 8, %s23
      %p361 = scmp.lt.s32.totalorder %s22, 1
      %s362 = scalar_select %p361, %s22, 1
      %p363 = scmp.lt.s32.totalorder %s360, 7
      %s364 = scalar_select %p363, %s360, 7
      %s365 = smul.addr %s362, 64
      %s366 = sadd.s32 %s364, %s365
      %s367 = smul.addr %s366, 4
      %s368 = scalar_lea.vmem %s7, %s367
      %s369 = smul.u32 8, %s23
      %p370 = scmp.lt.s32.totalorder %s22, 1
      %s371 = scalar_select %p370, %s22, 1
      %p372 = scmp.lt.s32.totalorder %s369, 7
      %s373 = scalar_select %p372, %s369, 7
      %s374 = smul.addr %s371, 64
      %s375 = sadd.s32 %s373, %s374
      %s376 = smul.addr %s375, 4
      %s377 = scalar_lea.vmem %s2, %s376
      %s378 = smul.u32 8, %s23
      %s379 = smul.u32 8, %s23
      %p380 = scmp.lt.s32.totalorder %s22, 1
      %s381 = scalar_select %p380, %s22, 1
      %p382 = scmp.lt.s32.totalorder %s379, 7
      %s383 = scalar_select %p382, %s379, 7
      %s384 = smul.addr %s381, 64
      %s385 = sadd.s32 %s383, %s384
      %s386 = smul.addr %s385, 4
      %s387 = scalar_lea.vmem %s3, %s386
      %s388 = smul.u32 8, %s23
      %p389 = scmp.lt.s32.totalorder %s22, 1
      %s390 = scalar_select %p389, %s22, 1
      %s391 = smul.addr %s390, 64
      %s392 = smul.addr %s391, 4
      %s393 = scalar_lea.vmem %s4, %s392
      %p394 = scmp.lt.s32.totalorder %s22, 1
      %s395 = scalar_select %p394, %s22, 1
      %s396 = smul.addr %s395, 64
      %s397 = smul.addr %s396, 4
      %s398 = scalar_lea.vmem %s5, %s397
      %p399 = scmp.lt.s32.totalorder %s22, 1
      %s400 = scalar_select %p399, %s22, 1
      %s401 = smul.addr %s400, 64
      %s402 = smul.addr %s401, 4
      %s403 = scalar_lea.vmem %s6, %s402
      %s404 = smul.u32 8, %s23
      %p405 = scmp.lt.s32.totalorder %s22, 1
      %s406 = scalar_select %p405, %s22, 1
      %p407 = scmp.lt.s32.totalorder %s404, 7
      %s408 = scalar_select %p407, %s404, 7
      %s409 = smul.addr %s406, 64
      %s410 = sadd.s32 %s408, %s409
      %s411 = smul.addr %s410, 4
      %s412 = scalar_lea.vmem %s7, %s411
      %s413 = smul.u32 8, %s23
      %v415 = vld [vmem:[%s377] sm:$0xf]
      %v416 = vld [vmem:[%s377 + $0x4] sm:$0xf]
      %v417 = vld [vmem:[%s377 + $0x8] sm:$0xf]
      %v418 = vld [vmem:[%s377 + $0xc] sm:$0xf]
      %v419 = vld [vmem:[%s377 + $0x10] sm:$0xf]
      %v420 = vld [vmem:[%s377 + $0x14] sm:$0xf]
      %v421 = vld [vmem:[%s377 + $0x18] sm:$0xf]
      %v422 = vld [vmem:[%s377 + $0x1c] sm:$0xf]
      %v423 = vld [vmem:[%s377 + $0x20] sm:$0xf]
      %v424 = vld [vmem:[%s377 + $0x24] sm:$0xf]
      %v425 = vld [vmem:[%s377 + $0x28] sm:$0xf]
      %v426 = vld [vmem:[%s377 + $0x2c] sm:$0xf]
      %v427 = vld [vmem:[%s377 + $0x30] sm:$0xf]
      %v428 = vld [vmem:[%s377 + $0x34] sm:$0xf]
      %v429 = vld [vmem:[%s377 + $0x38] sm:$0xf]
      %v430 = vld [vmem:[%s377 + $0x3c] sm:$0xf]
      %v431 = vld [vmem:[%s377 + $0x40] sm:$0xf]
      %v432 = vld [vmem:[%s377 + $0x44] sm:$0xf]
      %v433 = vld [vmem:[%s377 + $0x48] sm:$0xf]
      %v434 = vld [vmem:[%s377 + $0x4c] sm:$0xf]
      %v435 = vld [vmem:[%s377 + $0x50] sm:$0xf]
      %v436 = vld [vmem:[%s377 + $0x54] sm:$0xf]
      %v437 = vld [vmem:[%s377 + $0x58] sm:$0xf]
      %v438 = vld [vmem:[%s377 + $0x5c] sm:$0xf]
      %v439 = vld [vmem:[%s377 + $0x60] sm:$0xf]
      %v440 = vld [vmem:[%s377 + $0x64] sm:$0xf]
      %v441 = vld [vmem:[%s377 + $0x68] sm:$0xf]
      %v442 = vld [vmem:[%s377 + $0x6c] sm:$0xf]
      %v443 = vld [vmem:[%s377 + $0x70] sm:$0xf]
      %v444 = vld [vmem:[%s377 + $0x74] sm:$0xf]
      %v445 = vld [vmem:[%s377 + $0x78] sm:$0xf]
      %v446 = vld [vmem:[%s377 + $0x7c] sm:$0xf]
      %v447 = vld [vmem:[%s377 + $0x80] sm:$0xf]
      %v448 = vld [vmem:[%s377 + $0x84] sm:$0xf]
      %v449 = vld [vmem:[%s377 + $0x88] sm:$0xf]
      %v450 = vld [vmem:[%s377 + $0x8c] sm:$0xf]
      %v451 = vld [vmem:[%s377 + $0x90] sm:$0xf]
      %v452 = vld [vmem:[%s377 + $0x94] sm:$0xf]
      %v453 = vld [vmem:[%s377 + $0x98] sm:$0xf]
      %v454 = vld [vmem:[%s377 + $0x9c] sm:$0xf]
      %v455 = vld [vmem:[%s377 + $0xa0] sm:$0xf]
      %v456 = vld [vmem:[%s377 + $0xa4] sm:$0xf]
      %v457 = vld [vmem:[%s377 + $0xa8] sm:$0xf]
      %v458 = vld [vmem:[%s377 + $0xac] sm:$0xf]
      %v459 = vld [vmem:[%s377 + $0xb0] sm:$0xf]
      %v460 = vld [vmem:[%s377 + $0xb4] sm:$0xf]
      %v461 = vld [vmem:[%s377 + $0xb8] sm:$0xf]
      %v462 = vld [vmem:[%s377 + $0xbc] sm:$0xf]
      %v463 = vld [vmem:[%s377 + $0xc0] sm:$0xf]
      %v464 = vld [vmem:[%s377 + $0xc4] sm:$0xf]
      %v465 = vld [vmem:[%s377 + $0xc8] sm:$0xf]
      %v466 = vld [vmem:[%s377 + $0xcc] sm:$0xf]
      %v467 = vld [vmem:[%s377 + $0xd0] sm:$0xf]
      %v468 = vld [vmem:[%s377 + $0xd4] sm:$0xf]
      %v469 = vld [vmem:[%s377 + $0xd8] sm:$0xf]
      %v470 = vld [vmem:[%s377 + $0xdc] sm:$0xf]
      %v471 = vld [vmem:[%s377 + $0xe0] sm:$0xf]
      %v472 = vld [vmem:[%s377 + $0xe4] sm:$0xf]
      %v473 = vld [vmem:[%s377 + $0xe8] sm:$0xf]
      %v474 = vld [vmem:[%s377 + $0xec] sm:$0xf]
      %v475 = vld [vmem:[%s377 + $0xf0] sm:$0xf]
      %v476 = vld [vmem:[%s377 + $0xf4] sm:$0xf]
      %v477 = vld [vmem:[%s377 + $0xf8] sm:$0xf]
      %v478 = vld [vmem:[%s377 + $0xfc] sm:$0xf]
      %v479 = vld [vmem:[%s387] sm:$0xf]
      %v480 = vld [vmem:[%s387 + $0x4] sm:$0xf]
      %v481 = vld [vmem:[%s387 + $0x8] sm:$0xf]
      %v482 = vld [vmem:[%s387 + $0xc] sm:$0xf]
      %v483 = vld [vmem:[%s387 + $0x10] sm:$0xf]
      %v484 = vld [vmem:[%s387 + $0x14] sm:$0xf]
      %v485 = vld [vmem:[%s387 + $0x18] sm:$0xf]
      %v486 = vld [vmem:[%s387 + $0x1c] sm:$0xf]
      %v487 = vld [vmem:[%s387 + $0x20] sm:$0xf]
      %v488 = vld [vmem:[%s387 + $0x24] sm:$0xf]
      %v489 = vld [vmem:[%s387 + $0x28] sm:$0xf]
      %v490 = vld [vmem:[%s387 + $0x2c] sm:$0xf]
      %v491 = vld [vmem:[%s387 + $0x30] sm:$0xf]
      %v492 = vld [vmem:[%s387 + $0x34] sm:$0xf]
      %v493 = vld [vmem:[%s387 + $0x38] sm:$0xf]
      %v494 = vld [vmem:[%s387 + $0x3c] sm:$0xf]
      %v495 = vld [vmem:[%s387 + $0x40] sm:$0xf]
      %v496 = vld [vmem:[%s387 + $0x44] sm:$0xf]
      %v497 = vld [vmem:[%s387 + $0x48] sm:$0xf]
      %v498 = vld [vmem:[%s387 + $0x4c] sm:$0xf]
      %v499 = vld [vmem:[%s387 + $0x50] sm:$0xf]
      %v500 = vld [vmem:[%s387 + $0x54] sm:$0xf]
      %v501 = vld [vmem:[%s387 + $0x58] sm:$0xf]
      %v502 = vld [vmem:[%s387 + $0x5c] sm:$0xf]
      %v503 = vld [vmem:[%s387 + $0x60] sm:$0xf]
      %v504 = vld [vmem:[%s387 + $0x64] sm:$0xf]
      %v505 = vld [vmem:[%s387 + $0x68] sm:$0xf]
      %v506 = vld [vmem:[%s387 + $0x6c] sm:$0xf]
      %v507 = vld [vmem:[%s387 + $0x70] sm:$0xf]
      %v508 = vld [vmem:[%s387 + $0x74] sm:$0xf]
      %v509 = vld [vmem:[%s387 + $0x78] sm:$0xf]
      %v510 = vld [vmem:[%s387 + $0x7c] sm:$0xf]
      %v511 = vld [vmem:[%s387 + $0x80] sm:$0xf]
      %v512 = vld [vmem:[%s387 + $0x84] sm:$0xf]
      %v513 = vld [vmem:[%s387 + $0x88] sm:$0xf]
      %v514 = vld [vmem:[%s387 + $0x8c] sm:$0xf]
      %v515 = vld [vmem:[%s387 + $0x90] sm:$0xf]
      %v516 = vld [vmem:[%s387 + $0x94] sm:$0xf]
      %v517 = vld [vmem:[%s387 + $0x98] sm:$0xf]
      %v518 = vld [vmem:[%s387 + $0x9c] sm:$0xf]
      %v519 = vld [vmem:[%s387 + $0xa0] sm:$0xf]
      %v520 = vld [vmem:[%s387 + $0xa4] sm:$0xf]
      %v521 = vld [vmem:[%s387 + $0xa8] sm:$0xf]
      %v522 = vld [vmem:[%s387 + $0xac] sm:$0xf]
      %v523 = vld [vmem:[%s387 + $0xb0] sm:$0xf]
      %v524 = vld [vmem:[%s387 + $0xb4] sm:$0xf]
      %v525 = vld [vmem:[%s387 + $0xb8] sm:$0xf]
      %v526 = vld [vmem:[%s387 + $0xbc] sm:$0xf]
      %v527 = vld [vmem:[%s387 + $0xc0] sm:$0xf]
      %v528 = vld [vmem:[%s387 + $0xc4] sm:$0xf]
      %v529 = vld [vmem:[%s387 + $0xc8] sm:$0xf]
      %v530 = vld [vmem:[%s387 + $0xcc] sm:$0xf]
      %v531 = vld [vmem:[%s387 + $0xd0] sm:$0xf]
      %v532 = vld [vmem:[%s387 + $0xd4] sm:$0xf]
      %v533 = vld [vmem:[%s387 + $0xd8] sm:$0xf]
      %v534 = vld [vmem:[%s387 + $0xdc] sm:$0xf]
      %v535 = vld [vmem:[%s387 + $0xe0] sm:$0xf]
      %v536 = vld [vmem:[%s387 + $0xe4] sm:$0xf]
      %v537 = vld [vmem:[%s387 + $0xe8] sm:$0xf]
      %v538 = vld [vmem:[%s387 + $0xec] sm:$0xf]
      %v539 = vld [vmem:[%s387 + $0xf0] sm:$0xf]
      %v540 = vld [vmem:[%s387 + $0xf4] sm:$0xf]
      %v541 = vld [vmem:[%s387 + $0xf8] sm:$0xf]
      %v542 = vld [vmem:[%s387 + $0xfc] sm:$0xf]
      %v543 = vld [vmem:[%s393] sm:$0xf]
      %v544 = vld [vmem:[%s393 + $0x4] sm:$0xf]
      %v545 = vld [vmem:[%s393 + $0x8] sm:$0xf]
      %v546 = vld [vmem:[%s393 + $0xc] sm:$0xf]
      %v547 = vld [vmem:[%s393 + $0x10] sm:$0xf]
      %v548 = vld [vmem:[%s393 + $0x14] sm:$0xf]
      %v549 = vld [vmem:[%s393 + $0x18] sm:$0xf]
      %v550 = vld [vmem:[%s393 + $0x1c] sm:$0xf]
      %v551 = vld [vmem:[%s393 + $0x20] sm:$0xf]
      %v552 = vld [vmem:[%s393 + $0x24] sm:$0xf]
      %v553 = vld [vmem:[%s393 + $0x28] sm:$0xf]
      %v554 = vld [vmem:[%s393 + $0x2c] sm:$0xf]
      %v555 = vld [vmem:[%s393 + $0x30] sm:$0xf]
      %v556 = vld [vmem:[%s393 + $0x34] sm:$0xf]
      %v557 = vld [vmem:[%s393 + $0x38] sm:$0xf]
      %v558 = vld [vmem:[%s393 + $0x3c] sm:$0xf]
      %v559 = vld [vmem:[%s393 + $0x40] sm:$0xf]
      %v560 = vld [vmem:[%s393 + $0x44] sm:$0xf]
      %v561 = vld [vmem:[%s393 + $0x48] sm:$0xf]
      %v562 = vld [vmem:[%s393 + $0x4c] sm:$0xf]
      %v563 = vld [vmem:[%s393 + $0x50] sm:$0xf]
      %v564 = vld [vmem:[%s393 + $0x54] sm:$0xf]
      %v565 = vld [vmem:[%s393 + $0x58] sm:$0xf]
      %v566 = vld [vmem:[%s393 + $0x5c] sm:$0xf]
      %v567 = vld [vmem:[%s393 + $0x60] sm:$0xf]
      %v568 = vld [vmem:[%s393 + $0x64] sm:$0xf]
      %v569 = vld [vmem:[%s393 + $0x68] sm:$0xf]
      %v570 = vld [vmem:[%s393 + $0x6c] sm:$0xf]
      %v571 = vld [vmem:[%s393 + $0x70] sm:$0xf]
      %v572 = vld [vmem:[%s393 + $0x74] sm:$0xf]
      %v573 = vld [vmem:[%s393 + $0x78] sm:$0xf]
      %v574 = vld [vmem:[%s393 + $0x7c] sm:$0xf]
      %v575 = vld [vmem:[%s393 + $0x80] sm:$0xf]
      %v576 = vld [vmem:[%s393 + $0x84] sm:$0xf]
      %v577 = vld [vmem:[%s393 + $0x88] sm:$0xf]
      %v578 = vld [vmem:[%s393 + $0x8c] sm:$0xf]
      %v579 = vld [vmem:[%s393 + $0x90] sm:$0xf]
      %v580 = vld [vmem:[%s393 + $0x94] sm:$0xf]
      %v581 = vld [vmem:[%s393 + $0x98] sm:$0xf]
      %v582 = vld [vmem:[%s393 + $0x9c] sm:$0xf]
      %v583 = vld [vmem:[%s393 + $0xa0] sm:$0xf]
      %v584 = vld [vmem:[%s393 + $0xa4] sm:$0xf]
      %v585 = vld [vmem:[%s393 + $0xa8] sm:$0xf]
      %v586 = vld [vmem:[%s393 + $0xac] sm:$0xf]
      %v587 = vld [vmem:[%s393 + $0xb0] sm:$0xf]
      %v588 = vld [vmem:[%s393 + $0xb4] sm:$0xf]
      %v589 = vld [vmem:[%s393 + $0xb8] sm:$0xf]
      %v590 = vld [vmem:[%s393 + $0xbc] sm:$0xf]
      %v591 = vld [vmem:[%s393 + $0xc0] sm:$0xf]
      %v592 = vld [vmem:[%s393 + $0xc4] sm:$0xf]
      %v593 = vld [vmem:[%s393 + $0xc8] sm:$0xf]
      %v594 = vld [vmem:[%s393 + $0xcc] sm:$0xf]
      %v595 = vld [vmem:[%s393 + $0xd0] sm:$0xf]
      %v596 = vld [vmem:[%s393 + $0xd4] sm:$0xf]
      %v597 = vld [vmem:[%s393 + $0xd8] sm:$0xf]
      %v598 = vld [vmem:[%s393 + $0xdc] sm:$0xf]
      %v599 = vld [vmem:[%s393 + $0xe0] sm:$0xf]
      %v600 = vld [vmem:[%s393 + $0xe4] sm:$0xf]
      %v601 = vld [vmem:[%s393 + $0xe8] sm:$0xf]
      %v602 = vld [vmem:[%s393 + $0xec] sm:$0xf]
      %v603 = vld [vmem:[%s393 + $0xf0] sm:$0xf]
      %v604 = vld [vmem:[%s393 + $0xf4] sm:$0xf]
      %v605 = vld [vmem:[%s393 + $0xf8] sm:$0xf]
      %v606 = vld [vmem:[%s393 + $0xfc] sm:$0xf]
      %v607 = vld [vmem:[%s398] sm:$0xf]
      %v608 = vld [vmem:[%s398 + $0x4] sm:$0xf]
      %v609 = vld [vmem:[%s398 + $0x8] sm:$0xf]
      %v610 = vld [vmem:[%s398 + $0xc] sm:$0xf]
      %v611 = vld [vmem:[%s398 + $0x10] sm:$0xf]
      %v612 = vld [vmem:[%s398 + $0x14] sm:$0xf]
      %v613 = vld [vmem:[%s398 + $0x18] sm:$0xf]
      %v614 = vld [vmem:[%s398 + $0x1c] sm:$0xf]
      %v615 = vld [vmem:[%s398 + $0x20] sm:$0xf]
      %v616 = vld [vmem:[%s398 + $0x24] sm:$0xf]
      %v617 = vld [vmem:[%s398 + $0x28] sm:$0xf]
      %v618 = vld [vmem:[%s398 + $0x2c] sm:$0xf]
      %v619 = vld [vmem:[%s398 + $0x30] sm:$0xf]
      %v620 = vld [vmem:[%s398 + $0x34] sm:$0xf]
      %v621 = vld [vmem:[%s398 + $0x38] sm:$0xf]
      %v622 = vld [vmem:[%s398 + $0x3c] sm:$0xf]
      %v623 = vld [vmem:[%s398 + $0x40] sm:$0xf]
      %v624 = vld [vmem:[%s398 + $0x44] sm:$0xf]
      %v625 = vld [vmem:[%s398 + $0x48] sm:$0xf]
      %v626 = vld [vmem:[%s398 + $0x4c] sm:$0xf]
      %v627 = vld [vmem:[%s398 + $0x50] sm:$0xf]
      %v628 = vld [vmem:[%s398 + $0x54] sm:$0xf]
      %v629 = vld [vmem:[%s398 + $0x58] sm:$0xf]
      %v630 = vld [vmem:[%s398 + $0x5c] sm:$0xf]
      %v631 = vld [vmem:[%s398 + $0x60] sm:$0xf]
      %v632 = vld [vmem:[%s398 + $0x64] sm:$0xf]
      %v633 = vld [vmem:[%s398 + $0x68] sm:$0xf]
      %v634 = vld [vmem:[%s398 + $0x6c] sm:$0xf]
      %v635 = vld [vmem:[%s398 + $0x70] sm:$0xf]
      %v636 = vld [vmem:[%s398 + $0x74] sm:$0xf]
      %v637 = vld [vmem:[%s398 + $0x78] sm:$0xf]
      %v638 = vld [vmem:[%s398 + $0x7c] sm:$0xf]
      %v639 = vld [vmem:[%s398 + $0x80] sm:$0xf]
      %v640 = vld [vmem:[%s398 + $0x84] sm:$0xf]
      %v641 = vld [vmem:[%s398 + $0x88] sm:$0xf]
      %v642 = vld [vmem:[%s398 + $0x8c] sm:$0xf]
      %v643 = vld [vmem:[%s398 + $0x90] sm:$0xf]
      %v644 = vld [vmem:[%s398 + $0x94] sm:$0xf]
      %v645 = vld [vmem:[%s398 + $0x98] sm:$0xf]
      %v646 = vld [vmem:[%s398 + $0x9c] sm:$0xf]
      %v647 = vld [vmem:[%s398 + $0xa0] sm:$0xf]
      %v648 = vld [vmem:[%s398 + $0xa4] sm:$0xf]
      %v649 = vld [vmem:[%s398 + $0xa8] sm:$0xf]
      %v650 = vld [vmem:[%s398 + $0xac] sm:$0xf]
      %v651 = vld [vmem:[%s398 + $0xb0] sm:$0xf]
      %v652 = vld [vmem:[%s398 + $0xb4] sm:$0xf]
      %v653 = vld [vmem:[%s398 + $0xb8] sm:$0xf]
      %v654 = vld [vmem:[%s398 + $0xbc] sm:$0xf]
      %v655 = vld [vmem:[%s398 + $0xc0] sm:$0xf]
      %v656 = vld [vmem:[%s398 + $0xc4] sm:$0xf]
      %v657 = vld [vmem:[%s398 + $0xc8] sm:$0xf]
      %v658 = vld [vmem:[%s398 + $0xcc] sm:$0xf]
      %v659 = vld [vmem:[%s398 + $0xd0] sm:$0xf]
      %v660 = vld [vmem:[%s398 + $0xd4] sm:$0xf]
      %v661 = vld [vmem:[%s398 + $0xd8] sm:$0xf]
      %v662 = vld [vmem:[%s398 + $0xdc] sm:$0xf]
      %v663 = vld [vmem:[%s398 + $0xe0] sm:$0xf]
      %v664 = vld [vmem:[%s398 + $0xe4] sm:$0xf]
      %v665 = vld [vmem:[%s398 + $0xe8] sm:$0xf]
      %v666 = vld [vmem:[%s398 + $0xec] sm:$0xf]
      %v667 = vld [vmem:[%s398 + $0xf0] sm:$0xf]
      %v668 = vld [vmem:[%s398 + $0xf4] sm:$0xf]
      %v669 = vld [vmem:[%s398 + $0xf8] sm:$0xf]
      %v670 = vld [vmem:[%s398 + $0xfc] sm:$0xf]
      %v671 = vld [vmem:[%s403] sm:$0xf]
      %v672 = vld [vmem:[%s403 + $0x4] sm:$0xf]
      %v673 = vld [vmem:[%s403 + $0x8] sm:$0xf]
      %v674 = vld [vmem:[%s403 + $0xc] sm:$0xf]
      %v675 = vld [vmem:[%s403 + $0x10] sm:$0xf]
      %v676 = vld [vmem:[%s403 + $0x14] sm:$0xf]
      %v677 = vld [vmem:[%s403 + $0x18] sm:$0xf]
      %v678 = vld [vmem:[%s403 + $0x1c] sm:$0xf]
      %v679 = vld [vmem:[%s403 + $0x20] sm:$0xf]
      %v680 = vld [vmem:[%s403 + $0x24] sm:$0xf]
      %v681 = vld [vmem:[%s403 + $0x28] sm:$0xf]
      %v682 = vld [vmem:[%s403 + $0x2c] sm:$0xf]
      %v683 = vld [vmem:[%s403 + $0x30] sm:$0xf]
      %v684 = vld [vmem:[%s403 + $0x34] sm:$0xf]
      %v685 = vld [vmem:[%s403 + $0x38] sm:$0xf]
      %v686 = vld [vmem:[%s403 + $0x3c] sm:$0xf]
      %v687 = vld [vmem:[%s403 + $0x40] sm:$0xf]
      %v688 = vld [vmem:[%s403 + $0x44] sm:$0xf]
      %v689 = vld [vmem:[%s403 + $0x48] sm:$0xf]
      %v690 = vld [vmem:[%s403 + $0x4c] sm:$0xf]
      %v691 = vld [vmem:[%s403 + $0x50] sm:$0xf]
      %v692 = vld [vmem:[%s403 + $0x54] sm:$0xf]
      %v693 = vld [vmem:[%s403 + $0x58] sm:$0xf]
      %v694 = vld [vmem:[%s403 + $0x5c] sm:$0xf]
      %v695 = vld [vmem:[%s403 + $0x60] sm:$0xf]
      %v696 = vld [vmem:[%s403 + $0x64] sm:$0xf]
      %v697 = vld [vmem:[%s403 + $0x68] sm:$0xf]
      %v698 = vld [vmem:[%s403 + $0x6c] sm:$0xf]
      %v699 = vld [vmem:[%s403 + $0x70] sm:$0xf]
      %v700 = vld [vmem:[%s403 + $0x74] sm:$0xf]
      %v701 = vld [vmem:[%s403 + $0x78] sm:$0xf]
      %v702 = vld [vmem:[%s403 + $0x7c] sm:$0xf]
      %v703 = vld [vmem:[%s403 + $0x80] sm:$0xf]
      %v704 = vld [vmem:[%s403 + $0x84] sm:$0xf]
      %v705 = vld [vmem:[%s403 + $0x88] sm:$0xf]
      %v706 = vld [vmem:[%s403 + $0x8c] sm:$0xf]
      %v707 = vld [vmem:[%s403 + $0x90] sm:$0xf]
      %v708 = vld [vmem:[%s403 + $0x94] sm:$0xf]
      %v709 = vld [vmem:[%s403 + $0x98] sm:$0xf]
      %v710 = vld [vmem:[%s403 + $0x9c] sm:$0xf]
      %v711 = vld [vmem:[%s403 + $0xa0] sm:$0xf]
      %v712 = vld [vmem:[%s403 + $0xa4] sm:$0xf]
      %v713 = vld [vmem:[%s403 + $0xa8] sm:$0xf]
      %v714 = vld [vmem:[%s403 + $0xac] sm:$0xf]
      %v715 = vld [vmem:[%s403 + $0xb0] sm:$0xf]
      %v716 = vld [vmem:[%s403 + $0xb4] sm:$0xf]
      %v717 = vld [vmem:[%s403 + $0xb8] sm:$0xf]
      %v718 = vld [vmem:[%s403 + $0xbc] sm:$0xf]
      %v719 = vld [vmem:[%s403 + $0xc0] sm:$0xf]
      %v720 = vld [vmem:[%s403 + $0xc4] sm:$0xf]
      %v721 = vld [vmem:[%s403 + $0xc8] sm:$0xf]
      %v722 = vld [vmem:[%s403 + $0xcc] sm:$0xf]
      %v723 = vld [vmem:[%s403 + $0xd0] sm:$0xf]
      %v724 = vld [vmem:[%s403 + $0xd4] sm:$0xf]
      %v725 = vld [vmem:[%s403 + $0xd8] sm:$0xf]
      %v726 = vld [vmem:[%s403 + $0xdc] sm:$0xf]
      %v727 = vld [vmem:[%s403 + $0xe0] sm:$0xf]
      %v728 = vld [vmem:[%s403 + $0xe4] sm:$0xf]
      %v729 = vld [vmem:[%s403 + $0xe8] sm:$0xf]
      %v730 = vld [vmem:[%s403 + $0xec] sm:$0xf]
      %v731 = vld [vmem:[%s403 + $0xf0] sm:$0xf]
      %v732 = vld [vmem:[%s403 + $0xf4] sm:$0xf]
      %v733 = vld [vmem:[%s403 + $0xf8] sm:$0xf]
      %v734 = vld [vmem:[%s403 + $0xfc] sm:$0xf]
      %v735 = vld [vmem:[%s0] sm:$0x1]
      %v736 = vld [vmem:[%s0 + $0x1] sm:$0x1]
      %v737 = vld [vmem:[%s0 + $0x2] sm:$0x1]
      %v738 = vld [vmem:[%s0 + $0x3] sm:$0x1]
      %v739 = vld [vmem:[%s0 + $0x4] sm:$0x1]
      %v740 = vld [vmem:[%s0 + $0x5] sm:$0x1]
      %v741 = vld [vmem:[%s0 + $0x6] sm:$0x1]
      %v742 = vld [vmem:[%s0 + $0x7] sm:$0x1]
      %v743 = vld [vmem:[%s1] sm:$0x1]
      %v752 = vunpack.c.l.b16 %v415
      %v753 = vunpack.c.l.b16 %v416
      %v754 = vunpack.c.l.b16 %v417
      %v755 = vunpack.c.l.b16 %v418
      %v756 = vunpack.c.l.b16 %v419
      %v757 = vunpack.c.l.b16 %v420
      %v758 = vunpack.c.l.b16 %v421
      %v759 = vunpack.c.l.b16 %v422
      %v760 = vpack.c.b16 %v753, %v752
      %v761 = vpack.c.b16 %v755, %v754
      %v762 = vpack.c.b16 %v757, %v756
      %v763 = vpack.c.b16 %v759, %v758
      %v772 = vunpack.c.l.b16 %v543
      %v773 = vunpack.c.l.b16 %v544
      %v774 = vunpack.c.l.b16 %v545
      %v775 = vunpack.c.l.b16 %v546
      %v776 = vunpack.c.l.b16 %v547
      %v777 = vunpack.c.l.b16 %v548
      %v778 = vunpack.c.l.b16 %v549
      %v779 = vunpack.c.l.b16 %v550
      %v780 = vpack.c.b16 %v773, %v772
      %v781 = vpack.c.b16 %v775, %v774
      %v782 = vpack.c.b16 %v777, %v776
      %v783 = vpack.c.b16 %v779, %v778
      %vm784 = vcmask 15360
      %v786 = vsel %vm784, %v760, 0
      %v789 = vsel %vm784, %v761, 0
      %v792 = vsel %vm784, %v762, 0
      %v795 = vsel %vm784, %v763, 0
      %v798 = vsel %vm784, %v780, 0
      %v801 = vsel %vm784, %v781, 0
      %v804 = vsel %vm784, %v782, 0
      %v807 = vsel %vm784, %v783, 0
      %809 = vmatprep.subr.bf16.mxu0 0
      %810 = vmatpush1.bf16.xpose.msra.mxu0 0
      %811 = vmatprep.subr.bf16.mxu0 0
      %812 = vmatpush1.bf16.xpose.msra.mxu0 0
      %813 = vmatprep.subr.bf16.mxu0 0
      %814 = vmatpush1.bf16.xpose.msra.mxu0 0
      %815 = vmatprep.subr.bf16.mxu0 0
      %816 = vmatpush1.bf16.xpose.msra.mxu0 0
      %817 = vmatprep.subr.bf16.mxu0 0
      %818 = vmatpush1.bf16.xpose.msra.mxu0 %v807
      %819 = vmatprep.subr.bf16.mxu0 0
      %820 = vmatpush1.bf16.xpose.msra.mxu0 %v804
      %821 = vmatprep.subr.bf16.mxu0 0
      %822 = vmatpush1.bf16.xpose.msra.mxu0 %v801
      %823 = vmatprep.subr.bf16.mxu0 0
      %824 = vmatpush1.bf16.xpose.msra.mxu0 %v798
      %825 = vmatprep.subr.bf16.mxu0 0
      %826 = vmatpush2.bf16.xpose.msra.mxu0 0
      %827 = vmatprep.subr.bf16.mxu0 0
      %828 = vmatpush2.bf16.xpose.msra.mxu0 0
      %829 = vmatprep.subr.bf16.mxu0 0
      %830 = vmatpush2.bf16.xpose.msra.mxu0 0
      %831 = vmatprep.subr.bf16.mxu0 0
      %832 = vmatpush2.bf16.xpose.msra.mxu0 0
      %833 = vmatprep.subr.bf16.mxu0 0
      %834 = vmatpush2.bf16.xpose.msra.mxu0 0
      %835 = vmatprep.subr.bf16.mxu0 0
      %836 = vmatpush2.bf16.xpose.msra.mxu0 0
      %837 = vmatprep.subr.bf16.mxu0 0
      %838 = vmatpush2.bf16.xpose.msra.mxu0 0
      %839 = vmatprep.subr.bf16.mxu0 0
      %840 = vmatpush2.bf16.xpose.msra.mxu0 0
      %841 = vmatprep.mubr.bf16.mxu0 0
      %842 = vmatmul.mubr.bf16.gmra.mxu0 %v786
      %v843 = vpop.f32.mrf.mxu0
      %v844 = vadd.f32 0.0, %v843
      %v845 = vpop.f32.mrf.mxu0
      %v846 = vpop.f32.mrf.mxu0
      %v847 = vadd.f32 0.0, %v846
      %v848 = vpop.f32.mrf.mxu0
      %849 = vmatprep.mubr.bf16.mxu0 0
      %850 = vmatmul.mubr.bf16.gmra.mxu0 %v789
      %v851 = vpop.f32.mrf.mxu0
      %v852 = vadd.f32 0.0, %v851
      %v853 = vpop.f32.mrf.mxu0
      %v854 = vpop.f32.mrf.mxu0
      %v855 = vadd.f32 0.0, %v854
      %v856 = vpop.f32.mrf.mxu0
      %857 = vmatprep.mubr.bf16.mxu0 0
      %858 = vmatmul.mubr.bf16.gmra.mxu0 %v792
      %v859 = vpop.f32.mrf.mxu0
      %v860 = vadd.f32 0.0, %v859
      %v861 = vpop.f32.mrf.mxu0
      %v862 = vpop.f32.mrf.mxu0
      %v863 = vadd.f32 0.0, %v862
      %v864 = vpop.f32.mrf.mxu0
      %865 = vmatprep.mubr.bf16.mxu0 0
      %866 = vmatmul.mubr.bf16.gmra.mxu0 %v795
      %v867 = vpop.f32.mrf.mxu0
      %v868 = vadd.f32 0.0, %v867
      %v869 = vpop.f32.mrf.mxu0
      %v870 = vpop.f32.mrf.mxu0
      %v871 = vadd.f32 0.0, %v870
      %v872 = vpop.f32.mrf.mxu0
      %873 = vdwg.mxu0
      %v882 = vunpack.c.l.b16 %v423
      %v883 = vunpack.c.l.b16 %v424
      %v884 = vunpack.c.l.b16 %v425
      %v885 = vunpack.c.l.b16 %v426
      %v886 = vunpack.c.l.b16 %v427
      %v887 = vunpack.c.l.b16 %v428
      %v888 = vunpack.c.l.b16 %v429
      %v889 = vunpack.c.l.b16 %v430
      %v890 = vpack.c.b16 %v883, %v882
      %v891 = vpack.c.b16 %v885, %v884
      %v892 = vpack.c.b16 %v887, %v886
      %v893 = vpack.c.b16 %v889, %v888
      %v902 = vunpack.c.l.b16 %v551
      %v903 = vunpack.c.l.b16 %v552
      %v904 = vunpack.c.l.b16 %v553
      %v905 = vunpack.c.l.b16 %v554
      %v906 = vunpack.c.l.b16 %v555
      %v907 = vunpack.c.l.b16 %v556
      %v908 = vunpack.c.l.b16 %v557
      %v909 = vunpack.c.l.b16 %v558
      %v910 = vpack.c.b16 %v903, %v902
      %v911 = vpack.c.b16 %v905, %v904
      %v912 = vpack.c.b16 %v907, %v906
      %v913 = vpack.c.b16 %v909, %v908
      %v915 = vsel %vm784, %v890, 0
      %v918 = vsel %vm784, %v891, 0
      %v921 = vsel %vm784, %v892, 0
      %v924 = vsel %vm784, %v893, 0
      %v927 = vsel %vm784, %v910, 0
      %v930 = vsel %vm784, %v911, 0
      %v933 = vsel %vm784, %v912, 0
      %v936 = vsel %vm784, %v913, 0
      %938 = vmatprep.subr.bf16.mxu0 0
      %939 = vmatpush1.bf16.xpose.msra.mxu0 0
      %940 = vmatprep.subr.bf16.mxu0 0
      %941 = vmatpush1.bf16.xpose.msra.mxu0 0
      %942 = vmatprep.subr.bf16.mxu0 0
      %943 = vmatpush1.bf16.xpose.msra.mxu0 0
      %944 = vmatprep.subr.bf16.mxu0 0
      %945 = vmatpush1.bf16.xpose.msra.mxu0 0
      %946 = vmatprep.subr.bf16.mxu0 0
      %947 = vmatpush1.bf16.xpose.msra.mxu0 %v936
      %948 = vmatprep.subr.bf16.mxu0 0
      %949 = vmatpush1.bf16.xpose.msra.mxu0 %v933
      %950 = vmatprep.subr.bf16.mxu0 0
      %951 = vmatpush1.bf16.xpose.msra.mxu0 %v930
      %952 = vmatprep.subr.bf16.mxu0 0
      %953 = vmatpush1.bf16.xpose.msra.mxu0 %v927
      %954 = vmatprep.subr.bf16.mxu0 0
      %955 = vmatpush2.bf16.xpose.msra.mxu0 0
      %956 = vmatprep.subr.bf16.mxu0 0
      %957 = vmatpush2.bf16.xpose.msra.mxu0 0
      %958 = vmatprep.subr.bf16.mxu0 0
      %959 = vmatpush2.bf16.xpose.msra.mxu0 0
      %960 = vmatprep.subr.bf16.mxu0 0
      %961 = vmatpush2.bf16.xpose.msra.mxu0 0
      %962 = vmatprep.subr.bf16.mxu0 0
      %963 = vmatpush2.bf16.xpose.msra.mxu0 0
      %964 = vmatprep.subr.bf16.mxu0 0
      %965 = vmatpush2.bf16.xpose.msra.mxu0 0
      %966 = vmatprep.subr.bf16.mxu0 0
      %967 = vmatpush2.bf16.xpose.msra.mxu0 0
      %968 = vmatprep.subr.bf16.mxu0 0
      %969 = vmatpush2.bf16.xpose.msra.mxu0 0
      %970 = vmatprep.mubr.bf16.mxu0 0
      %971 = vmatmul.mubr.bf16.gmra.mxu0 %v915
      %v972 = vpop.f32.mrf.mxu0
      %v973 = vadd.f32 0.0, %v972
      %v974 = vpop.f32.mrf.mxu0
      %v975 = vpop.f32.mrf.mxu0
      %v976 = vadd.f32 0.0, %v975
      %v977 = vpop.f32.mrf.mxu0
      %978 = vmatprep.mubr.bf16.mxu0 0
      %979 = vmatmul.mubr.bf16.gmra.mxu0 %v918
      %v980 = vpop.f32.mrf.mxu0
      %v981 = vadd.f32 0.0, %v980
      %v982 = vpop.f32.mrf.mxu0
      %v983 = vpop.f32.mrf.mxu0
      %v984 = vadd.f32 0.0, %v983
      %v985 = vpop.f32.mrf.mxu0
      %986 = vmatprep.mubr.bf16.mxu0 0
      %987 = vmatmul.mubr.bf16.gmra.mxu0 %v921
      %v988 = vpop.f32.mrf.mxu0
      %v989 = vadd.f32 0.0, %v988
      %v990 = vpop.f32.mrf.mxu0
      %v991 = vpop.f32.mrf.mxu0
      %v992 = vadd.f32 0.0, %v991
      %v993 = vpop.f32.mrf.mxu0
      %994 = vmatprep.mubr.bf16.mxu0 0
      %995 = vmatmul.mubr.bf16.gmra.mxu0 %v924
      %v996 = vpop.f32.mrf.mxu0
      %v997 = vadd.f32 0.0, %v996
      %v998 = vpop.f32.mrf.mxu0
      %v999 = vpop.f32.mrf.mxu0
      %v1000 = vadd.f32 0.0, %v999
      %v1001 = vpop.f32.mrf.mxu0
      %1002 = vdwg.mxu0
      %v1011 = vunpack.c.l.b16 %v431
      %v1012 = vunpack.c.l.b16 %v432
      %v1013 = vunpack.c.l.b16 %v433
      %v1014 = vunpack.c.l.b16 %v434
      %v1015 = vunpack.c.l.b16 %v435
      %v1016 = vunpack.c.l.b16 %v436
      %v1017 = vunpack.c.l.b16 %v437
      %v1018 = vunpack.c.l.b16 %v438
      %v1019 = vpack.c.b16 %v1012, %v1011
      %v1020 = vpack.c.b16 %v1014, %v1013
      %v1021 = vpack.c.b16 %v1016, %v1015
      %v1022 = vpack.c.b16 %v1018, %v1017
      %v1031 = vunpack.c.l.b16 %v559
      %v1032 = vunpack.c.l.b16 %v560
      %v1033 = vunpack.c.l.b16 %v561
      %v1034 = vunpack.c.l.b16 %v562
      %v1035 = vunpack.c.l.b16 %v563
      %v1036 = vunpack.c.l.b16 %v564
      %v1037 = vunpack.c.l.b16 %v565
      %v1038 = vunpack.c.l.b16 %v566
      %v1039 = vpack.c.b16 %v1032, %v1031
      %v1040 = vpack.c.b16 %v1034, %v1033
      %v1041 = vpack.c.b16 %v1036, %v1035
      %v1042 = vpack.c.b16 %v1038, %v1037
      %v1044 = vsel %vm784, %v1019, 0
      %v1047 = vsel %vm784, %v1020, 0
      %v1050 = vsel %vm784, %v1021, 0
      %v1053 = vsel %vm784, %v1022, 0
      %v1056 = vsel %vm784, %v1039, 0
      %v1059 = vsel %vm784, %v1040, 0
      %v1062 = vsel %vm784, %v1041, 0
      %v1065 = vsel %vm784, %v1042, 0
      %1067 = vmatprep.subr.bf16.mxu0 0
      %1068 = vmatpush1.bf16.xpose.msra.mxu0 0
      %1069 = vmatprep.subr.bf16.mxu0 0
      %1070 = vmatpush1.bf16.xpose.msra.mxu0 0
      %1071 = vmatprep.subr.bf16.mxu0 0
      %1072 = vmatpush1.bf16.xpose.msra.mxu0 0
      %1073 = vmatprep.subr.bf16.mxu0 0
      %1074 = vmatpush1.bf16.xpose.msra.mxu0 0
      %1075 = vmatprep.subr.bf16.mxu0 0
      %1076 = vmatpush1.bf16.xpose.msra.mxu0 %v1065
      %1077 = vmatprep.subr.bf16.mxu0 0
      %1078 = vmatpush1.bf16.xpose.msra.mxu0 %v1062
      %1079 = vmatprep.subr.bf16.mxu0 0
      %1080 = vmatpush1.bf16.xpose.msra.mxu0 %v1059
      %1081 = vmatprep.subr.bf16.mxu0 0
      %1082 = vmatpush1.bf16.xpose.msra.mxu0 %v1056
      %1083 = vmatprep.subr.bf16.mxu0 0
      %1084 = vmatpush2.bf16.xpose.msra.mxu0 0
      %1085 = vmatprep.subr.bf16.mxu0 0
      %1086 = vmatpush2.bf16.xpose.msra.mxu0 0
      %1087 = vmatprep.subr.bf16.mxu0 0
      %1088 = vmatpush2.bf16.xpose.msra.mxu0 0
      %1089 = vmatprep.subr.bf16.mxu0 0
      %1090 = vmatpush2.bf16.xpose.msra.mxu0 0
      %1091 = vmatprep.subr.bf16.mxu0 0
      %1092 = vmatpush2.bf16.xpose.msra.mxu0 0
      %1093 = vmatprep.subr.bf16.mxu0 0
      %1094 = vmatpush2.bf16.xpose.msra.mxu0 0
      %1095 = vmatprep.subr.bf16.mxu0 0
      %1096 = vmatpush2.bf16.xpose.msra.mxu0 0
      %1097 = vmatprep.subr.bf16.mxu0 0
      %1098 = vmatpush2.bf16.xpose.msra.mxu0 0
      %1099 = vmatprep.mubr.bf16.mxu0 0
      %1100 = vmatmul.mubr.bf16.gmra.mxu0 %v1044
      %v1101 = vpop.f32.mrf.mxu0
      %v1102 = vadd.f32 0.0, %v1101
      %v1103 = vpop.f32.mrf.mxu0
      %v1104 = vpop.f32.mrf.mxu0
      %v1105 = vadd.f32 0.0, %v1104
      %v1106 = vpop.f32.mrf.mxu0
      %1107 = vmatprep.mubr.bf16.mxu0 0
      %1108 = vmatmul.mubr.bf16.gmra.mxu0 %v1047
      %v1109 = vpop.f32.mrf.mxu0
      %v1110 = vadd.f32 0.0, %v1109
      %v1111 = vpop.f32.mrf.mxu0
      %v1112 = vpop.f32.mrf.mxu0
      %v1113 = vadd.f32 0.0, %v1112
      %v1114 = vpop.f32.mrf.mxu0
      %1115 = vmatprep.mubr.bf16.mxu0 0
      %1116 = vmatmul.mubr.bf16.gmra.mxu0 %v1050
      %v1117 = vpop.f32.mrf.mxu0
      %v1118 = vadd.f32 0.0, %v1117
      %v1119 = vpop.f32.mrf.mxu0
      %v1120 = vpop.f32.mrf.mxu0
      %v1121 = vadd.f32 0.0, %v1120
      %v1122 = vpop.f32.mrf.mxu0
      %1123 = vmatprep.mubr.bf16.mxu0 0
      %1124 = vmatmul.mubr.bf16.gmra.mxu0 %v1053
      %v1125 = vpop.f32.mrf.mxu0
      %v1126 = vadd.f32 0.0, %v1125
      %v1127 = vpop.f32.mrf.mxu0
      %v1128 = vpop.f32.mrf.mxu0
      %v1129 = vadd.f32 0.0, %v1128
      %v1130 = vpop.f32.mrf.mxu0
      %1131 = vdwg.mxu0
      %v1140 = vunpack.c.l.b16 %v439
      %v1141 = vunpack.c.l.b16 %v440
      %v1142 = vunpack.c.l.b16 %v441
      %v1143 = vunpack.c.l.b16 %v442
      %v1144 = vunpack.c.l.b16 %v443
      %v1145 = vunpack.c.l.b16 %v444
      %v1146 = vunpack.c.l.b16 %v445
      %v1147 = vunpack.c.l.b16 %v446
      %v1148 = vpack.c.b16 %v1141, %v1140
      %v1149 = vpack.c.b16 %v1143, %v1142
      %v1150 = vpack.c.b16 %v1145, %v1144
      %v1151 = vpack.c.b16 %v1147, %v1146
      %v1160 = vunpack.c.l.b16 %v567
      %v1161 = vunpack.c.l.b16 %v568
      %v1162 = vunpack.c.l.b16 %v569
      %v1163 = vunpack.c.l.b16 %v570
      %v1164 = vunpack.c.l.b16 %v571
      %v1165 = vunpack.c.l.b16 %v572
      %v1166 = vunpack.c.l.b16 %v573
      %v1167 = vunpack.c.l.b16 %v574
      %v1168 = vpack.c.b16 %v1161, %v1160
      %v1169 = vpack.c.b16 %v1163, %v1162
      %v1170 = vpack.c.b16 %v1165, %v1164
      %v1171 = vpack.c.b16 %v1167, %v1166
      %v1173 = vsel %vm784, %v1148, 0
      %v1176 = vsel %vm784, %v1149, 0
      %v1179 = vsel %vm784, %v1150, 0
      %v1182 = vsel %vm784, %v1151, 0
      %v1185 = vsel %vm784, %v1168, 0
      %v1188 = vsel %vm784, %v1169, 0
      %v1191 = vsel %vm784, %v1170, 0
      %v1194 = vsel %vm784, %v1171, 0
      %1196 = vmatprep.subr.bf16.mxu0 0
      %1197 = vmatpush1.bf16.xpose.msra.mxu0 0
      %1198 = vmatprep.subr.bf16.mxu0 0
      %1199 = vmatpush1.bf16.xpose.msra.mxu0 0
      %1200 = vmatprep.subr.bf16.mxu0 0
      %1201 = vmatpush1.bf16.xpose.msra.mxu0 0
      %1202 = vmatprep.subr.bf16.mxu0 0
      %1203 = vmatpush1.bf16.xpose.msra.mxu0 0
      %1204 = vmatprep.subr.bf16.mxu0 0
      %1205 = vmatpush1.bf16.xpose.msra.mxu0 %v1194
      %1206 = vmatprep.subr.bf16.mxu0 0
      %1207 = vmatpush1.bf16.xpose.msra.mxu0 %v1191
      %1208 = vmatprep.subr.bf16.mxu0 0
      %1209 = vmatpush1.bf16.xpose.msra.mxu0 %v1188
      %1210 = vmatprep.subr.bf16.mxu0 0
      %1211 = vmatpush1.bf16.xpose.msra.mxu0 %v1185
      %1212 = vmatprep.subr.bf16.mxu0 0
      %1213 = vmatpush2.bf16.xpose.msra.mxu0 0
      %1214 = vmatprep.subr.bf16.mxu0 0
      %1215 = vmatpush2.bf16.xpose.msra.mxu0 0
      %1216 = vmatprep.subr.bf16.mxu0 0
      %1217 = vmatpush2.bf16.xpose.msra.mxu0 0
      %1218 = vmatprep.subr.bf16.mxu0 0
      %1219 = vmatpush2.bf16.xpose.msra.mxu0 0
      %1220 = vmatprep.subr.bf16.mxu0 0
      %1221 = vmatpush2.bf16.xpose.msra.mxu0 0
      %1222 = vmatprep.subr.bf16.mxu0 0
      %1223 = vmatpush2.bf16.xpose.msra.mxu0 0
      %1224 = vmatprep.subr.bf16.mxu0 0
      %1225 = vmatpush2.bf16.xpose.msra.mxu0 0
      %1226 = vmatprep.subr.bf16.mxu0 0
      %1227 = vmatpush2.bf16.xpose.msra.mxu0 0
      %1228 = vmatprep.mubr.bf16.mxu0 0
      %1229 = vmatmul.mubr.bf16.gmra.mxu0 %v1173
      %v1230 = vpop.f32.mrf.mxu0
      %v1231 = vadd.f32 0.0, %v1230
      %v1232 = vpop.f32.mrf.mxu0
      %v1233 = vpop.f32.mrf.mxu0
      %v1234 = vadd.f32 0.0, %v1233
      %v1235 = vpop.f32.mrf.mxu0
      %1236 = vmatprep.mubr.bf16.mxu0 0
      %1237 = vmatmul.mubr.bf16.gmra.mxu0 %v1176
      %v1238 = vpop.f32.mrf.mxu0
      %v1239 = vadd.f32 0.0, %v1238
      %v1240 = vpop.f32.mrf.mxu0
      %v1241 = vpop.f32.mrf.mxu0
      %v1242 = vadd.f32 0.0, %v1241
      %v1243 = vpop.f32.mrf.mxu0
      %1244 = vmatprep.mubr.bf16.mxu0 0
      %1245 = vmatmul.mubr.bf16.gmra.mxu0 %v1179
      %v1246 = vpop.f32.mrf.mxu0
      %v1247 = vadd.f32 0.0, %v1246
      %v1248 = vpop.f32.mrf.mxu0
      %v1249 = vpop.f32.mrf.mxu0
      %v1250 = vadd.f32 0.0, %v1249
      %v1251 = vpop.f32.mrf.mxu0
      %1252 = vmatprep.mubr.bf16.mxu0 0
      %1253 = vmatmul.mubr.bf16.gmra.mxu0 %v1182
      %v1254 = vpop.f32.mrf.mxu0
      %v1255 = vadd.f32 0.0, %v1254
      %v1256 = vpop.f32.mrf.mxu0
      %v1257 = vpop.f32.mrf.mxu0
      %v1258 = vadd.f32 0.0, %v1257
      %v1259 = vpop.f32.mrf.mxu0
      %1260 = vdwg.mxu0
      %v1269 = vunpack.c.l.b16 %v447
      %v1270 = vunpack.c.l.b16 %v448
      %v1271 = vunpack.c.l.b16 %v449
      %v1272 = vunpack.c.l.b16 %v450
      %v1273 = vunpack.c.l.b16 %v451
      %v1274 = vunpack.c.l.b16 %v452
      %v1275 = vunpack.c.l.b16 %v453
      %v1276 = vunpack.c.l.b16 %v454
      %v1277 = vpack.c.b16 %v1270, %v1269
      %v1278 = vpack.c.b16 %v1272, %v1271
      %v1279 = vpack.c.b16 %v1274, %v1273
      %v1280 = vpack.c.b16 %v1276, %v1275
      %v1289 = vunpack.c.l.b16 %v575
      %v1290 = vunpack.c.l.b16 %v576
      %v1291 = vunpack.c.l.b16 %v577
      %v1292 = vunpack.c.l.b16 %v578
      %v1293 = vunpack.c.l.b16 %v579
      %v1294 = vunpack.c.l.b16 %v580
      %v1295 = vunpack.c.l.b16 %v581
      %v1296 = vunpack.c.l.b16 %v582
      %v1297 = vpack.c.b16 %v1290, %v1289
      %v1298 = vpack.c.b16 %v1292, %v1291
      %v1299 = vpack.c.b16 %v1294, %v1293
      %v1300 = vpack.c.b16 %v1296, %v1295
      %v1302 = vsel %vm784, %v1277, 0
      %v1305 = vsel %vm784, %v1278, 0
      %v1308 = vsel %vm784, %v1279, 0
      %v1311 = vsel %vm784, %v1280, 0
      %v1314 = vsel %vm784, %v1297, 0
      %v1317 = vsel %vm784, %v1298, 0
      %v1320 = vsel %vm784, %v1299, 0
      %v1323 = vsel %vm784, %v1300, 0
      %1325 = vmatprep.subr.bf16.mxu0 0
      %1326 = vmatpush1.bf16.xpose.msra.mxu0 0
      %1327 = vmatprep.subr.bf16.mxu0 0
      %1328 = vmatpush1.bf16.xpose.msra.mxu0 0
      %1329 = vmatprep.subr.bf16.mxu0 0
      %1330 = vmatpush1.bf16.xpose.msra.mxu0 0
      %1331 = vmatprep.subr.bf16.mxu0 0
      %1332 = vmatpush1.bf16.xpose.msra.mxu0 0
      %1333 = vmatprep.subr.bf16.mxu0 0
      %1334 = vmatpush1.bf16.xpose.msra.mxu0 %v1323
      %1335 = vmatprep.subr.bf16.mxu0 0
      %1336 = vmatpush1.bf16.xpose.msra.mxu0 %v1320
      %1337 = vmatprep.subr.bf16.mxu0 0
      %1338 = vmatpush1.bf16.xpose.msra.mxu0 %v1317
      %1339 = vmatprep.subr.bf16.mxu0 0
      %1340 = vmatpush1.bf16.xpose.msra.mxu0 %v1314
      %1341 = vmatprep.subr.bf16.mxu0 0
      %1342 = vmatpush2.bf16.xpose.msra.mxu0 0
      %1343 = vmatprep.subr.bf16.mxu0 0
      %1344 = vmatpush2.bf16.xpose.msra.mxu0 0
      %1345 = vmatprep.subr.bf16.mxu0 0
      %1346 = vmatpush2.bf16.xpose.msra.mxu0 0
      %1347 = vmatprep.subr.bf16.mxu0 0
      %1348 = vmatpush2.bf16.xpose.msra.mxu0 0
      %1349 = vmatprep.subr.bf16.mxu0 0
      %1350 = vmatpush2.bf16.xpose.msra.mxu0 0
      %1351 = vmatprep.subr.bf16.mxu0 0
      %1352 = vmatpush2.bf16.xpose.msra.mxu0 0
      %1353 = vmatprep.subr.bf16.mxu0 0
      %1354 = vmatpush2.bf16.xpose.msra.mxu0 0
      %1355 = vmatprep.subr.bf16.mxu0 0
      %1356 = vmatpush2.bf16.xpose.msra.mxu0 0
      %1357 = vmatprep.mubr.bf16.mxu0 0
      %1358 = vmatmul.mubr.bf16.gmra.mxu0 %v1302
      %v1359 = vpop.f32.mrf.mxu0
      %v1360 = vadd.f32 0.0, %v1359
      %v1361 = vpop.f32.mrf.mxu0
      %v1362 = vpop.f32.mrf.mxu0
      %v1363 = vadd.f32 0.0, %v1362
      %v1364 = vpop.f32.mrf.mxu0
      %1365 = vmatprep.mubr.bf16.mxu0 0
      %1366 = vmatmul.mubr.bf16.gmra.mxu0 %v1305
      %v1367 = vpop.f32.mrf.mxu0
      %v1368 = vadd.f32 0.0, %v1367
      %v1369 = vpop.f32.mrf.mxu0
      %v1370 = vpop.f32.mrf.mxu0
      %v1371 = vadd.f32 0.0, %v1370
      %v1372 = vpop.f32.mrf.mxu0
      %1373 = vmatprep.mubr.bf16.mxu0 0
      %1374 = vmatmul.mubr.bf16.gmra.mxu0 %v1308
      %v1375 = vpop.f32.mrf.mxu0
      %v1376 = vadd.f32 0.0, %v1375
      %v1377 = vpop.f32.mrf.mxu0
      %v1378 = vpop.f32.mrf.mxu0
      %v1379 = vadd.f32 0.0, %v1378
      %v1380 = vpop.f32.mrf.mxu0
      %1381 = vmatprep.mubr.bf16.mxu0 0
      %1382 = vmatmul.mubr.bf16.gmra.mxu0 %v1311
      %v1383 = vpop.f32.mrf.mxu0
      %v1384 = vadd.f32 0.0, %v1383
      %v1385 = vpop.f32.mrf.mxu0
      %v1386 = vpop.f32.mrf.mxu0
      %v1387 = vadd.f32 0.0, %v1386
      %v1388 = vpop.f32.mrf.mxu0
      %1389 = vdwg.mxu0
      %v1398 = vunpack.c.l.b16 %v455
      %v1399 = vunpack.c.l.b16 %v456
      %v1400 = vunpack.c.l.b16 %v457
      %v1401 = vunpack.c.l.b16 %v458
      %v1402 = vunpack.c.l.b16 %v459
      %v1403 = vunpack.c.l.b16 %v460
      %v1404 = vunpack.c.l.b16 %v461
      %v1405 = vunpack.c.l.b16 %v462
      %v1406 = vpack.c.b16 %v1399, %v1398
      %v1407 = vpack.c.b16 %v1401, %v1400
      %v1408 = vpack.c.b16 %v1403, %v1402
      %v1409 = vpack.c.b16 %v1405, %v1404
      %v1418 = vunpack.c.l.b16 %v583
      %v1419 = vunpack.c.l.b16 %v584
      %v1420 = vunpack.c.l.b16 %v585
      %v1421 = vunpack.c.l.b16 %v586
      %v1422 = vunpack.c.l.b16 %v587
      %v1423 = vunpack.c.l.b16 %v588
      %v1424 = vunpack.c.l.b16 %v589
      %v1425 = vunpack.c.l.b16 %v590
      %v1426 = vpack.c.b16 %v1419, %v1418
      %v1427 = vpack.c.b16 %v1421, %v1420
      %v1428 = vpack.c.b16 %v1423, %v1422
      %v1429 = vpack.c.b16 %v1425, %v1424
      %v1431 = vsel %vm784, %v1406, 0
      %v1434 = vsel %vm784, %v1407, 0
      %v1437 = vsel %vm784, %v1408, 0
      %v1440 = vsel %vm784, %v1409, 0
      %v1443 = vsel %vm784, %v1426, 0
      %v1446 = vsel %vm784, %v1427, 0
      %v1449 = vsel %vm784, %v1428, 0
      %v1452 = vsel %vm784, %v1429, 0
      %1454 = vmatprep.subr.bf16.mxu0 0
      %1455 = vmatpush1.bf16.xpose.msra.mxu0 0
      %1456 = vmatprep.subr.bf16.mxu0 0
      %1457 = vmatpush1.bf16.xpose.msra.mxu0 0
      %1458 = vmatprep.subr.bf16.mxu0 0
      %1459 = vmatpush1.bf16.xpose.msra.mxu0 0
      %1460 = vmatprep.subr.bf16.mxu0 0
      %1461 = vmatpush1.bf16.xpose.msra.mxu0 0
      %1462 = vmatprep.subr.bf16.mxu0 0
      %1463 = vmatpush1.bf16.xpose.msra.mxu0 %v1452
      %1464 = vmatprep.subr.bf16.mxu0 0
      %1465 = vmatpush1.bf16.xpose.msra.mxu0 %v1449
      %1466 = vmatprep.subr.bf16.mxu0 0
      %1467 = vmatpush1.bf16.xpose.msra.mxu0 %v1446
      %1468 = vmatprep.subr.bf16.mxu0 0
      %1469 = vmatpush1.bf16.xpose.msra.mxu0 %v1443
      %1470 = vmatprep.subr.bf16.mxu0 0
      %1471 = vmatpush2.bf16.xpose.msra.mxu0 0
      %1472 = vmatprep.subr.bf16.mxu0 0
      %1473 = vmatpush2.bf16.xpose.msra.mxu0 0
      %1474 = vmatprep.subr.bf16.mxu0 0
      %1475 = vmatpush2.bf16.xpose.msra.mxu0 0
      %1476 = vmatprep.subr.bf16.mxu0 0
      %1477 = vmatpush2.bf16.xpose.msra.mxu0 0
      %1478 = vmatprep.subr.bf16.mxu0 0
      %1479 = vmatpush2.bf16.xpose.msra.mxu0 0
      %1480 = vmatprep.subr.bf16.mxu0 0
      %1481 = vmatpush2.bf16.xpose.msra.mxu0 0
      %1482 = vmatprep.subr.bf16.mxu0 0
      %1483 = vmatpush2.bf16.xpose.msra.mxu0 0
      %1484 = vmatprep.subr.bf16.mxu0 0
      %1485 = vmatpush2.bf16.xpose.msra.mxu0 0
      %1486 = vmatprep.mubr.bf16.mxu0 0
      %1487 = vmatmul.mubr.bf16.gmra.mxu0 %v1431
      %v1488 = vpop.f32.mrf.mxu0
      %v1489 = vadd.f32 0.0, %v1488
      %v1490 = vpop.f32.mrf.mxu0
      %v1491 = vpop.f32.mrf.mxu0
      %v1492 = vadd.f32 0.0, %v1491
      %v1493 = vpop.f32.mrf.mxu0
      %1494 = vmatprep.mubr.bf16.mxu0 0
      %1495 = vmatmul.mubr.bf16.gmra.mxu0 %v1434
      %v1496 = vpop.f32.mrf.mxu0
      %v1497 = vadd.f32 0.0, %v1496
      %v1498 = vpop.f32.mrf.mxu0
      %v1499 = vpop.f32.mrf.mxu0
      %v1500 = vadd.f32 0.0, %v1499
      %v1501 = vpop.f32.mrf.mxu0
      %1502 = vmatprep.mubr.bf16.mxu0 0
      %1503 = vmatmul.mubr.bf16.gmra.mxu0 %v1437
      %v1504 = vpop.f32.mrf.mxu0
      %v1505 = vadd.f32 0.0, %v1504
      %v1506 = vpop.f32.mrf.mxu0
      %v1507 = vpop.f32.mrf.mxu0
      %v1508 = vadd.f32 0.0, %v1507
      %v1509 = vpop.f32.mrf.mxu0
      %1510 = vmatprep.mubr.bf16.mxu0 0
      %1511 = vmatmul.mubr.bf16.gmra.mxu0 %v1440
      %v1512 = vpop.f32.mrf.mxu0
      %v1513 = vadd.f32 0.0, %v1512
      %v1514 = vpop.f32.mrf.mxu0
      %v1515 = vpop.f32.mrf.mxu0
      %v1516 = vadd.f32 0.0, %v1515
      %v1517 = vpop.f32.mrf.mxu0
      %1518 = vdwg.mxu0
      %v1527 = vunpack.c.l.b16 %v463
      %v1528 = vunpack.c.l.b16 %v464
      %v1529 = vunpack.c.l.b16 %v465
      %v1530 = vunpack.c.l.b16 %v466
      %v1531 = vunpack.c.l.b16 %v467
      %v1532 = vunpack.c.l.b16 %v468
      %v1533 = vunpack.c.l.b16 %v469
      %v1534 = vunpack.c.l.b16 %v470
      %v1535 = vpack.c.b16 %v1528, %v1527
      %v1536 = vpack.c.b16 %v1530, %v1529
      %v1537 = vpack.c.b16 %v1532, %v1531
      %v1538 = vpack.c.b16 %v1534, %v1533
      %v1547 = vunpack.c.l.b16 %v591
      %v1548 = vunpack.c.l.b16 %v592
      %v1549 = vunpack.c.l.b16 %v593
      %v1550 = vunpack.c.l.b16 %v594
      %v1551 = vunpack.c.l.b16 %v595
      %v1552 = vunpack.c.l.b16 %v596
      %v1553 = vunpack.c.l.b16 %v597
      %v1554 = vunpack.c.l.b16 %v598
      %v1555 = vpack.c.b16 %v1548, %v1547
      %v1556 = vpack.c.b16 %v1550, %v1549
      %v1557 = vpack.c.b16 %v1552, %v1551
      %v1558 = vpack.c.b16 %v1554, %v1553
      %v1560 = vsel %vm784, %v1535, 0
      %v1563 = vsel %vm784, %v1536, 0
      %v1566 = vsel %vm784, %v1537, 0
      %v1569 = vsel %vm784, %v1538, 0
      %v1572 = vsel %vm784, %v1555, 0
      %v1575 = vsel %vm784, %v1556, 0
      %v1578 = vsel %vm784, %v1557, 0
      %v1581 = vsel %vm784, %v1558, 0
      %1583 = vmatprep.subr.bf16.mxu0 0
      %1584 = vmatpush1.bf16.xpose.msra.mxu0 0
      %1585 = vmatprep.subr.bf16.mxu0 0
      %1586 = vmatpush1.bf16.xpose.msra.mxu0 0
      %1587 = vmatprep.subr.bf16.mxu0 0
      %1588 = vmatpush1.bf16.xpose.msra.mxu0 0
      %1589 = vmatprep.subr.bf16.mxu0 0
      %1590 = vmatpush1.bf16.xpose.msra.mxu0 0
      %1591 = vmatprep.subr.bf16.mxu0 0
      %1592 = vmatpush1.bf16.xpose.msra.mxu0 %v1581
      %1593 = vmatprep.subr.bf16.mxu0 0
      %1594 = vmatpush1.bf16.xpose.msra.mxu0 %v1578
      %1595 = vmatprep.subr.bf16.mxu0 0
      %1596 = vmatpush1.bf16.xpose.msra.mxu0 %v1575
      %1597 = vmatprep.subr.bf16.mxu0 0
      %1598 = vmatpush1.bf16.xpose.msra.mxu0 %v1572
      %1599 = vmatprep.subr.bf16.mxu0 0
      %1600 = vmatpush2.bf16.xpose.msra.mxu0 0
      %1601 = vmatprep.subr.bf16.mxu0 0
      %1602 = vmatpush2.bf16.xpose.msra.mxu0 0
      %1603 = vmatprep.subr.bf16.mxu0 0
      %1604 = vmatpush2.bf16.xpose.msra.mxu0 0
      %1605 = vmatprep.subr.bf16.mxu0 0
      %1606 = vmatpush2.bf16.xpose.msra.mxu0 0
      %1607 = vmatprep.subr.bf16.mxu0 0
      %1608 = vmatpush2.bf16.xpose.msra.mxu0 0
      %1609 = vmatprep.subr.bf16.mxu0 0
      %1610 = vmatpush2.bf16.xpose.msra.mxu0 0
      %1611 = vmatprep.subr.bf16.mxu0 0
      %1612 = vmatpush2.bf16.xpose.msra.mxu0 0
      %1613 = vmatprep.subr.bf16.mxu0 0
      %1614 = vmatpush2.bf16.xpose.msra.mxu0 0
      %1615 = vmatprep.mubr.bf16.mxu0 0
      %1616 = vmatmul.mubr.bf16.gmra.mxu0 %v1560
      %v1617 = vpop.f32.mrf.mxu0
      %v1618 = vadd.f32 0.0, %v1617
      %v1619 = vpop.f32.mrf.mxu0
      %v1620 = vpop.f32.mrf.mxu0
      %v1621 = vadd.f32 0.0, %v1620
      %v1622 = vpop.f32.mrf.mxu0
      %1623 = vmatprep.mubr.bf16.mxu0 0
      %1624 = vmatmul.mubr.bf16.gmra.mxu0 %v1563
      %v1625 = vpop.f32.mrf.mxu0
      %v1626 = vadd.f32 0.0, %v1625
      %v1627 = vpop.f32.mrf.mxu0
      %v1628 = vpop.f32.mrf.mxu0
      %v1629 = vadd.f32 0.0, %v1628
      %v1630 = vpop.f32.mrf.mxu0
      %1631 = vmatprep.mubr.bf16.mxu0 0
      %1632 = vmatmul.mubr.bf16.gmra.mxu0 %v1566
      %v1633 = vpop.f32.mrf.mxu0
      %v1634 = vadd.f32 0.0, %v1633
      %v1635 = vpop.f32.mrf.mxu0
      %v1636 = vpop.f32.mrf.mxu0
      %v1637 = vadd.f32 0.0, %v1636
      %v1638 = vpop.f32.mrf.mxu0
      %1639 = vmatprep.mubr.bf16.mxu0 0
      %1640 = vmatmul.mubr.bf16.gmra.mxu0 %v1569
      %v1641 = vpop.f32.mrf.mxu0
      %v1642 = vadd.f32 0.0, %v1641
      %v1643 = vpop.f32.mrf.mxu0
      %v1644 = vpop.f32.mrf.mxu0
      %v1645 = vadd.f32 0.0, %v1644
      %v1646 = vpop.f32.mrf.mxu0
      %1647 = vdwg.mxu0
      %v1656 = vunpack.c.l.b16 %v471
      %v1657 = vunpack.c.l.b16 %v472
      %v1658 = vunpack.c.l.b16 %v473
      %v1659 = vunpack.c.l.b16 %v474
      %v1660 = vunpack.c.l.b16 %v475
      %v1661 = vunpack.c.l.b16 %v476
      %v1662 = vunpack.c.l.b16 %v477
      %v1663 = vunpack.c.l.b16 %v478
      %v1664 = vpack.c.b16 %v1657, %v1656
      %v1665 = vpack.c.b16 %v1659, %v1658
      %v1666 = vpack.c.b16 %v1661, %v1660
      %v1667 = vpack.c.b16 %v1663, %v1662
      %v1676 = vunpack.c.l.b16 %v599
      %v1677 = vunpack.c.l.b16 %v600
      %v1678 = vunpack.c.l.b16 %v601
      %v1679 = vunpack.c.l.b16 %v602
      %v1680 = vunpack.c.l.b16 %v603
      %v1681 = vunpack.c.l.b16 %v604
      %v1682 = vunpack.c.l.b16 %v605
      %v1683 = vunpack.c.l.b16 %v606
      %v1684 = vpack.c.b16 %v1677, %v1676
      %v1685 = vpack.c.b16 %v1679, %v1678
      %v1686 = vpack.c.b16 %v1681, %v1680
      %v1687 = vpack.c.b16 %v1683, %v1682
      %v1689 = vsel %vm784, %v1664, 0
      %v1692 = vsel %vm784, %v1665, 0
      %v1695 = vsel %vm784, %v1666, 0
      %v1698 = vsel %vm784, %v1667, 0
      %v1701 = vsel %vm784, %v1684, 0
      %v1704 = vsel %vm784, %v1685, 0
      %v1707 = vsel %vm784, %v1686, 0
      %v1710 = vsel %vm784, %v1687, 0
      %1712 = vmatprep.subr.bf16.mxu0 0
      %1713 = vmatpush1.bf16.xpose.msra.mxu0 0
      %1714 = vmatprep.subr.bf16.mxu0 0
      %1715 = vmatpush1.bf16.xpose.msra.mxu0 0
      %1716 = vmatprep.subr.bf16.mxu0 0
      %1717 = vmatpush1.bf16.xpose.msra.mxu0 0
      %1718 = vmatprep.subr.bf16.mxu0 0
      %1719 = vmatpush1.bf16.xpose.msra.mxu0 0
      %1720 = vmatprep.subr.bf16.mxu0 0
      %1721 = vmatpush1.bf16.xpose.msra.mxu0 %v1710
      %1722 = vmatprep.subr.bf16.mxu0 0
      %1723 = vmatpush1.bf16.xpose.msra.mxu0 %v1707
      %1724 = vmatprep.subr.bf16.mxu0 0
      %1725 = vmatpush1.bf16.xpose.msra.mxu0 %v1704
      %1726 = vmatprep.subr.bf16.mxu0 0
      %1727 = vmatpush1.bf16.xpose.msra.mxu0 %v1701
      %1728 = vmatprep.subr.bf16.mxu0 0
      %1729 = vmatpush2.bf16.xpose.msra.mxu0 0
      %1730 = vmatprep.subr.bf16.mxu0 0
      %1731 = vmatpush2.bf16.xpose.msra.mxu0 0
      %1732 = vmatprep.subr.bf16.mxu0 0
      %1733 = vmatpush2.bf16.xpose.msra.mxu0 0
      %1734 = vmatprep.subr.bf16.mxu0 0
      %1735 = vmatpush2.bf16.xpose.msra.mxu0 0
      %1736 = vmatprep.subr.bf16.mxu0 0
      %1737 = vmatpush2.bf16.xpose.msra.mxu0 0
      %1738 = vmatprep.subr.bf16.mxu0 0
      %1739 = vmatpush2.bf16.xpose.msra.mxu0 0
      %1740 = vmatprep.subr.bf16.mxu0 0
      %1741 = vmatpush2.bf16.xpose.msra.mxu0 0
      %1742 = vmatprep.subr.bf16.mxu0 0
      %1743 = vmatpush2.bf16.xpose.msra.mxu0 0
      %1744 = vmatprep.mubr.bf16.mxu0 0
      %1745 = vmatmul.mubr.bf16.gmra.mxu0 %v1689
      %v1746 = vpop.f32.mrf.mxu0
      %v1747 = vadd.f32 0.0, %v1746
      %v1748 = vpop.f32.mrf.mxu0
      %v1749 = vpop.f32.mrf.mxu0
      %v1750 = vadd.f32 0.0, %v1749
      %v1751 = vpop.f32.mrf.mxu0
      %1752 = vmatprep.mubr.bf16.mxu0 0
      %1753 = vmatmul.mubr.bf16.gmra.mxu0 %v1692
      %v1754 = vpop.f32.mrf.mxu0
      %v1755 = vadd.f32 0.0, %v1754
      %v1756 = vpop.f32.mrf.mxu0
      %v1757 = vpop.f32.mrf.mxu0
      %v1758 = vadd.f32 0.0, %v1757
      %v1759 = vpop.f32.mrf.mxu0
      %1760 = vmatprep.mubr.bf16.mxu0 0
      %1761 = vmatmul.mubr.bf16.gmra.mxu0 %v1695
      %v1762 = vpop.f32.mrf.mxu0
      %v1763 = vadd.f32 0.0, %v1762
      %v1764 = vpop.f32.mrf.mxu0
      %v1765 = vpop.f32.mrf.mxu0
      %v1766 = vadd.f32 0.0, %v1765
      %v1767 = vpop.f32.mrf.mxu0
      %1768 = vmatprep.mubr.bf16.mxu0 0
      %1769 = vmatmul.mubr.bf16.gmra.mxu0 %v1698
      %v1770 = vpop.f32.mrf.mxu0
      %v1771 = vadd.f32 0.0, %v1770
      %v1772 = vpop.f32.mrf.mxu0
      %v1773 = vpop.f32.mrf.mxu0
      %v1774 = vadd.f32 0.0, %v1773
      %v1775 = vpop.f32.mrf.mxu0
      %1776 = vdwg.mxu0
      %v1777 = vmul.f32 %v844, 0.70710677
      %v1778 = vmul.f32 %v847, 0.70710677
      %v1779 = vmul.f32 %v852, 0.70710677
      %v1780 = vmul.f32 %v855, 0.70710677
      %v1781 = vmul.f32 %v860, 0.70710677
      %v1782 = vmul.f32 %v863, 0.70710677
      %v1783 = vmul.f32 %v868, 0.70710677
      %v1784 = vmul.f32 %v871, 0.70710677
      %v1785 = vmul.f32 %v973, 0.70710677
      %v1786 = vmul.f32 %v976, 0.70710677
      %v1787 = vmul.f32 %v981, 0.70710677
      %v1788 = vmul.f32 %v984, 0.70710677
      %v1789 = vmul.f32 %v989, 0.70710677
      %v1790 = vmul.f32 %v992, 0.70710677
      %v1791 = vmul.f32 %v997, 0.70710677
      %v1792 = vmul.f32 %v1000, 0.70710677
      %v1793 = vmul.f32 %v1102, 0.70710677
      %v1794 = vmul.f32 %v1105, 0.70710677
      %v1795 = vmul.f32 %v1110, 0.70710677
      %v1796 = vmul.f32 %v1113, 0.70710677
      %v1797 = vmul.f32 %v1118, 0.70710677
      %v1798 = vmul.f32 %v1121, 0.70710677
      %v1799 = vmul.f32 %v1126, 0.70710677
      %v1800 = vmul.f32 %v1129, 0.70710677
      %v1801 = vmul.f32 %v1231, 0.70710677
      %v1802 = vmul.f32 %v1234, 0.70710677
      %v1803 = vmul.f32 %v1239, 0.70710677
      %v1804 = vmul.f32 %v1242, 0.70710677
      %v1805 = vmul.f32 %v1247, 0.70710677
      %v1806 = vmul.f32 %v1250, 0.70710677
      %v1807 = vmul.f32 %v1255, 0.70710677
      %v1808 = vmul.f32 %v1258, 0.70710677
      %v1809 = vmul.f32 %v1360, 0.70710677
      %v1810 = vmul.f32 %v1363, 0.70710677
      %v1811 = vmul.f32 %v1368, 0.70710677
      %v1812 = vmul.f32 %v1371, 0.70710677
      %v1813 = vmul.f32 %v1376, 0.70710677
      %v1814 = vmul.f32 %v1379, 0.70710677
      %v1815 = vmul.f32 %v1384, 0.70710677
      %v1816 = vmul.f32 %v1387, 0.70710677
      %v1817 = vmul.f32 %v1489, 0.70710677
      %v1818 = vmul.f32 %v1492, 0.70710677
      %v1819 = vmul.f32 %v1497, 0.70710677
      %v1820 = vmul.f32 %v1500, 0.70710677
      %v1821 = vmul.f32 %v1505, 0.70710677
      %v1822 = vmul.f32 %v1508, 0.70710677
      %v1823 = vmul.f32 %v1513, 0.70710677
      %v1824 = vmul.f32 %v1516, 0.70710677
      %v1825 = vmul.f32 %v1618, 0.70710677
      %v1826 = vmul.f32 %v1621, 0.70710677
      %v1827 = vmul.f32 %v1626, 0.70710677
      %v1828 = vmul.f32 %v1629, 0.70710677
      %v1829 = vmul.f32 %v1634, 0.70710677
      %v1830 = vmul.f32 %v1637, 0.70710677
      %v1831 = vmul.f32 %v1642, 0.70710677
      %v1832 = vmul.f32 %v1645, 0.70710677
      %v1833 = vmul.f32 %v1747, 0.70710677
      %v1834 = vmul.f32 %v1750, 0.70710677
      %v1835 = vmul.f32 %v1755, 0.70710677
      %v1836 = vmul.f32 %v1758, 0.70710677
      %v1837 = vmul.f32 %v1763, 0.70710677
      %v1838 = vmul.f32 %v1766, 0.70710677
      %v1839 = vmul.f32 %v1771, 0.70710677
      %v1840 = vmul.f32 %v1774, 0.70710677
      %v1849 = vunpack.c.l.b16 %v479
      %v1850 = vunpack.c.l.b16 %v480
      %v1851 = vunpack.c.l.b16 %v481
      %v1852 = vunpack.c.l.b16 %v482
      %v1853 = vunpack.c.l.b16 %v483
      %v1854 = vunpack.c.l.b16 %v484
      %v1855 = vunpack.c.l.b16 %v485
      %v1856 = vunpack.c.l.b16 %v486
      %v1857 = vpack.c.b16 %v1850, %v1849
      %v1858 = vpack.c.b16 %v1852, %v1851
      %v1859 = vpack.c.b16 %v1854, %v1853
      %v1860 = vpack.c.b16 %v1856, %v1855
      %v1869 = vunpack.c.l.b16 %v607
      %v1870 = vunpack.c.l.b16 %v608
      %v1871 = vunpack.c.l.b16 %v609
      %v1872 = vunpack.c.l.b16 %v610
      %v1873 = vunpack.c.l.b16 %v611
      %v1874 = vunpack.c.l.b16 %v612
      %v1875 = vunpack.c.l.b16 %v613
      %v1876 = vunpack.c.l.b16 %v614
      %v1877 = vpack.c.b16 %v1870, %v1869
      %v1878 = vpack.c.b16 %v1872, %v1871
      %v1879 = vpack.c.b16 %v1874, %v1873
      %v1880 = vpack.c.b16 %v1876, %v1875
      %v1882 = vsel %vm784, %v1857, 0
      %v1885 = vsel %vm784, %v1858, 0
      %v1888 = vsel %vm784, %v1859, 0
      %v1891 = vsel %vm784, %v1860, 0
      %v1894 = vsel %vm784, %v1877, 0
      %v1897 = vsel %vm784, %v1878, 0
      %v1900 = vsel %vm784, %v1879, 0
      %v1903 = vsel %vm784, %v1880, 0
      %1905 = vmatprep.subr.bf16.mxu0 0
      %1906 = vmatpush1.bf16.xpose.msra.mxu0 0
      %1907 = vmatprep.subr.bf16.mxu0 0
      %1908 = vmatpush1.bf16.xpose.msra.mxu0 0
      %1909 = vmatprep.subr.bf16.mxu0 0
      %1910 = vmatpush1.bf16.xpose.msra.mxu0 0
      %1911 = vmatprep.subr.bf16.mxu0 0
      %1912 = vmatpush1.bf16.xpose.msra.mxu0 0
      %1913 = vmatprep.subr.bf16.mxu0 0
      %1914 = vmatpush1.bf16.xpose.msra.mxu0 %v1903
      %1915 = vmatprep.subr.bf16.mxu0 0
      %1916 = vmatpush1.bf16.xpose.msra.mxu0 %v1900
      %1917 = vmatprep.subr.bf16.mxu0 0
      %1918 = vmatpush1.bf16.xpose.msra.mxu0 %v1897
      %1919 = vmatprep.subr.bf16.mxu0 0
      %1920 = vmatpush1.bf16.xpose.msra.mxu0 %v1894
      %1921 = vmatprep.subr.bf16.mxu0 0
      %1922 = vmatpush2.bf16.xpose.msra.mxu0 0
      %1923 = vmatprep.subr.bf16.mxu0 0
      %1924 = vmatpush2.bf16.xpose.msra.mxu0 0
      %1925 = vmatprep.subr.bf16.mxu0 0
      %1926 = vmatpush2.bf16.xpose.msra.mxu0 0
      %1927 = vmatprep.subr.bf16.mxu0 0
      %1928 = vmatpush2.bf16.xpose.msra.mxu0 0
      %1929 = vmatprep.subr.bf16.mxu0 0
      %1930 = vmatpush2.bf16.xpose.msra.mxu0 0
      %1931 = vmatprep.subr.bf16.mxu0 0
      %1932 = vmatpush2.bf16.xpose.msra.mxu0 0
      %1933 = vmatprep.subr.bf16.mxu0 0
      %1934 = vmatpush2.bf16.xpose.msra.mxu0 0
      %1935 = vmatprep.subr.bf16.mxu0 0
      %1936 = vmatpush2.bf16.xpose.msra.mxu0 0
      %1937 = vmatprep.mubr.bf16.mxu0 0
      %1938 = vmatmul.mubr.bf16.gmra.mxu0 %v1882
      %v1939 = vpop.f32.mrf.mxu0
      %v1940 = vadd.f32 0.0, %v1939
      %v1941 = vpop.f32.mrf.mxu0
      %v1942 = vpop.f32.mrf.mxu0
      %v1943 = vadd.f32 0.0, %v1942
      %v1944 = vpop.f32.mrf.mxu0
      %1945 = vmatprep.mubr.bf16.mxu0 0
      %1946 = vmatmul.mubr.bf16.gmra.mxu0 %v1885
      %v1947 = vpop.f32.mrf.mxu0
      %v1948 = vadd.f32 0.0, %v1947
      %v1949 = vpop.f32.mrf.mxu0
      %v1950 = vpop.f32.mrf.mxu0
      %v1951 = vadd.f32 0.0, %v1950
      %v1952 = vpop.f32.mrf.mxu0
      %1953 = vmatprep.mubr.bf16.mxu0 0
      %1954 = vmatmul.mubr.bf16.gmra.mxu0 %v1888
      %v1955 = vpop.f32.mrf.mxu0
      %v1956 = vadd.f32 0.0, %v1955
      %v1957 = vpop.f32.mrf.mxu0
      %v1958 = vpop.f32.mrf.mxu0
      %v1959 = vadd.f32 0.0, %v1958
      %v1960 = vpop.f32.mrf.mxu0
      %1961 = vmatprep.mubr.bf16.mxu0 0
      %1962 = vmatmul.mubr.bf16.gmra.mxu0 %v1891
      %v1963 = vpop.f32.mrf.mxu0
      %v1964 = vadd.f32 0.0, %v1963
      %v1965 = vpop.f32.mrf.mxu0
      %v1966 = vpop.f32.mrf.mxu0
      %v1967 = vadd.f32 0.0, %v1966
      %v1968 = vpop.f32.mrf.mxu0
      %1969 = vdwg.mxu0
      %v1978 = vunpack.c.l.b16 %v487
      %v1979 = vunpack.c.l.b16 %v488
      %v1980 = vunpack.c.l.b16 %v489
      %v1981 = vunpack.c.l.b16 %v490
      %v1982 = vunpack.c.l.b16 %v491
      %v1983 = vunpack.c.l.b16 %v492
      %v1984 = vunpack.c.l.b16 %v493
      %v1985 = vunpack.c.l.b16 %v494
      %v1986 = vpack.c.b16 %v1979, %v1978
      %v1987 = vpack.c.b16 %v1981, %v1980
      %v1988 = vpack.c.b16 %v1983, %v1982
      %v1989 = vpack.c.b16 %v1985, %v1984
      %v1998 = vunpack.c.l.b16 %v615
      %v1999 = vunpack.c.l.b16 %v616
      %v2000 = vunpack.c.l.b16 %v617
      %v2001 = vunpack.c.l.b16 %v618
      %v2002 = vunpack.c.l.b16 %v619
      %v2003 = vunpack.c.l.b16 %v620
      %v2004 = vunpack.c.l.b16 %v621
      %v2005 = vunpack.c.l.b16 %v622
      %v2006 = vpack.c.b16 %v1999, %v1998
      %v2007 = vpack.c.b16 %v2001, %v2000
      %v2008 = vpack.c.b16 %v2003, %v2002
      %v2009 = vpack.c.b16 %v2005, %v2004
      %v2011 = vsel %vm784, %v1986, 0
      %v2014 = vsel %vm784, %v1987, 0
      %v2017 = vsel %vm784, %v1988, 0
      %v2020 = vsel %vm784, %v1989, 0
      %v2023 = vsel %vm784, %v2006, 0
      %v2026 = vsel %vm784, %v2007, 0
      %v2029 = vsel %vm784, %v2008, 0
      %v2032 = vsel %vm784, %v2009, 0
      %2034 = vmatprep.subr.bf16.mxu0 0
      %2035 = vmatpush1.bf16.xpose.msra.mxu0 0
      %2036 = vmatprep.subr.bf16.mxu0 0
      %2037 = vmatpush1.bf16.xpose.msra.mxu0 0
      %2038 = vmatprep.subr.bf16.mxu0 0
      %2039 = vmatpush1.bf16.xpose.msra.mxu0 0
      %2040 = vmatprep.subr.bf16.mxu0 0
      %2041 = vmatpush1.bf16.xpose.msra.mxu0 0
      %2042 = vmatprep.subr.bf16.mxu0 0
      %2043 = vmatpush1.bf16.xpose.msra.mxu0 %v2032
      %2044 = vmatprep.subr.bf16.mxu0 0
      %2045 = vmatpush1.bf16.xpose.msra.mxu0 %v2029
      %2046 = vmatprep.subr.bf16.mxu0 0
      %2047 = vmatpush1.bf16.xpose.msra.mxu0 %v2026
      %2048 = vmatprep.subr.bf16.mxu0 0
      %2049 = vmatpush1.bf16.xpose.msra.mxu0 %v2023
      %2050 = vmatprep.subr.bf16.mxu0 0
      %2051 = vmatpush2.bf16.xpose.msra.mxu0 0
      %2052 = vmatprep.subr.bf16.mxu0 0
      %2053 = vmatpush2.bf16.xpose.msra.mxu0 0
      %2054 = vmatprep.subr.bf16.mxu0 0
      %2055 = vmatpush2.bf16.xpose.msra.mxu0 0
      %2056 = vmatprep.subr.bf16.mxu0 0
      %2057 = vmatpush2.bf16.xpose.msra.mxu0 0
      %2058 = vmatprep.subr.bf16.mxu0 0
      %2059 = vmatpush2.bf16.xpose.msra.mxu0 0
      %2060 = vmatprep.subr.bf16.mxu0 0
      %2061 = vmatpush2.bf16.xpose.msra.mxu0 0
      %2062 = vmatprep.subr.bf16.mxu0 0
      %2063 = vmatpush2.bf16.xpose.msra.mxu0 0
      %2064 = vmatprep.subr.bf16.mxu0 0
      %2065 = vmatpush2.bf16.xpose.msra.mxu0 0
      %2066 = vmatprep.mubr.bf16.mxu0 0
      %2067 = vmatmul.mubr.bf16.gmra.mxu0 %v2011
      %v2068 = vpop.f32.mrf.mxu0
      %v2069 = vadd.f32 0.0, %v2068
      %v2070 = vpop.f32.mrf.mxu0
      %v2071 = vpop.f32.mrf.mxu0
      %v2072 = vadd.f32 0.0, %v2071
      %v2073 = vpop.f32.mrf.mxu0
      %2074 = vmatprep.mubr.bf16.mxu0 0
      %2075 = vmatmul.mubr.bf16.gmra.mxu0 %v2014
      %v2076 = vpop.f32.mrf.mxu0
      %v2077 = vadd.f32 0.0, %v2076
      %v2078 = vpop.f32.mrf.mxu0
      %v2079 = vpop.f32.mrf.mxu0
      %v2080 = vadd.f32 0.0, %v2079
      %v2081 = vpop.f32.mrf.mxu0
      %2082 = vmatprep.mubr.bf16.mxu0 0
      %2083 = vmatmul.mubr.bf16.gmra.mxu0 %v2017
      %v2084 = vpop.f32.mrf.mxu0
      %v2085 = vadd.f32 0.0, %v2084
      %v2086 = vpop.f32.mrf.mxu0
      %v2087 = vpop.f32.mrf.mxu0
      %v2088 = vadd.f32 0.0, %v2087
      %v2089 = vpop.f32.mrf.mxu0
      %2090 = vmatprep.mubr.bf16.mxu0 0
      %2091 = vmatmul.mubr.bf16.gmra.mxu0 %v2020
      %v2092 = vpop.f32.mrf.mxu0
      %v2093 = vadd.f32 0.0, %v2092
      %v2094 = vpop.f32.mrf.mxu0
      %v2095 = vpop.f32.mrf.mxu0
      %v2096 = vadd.f32 0.0, %v2095
      %v2097 = vpop.f32.mrf.mxu0
      %2098 = vdwg.mxu0
      %v2107 = vunpack.c.l.b16 %v495
      %v2108 = vunpack.c.l.b16 %v496
      %v2109 = vunpack.c.l.b16 %v497
      %v2110 = vunpack.c.l.b16 %v498
      %v2111 = vunpack.c.l.b16 %v499
      %v2112 = vunpack.c.l.b16 %v500
      %v2113 = vunpack.c.l.b16 %v501
      %v2114 = vunpack.c.l.b16 %v502
      %v2115 = vpack.c.b16 %v2108, %v2107
      %v2116 = vpack.c.b16 %v2110, %v2109
      %v2117 = vpack.c.b16 %v2112, %v2111
      %v2118 = vpack.c.b16 %v2114, %v2113
      %v2127 = vunpack.c.l.b16 %v623
      %v2128 = vunpack.c.l.b16 %v624
      %v2129 = vunpack.c.l.b16 %v625
      %v2130 = vunpack.c.l.b16 %v626
      %v2131 = vunpack.c.l.b16 %v627
      %v2132 = vunpack.c.l.b16 %v628
      %v2133 = vunpack.c.l.b16 %v629
      %v2134 = vunpack.c.l.b16 %v630
      %v2135 = vpack.c.b16 %v2128, %v2127
      %v2136 = vpack.c.b16 %v2130, %v2129
      %v2137 = vpack.c.b16 %v2132, %v2131
      %v2138 = vpack.c.b16 %v2134, %v2133
      %v2140 = vsel %vm784, %v2115, 0
      %v2143 = vsel %vm784, %v2116, 0
      %v2146 = vsel %vm784, %v2117, 0
      %v2149 = vsel %vm784, %v2118, 0
      %v2152 = vsel %vm784, %v2135, 0
      %v2155 = vsel %vm784, %v2136, 0
      %v2158 = vsel %vm784, %v2137, 0
      %v2161 = vsel %vm784, %v2138, 0
      %2163 = vmatprep.subr.bf16.mxu0 0
      %2164 = vmatpush1.bf16.xpose.msra.mxu0 0
      %2165 = vmatprep.subr.bf16.mxu0 0
      %2166 = vmatpush1.bf16.xpose.msra.mxu0 0
      %2167 = vmatprep.subr.bf16.mxu0 0
      %2168 = vmatpush1.bf16.xpose.msra.mxu0 0
      %2169 = vmatprep.subr.bf16.mxu0 0
      %2170 = vmatpush1.bf16.xpose.msra.mxu0 0
      %2171 = vmatprep.subr.bf16.mxu0 0
      %2172 = vmatpush1.bf16.xpose.msra.mxu0 %v2161
      %2173 = vmatprep.subr.bf16.mxu0 0
      %2174 = vmatpush1.bf16.xpose.msra.mxu0 %v2158
      %2175 = vmatprep.subr.bf16.mxu0 0
      %2176 = vmatpush1.bf16.xpose.msra.mxu0 %v2155
      %2177 = vmatprep.subr.bf16.mxu0 0
      %2178 = vmatpush1.bf16.xpose.msra.mxu0 %v2152
      %2179 = vmatprep.subr.bf16.mxu0 0
      %2180 = vmatpush2.bf16.xpose.msra.mxu0 0
      %2181 = vmatprep.subr.bf16.mxu0 0
      %2182 = vmatpush2.bf16.xpose.msra.mxu0 0
      %2183 = vmatprep.subr.bf16.mxu0 0
      %2184 = vmatpush2.bf16.xpose.msra.mxu0 0
      %2185 = vmatprep.subr.bf16.mxu0 0
      %2186 = vmatpush2.bf16.xpose.msra.mxu0 0
      %2187 = vmatprep.subr.bf16.mxu0 0
      %2188 = vmatpush2.bf16.xpose.msra.mxu0 0
      %2189 = vmatprep.subr.bf16.mxu0 0
      %2190 = vmatpush2.bf16.xpose.msra.mxu0 0
      %2191 = vmatprep.subr.bf16.mxu0 0
      %2192 = vmatpush2.bf16.xpose.msra.mxu0 0
      %2193 = vmatprep.subr.bf16.mxu0 0
      %2194 = vmatpush2.bf16.xpose.msra.mxu0 0
      %2195 = vmatprep.mubr.bf16.mxu0 0
      %2196 = vmatmul.mubr.bf16.gmra.mxu0 %v2140
      %v2197 = vpop.f32.mrf.mxu0
      %v2198 = vadd.f32 0.0, %v2197
      %v2199 = vpop.f32.mrf.mxu0
      %v2200 = vpop.f32.mrf.mxu0
      %v2201 = vadd.f32 0.0, %v2200
      %v2202 = vpop.f32.mrf.mxu0
      %2203 = vmatprep.mubr.bf16.mxu0 0
      %2204 = vmatmul.mubr.bf16.gmra.mxu0 %v2143
      %v2205 = vpop.f32.mrf.mxu0
      %v2206 = vadd.f32 0.0, %v2205
      %v2207 = vpop.f32.mrf.mxu0
      %v2208 = vpop.f32.mrf.mxu0
      %v2209 = vadd.f32 0.0, %v2208
      %v2210 = vpop.f32.mrf.mxu0
      %2211 = vmatprep.mubr.bf16.mxu0 0
      %2212 = vmatmul.mubr.bf16.gmra.mxu0 %v2146
      %v2213 = vpop.f32.mrf.mxu0
      %v2214 = vadd.f32 0.0, %v2213
      %v2215 = vpop.f32.mrf.mxu0
      %v2216 = vpop.f32.mrf.mxu0
      %v2217 = vadd.f32 0.0, %v2216
      %v2218 = vpop.f32.mrf.mxu0
      %2219 = vmatprep.mubr.bf16.mxu0 0
      %2220 = vmatmul.mubr.bf16.gmra.mxu0 %v2149
      %v2221 = vpop.f32.mrf.mxu0
      %v2222 = vadd.f32 0.0, %v2221
      %v2223 = vpop.f32.mrf.mxu0
      %v2224 = vpop.f32.mrf.mxu0
      %v2225 = vadd.f32 0.0, %v2224
      %v2226 = vpop.f32.mrf.mxu0
      %2227 = vdwg.mxu0
      %v2236 = vunpack.c.l.b16 %v503
      %v2237 = vunpack.c.l.b16 %v504
      %v2238 = vunpack.c.l.b16 %v505
      %v2239 = vunpack.c.l.b16 %v506
      %v2240 = vunpack.c.l.b16 %v507
      %v2241 = vunpack.c.l.b16 %v508
      %v2242 = vunpack.c.l.b16 %v509
      %v2243 = vunpack.c.l.b16 %v510
      %v2244 = vpack.c.b16 %v2237, %v2236
      %v2245 = vpack.c.b16 %v2239, %v2238
      %v2246 = vpack.c.b16 %v2241, %v2240
      %v2247 = vpack.c.b16 %v2243, %v2242
      %v2256 = vunpack.c.l.b16 %v631
      %v2257 = vunpack.c.l.b16 %v632
      %v2258 = vunpack.c.l.b16 %v633
      %v2259 = vunpack.c.l.b16 %v634
      %v2260 = vunpack.c.l.b16 %v635
      %v2261 = vunpack.c.l.b16 %v636
      %v2262 = vunpack.c.l.b16 %v637
      %v2263 = vunpack.c.l.b16 %v638
      %v2264 = vpack.c.b16 %v2257, %v2256
      %v2265 = vpack.c.b16 %v2259, %v2258
      %v2266 = vpack.c.b16 %v2261, %v2260
      %v2267 = vpack.c.b16 %v2263, %v2262
      %v2269 = vsel %vm784, %v2244, 0
      %v2272 = vsel %vm784, %v2245, 0
      %v2275 = vsel %vm784, %v2246, 0
      %v2278 = vsel %vm784, %v2247, 0
      %v2281 = vsel %vm784, %v2264, 0
      %v2284 = vsel %vm784, %v2265, 0
      %v2287 = vsel %vm784, %v2266, 0
      %v2290 = vsel %vm784, %v2267, 0
      %2292 = vmatprep.subr.bf16.mxu0 0
      %2293 = vmatpush1.bf16.xpose.msra.mxu0 0
      %2294 = vmatprep.subr.bf16.mxu0 0
      %2295 = vmatpush1.bf16.xpose.msra.mxu0 0
      %2296 = vmatprep.subr.bf16.mxu0 0
      %2297 = vmatpush1.bf16.xpose.msra.mxu0 0
      %2298 = vmatprep.subr.bf16.mxu0 0
      %2299 = vmatpush1.bf16.xpose.msra.mxu0 0
      %2300 = vmatprep.subr.bf16.mxu0 0
      %2301 = vmatpush1.bf16.xpose.msra.mxu0 %v2290
      %2302 = vmatprep.subr.bf16.mxu0 0
      %2303 = vmatpush1.bf16.xpose.msra.mxu0 %v2287
      %2304 = vmatprep.subr.bf16.mxu0 0
      %2305 = vmatpush1.bf16.xpose.msra.mxu0 %v2284
      %2306 = vmatprep.subr.bf16.mxu0 0
      %2307 = vmatpush1.bf16.xpose.msra.mxu0 %v2281
      %2308 = vmatprep.subr.bf16.mxu0 0
      %2309 = vmatpush2.bf16.xpose.msra.mxu0 0
      %2310 = vmatprep.subr.bf16.mxu0 0
      %2311 = vmatpush2.bf16.xpose.msra.mxu0 0
      %2312 = vmatprep.subr.bf16.mxu0 0
      %2313 = vmatpush2.bf16.xpose.msra.mxu0 0
      %2314 = vmatprep.subr.bf16.mxu0 0
      %2315 = vmatpush2.bf16.xpose.msra.mxu0 0
      %2316 = vmatprep.subr.bf16.mxu0 0
      %2317 = vmatpush2.bf16.xpose.msra.mxu0 0
      %2318 = vmatprep.subr.bf16.mxu0 0
      %2319 = vmatpush2.bf16.xpose.msra.mxu0 0
      %2320 = vmatprep.subr.bf16.mxu0 0
      %2321 = vmatpush2.bf16.xpose.msra.mxu0 0
      %2322 = vmatprep.subr.bf16.mxu0 0
      %2323 = vmatpush2.bf16.xpose.msra.mxu0 0
      %2324 = vmatprep.mubr.bf16.mxu0 0
      %2325 = vmatmul.mubr.bf16.gmra.mxu0 %v2269
      %v2326 = vpop.f32.mrf.mxu0
      %v2327 = vadd.f32 0.0, %v2326
      %v2328 = vpop.f32.mrf.mxu0
      %v2329 = vpop.f32.mrf.mxu0
      %v2330 = vadd.f32 0.0, %v2329
      %v2331 = vpop.f32.mrf.mxu0
      %2332 = vmatprep.mubr.bf16.mxu0 0
      %2333 = vmatmul.mubr.bf16.gmra.mxu0 %v2272
      %v2334 = vpop.f32.mrf.mxu0
      %v2335 = vadd.f32 0.0, %v2334
      %v2336 = vpop.f32.mrf.mxu0
      %v2337 = vpop.f32.mrf.mxu0
      %v2338 = vadd.f32 0.0, %v2337
      %v2339 = vpop.f32.mrf.mxu0
      %2340 = vmatprep.mubr.bf16.mxu0 0
      %2341 = vmatmul.mubr.bf16.gmra.mxu0 %v2275
      %v2342 = vpop.f32.mrf.mxu0
      %v2343 = vadd.f32 0.0, %v2342
      %v2344 = vpop.f32.mrf.mxu0
      %v2345 = vpop.f32.mrf.mxu0
      %v2346 = vadd.f32 0.0, %v2345
      %v2347 = vpop.f32.mrf.mxu0
      %2348 = vmatprep.mubr.bf16.mxu0 0
      %2349 = vmatmul.mubr.bf16.gmra.mxu0 %v2278
      %v2350 = vpop.f32.mrf.mxu0
      %v2351 = vadd.f32 0.0, %v2350
      %v2352 = vpop.f32.mrf.mxu0
      %v2353 = vpop.f32.mrf.mxu0
      %v2354 = vadd.f32 0.0, %v2353
      %v2355 = vpop.f32.mrf.mxu0
      %2356 = vdwg.mxu0
      %v2365 = vunpack.c.l.b16 %v511
      %v2366 = vunpack.c.l.b16 %v512
      %v2367 = vunpack.c.l.b16 %v513
      %v2368 = vunpack.c.l.b16 %v514
      %v2369 = vunpack.c.l.b16 %v515
      %v2370 = vunpack.c.l.b16 %v516
      %v2371 = vunpack.c.l.b16 %v517
      %v2372 = vunpack.c.l.b16 %v518
      %v2373 = vpack.c.b16 %v2366, %v2365
      %v2374 = vpack.c.b16 %v2368, %v2367
      %v2375 = vpack.c.b16 %v2370, %v2369
      %v2376 = vpack.c.b16 %v2372, %v2371
      %v2385 = vunpack.c.l.b16 %v639
      %v2386 = vunpack.c.l.b16 %v640
      %v2387 = vunpack.c.l.b16 %v641
      %v2388 = vunpack.c.l.b16 %v642
      %v2389 = vunpack.c.l.b16 %v643
      %v2390 = vunpack.c.l.b16 %v644
      %v2391 = vunpack.c.l.b16 %v645
      %v2392 = vunpack.c.l.b16 %v646
      %v2393 = vpack.c.b16 %v2386, %v2385
      %v2394 = vpack.c.b16 %v2388, %v2387
      %v2395 = vpack.c.b16 %v2390, %v2389
      %v2396 = vpack.c.b16 %v2392, %v2391
      %v2398 = vsel %vm784, %v2373, 0
      %v2401 = vsel %vm784, %v2374, 0
      %v2404 = vsel %vm784, %v2375, 0
      %v2407 = vsel %vm784, %v2376, 0
      %v2410 = vsel %vm784, %v2393, 0
      %v2413 = vsel %vm784, %v2394, 0
      %v2416 = vsel %vm784, %v2395, 0
      %v2419 = vsel %vm784, %v2396, 0
      %2421 = vmatprep.subr.bf16.mxu0 0
      %2422 = vmatpush1.bf16.xpose.msra.mxu0 0
      %2423 = vmatprep.subr.bf16.mxu0 0
      %2424 = vmatpush1.bf16.xpose.msra.mxu0 0
      %2425 = vmatprep.subr.bf16.mxu0 0
      %2426 = vmatpush1.bf16.xpose.msra.mxu0 0
      %2427 = vmatprep.subr.bf16.mxu0 0
      %2428 = vmatpush1.bf16.xpose.msra.mxu0 0
      %2429 = vmatprep.subr.bf16.mxu0 0
      %2430 = vmatpush1.bf16.xpose.msra.mxu0 %v2419
      %2431 = vmatprep.subr.bf16.mxu0 0
      %2432 = vmatpush1.bf16.xpose.msra.mxu0 %v2416
      %2433 = vmatprep.subr.bf16.mxu0 0
      %2434 = vmatpush1.bf16.xpose.msra.mxu0 %v2413
      %2435 = vmatprep.subr.bf16.mxu0 0
      %2436 = vmatpush1.bf16.xpose.msra.mxu0 %v2410
      %2437 = vmatprep.subr.bf16.mxu0 0
      %2438 = vmatpush2.bf16.xpose.msra.mxu0 0
      %2439 = vmatprep.subr.bf16.mxu0 0
      %2440 = vmatpush2.bf16.xpose.msra.mxu0 0
      %2441 = vmatprep.subr.bf16.mxu0 0
      %2442 = vmatpush2.bf16.xpose.msra.mxu0 0
      %2443 = vmatprep.subr.bf16.mxu0 0
      %2444 = vmatpush2.bf16.xpose.msra.mxu0 0
      %2445 = vmatprep.subr.bf16.mxu0 0
      %2446 = vmatpush2.bf16.xpose.msra.mxu0 0
      %2447 = vmatprep.subr.bf16.mxu0 0
      %2448 = vmatpush2.bf16.xpose.msra.mxu0 0
      %2449 = vmatprep.subr.bf16.mxu0 0
      %2450 = vmatpush2.bf16.xpose.msra.mxu0 0
      %2451 = vmatprep.subr.bf16.mxu0 0
      %2452 = vmatpush2.bf16.xpose.msra.mxu0 0
      %2453 = vmatprep.mubr.bf16.mxu0 0
      %2454 = vmatmul.mubr.bf16.gmra.mxu0 %v2398
      %v2455 = vpop.f32.mrf.mxu0
      %v2456 = vadd.f32 0.0, %v2455
      %v2457 = vpop.f32.mrf.mxu0
      %v2458 = vpop.f32.mrf.mxu0
      %v2459 = vadd.f32 0.0, %v2458
      %v2460 = vpop.f32.mrf.mxu0
      %2461 = vmatprep.mubr.bf16.mxu0 0
      %2462 = vmatmul.mubr.bf16.gmra.mxu0 %v2401
      %v2463 = vpop.f32.mrf.mxu0
      %v2464 = vadd.f32 0.0, %v2463
      %v2465 = vpop.f32.mrf.mxu0
      %v2466 = vpop.f32.mrf.mxu0
      %v2467 = vadd.f32 0.0, %v2466
      %v2468 = vpop.f32.mrf.mxu0
      %2469 = vmatprep.mubr.bf16.mxu0 0
      %2470 = vmatmul.mubr.bf16.gmra.mxu0 %v2404
      %v2471 = vpop.f32.mrf.mxu0
      %v2472 = vadd.f32 0.0, %v2471
      %v2473 = vpop.f32.mrf.mxu0
      %v2474 = vpop.f32.mrf.mxu0
      %v2475 = vadd.f32 0.0, %v2474
      %v2476 = vpop.f32.mrf.mxu0
      %2477 = vmatprep.mubr.bf16.mxu0 0
      %2478 = vmatmul.mubr.bf16.gmra.mxu0 %v2407
      %v2479 = vpop.f32.mrf.mxu0
      %v2480 = vadd.f32 0.0, %v2479
      %v2481 = vpop.f32.mrf.mxu0
      %v2482 = vpop.f32.mrf.mxu0
      %v2483 = vadd.f32 0.0, %v2482
      %v2484 = vpop.f32.mrf.mxu0
      %2485 = vdwg.mxu0
      %v2494 = vunpack.c.l.b16 %v519
      %v2495 = vunpack.c.l.b16 %v520
      %v2496 = vunpack.c.l.b16 %v521
      %v2497 = vunpack.c.l.b16 %v522
      %v2498 = vunpack.c.l.b16 %v523
      %v2499 = vunpack.c.l.b16 %v524
      %v2500 = vunpack.c.l.b16 %v525
      %v2501 = vunpack.c.l.b16 %v526
      %v2502 = vpack.c.b16 %v2495, %v2494
      %v2503 = vpack.c.b16 %v2497, %v2496
      %v2504 = vpack.c.b16 %v2499, %v2498
      %v2505 = vpack.c.b16 %v2501, %v2500
      %v2514 = vunpack.c.l.b16 %v647
      %v2515 = vunpack.c.l.b16 %v648
      %v2516 = vunpack.c.l.b16 %v649
      %v2517 = vunpack.c.l.b16 %v650
      %v2518 = vunpack.c.l.b16 %v651
      %v2519 = vunpack.c.l.b16 %v652
      %v2520 = vunpack.c.l.b16 %v653
      %v2521 = vunpack.c.l.b16 %v654
      %v2522 = vpack.c.b16 %v2515, %v2514
      %v2523 = vpack.c.b16 %v2517, %v2516
      %v2524 = vpack.c.b16 %v2519, %v2518
      %v2525 = vpack.c.b16 %v2521, %v2520
      %v2527 = vsel %vm784, %v2502, 0
      %v2530 = vsel %vm784, %v2503, 0
      %v2533 = vsel %vm784, %v2504, 0
      %v2536 = vsel %vm784, %v2505, 0
      %v2539 = vsel %vm784, %v2522, 0
      %v2542 = vsel %vm784, %v2523, 0
      %v2545 = vsel %vm784, %v2524, 0
      %v2548 = vsel %vm784, %v2525, 0
      %2550 = vmatprep.subr.bf16.mxu0 0
      %2551 = vmatpush1.bf16.xpose.msra.mxu0 0
      %2552 = vmatprep.subr.bf16.mxu0 0
      %2553 = vmatpush1.bf16.xpose.msra.mxu0 0
      %2554 = vmatprep.subr.bf16.mxu0 0
      %2555 = vmatpush1.bf16.xpose.msra.mxu0 0
      %2556 = vmatprep.subr.bf16.mxu0 0
      %2557 = vmatpush1.bf16.xpose.msra.mxu0 0
      %2558 = vmatprep.subr.bf16.mxu0 0
      %2559 = vmatpush1.bf16.xpose.msra.mxu0 %v2548
      %2560 = vmatprep.subr.bf16.mxu0 0
      %2561 = vmatpush1.bf16.xpose.msra.mxu0 %v2545
      %2562 = vmatprep.subr.bf16.mxu0 0
      %2563 = vmatpush1.bf16.xpose.msra.mxu0 %v2542
      %2564 = vmatprep.subr.bf16.mxu0 0
      %2565 = vmatpush1.bf16.xpose.msra.mxu0 %v2539
      %2566 = vmatprep.subr.bf16.mxu0 0
      %2567 = vmatpush2.bf16.xpose.msra.mxu0 0
      %2568 = vmatprep.subr.bf16.mxu0 0
      %2569 = vmatpush2.bf16.xpose.msra.mxu0 0
      %2570 = vmatprep.subr.bf16.mxu0 0
      %2571 = vmatpush2.bf16.xpose.msra.mxu0 0
      %2572 = vmatprep.subr.bf16.mxu0 0
      %2573 = vmatpush2.bf16.xpose.msra.mxu0 0
      %2574 = vmatprep.subr.bf16.mxu0 0
      %2575 = vmatpush2.bf16.xpose.msra.mxu0 0
      %2576 = vmatprep.subr.bf16.mxu0 0
      %2577 = vmatpush2.bf16.xpose.msra.mxu0 0
      %2578 = vmatprep.subr.bf16.mxu0 0
      %2579 = vmatpush2.bf16.xpose.msra.mxu0 0
      %2580 = vmatprep.subr.bf16.mxu0 0
      %2581 = vmatpush2.bf16.xpose.msra.mxu0 0
      %2582 = vmatprep.mubr.bf16.mxu0 0
      %2583 = vmatmul.mubr.bf16.gmra.mxu0 %v2527
      %v2584 = vpop.f32.mrf.mxu0
      %v2585 = vadd.f32 0.0, %v2584
      %v2586 = vpop.f32.mrf.mxu0
      %v2587 = vpop.f32.mrf.mxu0
      %v2588 = vadd.f32 0.0, %v2587
      %v2589 = vpop.f32.mrf.mxu0
      %2590 = vmatprep.mubr.bf16.mxu0 0
      %2591 = vmatmul.mubr.bf16.gmra.mxu0 %v2530
      %v2592 = vpop.f32.mrf.mxu0
      %v2593 = vadd.f32 0.0, %v2592
      %v2594 = vpop.f32.mrf.mxu0
      %v2595 = vpop.f32.mrf.mxu0
      %v2596 = vadd.f32 0.0, %v2595
      %v2597 = vpop.f32.mrf.mxu0
      %2598 = vmatprep.mubr.bf16.mxu0 0
      %2599 = vmatmul.mubr.bf16.gmra.mxu0 %v2533
      %v2600 = vpop.f32.mrf.mxu0
      %v2601 = vadd.f32 0.0, %v2600
      %v2602 = vpop.f32.mrf.mxu0
      %v2603 = vpop.f32.mrf.mxu0
      %v2604 = vadd.f32 0.0, %v2603
      %v2605 = vpop.f32.mrf.mxu0
      %2606 = vmatprep.mubr.bf16.mxu0 0
      %2607 = vmatmul.mubr.bf16.gmra.mxu0 %v2536
      %v2608 = vpop.f32.mrf.mxu0
      %v2609 = vadd.f32 0.0, %v2608
      %v2610 = vpop.f32.mrf.mxu0
      %v2611 = vpop.f32.mrf.mxu0
      %v2612 = vadd.f32 0.0, %v2611
      %v2613 = vpop.f32.mrf.mxu0
      %2614 = vdwg.mxu0
      %v2623 = vunpack.c.l.b16 %v527
      %v2624 = vunpack.c.l.b16 %v528
      %v2625 = vunpack.c.l.b16 %v529
      %v2626 = vunpack.c.l.b16 %v530
      %v2627 = vunpack.c.l.b16 %v531
      %v2628 = vunpack.c.l.b16 %v532
      %v2629 = vunpack.c.l.b16 %v533
      %v2630 = vunpack.c.l.b16 %v534
      %v2631 = vpack.c.b16 %v2624, %v2623
      %v2632 = vpack.c.b16 %v2626, %v2625
      %v2633 = vpack.c.b16 %v2628, %v2627
      %v2634 = vpack.c.b16 %v2630, %v2629
      %v2643 = vunpack.c.l.b16 %v655
      %v2644 = vunpack.c.l.b16 %v656
      %v2645 = vunpack.c.l.b16 %v657
      %v2646 = vunpack.c.l.b16 %v658
      %v2647 = vunpack.c.l.b16 %v659
      %v2648 = vunpack.c.l.b16 %v660
      %v2649 = vunpack.c.l.b16 %v661
      %v2650 = vunpack.c.l.b16 %v662
      %v2651 = vpack.c.b16 %v2644, %v2643
      %v2652 = vpack.c.b16 %v2646, %v2645
      %v2653 = vpack.c.b16 %v2648, %v2647
      %v2654 = vpack.c.b16 %v2650, %v2649
      %v2656 = vsel %vm784, %v2631, 0
      %v2659 = vsel %vm784, %v2632, 0
      %v2662 = vsel %vm784, %v2633, 0
      %v2665 = vsel %vm784, %v2634, 0
      %v2668 = vsel %vm784, %v2651, 0
      %v2671 = vsel %vm784, %v2652, 0
      %v2674 = vsel %vm784, %v2653, 0
      %v2677 = vsel %vm784, %v2654, 0
      %2679 = vmatprep.subr.bf16.mxu0 0
      %2680 = vmatpush1.bf16.xpose.msra.mxu0 0
      %2681 = vmatprep.subr.bf16.mxu0 0
      %2682 = vmatpush1.bf16.xpose.msra.mxu0 0
      %2683 = vmatprep.subr.bf16.mxu0 0
      %2684 = vmatpush1.bf16.xpose.msra.mxu0 0
      %2685 = vmatprep.subr.bf16.mxu0 0
      %2686 = vmatpush1.bf16.xpose.msra.mxu0 0
      %2687 = vmatprep.subr.bf16.mxu0 0
      %2688 = vmatpush1.bf16.xpose.msra.mxu0 %v2677
      %2689 = vmatprep.subr.bf16.mxu0 0
      %2690 = vmatpush1.bf16.xpose.msra.mxu0 %v2674
      %2691 = vmatprep.subr.bf16.mxu0 0
      %2692 = vmatpush1.bf16.xpose.msra.mxu0 %v2671
      %2693 = vmatprep.subr.bf16.mxu0 0
      %2694 = vmatpush1.bf16.xpose.msra.mxu0 %v2668
      %2695 = vmatprep.subr.bf16.mxu0 0
      %2696 = vmatpush2.bf16.xpose.msra.mxu0 0
      %2697 = vmatprep.subr.bf16.mxu0 0
      %2698 = vmatpush2.bf16.xpose.msra.mxu0 0
      %2699 = vmatprep.subr.bf16.mxu0 0
      %2700 = vmatpush2.bf16.xpose.msra.mxu0 0
      %2701 = vmatprep.subr.bf16.mxu0 0
      %2702 = vmatpush2.bf16.xpose.msra.mxu0 0
      %2703 = vmatprep.subr.bf16.mxu0 0
      %2704 = vmatpush2.bf16.xpose.msra.mxu0 0
      %2705 = vmatprep.subr.bf16.mxu0 0
      %2706 = vmatpush2.bf16.xpose.msra.mxu0 0
      %2707 = vmatprep.subr.bf16.mxu0 0
      %2708 = vmatpush2.bf16.xpose.msra.mxu0 0
      %2709 = vmatprep.subr.bf16.mxu0 0
      %2710 = vmatpush2.bf16.xpose.msra.mxu0 0
      %2711 = vmatprep.mubr.bf16.mxu0 0
      %2712 = vmatmul.mubr.bf16.gmra.mxu0 %v2656
      %v2713 = vpop.f32.mrf.mxu0
      %v2714 = vadd.f32 0.0, %v2713
      %v2715 = vpop.f32.mrf.mxu0
      %v2716 = vpop.f32.mrf.mxu0
      %v2717 = vadd.f32 0.0, %v2716
      %v2718 = vpop.f32.mrf.mxu0
      %2719 = vmatprep.mubr.bf16.mxu0 0
      %2720 = vmatmul.mubr.bf16.gmra.mxu0 %v2659
      %v2721 = vpop.f32.mrf.mxu0
      %v2722 = vadd.f32 0.0, %v2721
      %v2723 = vpop.f32.mrf.mxu0
      %v2724 = vpop.f32.mrf.mxu0
      %v2725 = vadd.f32 0.0, %v2724
      %v2726 = vpop.f32.mrf.mxu0
      %2727 = vmatprep.mubr.bf16.mxu0 0
      %2728 = vmatmul.mubr.bf16.gmra.mxu0 %v2662
      %v2729 = vpop.f32.mrf.mxu0
      %v2730 = vadd.f32 0.0, %v2729
      %v2731 = vpop.f32.mrf.mxu0
      %v2732 = vpop.f32.mrf.mxu0
      %v2733 = vadd.f32 0.0, %v2732
      %v2734 = vpop.f32.mrf.mxu0
      %2735 = vmatprep.mubr.bf16.mxu0 0
      %2736 = vmatmul.mubr.bf16.gmra.mxu0 %v2665
      %v2737 = vpop.f32.mrf.mxu0
      %v2738 = vadd.f32 0.0, %v2737
      %v2739 = vpop.f32.mrf.mxu0
      %v2740 = vpop.f32.mrf.mxu0
      %v2741 = vadd.f32 0.0, %v2740
      %v2742 = vpop.f32.mrf.mxu0
      %2743 = vdwg.mxu0
      %v2752 = vunpack.c.l.b16 %v535
      %v2753 = vunpack.c.l.b16 %v536
      %v2754 = vunpack.c.l.b16 %v537
      %v2755 = vunpack.c.l.b16 %v538
      %v2756 = vunpack.c.l.b16 %v539
      %v2757 = vunpack.c.l.b16 %v540
      %v2758 = vunpack.c.l.b16 %v541
      %v2759 = vunpack.c.l.b16 %v542
      %v2760 = vpack.c.b16 %v2753, %v2752
      %v2761 = vpack.c.b16 %v2755, %v2754
      %v2762 = vpack.c.b16 %v2757, %v2756
      %v2763 = vpack.c.b16 %v2759, %v2758
      %v2772 = vunpack.c.l.b16 %v663
      %v2773 = vunpack.c.l.b16 %v664
      %v2774 = vunpack.c.l.b16 %v665
      %v2775 = vunpack.c.l.b16 %v666
      %v2776 = vunpack.c.l.b16 %v667
      %v2777 = vunpack.c.l.b16 %v668
      %v2778 = vunpack.c.l.b16 %v669
      %v2779 = vunpack.c.l.b16 %v670
      %v2780 = vpack.c.b16 %v2773, %v2772
      %v2781 = vpack.c.b16 %v2775, %v2774
      %v2782 = vpack.c.b16 %v2777, %v2776
      %v2783 = vpack.c.b16 %v2779, %v2778
      %v2785 = vsel %vm784, %v2760, 0
      %v2788 = vsel %vm784, %v2761, 0
      %v2791 = vsel %vm784, %v2762, 0
      %v2794 = vsel %vm784, %v2763, 0
      %v2797 = vsel %vm784, %v2780, 0
      %v2800 = vsel %vm784, %v2781, 0
      %v2803 = vsel %vm784, %v2782, 0
      %v2806 = vsel %vm784, %v2783, 0
      %2808 = vmatprep.subr.bf16.mxu0 0
      %2809 = vmatpush1.bf16.xpose.msra.mxu0 0
      %2810 = vmatprep.subr.bf16.mxu0 0
      %2811 = vmatpush1.bf16.xpose.msra.mxu0 0
      %2812 = vmatprep.subr.bf16.mxu0 0
      %2813 = vmatpush1.bf16.xpose.msra.mxu0 0
      %2814 = vmatprep.subr.bf16.mxu0 0
      %2815 = vmatpush1.bf16.xpose.msra.mxu0 0
      %2816 = vmatprep.subr.bf16.mxu0 0
      %2817 = vmatpush1.bf16.xpose.msra.mxu0 %v2806
      %2818 = vmatprep.subr.bf16.mxu0 0
      %2819 = vmatpush1.bf16.xpose.msra.mxu0 %v2803
      %2820 = vmatprep.subr.bf16.mxu0 0
      %2821 = vmatpush1.bf16.xpose.msra.mxu0 %v2800
      %2822 = vmatprep.subr.bf16.mxu0 0
      %2823 = vmatpush1.bf16.xpose.msra.mxu0 %v2797
      %2824 = vmatprep.subr.bf16.mxu0 0
      %2825 = vmatpush2.bf16.xpose.msra.mxu0 0
      %2826 = vmatprep.subr.bf16.mxu0 0
      %2827 = vmatpush2.bf16.xpose.msra.mxu0 0
      %2828 = vmatprep.subr.bf16.mxu0 0
      %2829 = vmatpush2.bf16.xpose.msra.mxu0 0
      %2830 = vmatprep.subr.bf16.mxu0 0
      %2831 = vmatpush2.bf16.xpose.msra.mxu0 0
      %2832 = vmatprep.subr.bf16.mxu0 0
      %2833 = vmatpush2.bf16.xpose.msra.mxu0 0
      %2834 = vmatprep.subr.bf16.mxu0 0
      %2835 = vmatpush2.bf16.xpose.msra.mxu0 0
      %2836 = vmatprep.subr.bf16.mxu0 0
      %2837 = vmatpush2.bf16.xpose.msra.mxu0 0
      %2838 = vmatprep.subr.bf16.mxu0 0
      %2839 = vmatpush2.bf16.xpose.msra.mxu0 0
      %2840 = vmatprep.mubr.bf16.mxu0 0
      %2841 = vmatmul.mubr.bf16.gmra.mxu0 %v2785
      %v2842 = vpop.f32.mrf.mxu0
      %v2843 = vadd.f32 0.0, %v2842
      %v2844 = vpop.f32.mrf.mxu0
      %v2845 = vpop.f32.mrf.mxu0
      %v2846 = vadd.f32 0.0, %v2845
      %v2847 = vpop.f32.mrf.mxu0
      %2848 = vmatprep.mubr.bf16.mxu0 0
      %2849 = vmatmul.mubr.bf16.gmra.mxu0 %v2788
      %v2850 = vpop.f32.mrf.mxu0
      %v2851 = vadd.f32 0.0, %v2850
      %v2852 = vpop.f32.mrf.mxu0
      %v2853 = vpop.f32.mrf.mxu0
      %v2854 = vadd.f32 0.0, %v2853
      %v2855 = vpop.f32.mrf.mxu0
      %2856 = vmatprep.mubr.bf16.mxu0 0
      %2857 = vmatmul.mubr.bf16.gmra.mxu0 %v2791
      %v2858 = vpop.f32.mrf.mxu0
      %v2859 = vadd.f32 0.0, %v2858
      %v2860 = vpop.f32.mrf.mxu0
      %v2861 = vpop.f32.mrf.mxu0
      %v2862 = vadd.f32 0.0, %v2861
      %v2863 = vpop.f32.mrf.mxu0
      %2864 = vmatprep.mubr.bf16.mxu0 0
      %2865 = vmatmul.mubr.bf16.gmra.mxu0 %v2794
      %v2866 = vpop.f32.mrf.mxu0
      %v2867 = vadd.f32 0.0, %v2866
      %v2868 = vpop.f32.mrf.mxu0
      %v2869 = vpop.f32.mrf.mxu0
      %v2870 = vadd.f32 0.0, %v2869
      %v2871 = vpop.f32.mrf.mxu0
      %2872 = vdwg.mxu0
      %v2873 = vmul.f32 %v1940, 0.70710677
      %v2874 = vmul.f32 %v1943, 0.70710677
      %v2875 = vmul.f32 %v1948, 0.70710677
      %v2876 = vmul.f32 %v1951, 0.70710677
      %v2877 = vmul.f32 %v1956, 0.70710677
      %v2878 = vmul.f32 %v1959, 0.70710677
      %v2879 = vmul.f32 %v1964, 0.70710677
      %v2880 = vmul.f32 %v1967, 0.70710677
      %v2881 = vmul.f32 %v2069, 0.70710677
      %v2882 = vmul.f32 %v2072, 0.70710677
      %v2883 = vmul.f32 %v2077, 0.70710677
      %v2884 = vmul.f32 %v2080, 0.70710677
      %v2885 = vmul.f32 %v2085, 0.70710677
      %v2886 = vmul.f32 %v2088, 0.70710677
      %v2887 = vmul.f32 %v2093, 0.70710677
      %v2888 = vmul.f32 %v2096, 0.70710677
      %v2889 = vmul.f32 %v2198, 0.70710677
      %v2890 = vmul.f32 %v2201, 0.70710677
      %v2891 = vmul.f32 %v2206, 0.70710677
      %v2892 = vmul.f32 %v2209, 0.70710677
      %v2893 = vmul.f32 %v2214, 0.70710677
      %v2894 = vmul.f32 %v2217, 0.70710677
      %v2895 = vmul.f32 %v2222, 0.70710677
      %v2896 = vmul.f32 %v2225, 0.70710677
      %v2897 = vmul.f32 %v2327, 0.70710677
      %v2898 = vmul.f32 %v2330, 0.70710677
      %v2899 = vmul.f32 %v2335, 0.70710677
      %v2900 = vmul.f32 %v2338, 0.70710677
      %v2901 = vmul.f32 %v2343, 0.70710677
      %v2902 = vmul.f32 %v2346, 0.70710677
      %v2903 = vmul.f32 %v2351, 0.70710677
      %v2904 = vmul.f32 %v2354, 0.70710677
      %v2905 = vmul.f32 %v2456, 0.70710677
      %v2906 = vmul.f32 %v2459, 0.70710677
      %v2907 = vmul.f32 %v2464, 0.70710677
      %v2908 = vmul.f32 %v2467, 0.70710677
      %v2909 = vmul.f32 %v2472, 0.70710677
      %v2910 = vmul.f32 %v2475, 0.70710677
      %v2911 = vmul.f32 %v2480, 0.70710677
      %v2912 = vmul.f32 %v2483, 0.70710677
      %v2913 = vmul.f32 %v2585, 0.70710677
      %v2914 = vmul.f32 %v2588, 0.70710677
      %v2915 = vmul.f32 %v2593, 0.70710677
      %v2916 = vmul.f32 %v2596, 0.70710677
      %v2917 = vmul.f32 %v2601, 0.70710677
      %v2918 = vmul.f32 %v2604, 0.70710677
      %v2919 = vmul.f32 %v2609, 0.70710677
      %v2920 = vmul.f32 %v2612, 0.70710677
      %v2921 = vmul.f32 %v2714, 0.70710677
      %v2922 = vmul.f32 %v2717, 0.70710677
      %v2923 = vmul.f32 %v2722, 0.70710677
      %v2924 = vmul.f32 %v2725, 0.70710677
      %v2925 = vmul.f32 %v2730, 0.70710677
      %v2926 = vmul.f32 %v2733, 0.70710677
      %v2927 = vmul.f32 %v2738, 0.70710677
      %v2928 = vmul.f32 %v2741, 0.70710677
      %v2929 = vmul.f32 %v2843, 0.70710677
      %v2930 = vmul.f32 %v2846, 0.70710677
      %v2931 = vmul.f32 %v2851, 0.70710677
      %v2932 = vmul.f32 %v2854, 0.70710677
      %v2933 = vmul.f32 %v2859, 0.70710677
      %v2934 = vmul.f32 %v2862, 0.70710677
      %v2935 = vmul.f32 %v2867, 0.70710677
      %v2936 = vmul.f32 %v2870, 0.70710677
      %s2937 = smul.u32 %s23, 64
      %v2938 = vlaneseq
      %v2939 = vshrl.u32 %v2938, 7
      %v2940 = vadd.s32 %v2939, 8
      %v2941 = vadd.s32 %v2939, 16
      %v2942 = vadd.s32 %v2939, 24
      %v2943 = vadd.s32 %v2939, 32
      %v2944 = vadd.s32 %v2939, 40
      %v2945 = vadd.s32 %v2939, 48
      %v2946 = vadd.s32 %v2939, 56
      %v2947 = vstv %s2937
      %v2948 = vadd.s32 %v2939, %v2947
      %v2949 = vadd.s32 %v2940, %v2947
      %v2950 = vadd.s32 %v2941, %v2947
      %v2951 = vadd.s32 %v2942, %v2947
      %v2952 = vadd.s32 %v2943, %v2947
      %v2953 = vadd.s32 %v2944, %v2947
      %v2954 = vadd.s32 %v2945, %v2947
      %v2955 = vadd.s32 %v2946, %v2947
      %v2956 = vlaneseq
      %v2957 = vand.u32 %v2956, 127
      %vm2958 = vcmp.ge.s32.totalorder %v2948, %v2957
      %vm2959 = vcmp.ge.s32.totalorder %v2949, %v2957
      %vm2960 = vcmp.ge.s32.totalorder %v2950, %v2957
      %vm2961 = vcmp.ge.s32.totalorder %v2951, %v2957
      %vm2962 = vcmp.ge.s32.totalorder %v2952, %v2957
      %vm2963 = vcmp.ge.s32.totalorder %v2953, %v2957
      %vm2964 = vcmp.ge.s32.totalorder %v2954, %v2957
      %vm2965 = vcmp.ge.s32.totalorder %v2955, %v2957
      %v2966 = vsel %vm2958, 1, 0
      %v2967 = vsel %vm2959, 1, 0
      %v2968 = vsel %vm2960, 1, 0
      %v2969 = vsel %vm2961, 1, 0
      %v2970 = vsel %vm2962, 1, 0
      %v2971 = vsel %vm2963, 1, 0
      %v2972 = vsel %vm2964, 1, 0
      %v2973 = vsel %vm2965, 1, 0
      %vm2974 = vcmp.eq.s32.totalorder %v2966, 1
      %vm2975 = vcmp.eq.s32.totalorder %v2967, 1
      %vm2976 = vcmp.eq.s32.totalorder %v2968, 1
      %vm2977 = vcmp.eq.s32.totalorder %v2969, 1
      %vm2978 = vcmp.eq.s32.totalorder %v2970, 1
      %vm2979 = vcmp.eq.s32.totalorder %v2971, 1
      %vm2980 = vcmp.eq.s32.totalorder %v2972, 1
      %vm2981 = vcmp.eq.s32.totalorder %v2973, 1
      %v2982 = vsel %vm2974, %v1777, -1e+30
      %v2983 = vsel %vm2975, %v1778, -1e+30
      %v2984 = vsel %vm2976, %v1779, -1e+30
      %v2985 = vsel %vm2977, %v1780, -1e+30
      %v2986 = vsel %vm2978, %v1781, -1e+30
      %v2987 = vsel %vm2979, %v1782, -1e+30
      %v2988 = vsel %vm2980, %v1783, -1e+30
      %v2989 = vsel %vm2981, %v1784, -1e+30
      %v2990 = vsel %vm2974, %v1785, -1e+30
      %v2991 = vsel %vm2975, %v1786, -1e+30
      %v2992 = vsel %vm2976, %v1787, -1e+30
      %v2993 = vsel %vm2977, %v1788, -1e+30
      %v2994 = vsel %vm2978, %v1789, -1e+30
      %v2995 = vsel %vm2979, %v1790, -1e+30
      %v2996 = vsel %vm2980, %v1791, -1e+30
      %v2997 = vsel %vm2981, %v1792, -1e+30
      %v2998 = vsel %vm2974, %v1793, -1e+30
      %v2999 = vsel %vm2975, %v1794, -1e+30
      %v3000 = vsel %vm2976, %v1795, -1e+30
      %v3001 = vsel %vm2977, %v1796, -1e+30
      %v3002 = vsel %vm2978, %v1797, -1e+30
      %v3003 = vsel %vm2979, %v1798, -1e+30
      %v3004 = vsel %vm2980, %v1799, -1e+30
      %v3005 = vsel %vm2981, %v1800, -1e+30
      %v3006 = vsel %vm2974, %v1801, -1e+30
      %v3007 = vsel %vm2975, %v1802, -1e+30
      %v3008 = vsel %vm2976, %v1803, -1e+30
      %v3009 = vsel %vm2977, %v1804, -1e+30
      %v3010 = vsel %vm2978, %v1805, -1e+30
      %v3011 = vsel %vm2979, %v1806, -1e+30
      %v3012 = vsel %vm2980, %v1807, -1e+30
      %v3013 = vsel %vm2981, %v1808, -1e+30
      %v3014 = vsel %vm2974, %v1809, -1e+30
      %v3015 = vsel %vm2975, %v1810, -1e+30
      %v3016 = vsel %vm2976, %v1811, -1e+30
      %v3017 = vsel %vm2977, %v1812, -1e+30
      %v3018 = vsel %vm2978, %v1813, -1e+30
      %v3019 = vsel %vm2979, %v1814, -1e+30
      %v3020 = vsel %vm2980, %v1815, -1e+30
      %v3021 = vsel %vm2981, %v1816, -1e+30
      %v3022 = vsel %vm2974, %v1817, -1e+30
      %v3023 = vsel %vm2975, %v1818, -1e+30
      %v3024 = vsel %vm2976, %v1819, -1e+30
      %v3025 = vsel %vm2977, %v1820, -1e+30
      %v3026 = vsel %vm2978, %v1821, -1e+30
      %v3027 = vsel %vm2979, %v1822, -1e+30
      %v3028 = vsel %vm2980, %v1823, -1e+30
      %v3029 = vsel %vm2981, %v1824, -1e+30
      %v3030 = vsel %vm2974, %v1825, -1e+30
      %v3031 = vsel %vm2975, %v1826, -1e+30
      %v3032 = vsel %vm2976, %v1827, -1e+30
      %v3033 = vsel %vm2977, %v1828, -1e+30
      %v3034 = vsel %vm2978, %v1829, -1e+30
      %v3035 = vsel %vm2979, %v1830, -1e+30
      %v3036 = vsel %vm2980, %v1831, -1e+30
      %v3037 = vsel %vm2981, %v1832, -1e+30
      %v3038 = vsel %vm2974, %v1833, -1e+30
      %v3039 = vsel %vm2975, %v1834, -1e+30
      %v3040 = vsel %vm2976, %v1835, -1e+30
      %v3041 = vsel %vm2977, %v1836, -1e+30
      %v3042 = vsel %vm2978, %v1837, -1e+30
      %v3043 = vsel %vm2979, %v1838, -1e+30
      %v3044 = vsel %vm2980, %v1839, -1e+30
      %v3045 = vsel %vm2981, %v1840, -1e+30
      %v3046 = vsel %vm2974, %v2873, -1e+30
      %v3047 = vsel %vm2975, %v2874, -1e+30
      %v3048 = vsel %vm2976, %v2875, -1e+30
      %v3049 = vsel %vm2977, %v2876, -1e+30
      %v3050 = vsel %vm2978, %v2877, -1e+30
      %v3051 = vsel %vm2979, %v2878, -1e+30
      %v3052 = vsel %vm2980, %v2879, -1e+30
      %v3053 = vsel %vm2981, %v2880, -1e+30
      %v3054 = vsel %vm2974, %v2881, -1e+30
      %v3055 = vsel %vm2975, %v2882, -1e+30
      %v3056 = vsel %vm2976, %v2883, -1e+30
      %v3057 = vsel %vm2977, %v2884, -1e+30
      %v3058 = vsel %vm2978, %v2885, -1e+30
      %v3059 = vsel %vm2979, %v2886, -1e+30
      %v3060 = vsel %vm2980, %v2887, -1e+30
      %v3061 = vsel %vm2981, %v2888, -1e+30
      %v3062 = vsel %vm2974, %v2889, -1e+30
      %v3063 = vsel %vm2975, %v2890, -1e+30
      %v3064 = vsel %vm2976, %v2891, -1e+30
      %v3065 = vsel %vm2977, %v2892, -1e+30
      %v3066 = vsel %vm2978, %v2893, -1e+30
      %v3067 = vsel %vm2979, %v2894, -1e+30
      %v3068 = vsel %vm2980, %v2895, -1e+30
      %v3069 = vsel %vm2981, %v2896, -1e+30
      %v3070 = vsel %vm2974, %v2897, -1e+30
      %v3071 = vsel %vm2975, %v2898, -1e+30
      %v3072 = vsel %vm2976, %v2899, -1e+30
      %v3073 = vsel %vm2977, %v2900, -1e+30
      %v3074 = vsel %vm2978, %v2901, -1e+30
      %v3075 = vsel %vm2979, %v2902, -1e+30
      %v3076 = vsel %vm2980, %v2903, -1e+30
      %v3077 = vsel %vm2981, %v2904, -1e+30
      %v3078 = vsel %vm2974, %v2905, -1e+30
      %v3079 = vsel %vm2975, %v2906, -1e+30
      %v3080 = vsel %vm2976, %v2907, -1e+30
      %v3081 = vsel %vm2977, %v2908, -1e+30
      %v3082 = vsel %vm2978, %v2909, -1e+30
      %v3083 = vsel %vm2979, %v2910, -1e+30
      %v3084 = vsel %vm2980, %v2911, -1e+30
      %v3085 = vsel %vm2981, %v2912, -1e+30
      %v3086 = vsel %vm2974, %v2913, -1e+30
      %v3087 = vsel %vm2975, %v2914, -1e+30
      %v3088 = vsel %vm2976, %v2915, -1e+30
      %v3089 = vsel %vm2977, %v2916, -1e+30
      %v3090 = vsel %vm2978, %v2917, -1e+30
      %v3091 = vsel %vm2979, %v2918, -1e+30
      %v3092 = vsel %vm2980, %v2919, -1e+30
      %v3093 = vsel %vm2981, %v2920, -1e+30
      %v3094 = vsel %vm2974, %v2921, -1e+30
      %v3095 = vsel %vm2975, %v2922, -1e+30
      %v3096 = vsel %vm2976, %v2923, -1e+30
      %v3097 = vsel %vm2977, %v2924, -1e+30
      %v3098 = vsel %vm2978, %v2925, -1e+30
      %v3099 = vsel %vm2979, %v2926, -1e+30
      %v3100 = vsel %vm2980, %v2927, -1e+30
      %v3101 = vsel %vm2981, %v2928, -1e+30
      %v3102 = vsel %vm2974, %v2929, -1e+30
      %v3103 = vsel %vm2975, %v2930, -1e+30
      %v3104 = vsel %vm2976, %v2931, -1e+30
      %v3105 = vsel %vm2977, %v2932, -1e+30
      %v3106 = vsel %vm2978, %v2933, -1e+30
      %v3107 = vsel %vm2979, %v2934, -1e+30
      %v3108 = vsel %vm2980, %v2935, -1e+30
      %v3109 = vsel %vm2981, %v2936, -1e+30
      %vm3110 = vcmask 523264
      %v3111 = vsel %vm3110, %v2982, -inf
      %3112 = vmax.xlane.f32.xlu0 %v3111
      %v3113 = vpop.xlane.xlu0 %3112
      %v3114 = vsel %vm3110, %v2983, -inf
      %3115 = vmax.xlane.f32.xlu0 %v3114
      %v3116 = vpop.xlane.xlu0 %3115
      %v3117 = vsel %vm3110, %v2984, -inf
      %3118 = vmax.xlane.f32.xlu0 %v3117
      %v3119 = vpop.xlane.xlu0 %3118
      %v3120 = vsel %vm3110, %v2985, -inf
      %3121 = vmax.xlane.f32.xlu0 %v3120
      %v3122 = vpop.xlane.xlu0 %3121
      %v3123 = vsel %vm3110, %v2986, -inf
      %3124 = vmax.xlane.f32.xlu0 %v3123
      %v3125 = vpop.xlane.xlu0 %3124
      %v3126 = vsel %vm3110, %v2987, -inf
      %3127 = vmax.xlane.f32.xlu0 %v3126
      %v3128 = vpop.xlane.xlu0 %3127
      %v3129 = vsel %vm3110, %v2988, -inf
      %3130 = vmax.xlane.f32.xlu0 %v3129
      %v3131 = vpop.xlane.xlu0 %3130
      %v3132 = vsel %vm3110, %v2989, -inf
      %3133 = vmax.xlane.f32.xlu0 %v3132
      %v3134 = vpop.xlane.xlu0 %3133
      %v3135 = vsel %vm3110, %v2990, -inf
      %3136 = vmax.xlane.f32.xlu0 %v3135
      %v3137 = vpop.xlane.xlu0 %3136
      %v3138 = vsel %vm3110, %v2991, -inf
      %3139 = vmax.xlane.f32.xlu0 %v3138
      %v3140 = vpop.xlane.xlu0 %3139
      %v3141 = vsel %vm3110, %v2992, -inf
      %3142 = vmax.xlane.f32.xlu0 %v3141
      %v3143 = vpop.xlane.xlu0 %3142
      %v3144 = vsel %vm3110, %v2993, -inf
      %3145 = vmax.xlane.f32.xlu0 %v3144
      %v3146 = vpop.xlane.xlu0 %3145
      %v3147 = vsel %vm3110, %v2994, -inf
      %3148 = vmax.xlane.f32.xlu0 %v3147
      %v3149 = vpop.xlane.xlu0 %3148
      %v3150 = vsel %vm3110, %v2995, -inf
      %3151 = vmax.xlane.f32.xlu0 %v3150
      %v3152 = vpop.xlane.xlu0 %3151
      %v3153 = vsel %vm3110, %v2996, -inf
      %3154 = vmax.xlane.f32.xlu0 %v3153
      %v3155 = vpop.xlane.xlu0 %3154
      %v3156 = vsel %vm3110, %v2997, -inf
      %3157 = vmax.xlane.f32.xlu0 %v3156
      %v3158 = vpop.xlane.xlu0 %3157
      %v3159 = vsel %vm3110, %v2998, -inf
      %3160 = vmax.xlane.f32.xlu0 %v3159
      %v3161 = vpop.xlane.xlu0 %3160
      %v3162 = vsel %vm3110, %v2999, -inf
      %3163 = vmax.xlane.f32.xlu0 %v3162
      %v3164 = vpop.xlane.xlu0 %3163
      %v3165 = vsel %vm3110, %v3000, -inf
      %3166 = vmax.xlane.f32.xlu0 %v3165
      %v3167 = vpop.xlane.xlu0 %3166
      %v3168 = vsel %vm3110, %v3001, -inf
      %3169 = vmax.xlane.f32.xlu0 %v3168
      %v3170 = vpop.xlane.xlu0 %3169
      %v3171 = vsel %vm3110, %v3002, -inf
      %3172 = vmax.xlane.f32.xlu0 %v3171
      %v3173 = vpop.xlane.xlu0 %3172
      %v3174 = vsel %vm3110, %v3003, -inf
      %3175 = vmax.xlane.f32.xlu0 %v3174
      %v3176 = vpop.xlane.xlu0 %3175
      %v3177 = vsel %vm3110, %v3004, -inf
      %3178 = vmax.xlane.f32.xlu0 %v3177
      %v3179 = vpop.xlane.xlu0 %3178
      %v3180 = vsel %vm3110, %v3005, -inf
      %3181 = vmax.xlane.f32.xlu0 %v3180
      %v3182 = vpop.xlane.xlu0 %3181
      %v3183 = vsel %vm3110, %v3006, -inf
      %3184 = vmax.xlane.f32.xlu0 %v3183
      %v3185 = vpop.xlane.xlu0 %3184
      %v3186 = vsel %vm3110, %v3007, -inf
      %3187 = vmax.xlane.f32.xlu0 %v3186
      %v3188 = vpop.xlane.xlu0 %3187
      %v3189 = vsel %vm3110, %v3008, -inf
      %3190 = vmax.xlane.f32.xlu0 %v3189
      %v3191 = vpop.xlane.xlu0 %3190
      %v3192 = vsel %vm3110, %v3009, -inf
      %3193 = vmax.xlane.f32.xlu0 %v3192
      %v3194 = vpop.xlane.xlu0 %3193
      %v3195 = vsel %vm3110, %v3010, -inf
      %3196 = vmax.xlane.f32.xlu0 %v3195
      %v3197 = vpop.xlane.xlu0 %3196
      %v3198 = vsel %vm3110, %v3011, -inf
      %3199 = vmax.xlane.f32.xlu0 %v3198
      %v3200 = vpop.xlane.xlu0 %3199
      %v3201 = vsel %vm3110, %v3012, -inf
      %3202 = vmax.xlane.f32.xlu0 %v3201
      %v3203 = vpop.xlane.xlu0 %3202
      %v3204 = vsel %vm3110, %v3013, -inf
      %3205 = vmax.xlane.f32.xlu0 %v3204
      %v3206 = vpop.xlane.xlu0 %3205
      %v3207 = vsel %vm3110, %v3014, -inf
      %3208 = vmax.xlane.f32.xlu0 %v3207
      %v3209 = vpop.xlane.xlu0 %3208
      %v3210 = vsel %vm3110, %v3015, -inf
      %3211 = vmax.xlane.f32.xlu0 %v3210
      %v3212 = vpop.xlane.xlu0 %3211
      %v3213 = vsel %vm3110, %v3016, -inf
      %3214 = vmax.xlane.f32.xlu0 %v3213
      %v3215 = vpop.xlane.xlu0 %3214
      %v3216 = vsel %vm3110, %v3017, -inf
      %3217 = vmax.xlane.f32.xlu0 %v3216
      %v3218 = vpop.xlane.xlu0 %3217
      %v3219 = vsel %vm3110, %v3018, -inf
      %3220 = vmax.xlane.f32.xlu0 %v3219
      %v3221 = vpop.xlane.xlu0 %3220
      %v3222 = vsel %vm3110, %v3019, -inf
      %3223 = vmax.xlane.f32.xlu0 %v3222
      %v3224 = vpop.xlane.xlu0 %3223
      %v3225 = vsel %vm3110, %v3020, -inf
      %3226 = vmax.xlane.f32.xlu0 %v3225
      %v3227 = vpop.xlane.xlu0 %3226
      %v3228 = vsel %vm3110, %v3021, -inf
      %3229 = vmax.xlane.f32.xlu0 %v3228
      %v3230 = vpop.xlane.xlu0 %3229
      %v3231 = vsel %vm3110, %v3022, -inf
      %3232 = vmax.xlane.f32.xlu0 %v3231
      %v3233 = vpop.xlane.xlu0 %3232
      %v3234 = vsel %vm3110, %v3023, -inf
      %3235 = vmax.xlane.f32.xlu0 %v3234
      %v3236 = vpop.xlane.xlu0 %3235
      %v3237 = vsel %vm3110, %v3024, -inf
      %3238 = vmax.xlane.f32.xlu0 %v3237
      %v3239 = vpop.xlane.xlu0 %3238
      %v3240 = vsel %vm3110, %v3025, -inf
      %3241 = vmax.xlane.f32.xlu0 %v3240
      %v3242 = vpop.xlane.xlu0 %3241
      %v3243 = vsel %vm3110, %v3026, -inf
      %3244 = vmax.xlane.f32.xlu0 %v3243
      %v3245 = vpop.xlane.xlu0 %3244
      %v3246 = vsel %vm3110, %v3027, -inf
      %3247 = vmax.xlane.f32.xlu0 %v3246
      %v3248 = vpop.xlane.xlu0 %3247
      %v3249 = vsel %vm3110, %v3028, -inf
      %3250 = vmax.xlane.f32.xlu0 %v3249
      %v3251 = vpop.xlane.xlu0 %3250
      %v3252 = vsel %vm3110, %v3029, -inf
      %3253 = vmax.xlane.f32.xlu0 %v3252
      %v3254 = vpop.xlane.xlu0 %3253
      %v3255 = vsel %vm3110, %v3030, -inf
      %3256 = vmax.xlane.f32.xlu0 %v3255
      %v3257 = vpop.xlane.xlu0 %3256
      %v3258 = vsel %vm3110, %v3031, -inf
      %3259 = vmax.xlane.f32.xlu0 %v3258
      %v3260 = vpop.xlane.xlu0 %3259
      %v3261 = vsel %vm3110, %v3032, -inf
      %3262 = vmax.xlane.f32.xlu0 %v3261
      %v3263 = vpop.xlane.xlu0 %3262
      %v3264 = vsel %vm3110, %v3033, -inf
      %3265 = vmax.xlane.f32.xlu0 %v3264
      %v3266 = vpop.xlane.xlu0 %3265
      %v3267 = vsel %vm3110, %v3034, -inf
      %3268 = vmax.xlane.f32.xlu0 %v3267
      %v3269 = vpop.xlane.xlu0 %3268
      %v3270 = vsel %vm3110, %v3035, -inf
      %3271 = vmax.xlane.f32.xlu0 %v3270
      %v3272 = vpop.xlane.xlu0 %3271
      %v3273 = vsel %vm3110, %v3036, -inf
      %3274 = vmax.xlane.f32.xlu0 %v3273
      %v3275 = vpop.xlane.xlu0 %3274
      %v3276 = vsel %vm3110, %v3037, -inf
      %3277 = vmax.xlane.f32.xlu0 %v3276
      %v3278 = vpop.xlane.xlu0 %3277
      %v3279 = vsel %vm3110, %v3038, -inf
      %3280 = vmax.xlane.f32.xlu0 %v3279
      %v3281 = vpop.xlane.xlu0 %3280
      %v3282 = vsel %vm3110, %v3039, -inf
      %3283 = vmax.xlane.f32.xlu0 %v3282
      %v3284 = vpop.xlane.xlu0 %3283
      %v3285 = vsel %vm3110, %v3040, -inf
      %3286 = vmax.xlane.f32.xlu0 %v3285
      %v3287 = vpop.xlane.xlu0 %3286
      %v3288 = vsel %vm3110, %v3041, -inf
      %3289 = vmax.xlane.f32.xlu0 %v3288
      %v3290 = vpop.xlane.xlu0 %3289
      %v3291 = vsel %vm3110, %v3042, -inf
      %3292 = vmax.xlane.f32.xlu0 %v3291
      %v3293 = vpop.xlane.xlu0 %3292
      %v3294 = vsel %vm3110, %v3043, -inf
      %3295 = vmax.xlane.f32.xlu0 %v3294
      %v3296 = vpop.xlane.xlu0 %3295
      %v3297 = vsel %vm3110, %v3044, -inf
      %3298 = vmax.xlane.f32.xlu0 %v3297
      %v3299 = vpop.xlane.xlu0 %3298
      %v3300 = vsel %vm3110, %v3045, -inf
      %3301 = vmax.xlane.f32.xlu0 %v3300
      %v3302 = vpop.xlane.xlu0 %3301
      %v3303 = vsub.f32 %v2982, %v3113
      %v3304 = vsub.f32 %v2983, %v3116
      %v3305 = vsub.f32 %v2984, %v3119
      %v3306 = vsub.f32 %v2985, %v3122
      %v3307 = vsub.f32 %v2986, %v3125
      %v3308 = vsub.f32 %v2987, %v3128
      %v3309 = vsub.f32 %v2988, %v3131
      %v3310 = vsub.f32 %v2989, %v3134
      %v3311 = vsub.f32 %v2990, %v3137
      %v3312 = vsub.f32 %v2991, %v3140
      %v3313 = vsub.f32 %v2992, %v3143
      %v3314 = vsub.f32 %v2993, %v3146
      %v3315 = vsub.f32 %v2994, %v3149
      %v3316 = vsub.f32 %v2995, %v3152
      %v3317 = vsub.f32 %v2996, %v3155
      %v3318 = vsub.f32 %v2997, %v3158
      %v3319 = vsub.f32 %v2998, %v3161
      %v3320 = vsub.f32 %v2999, %v3164
      %v3321 = vsub.f32 %v3000, %v3167
      %v3322 = vsub.f32 %v3001, %v3170
      %v3323 = vsub.f32 %v3002, %v3173
      %v3324 = vsub.f32 %v3003, %v3176
      %v3325 = vsub.f32 %v3004, %v3179
      %v3326 = vsub.f32 %v3005, %v3182
      %v3327 = vsub.f32 %v3006, %v3185
      %v3328 = vsub.f32 %v3007, %v3188
      %v3329 = vsub.f32 %v3008, %v3191
      %v3330 = vsub.f32 %v3009, %v3194
      %v3331 = vsub.f32 %v3010, %v3197
      %v3332 = vsub.f32 %v3011, %v3200
      %v3333 = vsub.f32 %v3012, %v3203
      %v3334 = vsub.f32 %v3013, %v3206
      %v3335 = vsub.f32 %v3014, %v3209
      %v3336 = vsub.f32 %v3015, %v3212
      %v3337 = vsub.f32 %v3016, %v3215
      %v3338 = vsub.f32 %v3017, %v3218
      %v3339 = vsub.f32 %v3018, %v3221
      %v3340 = vsub.f32 %v3019, %v3224
      %v3341 = vsub.f32 %v3020, %v3227
      %v3342 = vsub.f32 %v3021, %v3230
      %v3343 = vsub.f32 %v3022, %v3233
      %v3344 = vsub.f32 %v3023, %v3236
      %v3345 = vsub.f32 %v3024, %v3239
      %v3346 = vsub.f32 %v3025, %v3242
      %v3347 = vsub.f32 %v3026, %v3245
      %v3348 = vsub.f32 %v3027, %v3248
      %v3349 = vsub.f32 %v3028, %v3251
      %v3350 = vsub.f32 %v3029, %v3254
      %v3351 = vsub.f32 %v3030, %v3257
      %v3352 = vsub.f32 %v3031, %v3260
      %v3353 = vsub.f32 %v3032, %v3263
      %v3354 = vsub.f32 %v3033, %v3266
      %v3355 = vsub.f32 %v3034, %v3269
      %v3356 = vsub.f32 %v3035, %v3272
      %v3357 = vsub.f32 %v3036, %v3275
      %v3358 = vsub.f32 %v3037, %v3278
      %v3359 = vsub.f32 %v3038, %v3281
      %v3360 = vsub.f32 %v3039, %v3284
      %v3361 = vsub.f32 %v3040, %v3287
      %v3362 = vsub.f32 %v3041, %v3290
      %v3363 = vsub.f32 %v3042, %v3293
      %v3364 = vsub.f32 %v3043, %v3296
      %v3365 = vsub.f32 %v3044, %v3299
      %v3366 = vsub.f32 %v3045, %v3302
      %v3367 = vmul.f32 %v3303, 1.442695
      %v3368 = vpow.pop %v3367
      %v3369 = vmul.f32 %v3304, 1.442695
      %v3370 = vpow.pop %v3369
      %v3371 = vmul.f32 %v3305, 1.442695
      %v3372 = vpow.pop %v3371
      %v3373 = vmul.f32 %v3306, 1.442695
      %v3374 = vpow.pop %v3373
      %v3375 = vmul.f32 %v3307, 1.442695
      %v3376 = vpow.pop %v3375
      %v3377 = vmul.f32 %v3308, 1.442695
      %v3378 = vpow.pop %v3377
      %v3379 = vmul.f32 %v3309, 1.442695
      %v3380 = vpow.pop %v3379
      %v3381 = vmul.f32 %v3310, 1.442695
      %v3382 = vpow.pop %v3381
      %v3383 = vmul.f32 %v3311, 1.442695
      %v3384 = vpow.pop %v3383
      %v3385 = vmul.f32 %v3312, 1.442695
      %v3386 = vpow.pop %v3385
      %v3387 = vmul.f32 %v3313, 1.442695
      %v3388 = vpow.pop %v3387
      %v3389 = vmul.f32 %v3314, 1.442695
      %v3390 = vpow.pop %v3389
      %v3391 = vmul.f32 %v3315, 1.442695
      %v3392 = vpow.pop %v3391
      %v3393 = vmul.f32 %v3316, 1.442695
      %v3394 = vpow.pop %v3393
      %v3395 = vmul.f32 %v3317, 1.442695
      %v3396 = vpow.pop %v3395
      %v3397 = vmul.f32 %v3318, 1.442695
      %v3398 = vpow.pop %v3397
      %v3399 = vmul.f32 %v3319, 1.442695
      %v3400 = vpow.pop %v3399
      %v3401 = vmul.f32 %v3320, 1.442695
      %v3402 = vpow.pop %v3401
      %v3403 = vmul.f32 %v3321, 1.442695
      %v3404 = vpow.pop %v3403
      %v3405 = vmul.f32 %v3322, 1.442695
      %v3406 = vpow.pop %v3405
      %v3407 = vmul.f32 %v3323, 1.442695
      %v3408 = vpow.pop %v3407
      %v3409 = vmul.f32 %v3324, 1.442695
      %v3410 = vpow.pop %v3409
      %v3411 = vmul.f32 %v3325, 1.442695
      %v3412 = vpow.pop %v3411
      %v3413 = vmul.f32 %v3326, 1.442695
      %v3414 = vpow.pop %v3413
      %v3415 = vmul.f32 %v3327, 1.442695
      %v3416 = vpow.pop %v3415
      %v3417 = vmul.f32 %v3328, 1.442695
      %v3418 = vpow.pop %v3417
      %v3419 = vmul.f32 %v3329, 1.442695
      %v3420 = vpow.pop %v3419
      %v3421 = vmul.f32 %v3330, 1.442695
      %v3422 = vpow.pop %v3421
      %v3423 = vmul.f32 %v3331, 1.442695
      %v3424 = vpow.pop %v3423
      %v3425 = vmul.f32 %v3332, 1.442695
      %v3426 = vpow.pop %v3425
      %v3427 = vmul.f32 %v3333, 1.442695
      %v3428 = vpow.pop %v3427
      %v3429 = vmul.f32 %v3334, 1.442695
      %v3430 = vpow.pop %v3429
      %v3431 = vmul.f32 %v3335, 1.442695
      %v3432 = vpow.pop %v3431
      %v3433 = vmul.f32 %v3336, 1.442695
      %v3434 = vpow.pop %v3433
      %v3435 = vmul.f32 %v3337, 1.442695
      %v3436 = vpow.pop %v3435
      %v3437 = vmul.f32 %v3338, 1.442695
      %v3438 = vpow.pop %v3437
      %v3439 = vmul.f32 %v3339, 1.442695
      %v3440 = vpow.pop %v3439
      %v3441 = vmul.f32 %v3340, 1.442695
      %v3442 = vpow.pop %v3441
      %v3443 = vmul.f32 %v3341, 1.442695
      %v3444 = vpow.pop %v3443
      %v3445 = vmul.f32 %v3342, 1.442695
      %v3446 = vpow.pop %v3445
      %v3447 = vmul.f32 %v3343, 1.442695
      %v3448 = vpow.pop %v3447
      %v3449 = vmul.f32 %v3344, 1.442695
      %v3450 = vpow.pop %v3449
      %v3451 = vmul.f32 %v3345, 1.442695
      %v3452 = vpow.pop %v3451
      %v3453 = vmul.f32 %v3346, 1.442695
      %v3454 = vpow.pop %v3453
      %v3455 = vmul.f32 %v3347, 1.442695
      %v3456 = vpow.pop %v3455
      %v3457 = vmul.f32 %v3348, 1.442695
      %v3458 = vpow.pop %v3457
      %v3459 = vmul.f32 %v3349, 1.442695
      %v3460 = vpow.pop %v3459
      %v3461 = vmul.f32 %v3350, 1.442695
      %v3462 = vpow.pop %v3461
      %v3463 = vmul.f32 %v3351, 1.442695
      %v3464 = vpow.pop %v3463
      %v3465 = vmul.f32 %v3352, 1.442695
      %v3466 = vpow.pop %v3465
      %v3467 = vmul.f32 %v3353, 1.442695
      %v3468 = vpow.pop %v3467
      %v3469 = vmul.f32 %v3354, 1.442695
      %v3470 = vpow.pop %v3469
      %v3471 = vmul.f32 %v3355, 1.442695
      %v3472 = vpow.pop %v3471
      %v3473 = vmul.f32 %v3356, 1.442695
      %v3474 = vpow.pop %v3473
      %v3475 = vmul.f32 %v3357, 1.442695
      %v3476 = vpow.pop %v3475
      %v3477 = vmul.f32 %v3358, 1.442695
      %v3478 = vpow.pop %v3477
      %v3479 = vmul.f32 %v3359, 1.442695
      %v3480 = vpow.pop %v3479
      %v3481 = vmul.f32 %v3360, 1.442695
      %v3482 = vpow.pop %v3481
      %v3483 = vmul.f32 %v3361, 1.442695
      %v3484 = vpow.pop %v3483
      %v3485 = vmul.f32 %v3362, 1.442695
      %v3486 = vpow.pop %v3485
      %v3487 = vmul.f32 %v3363, 1.442695
      %v3488 = vpow.pop %v3487
      %v3489 = vmul.f32 %v3364, 1.442695
      %v3490 = vpow.pop %v3489
      %v3491 = vmul.f32 %v3365, 1.442695
      %v3492 = vpow.pop %v3491
      %v3493 = vmul.f32 %v3366, 1.442695
      %v3494 = vpow.pop %v3493
      %v3495 = vsel %vm3110, %v3046, -inf
      %3496 = vmax.xlane.f32.xlu0 %v3495
      %v3497 = vpop.xlane.xlu0 %3496
      %v3498 = vsel %vm3110, %v3047, -inf
      %3499 = vmax.xlane.f32.xlu0 %v3498
      %v3500 = vpop.xlane.xlu0 %3499
      %v3501 = vsel %vm3110, %v3048, -inf
      %3502 = vmax.xlane.f32.xlu0 %v3501
      %v3503 = vpop.xlane.xlu0 %3502
      %v3504 = vsel %vm3110, %v3049, -inf
      %3505 = vmax.xlane.f32.xlu0 %v3504
      %v3506 = vpop.xlane.xlu0 %3505
      %v3507 = vsel %vm3110, %v3050, -inf
      %3508 = vmax.xlane.f32.xlu0 %v3507
      %v3509 = vpop.xlane.xlu0 %3508
      %v3510 = vsel %vm3110, %v3051, -inf
      %3511 = vmax.xlane.f32.xlu0 %v3510
      %v3512 = vpop.xlane.xlu0 %3511
      %v3513 = vsel %vm3110, %v3052, -inf
      %3514 = vmax.xlane.f32.xlu0 %v3513
      %v3515 = vpop.xlane.xlu0 %3514
      %v3516 = vsel %vm3110, %v3053, -inf
      %3517 = vmax.xlane.f32.xlu0 %v3516
      %v3518 = vpop.xlane.xlu0 %3517
      %v3519 = vsel %vm3110, %v3054, -inf
      %3520 = vmax.xlane.f32.xlu0 %v3519
      %v3521 = vpop.xlane.xlu0 %3520
      %v3522 = vsel %vm3110, %v3055, -inf
      %3523 = vmax.xlane.f32.xlu0 %v3522
      %v3524 = vpop.xlane.xlu0 %3523
      %v3525 = vsel %vm3110, %v3056, -inf
      %3526 = vmax.xlane.f32.xlu0 %v3525
      %v3527 = vpop.xlane.xlu0 %3526
      %v3528 = vsel %vm3110, %v3057, -inf
      %3529 = vmax.xlane.f32.xlu0 %v3528
      %v3530 = vpop.xlane.xlu0 %3529
      %v3531 = vsel %vm3110, %v3058, -inf
      %3532 = vmax.xlane.f32.xlu0 %v3531
      %v3533 = vpop.xlane.xlu0 %3532
      %v3534 = vsel %vm3110, %v3059, -inf
      %3535 = vmax.xlane.f32.xlu0 %v3534
      %v3536 = vpop.xlane.xlu0 %3535
      %v3537 = vsel %vm3110, %v3060, -inf
      %3538 = vmax.xlane.f32.xlu0 %v3537
      %v3539 = vpop.xlane.xlu0 %3538
      %v3540 = vsel %vm3110, %v3061, -inf
      %3541 = vmax.xlane.f32.xlu0 %v3540
      %v3542 = vpop.xlane.xlu0 %3541
      %v3543 = vsel %vm3110, %v3062, -inf
      %3544 = vmax.xlane.f32.xlu0 %v3543
      %v3545 = vpop.xlane.xlu0 %3544
      %v3546 = vsel %vm3110, %v3063, -inf
      %3547 = vmax.xlane.f32.xlu0 %v3546
      %v3548 = vpop.xlane.xlu0 %3547
      %v3549 = vsel %vm3110, %v3064, -inf
      %3550 = vmax.xlane.f32.xlu0 %v3549
      %v3551 = vpop.xlane.xlu0 %3550
      %v3552 = vsel %vm3110, %v3065, -inf
      %3553 = vmax.xlane.f32.xlu0 %v3552
      %v3554 = vpop.xlane.xlu0 %3553
      %v3555 = vsel %vm3110, %v3066, -inf
      %3556 = vmax.xlane.f32.xlu0 %v3555
      %v3557 = vpop.xlane.xlu0 %3556
      %v3558 = vsel %vm3110, %v3067, -inf
      %3559 = vmax.xlane.f32.xlu0 %v3558
      %v3560 = vpop.xlane.xlu0 %3559
      %v3561 = vsel %vm3110, %v3068, -inf
      %3562 = vmax.xlane.f32.xlu0 %v3561
      %v3563 = vpop.xlane.xlu0 %3562
      %v3564 = vsel %vm3110, %v3069, -inf
      %3565 = vmax.xlane.f32.xlu0 %v3564
      %v3566 = vpop.xlane.xlu0 %3565
      %v3567 = vsel %vm3110, %v3070, -inf
      %3568 = vmax.xlane.f32.xlu0 %v3567
      %v3569 = vpop.xlane.xlu0 %3568
      %v3570 = vsel %vm3110, %v3071, -inf
      %3571 = vmax.xlane.f32.xlu0 %v3570
      %v3572 = vpop.xlane.xlu0 %3571
      %v3573 = vsel %vm3110, %v3072, -inf
      %3574 = vmax.xlane.f32.xlu0 %v3573
      %v3575 = vpop.xlane.xlu0 %3574
      %v3576 = vsel %vm3110, %v3073, -inf
      %3577 = vmax.xlane.f32.xlu0 %v3576
      %v3578 = vpop.xlane.xlu0 %3577
      %v3579 = vsel %vm3110, %v3074, -inf
      %3580 = vmax.xlane.f32.xlu0 %v3579
      %v3581 = vpop.xlane.xlu0 %3580
      %v3582 = vsel %vm3110, %v3075, -inf
      %3583 = vmax.xlane.f32.xlu0 %v3582
      %v3584 = vpop.xlane.xlu0 %3583
      %v3585 = vsel %vm3110, %v3076, -inf
      %3586 = vmax.xlane.f32.xlu0 %v3585
      %v3587 = vpop.xlane.xlu0 %3586
      %v3588 = vsel %vm3110, %v3077, -inf
      %3589 = vmax.xlane.f32.xlu0 %v3588
      %v3590 = vpop.xlane.xlu0 %3589
      %v3591 = vsel %vm3110, %v3078, -inf
      %3592 = vmax.xlane.f32.xlu0 %v3591
      %v3593 = vpop.xlane.xlu0 %3592
      %v3594 = vsel %vm3110, %v3079, -inf
      %3595 = vmax.xlane.f32.xlu0 %v3594
      %v3596 = vpop.xlane.xlu0 %3595
      %v3597 = vsel %vm3110, %v3080, -inf
      %3598 = vmax.xlane.f32.xlu0 %v3597
      %v3599 = vpop.xlane.xlu0 %3598
      %v3600 = vsel %vm3110, %v3081, -inf
      %3601 = vmax.xlane.f32.xlu0 %v3600
      %v3602 = vpop.xlane.xlu0 %3601
      %v3603 = vsel %vm3110, %v3082, -inf
      %3604 = vmax.xlane.f32.xlu0 %v3603
      %v3605 = vpop.xlane.xlu0 %3604
      %v3606 = vsel %vm3110, %v3083, -inf
      %3607 = vmax.xlane.f32.xlu0 %v3606
      %v3608 = vpop.xlane.xlu0 %3607
      %v3609 = vsel %vm3110, %v3084, -inf
      %3610 = vmax.xlane.f32.xlu0 %v3609
      %v3611 = vpop.xlane.xlu0 %3610
      %v3612 = vsel %vm3110, %v3085, -inf
      %3613 = vmax.xlane.f32.xlu0 %v3612
      %v3614 = vpop.xlane.xlu0 %3613
      %v3615 = vsel %vm3110, %v3086, -inf
      %3616 = vmax.xlane.f32.xlu0 %v3615
      %v3617 = vpop.xlane.xlu0 %3616
      %v3618 = vsel %vm3110, %v3087, -inf
      %3619 = vmax.xlane.f32.xlu0 %v3618
      %v3620 = vpop.xlane.xlu0 %3619
      %v3621 = vsel %vm3110, %v3088, -inf
      %3622 = vmax.xlane.f32.xlu0 %v3621
      %v3623 = vpop.xlane.xlu0 %3622
      %v3624 = vsel %vm3110, %v3089, -inf
      %3625 = vmax.xlane.f32.xlu0 %v3624
      %v3626 = vpop.xlane.xlu0 %3625
      %v3627 = vsel %vm3110, %v3090, -inf
      %3628 = vmax.xlane.f32.xlu0 %v3627
      %v3629 = vpop.xlane.xlu0 %3628
      %v3630 = vsel %vm3110, %v3091, -inf
      %3631 = vmax.xlane.f32.xlu0 %v3630
      %v3632 = vpop.xlane.xlu0 %3631
      %v3633 = vsel %vm3110, %v3092, -inf
      %3634 = vmax.xlane.f32.xlu0 %v3633
      %v3635 = vpop.xlane.xlu0 %3634
      %v3636 = vsel %vm3110, %v3093, -inf
      %3637 = vmax.xlane.f32.xlu0 %v3636
      %v3638 = vpop.xlane.xlu0 %3637
      %v3639 = vsel %vm3110, %v3094, -inf
      %3640 = vmax.xlane.f32.xlu0 %v3639
      %v3641 = vpop.xlane.xlu0 %3640
      %v3642 = vsel %vm3110, %v3095, -inf
      %3643 = vmax.xlane.f32.xlu0 %v3642
      %v3644 = vpop.xlane.xlu0 %3643
      %v3645 = vsel %vm3110, %v3096, -inf
      %3646 = vmax.xlane.f32.xlu0 %v3645
      %v3647 = vpop.xlane.xlu0 %3646
      %v3648 = vsel %vm3110, %v3097, -inf
      %3649 = vmax.xlane.f32.xlu0 %v3648
      %v3650 = vpop.xlane.xlu0 %3649
      %v3651 = vsel %vm3110, %v3098, -inf
      %3652 = vmax.xlane.f32.xlu0 %v3651
      %v3653 = vpop.xlane.xlu0 %3652
      %v3654 = vsel %vm3110, %v3099, -inf
      %3655 = vmax.xlane.f32.xlu0 %v3654
      %v3656 = vpop.xlane.xlu0 %3655
      %v3657 = vsel %vm3110, %v3100, -inf
      %3658 = vmax.xlane.f32.xlu0 %v3657
      %v3659 = vpop.xlane.xlu0 %3658
      %v3660 = vsel %vm3110, %v3101, -inf
      %3661 = vmax.xlane.f32.xlu0 %v3660
      %v3662 = vpop.xlane.xlu0 %3661
      %v3663 = vsel %vm3110, %v3102, -inf
      %3664 = vmax.xlane.f32.xlu0 %v3663
      %v3665 = vpop.xlane.xlu0 %3664
      %v3666 = vsel %vm3110, %v3103, -inf
      %3667 = vmax.xlane.f32.xlu0 %v3666
      %v3668 = vpop.xlane.xlu0 %3667
      %v3669 = vsel %vm3110, %v3104, -inf
      %3670 = vmax.xlane.f32.xlu0 %v3669
      %v3671 = vpop.xlane.xlu0 %3670
      %v3672 = vsel %vm3110, %v3105, -inf
      %3673 = vmax.xlane.f32.xlu0 %v3672
      %v3674 = vpop.xlane.xlu0 %3673
      %v3675 = vsel %vm3110, %v3106, -inf
      %3676 = vmax.xlane.f32.xlu0 %v3675
      %v3677 = vpop.xlane.xlu0 %3676
      %v3678 = vsel %vm3110, %v3107, -inf
      %3679 = vmax.xlane.f32.xlu0 %v3678
      %v3680 = vpop.xlane.xlu0 %3679
      %v3681 = vsel %vm3110, %v3108, -inf
      %3682 = vmax.xlane.f32.xlu0 %v3681
      %v3683 = vpop.xlane.xlu0 %3682
      %v3684 = vsel %vm3110, %v3109, -inf
      %3685 = vmax.xlane.f32.xlu0 %v3684
      %v3686 = vpop.xlane.xlu0 %3685
      %v3687 = vsub.f32 %v3046, %v3497
      %v3688 = vsub.f32 %v3047, %v3500
      %v3689 = vsub.f32 %v3048, %v3503
      %v3690 = vsub.f32 %v3049, %v3506
      %v3691 = vsub.f32 %v3050, %v3509
      %v3692 = vsub.f32 %v3051, %v3512
      %v3693 = vsub.f32 %v3052, %v3515
      %v3694 = vsub.f32 %v3053, %v3518
      %v3695 = vsub.f32 %v3054, %v3521
      %v3696 = vsub.f32 %v3055, %v3524
      %v3697 = vsub.f32 %v3056, %v3527
      %v3698 = vsub.f32 %v3057, %v3530
      %v3699 = vsub.f32 %v3058, %v3533
      %v3700 = vsub.f32 %v3059, %v3536
      %v3701 = vsub.f32 %v3060, %v3539
      %v3702 = vsub.f32 %v3061, %v3542
      %v3703 = vsub.f32 %v3062, %v3545
      %v3704 = vsub.f32 %v3063, %v3548
      %v3705 = vsub.f32 %v3064, %v3551
      %v3706 = vsub.f32 %v3065, %v3554
      %v3707 = vsub.f32 %v3066, %v3557
      %v3708 = vsub.f32 %v3067, %v3560
      %v3709 = vsub.f32 %v3068, %v3563
      %v3710 = vsub.f32 %v3069, %v3566
      %v3711 = vsub.f32 %v3070, %v3569
      %v3712 = vsub.f32 %v3071, %v3572
      %v3713 = vsub.f32 %v3072, %v3575
      %v3714 = vsub.f32 %v3073, %v3578
      %v3715 = vsub.f32 %v3074, %v3581
      %v3716 = vsub.f32 %v3075, %v3584
      %v3717 = vsub.f32 %v3076, %v3587
      %v3718 = vsub.f32 %v3077, %v3590
      %v3719 = vsub.f32 %v3078, %v3593
      %v3720 = vsub.f32 %v3079, %v3596
      %v3721 = vsub.f32 %v3080, %v3599
      %v3722 = vsub.f32 %v3081, %v3602
      %v3723 = vsub.f32 %v3082, %v3605
      %v3724 = vsub.f32 %v3083, %v3608
      %v3725 = vsub.f32 %v3084, %v3611
      %v3726 = vsub.f32 %v3085, %v3614
      %v3727 = vsub.f32 %v3086, %v3617
      %v3728 = vsub.f32 %v3087, %v3620
      %v3729 = vsub.f32 %v3088, %v3623
      %v3730 = vsub.f32 %v3089, %v3626
      %v3731 = vsub.f32 %v3090, %v3629
      %v3732 = vsub.f32 %v3091, %v3632
      %v3733 = vsub.f32 %v3092, %v3635
      %v3734 = vsub.f32 %v3093, %v3638
      %v3735 = vsub.f32 %v3094, %v3641
      %v3736 = vsub.f32 %v3095, %v3644
      %v3737 = vsub.f32 %v3096, %v3647
      %v3738 = vsub.f32 %v3097, %v3650
      %v3739 = vsub.f32 %v3098, %v3653
      %v3740 = vsub.f32 %v3099, %v3656
      %v3741 = vsub.f32 %v3100, %v3659
      %v3742 = vsub.f32 %v3101, %v3662
      %v3743 = vsub.f32 %v3102, %v3665
      %v3744 = vsub.f32 %v3103, %v3668
      %v3745 = vsub.f32 %v3104, %v3671
      %v3746 = vsub.f32 %v3105, %v3674
      %v3747 = vsub.f32 %v3106, %v3677
      %v3748 = vsub.f32 %v3107, %v3680
      %v3749 = vsub.f32 %v3108, %v3683
      %v3750 = vsub.f32 %v3109, %v3686
      %v3751 = vmul.f32 %v3687, 1.442695
      %v3752 = vpow.pop %v3751
      %v3753 = vmul.f32 %v3688, 1.442695
      %v3754 = vpow.pop %v3753
      %v3755 = vmul.f32 %v3689, 1.442695
      %v3756 = vpow.pop %v3755
      %v3757 = vmul.f32 %v3690, 1.442695
      %v3758 = vpow.pop %v3757
      %v3759 = vmul.f32 %v3691, 1.442695
      %v3760 = vpow.pop %v3759
      %v3761 = vmul.f32 %v3692, 1.442695
      %v3762 = vpow.pop %v3761
      %v3763 = vmul.f32 %v3693, 1.442695
      %v3764 = vpow.pop %v3763
      %v3765 = vmul.f32 %v3694, 1.442695
      %v3766 = vpow.pop %v3765
      %v3767 = vmul.f32 %v3695, 1.442695
      %v3768 = vpow.pop %v3767
      %v3769 = vmul.f32 %v3696, 1.442695
      %v3770 = vpow.pop %v3769
      %v3771 = vmul.f32 %v3697, 1.442695
      %v3772 = vpow.pop %v3771
      %v3773 = vmul.f32 %v3698, 1.442695
      %v3774 = vpow.pop %v3773
      %v3775 = vmul.f32 %v3699, 1.442695
      %v3776 = vpow.pop %v3775
      %v3777 = vmul.f32 %v3700, 1.442695
      %v3778 = vpow.pop %v3777
      %v3779 = vmul.f32 %v3701, 1.442695
      %v3780 = vpow.pop %v3779
      %v3781 = vmul.f32 %v3702, 1.442695
      %v3782 = vpow.pop %v3781
      %v3783 = vmul.f32 %v3703, 1.442695
      %v3784 = vpow.pop %v3783
      %v3785 = vmul.f32 %v3704, 1.442695
      %v3786 = vpow.pop %v3785
      %v3787 = vmul.f32 %v3705, 1.442695
      %v3788 = vpow.pop %v3787
      %v3789 = vmul.f32 %v3706, 1.442695
      %v3790 = vpow.pop %v3789
      %v3791 = vmul.f32 %v3707, 1.442695
      %v3792 = vpow.pop %v3791
      %v3793 = vmul.f32 %v3708, 1.442695
      %v3794 = vpow.pop %v3793
      %v3795 = vmul.f32 %v3709, 1.442695
      %v3796 = vpow.pop %v3795
      %v3797 = vmul.f32 %v3710, 1.442695
      %v3798 = vpow.pop %v3797
      %v3799 = vmul.f32 %v3711, 1.442695
      %v3800 = vpow.pop %v3799
      %v3801 = vmul.f32 %v3712, 1.442695
      %v3802 = vpow.pop %v3801
      %v3803 = vmul.f32 %v3713, 1.442695
      %v3804 = vpow.pop %v3803
      %v3805 = vmul.f32 %v3714, 1.442695
      %v3806 = vpow.pop %v3805
      %v3807 = vmul.f32 %v3715, 1.442695
      %v3808 = vpow.pop %v3807
      %v3809 = vmul.f32 %v3716, 1.442695
      %v3810 = vpow.pop %v3809
      %v3811 = vmul.f32 %v3717, 1.442695
      %v3812 = vpow.pop %v3811
      %v3813 = vmul.f32 %v3718, 1.442695
      %v3814 = vpow.pop %v3813
      %v3815 = vmul.f32 %v3719, 1.442695
      %v3816 = vpow.pop %v3815
      %v3817 = vmul.f32 %v3720, 1.442695
      %v3818 = vpow.pop %v3817
      %v3819 = vmul.f32 %v3721, 1.442695
      %v3820 = vpow.pop %v3819
      %v3821 = vmul.f32 %v3722, 1.442695
      %v3822 = vpow.pop %v3821
      %v3823 = vmul.f32 %v3723, 1.442695
      %v3824 = vpow.pop %v3823
      %v3825 = vmul.f32 %v3724, 1.442695
      %v3826 = vpow.pop %v3825
      %v3827 = vmul.f32 %v3725, 1.442695
      %v3828 = vpow.pop %v3827
      %v3829 = vmul.f32 %v3726, 1.442695
      %v3830 = vpow.pop %v3829
      %v3831 = vmul.f32 %v3727, 1.442695
      %v3832 = vpow.pop %v3831
      %v3833 = vmul.f32 %v3728, 1.442695
      %v3834 = vpow.pop %v3833
      %v3835 = vmul.f32 %v3729, 1.442695
      %v3836 = vpow.pop %v3835
      %v3837 = vmul.f32 %v3730, 1.442695
      %v3838 = vpow.pop %v3837
      %v3839 = vmul.f32 %v3731, 1.442695
      %v3840 = vpow.pop %v3839
      %v3841 = vmul.f32 %v3732, 1.442695
      %v3842 = vpow.pop %v3841
      %v3843 = vmul.f32 %v3733, 1.442695
      %v3844 = vpow.pop %v3843
      %v3845 = vmul.f32 %v3734, 1.442695
      %v3846 = vpow.pop %v3845
      %v3847 = vmul.f32 %v3735, 1.442695
      %v3848 = vpow.pop %v3847
      %v3849 = vmul.f32 %v3736, 1.442695
      %v3850 = vpow.pop %v3849
      %v3851 = vmul.f32 %v3737, 1.442695
      %v3852 = vpow.pop %v3851
      %v3853 = vmul.f32 %v3738, 1.442695
      %v3854 = vpow.pop %v3853
      %v3855 = vmul.f32 %v3739, 1.442695
      %v3856 = vpow.pop %v3855
      %v3857 = vmul.f32 %v3740, 1.442695
      %v3858 = vpow.pop %v3857
      %v3859 = vmul.f32 %v3741, 1.442695
      %v3860 = vpow.pop %v3859
      %v3861 = vmul.f32 %v3742, 1.442695
      %v3862 = vpow.pop %v3861
      %v3863 = vmul.f32 %v3743, 1.442695
      %v3864 = vpow.pop %v3863
      %v3865 = vmul.f32 %v3744, 1.442695
      %v3866 = vpow.pop %v3865
      %v3867 = vmul.f32 %v3745, 1.442695
      %v3868 = vpow.pop %v3867
      %v3869 = vmul.f32 %v3746, 1.442695
      %v3870 = vpow.pop %v3869
      %v3871 = vmul.f32 %v3747, 1.442695
      %v3872 = vpow.pop %v3871
      %v3873 = vmul.f32 %v3748, 1.442695
      %v3874 = vpow.pop %v3873
      %v3875 = vmul.f32 %v3749, 1.442695
      %v3876 = vpow.pop %v3875
      %v3877 = vmul.f32 %v3750, 1.442695
      %v3878 = vpow.pop %v3877
      %v3879 = vsel %vm3110, %v3368, 0.0
      %3880 = vadd.xlane.f32.xlu0 %v3879
      %v3881 = vpop.xlane.xlu0 %3880
      %v3882 = vsel %vm3110, %v3370, 0.0
      %3883 = vadd.xlane.f32.xlu0 %v3882
      %v3884 = vpop.xlane.xlu0 %3883
      %v3885 = vsel %vm3110, %v3372, 0.0
      %3886 = vadd.xlane.f32.xlu0 %v3885
      %v3887 = vpop.xlane.xlu0 %3886
      %v3888 = vsel %vm3110, %v3374, 0.0
      %3889 = vadd.xlane.f32.xlu0 %v3888
      %v3890 = vpop.xlane.xlu0 %3889
      %v3891 = vsel %vm3110, %v3376, 0.0
      %3892 = vadd.xlane.f32.xlu0 %v3891
      %v3893 = vpop.xlane.xlu0 %3892
      %v3894 = vsel %vm3110, %v3378, 0.0
      %3895 = vadd.xlane.f32.xlu0 %v3894
      %v3896 = vpop.xlane.xlu0 %3895
      %v3897 = vsel %vm3110, %v3380, 0.0
      %3898 = vadd.xlane.f32.xlu0 %v3897
      %v3899 = vpop.xlane.xlu0 %3898
      %v3900 = vsel %vm3110, %v3382, 0.0
      %3901 = vadd.xlane.f32.xlu0 %v3900
      %v3902 = vpop.xlane.xlu0 %3901
      %v3903 = vsel %vm3110, %v3384, 0.0
      %3904 = vadd.xlane.f32.xlu0 %v3903
      %v3905 = vpop.xlane.xlu0 %3904
      %v3906 = vsel %vm3110, %v3386, 0.0
      %3907 = vadd.xlane.f32.xlu0 %v3906
      %v3908 = vpop.xlane.xlu0 %3907
      %v3909 = vsel %vm3110, %v3388, 0.0
      %3910 = vadd.xlane.f32.xlu0 %v3909
      %v3911 = vpop.xlane.xlu0 %3910
      %v3912 = vsel %vm3110, %v3390, 0.0
      %3913 = vadd.xlane.f32.xlu0 %v3912
      %v3914 = vpop.xlane.xlu0 %3913
      %v3915 = vsel %vm3110, %v3392, 0.0
      %3916 = vadd.xlane.f32.xlu0 %v3915
      %v3917 = vpop.xlane.xlu0 %3916
      %v3918 = vsel %vm3110, %v3394, 0.0
      %3919 = vadd.xlane.f32.xlu0 %v3918
      %v3920 = vpop.xlane.xlu0 %3919
      %v3921 = vsel %vm3110, %v3396, 0.0
      %3922 = vadd.xlane.f32.xlu0 %v3921
      %v3923 = vpop.xlane.xlu0 %3922
      %v3924 = vsel %vm3110, %v3398, 0.0
      %3925 = vadd.xlane.f32.xlu0 %v3924
      %v3926 = vpop.xlane.xlu0 %3925
      %v3927 = vsel %vm3110, %v3400, 0.0
      %3928 = vadd.xlane.f32.xlu0 %v3927
      %v3929 = vpop.xlane.xlu0 %3928
      %v3930 = vsel %vm3110, %v3402, 0.0
      %3931 = vadd.xlane.f32.xlu0 %v3930
      %v3932 = vpop.xlane.xlu0 %3931
      %v3933 = vsel %vm3110, %v3404, 0.0
      %3934 = vadd.xlane.f32.xlu0 %v3933
      %v3935 = vpop.xlane.xlu0 %3934
      %v3936 = vsel %vm3110, %v3406, 0.0
      %3937 = vadd.xlane.f32.xlu0 %v3936
      %v3938 = vpop.xlane.xlu0 %3937
      %v3939 = vsel %vm3110, %v3408, 0.0
      %3940 = vadd.xlane.f32.xlu0 %v3939
      %v3941 = vpop.xlane.xlu0 %3940
      %v3942 = vsel %vm3110, %v3410, 0.0
      %3943 = vadd.xlane.f32.xlu0 %v3942
      %v3944 = vpop.xlane.xlu0 %3943
      %v3945 = vsel %vm3110, %v3412, 0.0
      %3946 = vadd.xlane.f32.xlu0 %v3945
      %v3947 = vpop.xlane.xlu0 %3946
      %v3948 = vsel %vm3110, %v3414, 0.0
      %3949 = vadd.xlane.f32.xlu0 %v3948
      %v3950 = vpop.xlane.xlu0 %3949
      %v3951 = vsel %vm3110, %v3416, 0.0
      %3952 = vadd.xlane.f32.xlu0 %v3951
      %v3953 = vpop.xlane.xlu0 %3952
      %v3954 = vsel %vm3110, %v3418, 0.0
      %3955 = vadd.xlane.f32.xlu0 %v3954
      %v3956 = vpop.xlane.xlu0 %3955
      %v3957 = vsel %vm3110, %v3420, 0.0
      %3958 = vadd.xlane.f32.xlu0 %v3957
      %v3959 = vpop.xlane.xlu0 %3958
      %v3960 = vsel %vm3110, %v3422, 0.0
      %3961 = vadd.xlane.f32.xlu0 %v3960
      %v3962 = vpop.xlane.xlu0 %3961
      %v3963 = vsel %vm3110, %v3424, 0.0
      %3964 = vadd.xlane.f32.xlu0 %v3963
      %v3965 = vpop.xlane.xlu0 %3964
      %v3966 = vsel %vm3110, %v3426, 0.0
      %3967 = vadd.xlane.f32.xlu0 %v3966
      %v3968 = vpop.xlane.xlu0 %3967
      %v3969 = vsel %vm3110, %v3428, 0.0
      %3970 = vadd.xlane.f32.xlu0 %v3969
      %v3971 = vpop.xlane.xlu0 %3970
      %v3972 = vsel %vm3110, %v3430, 0.0
      %3973 = vadd.xlane.f32.xlu0 %v3972
      %v3974 = vpop.xlane.xlu0 %3973
      %v3975 = vsel %vm3110, %v3432, 0.0
      %3976 = vadd.xlane.f32.xlu0 %v3975
      %v3977 = vpop.xlane.xlu0 %3976
      %v3978 = vsel %vm3110, %v3434, 0.0
      %3979 = vadd.xlane.f32.xlu0 %v3978
      %v3980 = vpop.xlane.xlu0 %3979
      %v3981 = vsel %vm3110, %v3436, 0.0
      %3982 = vadd.xlane.f32.xlu0 %v3981
      %v3983 = vpop.xlane.xlu0 %3982
      %v3984 = vsel %vm3110, %v3438, 0.0
      %3985 = vadd.xlane.f32.xlu0 %v3984
      %v3986 = vpop.xlane.xlu0 %3985
      %v3987 = vsel %vm3110, %v3440, 0.0
      %3988 = vadd.xlane.f32.xlu0 %v3987
      %v3989 = vpop.xlane.xlu0 %3988
      %v3990 = vsel %vm3110, %v3442, 0.0
      %3991 = vadd.xlane.f32.xlu0 %v3990
      %v3992 = vpop.xlane.xlu0 %3991
      %v3993 = vsel %vm3110, %v3444, 0.0
      %3994 = vadd.xlane.f32.xlu0 %v3993
      %v3995 = vpop.xlane.xlu0 %3994
      %v3996 = vsel %vm3110, %v3446, 0.0
      %3997 = vadd.xlane.f32.xlu0 %v3996
      %v3998 = vpop.xlane.xlu0 %3997
      %v3999 = vsel %vm3110, %v3448, 0.0
      %4000 = vadd.xlane.f32.xlu0 %v3999
      %v4001 = vpop.xlane.xlu0 %4000
      %v4002 = vsel %vm3110, %v3450, 0.0
      %4003 = vadd.xlane.f32.xlu0 %v4002
      %v4004 = vpop.xlane.xlu0 %4003
      %v4005 = vsel %vm3110, %v3452, 0.0
      %4006 = vadd.xlane.f32.xlu0 %v4005
      %v4007 = vpop.xlane.xlu0 %4006
      %v4008 = vsel %vm3110, %v3454, 0.0
      %4009 = vadd.xlane.f32.xlu0 %v4008
      %v4010 = vpop.xlane.xlu0 %4009
      %v4011 = vsel %vm3110, %v3456, 0.0
      %4012 = vadd.xlane.f32.xlu0 %v4011
      %v4013 = vpop.xlane.xlu0 %4012
      %v4014 = vsel %vm3110, %v3458, 0.0
      %4015 = vadd.xlane.f32.xlu0 %v4014
      %v4016 = vpop.xlane.xlu0 %4015
      %v4017 = vsel %vm3110, %v3460, 0.0
      %4018 = vadd.xlane.f32.xlu0 %v4017
      %v4019 = vpop.xlane.xlu0 %4018
      %v4020 = vsel %vm3110, %v3462, 0.0
      %4021 = vadd.xlane.f32.xlu0 %v4020
      %v4022 = vpop.xlane.xlu0 %4021
      %v4023 = vsel %vm3110, %v3464, 0.0
      %4024 = vadd.xlane.f32.xlu0 %v4023
      %v4025 = vpop.xlane.xlu0 %4024
      %v4026 = vsel %vm3110, %v3466, 0.0
      %4027 = vadd.xlane.f32.xlu0 %v4026
      %v4028 = vpop.xlane.xlu0 %4027
      %v4029 = vsel %vm3110, %v3468, 0.0
      %4030 = vadd.xlane.f32.xlu0 %v4029
      %v4031 = vpop.xlane.xlu0 %4030
      %v4032 = vsel %vm3110, %v3470, 0.0
      %4033 = vadd.xlane.f32.xlu0 %v4032
      %v4034 = vpop.xlane.xlu0 %4033
      %v4035 = vsel %vm3110, %v3472, 0.0
      %4036 = vadd.xlane.f32.xlu0 %v4035
      %v4037 = vpop.xlane.xlu0 %4036
      %v4038 = vsel %vm3110, %v3474, 0.0
      %4039 = vadd.xlane.f32.xlu0 %v4038
      %v4040 = vpop.xlane.xlu0 %4039
      %v4041 = vsel %vm3110, %v3476, 0.0
      %4042 = vadd.xlane.f32.xlu0 %v4041
      %v4043 = vpop.xlane.xlu0 %4042
      %v4044 = vsel %vm3110, %v3478, 0.0
      %4045 = vadd.xlane.f32.xlu0 %v4044
      %v4046 = vpop.xlane.xlu0 %4045
      %v4047 = vsel %vm3110, %v3480, 0.0
      %4048 = vadd.xlane.f32.xlu0 %v4047
      %v4049 = vpop.xlane.xlu0 %4048
      %v4050 = vsel %vm3110, %v3482, 0.0
      %4051 = vadd.xlane.f32.xlu0 %v4050
      %v4052 = vpop.xlane.xlu0 %4051
      %v4053 = vsel %vm3110, %v3484, 0.0
      %4054 = vadd.xlane.f32.xlu0 %v4053
      %v4055 = vpop.xlane.xlu0 %4054
      %v4056 = vsel %vm3110, %v3486, 0.0
      %4057 = vadd.xlane.f32.xlu0 %v4056
      %v4058 = vpop.xlane.xlu0 %4057
      %v4059 = vsel %vm3110, %v3488, 0.0
      %4060 = vadd.xlane.f32.xlu0 %v4059
      %v4061 = vpop.xlane.xlu0 %4060
      %v4062 = vsel %vm3110, %v3490, 0.0
      %4063 = vadd.xlane.f32.xlu0 %v4062
      %v4064 = vpop.xlane.xlu0 %4063
      %v4065 = vsel %vm3110, %v3492, 0.0
      %4066 = vadd.xlane.f32.xlu0 %v4065
      %v4067 = vpop.xlane.xlu0 %4066
      %v4068 = vsel %vm3110, %v3494, 0.0
      %4069 = vadd.xlane.f32.xlu0 %v4068
      %v4070 = vpop.xlane.xlu0 %4069
      %v4071 = vrcp.pop %v3881
      %v4072 = vrcp.pop %v3884
      %v4073 = vrcp.pop %v3887
      %v4074 = vrcp.pop %v3890
      %v4075 = vrcp.pop %v3893
      %v4076 = vrcp.pop %v3896
      %v4077 = vrcp.pop %v3899
      %v4078 = vrcp.pop %v3902
      %v4079 = vrcp.pop %v3905
      %v4080 = vrcp.pop %v3908
      %v4081 = vrcp.pop %v3911
      %v4082 = vrcp.pop %v3914
      %v4083 = vrcp.pop %v3917
      %v4084 = vrcp.pop %v3920
      %v4085 = vrcp.pop %v3923
      %v4086 = vrcp.pop %v3926
      %v4087 = vrcp.pop %v3929
      %v4088 = vrcp.pop %v3932
      %v4089 = vrcp.pop %v3935
      %v4090 = vrcp.pop %v3938
      %v4091 = vrcp.pop %v3941
      %v4092 = vrcp.pop %v3944
      %v4093 = vrcp.pop %v3947
      %v4094 = vrcp.pop %v3950
      %v4095 = vrcp.pop %v3953
      %v4096 = vrcp.pop %v3956
      %v4097 = vrcp.pop %v3959
      %v4098 = vrcp.pop %v3962
      %v4099 = vrcp.pop %v3965
      %v4100 = vrcp.pop %v3968
      %v4101 = vrcp.pop %v3971
      %v4102 = vrcp.pop %v3974
      %v4103 = vrcp.pop %v3977
      %v4104 = vrcp.pop %v3980
      %v4105 = vrcp.pop %v3983
      %v4106 = vrcp.pop %v3986
      %v4107 = vrcp.pop %v3989
      %v4108 = vrcp.pop %v3992
      %v4109 = vrcp.pop %v3995
      %v4110 = vrcp.pop %v3998
      %v4111 = vrcp.pop %v4001
      %v4112 = vrcp.pop %v4004
      %v4113 = vrcp.pop %v4007
      %v4114 = vrcp.pop %v4010
      %v4115 = vrcp.pop %v4013
      %v4116 = vrcp.pop %v4016
      %v4117 = vrcp.pop %v4019
      %v4118 = vrcp.pop %v4022
      %v4119 = vrcp.pop %v4025
      %v4120 = vrcp.pop %v4028
      %v4121 = vrcp.pop %v4031
      %v4122 = vrcp.pop %v4034
      %v4123 = vrcp.pop %v4037
      %v4124 = vrcp.pop %v4040
      %v4125 = vrcp.pop %v4043
      %v4126 = vrcp.pop %v4046
      %v4127 = vrcp.pop %v4049
      %v4128 = vrcp.pop %v4052
      %v4129 = vrcp.pop %v4055
      %v4130 = vrcp.pop %v4058
      %v4131 = vrcp.pop %v4061
      %v4132 = vrcp.pop %v4064
      %v4133 = vrcp.pop %v4067
      %v4134 = vrcp.pop %v4070
      %v4135 = vmul.f32 %v3368, %v4071
      %v4136 = vmul.f32 %v3370, %v4072
      %v4137 = vmul.f32 %v3372, %v4073
      %v4138 = vmul.f32 %v3374, %v4074
      %v4139 = vmul.f32 %v3376, %v4075
      %v4140 = vmul.f32 %v3378, %v4076
      %v4141 = vmul.f32 %v3380, %v4077
      %v4142 = vmul.f32 %v3382, %v4078
      %v4143 = vmul.f32 %v3384, %v4079
      %v4144 = vmul.f32 %v3386, %v4080
      %v4145 = vmul.f32 %v3388, %v4081
      %v4146 = vmul.f32 %v3390, %v4082
      %v4147 = vmul.f32 %v3392, %v4083
      %v4148 = vmul.f32 %v3394, %v4084
      %v4149 = vmul.f32 %v3396, %v4085
      %v4150 = vmul.f32 %v3398, %v4086
      %v4151 = vmul.f32 %v3400, %v4087
      %v4152 = vmul.f32 %v3402, %v4088
      %v4153 = vmul.f32 %v3404, %v4089
      %v4154 = vmul.f32 %v3406, %v4090
      %v4155 = vmul.f32 %v3408, %v4091
      %v4156 = vmul.f32 %v3410, %v4092
      %v4157 = vmul.f32 %v3412, %v4093
      %v4158 = vmul.f32 %v3414, %v4094
      %v4159 = vmul.f32 %v3416, %v4095
      %v4160 = vmul.f32 %v3418, %v4096
      %v4161 = vmul.f32 %v3420, %v4097
      %v4162 = vmul.f32 %v3422, %v4098
      %v4163 = vmul.f32 %v3424, %v4099
      %v4164 = vmul.f32 %v3426, %v4100
      %v4165 = vmul.f32 %v3428, %v4101
      %v4166 = vmul.f32 %v3430, %v4102
      %v4167 = vmul.f32 %v3432, %v4103
      %v4168 = vmul.f32 %v3434, %v4104
      %v4169 = vmul.f32 %v3436, %v4105
      %v4170 = vmul.f32 %v3438, %v4106
      %v4171 = vmul.f32 %v3440, %v4107
      %v4172 = vmul.f32 %v3442, %v4108
      %v4173 = vmul.f32 %v3444, %v4109
      %v4174 = vmul.f32 %v3446, %v4110
      %v4175 = vmul.f32 %v3448, %v4111
      %v4176 = vmul.f32 %v3450, %v4112
      %v4177 = vmul.f32 %v3452, %v4113
      %v4178 = vmul.f32 %v3454, %v4114
      %v4179 = vmul.f32 %v3456, %v4115
      %v4180 = vmul.f32 %v3458, %v4116
      %v4181 = vmul.f32 %v3460, %v4117
      %v4182 = vmul.f32 %v3462, %v4118
      %v4183 = vmul.f32 %v3464, %v4119
      %v4184 = vmul.f32 %v3466, %v4120
      %v4185 = vmul.f32 %v3468, %v4121
      %v4186 = vmul.f32 %v3470, %v4122
      %v4187 = vmul.f32 %v3472, %v4123
      %v4188 = vmul.f32 %v3474, %v4124
      %v4189 = vmul.f32 %v3476, %v4125
      %v4190 = vmul.f32 %v3478, %v4126
      %v4191 = vmul.f32 %v3480, %v4127
      %v4192 = vmul.f32 %v3482, %v4128
      %v4193 = vmul.f32 %v3484, %v4129
      %v4194 = vmul.f32 %v3486, %v4130
      %v4195 = vmul.f32 %v3488, %v4131
      %v4196 = vmul.f32 %v3490, %v4132
      %v4197 = vmul.f32 %v3492, %v4133
      %v4198 = vmul.f32 %v3494, %v4134
      %v4199 = vsel %vm3110, %v3752, 0.0
      %4200 = vadd.xlane.f32.xlu0 %v4199
      %v4201 = vpop.xlane.xlu0 %4200
      %v4202 = vsel %vm3110, %v3754, 0.0
      %4203 = vadd.xlane.f32.xlu0 %v4202
      %v4204 = vpop.xlane.xlu0 %4203
      %v4205 = vsel %vm3110, %v3756, 0.0
      %4206 = vadd.xlane.f32.xlu0 %v4205
      %v4207 = vpop.xlane.xlu0 %4206
      %v4208 = vsel %vm3110, %v3758, 0.0
      %4209 = vadd.xlane.f32.xlu0 %v4208
      %v4210 = vpop.xlane.xlu0 %4209
      %v4211 = vsel %vm3110, %v3760, 0.0
      %4212 = vadd.xlane.f32.xlu0 %v4211
      %v4213 = vpop.xlane.xlu0 %4212
      %v4214 = vsel %vm3110, %v3762, 0.0
      %4215 = vadd.xlane.f32.xlu0 %v4214
      %v4216 = vpop.xlane.xlu0 %4215
      %v4217 = vsel %vm3110, %v3764, 0.0
      %4218 = vadd.xlane.f32.xlu0 %v4217
      %v4219 = vpop.xlane.xlu0 %4218
      %v4220 = vsel %vm3110, %v3766, 0.0
      %4221 = vadd.xlane.f32.xlu0 %v4220
      %v4222 = vpop.xlane.xlu0 %4221
      %v4223 = vsel %vm3110, %v3768, 0.0
      %4224 = vadd.xlane.f32.xlu0 %v4223
      %v4225 = vpop.xlane.xlu0 %4224
      %v4226 = vsel %vm3110, %v3770, 0.0
      %4227 = vadd.xlane.f32.xlu0 %v4226
      %v4228 = vpop.xlane.xlu0 %4227
      %v4229 = vsel %vm3110, %v3772, 0.0
      %4230 = vadd.xlane.f32.xlu0 %v4229
      %v4231 = vpop.xlane.xlu0 %4230
      %v4232 = vsel %vm3110, %v3774, 0.0
      %4233 = vadd.xlane.f32.xlu0 %v4232
      %v4234 = vpop.xlane.xlu0 %4233
      %v4235 = vsel %vm3110, %v3776, 0.0
      %4236 = vadd.xlane.f32.xlu0 %v4235
      %v4237 = vpop.xlane.xlu0 %4236
      %v4238 = vsel %vm3110, %v3778, 0.0
      %4239 = vadd.xlane.f32.xlu0 %v4238
      %v4240 = vpop.xlane.xlu0 %4239
      %v4241 = vsel %vm3110, %v3780, 0.0
      %4242 = vadd.xlane.f32.xlu0 %v4241
      %v4243 = vpop.xlane.xlu0 %4242
      %v4244 = vsel %vm3110, %v3782, 0.0
      %4245 = vadd.xlane.f32.xlu0 %v4244
      %v4246 = vpop.xlane.xlu0 %4245
      %v4247 = vsel %vm3110, %v3784, 0.0
      %4248 = vadd.xlane.f32.xlu0 %v4247
      %v4249 = vpop.xlane.xlu0 %4248
      %v4250 = vsel %vm3110, %v3786, 0.0
      %4251 = vadd.xlane.f32.xlu0 %v4250
      %v4252 = vpop.xlane.xlu0 %4251
      %v4253 = vsel %vm3110, %v3788, 0.0
      %4254 = vadd.xlane.f32.xlu0 %v4253
      %v4255 = vpop.xlane.xlu0 %4254
      %v4256 = vsel %vm3110, %v3790, 0.0
      %4257 = vadd.xlane.f32.xlu0 %v4256
      %v4258 = vpop.xlane.xlu0 %4257
      %v4259 = vsel %vm3110, %v3792, 0.0
      %4260 = vadd.xlane.f32.xlu0 %v4259
      %v4261 = vpop.xlane.xlu0 %4260
      %v4262 = vsel %vm3110, %v3794, 0.0
      %4263 = vadd.xlane.f32.xlu0 %v4262
      %v4264 = vpop.xlane.xlu0 %4263
      %v4265 = vsel %vm3110, %v3796, 0.0
      %4266 = vadd.xlane.f32.xlu0 %v4265
      %v4267 = vpop.xlane.xlu0 %4266
      %v4268 = vsel %vm3110, %v3798, 0.0
      %4269 = vadd.xlane.f32.xlu0 %v4268
      %v4270 = vpop.xlane.xlu0 %4269
      %v4271 = vsel %vm3110, %v3800, 0.0
      %4272 = vadd.xlane.f32.xlu0 %v4271
      %v4273 = vpop.xlane.xlu0 %4272
      %v4274 = vsel %vm3110, %v3802, 0.0
      %4275 = vadd.xlane.f32.xlu0 %v4274
      %v4276 = vpop.xlane.xlu0 %4275
      %v4277 = vsel %vm3110, %v3804, 0.0
      %4278 = vadd.xlane.f32.xlu0 %v4277
      %v4279 = vpop.xlane.xlu0 %4278
      %v4280 = vsel %vm3110, %v3806, 0.0
      %4281 = vadd.xlane.f32.xlu0 %v4280
      %v4282 = vpop.xlane.xlu0 %4281
      %v4283 = vsel %vm3110, %v3808, 0.0
      %4284 = vadd.xlane.f32.xlu0 %v4283
      %v4285 = vpop.xlane.xlu0 %4284
      %v4286 = vsel %vm3110, %v3810, 0.0
      %4287 = vadd.xlane.f32.xlu0 %v4286
      %v4288 = vpop.xlane.xlu0 %4287
      %v4289 = vsel %vm3110, %v3812, 0.0
      %4290 = vadd.xlane.f32.xlu0 %v4289
      %v4291 = vpop.xlane.xlu0 %4290
      %v4292 = vsel %vm3110, %v3814, 0.0
      %4293 = vadd.xlane.f32.xlu0 %v4292
      %v4294 = vpop.xlane.xlu0 %4293
      %v4295 = vsel %vm3110, %v3816, 0.0
      %4296 = vadd.xlane.f32.xlu0 %v4295
      %v4297 = vpop.xlane.xlu0 %4296
      %v4298 = vsel %vm3110, %v3818, 0.0
      %4299 = vadd.xlane.f32.xlu0 %v4298
      %v4300 = vpop.xlane.xlu0 %4299
      %v4301 = vsel %vm3110, %v3820, 0.0
      %4302 = vadd.xlane.f32.xlu0 %v4301
      %v4303 = vpop.xlane.xlu0 %4302
      %v4304 = vsel %vm3110, %v3822, 0.0
      %4305 = vadd.xlane.f32.xlu0 %v4304
      %v4306 = vpop.xlane.xlu0 %4305
      %v4307 = vsel %vm3110, %v3824, 0.0
      %4308 = vadd.xlane.f32.xlu0 %v4307
      %v4309 = vpop.xlane.xlu0 %4308
      %v4310 = vsel %vm3110, %v3826, 0.0
      %4311 = vadd.xlane.f32.xlu0 %v4310
      %v4312 = vpop.xlane.xlu0 %4311
      %v4313 = vsel %vm3110, %v3828, 0.0
      %4314 = vadd.xlane.f32.xlu0 %v4313
      %v4315 = vpop.xlane.xlu0 %4314
      %v4316 = vsel %vm3110, %v3830, 0.0
      %4317 = vadd.xlane.f32.xlu0 %v4316
      %v4318 = vpop.xlane.xlu0 %4317
      %v4319 = vsel %vm3110, %v3832, 0.0
      %4320 = vadd.xlane.f32.xlu0 %v4319
      %v4321 = vpop.xlane.xlu0 %4320
      %v4322 = vsel %vm3110, %v3834, 0.0
      %4323 = vadd.xlane.f32.xlu0 %v4322
      %v4324 = vpop.xlane.xlu0 %4323
      %v4325 = vsel %vm3110, %v3836, 0.0
      %4326 = vadd.xlane.f32.xlu0 %v4325
      %v4327 = vpop.xlane.xlu0 %4326
      %v4328 = vsel %vm3110, %v3838, 0.0
      %4329 = vadd.xlane.f32.xlu0 %v4328
      %v4330 = vpop.xlane.xlu0 %4329
      %v4331 = vsel %vm3110, %v3840, 0.0
      %4332 = vadd.xlane.f32.xlu0 %v4331
      %v4333 = vpop.xlane.xlu0 %4332
      %v4334 = vsel %vm3110, %v3842, 0.0
      %4335 = vadd.xlane.f32.xlu0 %v4334
      %v4336 = vpop.xlane.xlu0 %4335
      %v4337 = vsel %vm3110, %v3844, 0.0
      %4338 = vadd.xlane.f32.xlu0 %v4337
      %v4339 = vpop.xlane.xlu0 %4338
      %v4340 = vsel %vm3110, %v3846, 0.0
      %4341 = vadd.xlane.f32.xlu0 %v4340
      %v4342 = vpop.xlane.xlu0 %4341
      %v4343 = vsel %vm3110, %v3848, 0.0
      %4344 = vadd.xlane.f32.xlu0 %v4343
      %v4345 = vpop.xlane.xlu0 %4344
      %v4346 = vsel %vm3110, %v3850, 0.0
      %4347 = vadd.xlane.f32.xlu0 %v4346
      %v4348 = vpop.xlane.xlu0 %4347
      %v4349 = vsel %vm3110, %v3852, 0.0
      %4350 = vadd.xlane.f32.xlu0 %v4349
      %v4351 = vpop.xlane.xlu0 %4350
      %v4352 = vsel %vm3110, %v3854, 0.0
      %4353 = vadd.xlane.f32.xlu0 %v4352
      %v4354 = vpop.xlane.xlu0 %4353
      %v4355 = vsel %vm3110, %v3856, 0.0
      %4356 = vadd.xlane.f32.xlu0 %v4355
      %v4357 = vpop.xlane.xlu0 %4356
      %v4358 = vsel %vm3110, %v3858, 0.0
      %4359 = vadd.xlane.f32.xlu0 %v4358
      %v4360 = vpop.xlane.xlu0 %4359
      %v4361 = vsel %vm3110, %v3860, 0.0
      %4362 = vadd.xlane.f32.xlu0 %v4361
      %v4363 = vpop.xlane.xlu0 %4362
      %v4364 = vsel %vm3110, %v3862, 0.0
      %4365 = vadd.xlane.f32.xlu0 %v4364
      %v4366 = vpop.xlane.xlu0 %4365
      %v4367 = vsel %vm3110, %v3864, 0.0
      %4368 = vadd.xlane.f32.xlu0 %v4367
      %v4369 = vpop.xlane.xlu0 %4368
      %v4370 = vsel %vm3110, %v3866, 0.0
      %4371 = vadd.xlane.f32.xlu0 %v4370
      %v4372 = vpop.xlane.xlu0 %4371
      %v4373 = vsel %vm3110, %v3868, 0.0
      %4374 = vadd.xlane.f32.xlu0 %v4373
      %v4375 = vpop.xlane.xlu0 %4374
      %v4376 = vsel %vm3110, %v3870, 0.0
      %4377 = vadd.xlane.f32.xlu0 %v4376
      %v4378 = vpop.xlane.xlu0 %4377
      %v4379 = vsel %vm3110, %v3872, 0.0
      %4380 = vadd.xlane.f32.xlu0 %v4379
      %v4381 = vpop.xlane.xlu0 %4380
      %v4382 = vsel %vm3110, %v3874, 0.0
      %4383 = vadd.xlane.f32.xlu0 %v4382
      %v4384 = vpop.xlane.xlu0 %4383
      %v4385 = vsel %vm3110, %v3876, 0.0
      %4386 = vadd.xlane.f32.xlu0 %v4385
      %v4387 = vpop.xlane.xlu0 %4386
      %v4388 = vsel %vm3110, %v3878, 0.0
      %4389 = vadd.xlane.f32.xlu0 %v4388
      %v4390 = vpop.xlane.xlu0 %4389
      %v4391 = vrcp.pop %v4201
      %v4392 = vrcp.pop %v4204
      %v4393 = vrcp.pop %v4207
      %v4394 = vrcp.pop %v4210
      %v4395 = vrcp.pop %v4213
      %v4396 = vrcp.pop %v4216
      %v4397 = vrcp.pop %v4219
      %v4398 = vrcp.pop %v4222
      %v4399 = vrcp.pop %v4225
      %v4400 = vrcp.pop %v4228
      %v4401 = vrcp.pop %v4231
      %v4402 = vrcp.pop %v4234
      %v4403 = vrcp.pop %v4237
      %v4404 = vrcp.pop %v4240
      %v4405 = vrcp.pop %v4243
      %v4406 = vrcp.pop %v4246
      %v4407 = vrcp.pop %v4249
      %v4408 = vrcp.pop %v4252
      %v4409 = vrcp.pop %v4255
      %v4410 = vrcp.pop %v4258
      %v4411 = vrcp.pop %v4261
      %v4412 = vrcp.pop %v4264
      %v4413 = vrcp.pop %v4267
      %v4414 = vrcp.pop %v4270
      %v4415 = vrcp.pop %v4273
      %v4416 = vrcp.pop %v4276
      %v4417 = vrcp.pop %v4279
      %v4418 = vrcp.pop %v4282
      %v4419 = vrcp.pop %v4285
      %v4420 = vrcp.pop %v4288
      %v4421 = vrcp.pop %v4291
      %v4422 = vrcp.pop %v4294
      %v4423 = vrcp.pop %v4297
      %v4424 = vrcp.pop %v4300
      %v4425 = vrcp.pop %v4303
      %v4426 = vrcp.pop %v4306
      %v4427 = vrcp.pop %v4309
      %v4428 = vrcp.pop %v4312
      %v4429 = vrcp.pop %v4315
      %v4430 = vrcp.pop %v4318
      %v4431 = vrcp.pop %v4321
      %v4432 = vrcp.pop %v4324
      %v4433 = vrcp.pop %v4327
      %v4434 = vrcp.pop %v4330
      %v4435 = vrcp.pop %v4333
      %v4436 = vrcp.pop %v4336
      %v4437 = vrcp.pop %v4339
      %v4438 = vrcp.pop %v4342
      %v4439 = vrcp.pop %v4345
      %v4440 = vrcp.pop %v4348
      %v4441 = vrcp.pop %v4351
      %v4442 = vrcp.pop %v4354
      %v4443 = vrcp.pop %v4357
      %v4444 = vrcp.pop %v4360
      %v4445 = vrcp.pop %v4363
      %v4446 = vrcp.pop %v4366
      %v4447 = vrcp.pop %v4369
      %v4448 = vrcp.pop %v4372
      %v4449 = vrcp.pop %v4375
      %v4450 = vrcp.pop %v4378
      %v4451 = vrcp.pop %v4381
      %v4452 = vrcp.pop %v4384
      %v4453 = vrcp.pop %v4387
      %v4454 = vrcp.pop %v4390
      %v4455 = vmul.f32 %v3752, %v4391
      %v4456 = vmul.f32 %v3754, %v4392
      %v4457 = vmul.f32 %v3756, %v4393
      %v4458 = vmul.f32 %v3758, %v4394
      %v4459 = vmul.f32 %v3760, %v4395
      %v4460 = vmul.f32 %v3762, %v4396
      %v4461 = vmul.f32 %v3764, %v4397
      %v4462 = vmul.f32 %v3766, %v4398
      %v4463 = vmul.f32 %v3768, %v4399
      %v4464 = vmul.f32 %v3770, %v4400
      %v4465 = vmul.f32 %v3772, %v4401
      %v4466 = vmul.f32 %v3774, %v4402
      %v4467 = vmul.f32 %v3776, %v4403
      %v4468 = vmul.f32 %v3778, %v4404
      %v4469 = vmul.f32 %v3780, %v4405
      %v4470 = vmul.f32 %v3782, %v4406
      %v4471 = vmul.f32 %v3784, %v4407
      %v4472 = vmul.f32 %v3786, %v4408
      %v4473 = vmul.f32 %v3788, %v4409
      %v4474 = vmul.f32 %v3790, %v4410
      %v4475 = vmul.f32 %v3792, %v4411
      %v4476 = vmul.f32 %v3794, %v4412
      %v4477 = vmul.f32 %v3796, %v4413
      %v4478 = vmul.f32 %v3798, %v4414
      %v4479 = vmul.f32 %v3800, %v4415
      %v4480 = vmul.f32 %v3802, %v4416
      %v4481 = vmul.f32 %v3804, %v4417
      %v4482 = vmul.f32 %v3806, %v4418
      %v4483 = vmul.f32 %v3808, %v4419
      %v4484 = vmul.f32 %v3810, %v4420
      %v4485 = vmul.f32 %v3812, %v4421
      %v4486 = vmul.f32 %v3814, %v4422
      %v4487 = vmul.f32 %v3816, %v4423
      %v4488 = vmul.f32 %v3818, %v4424
      %v4489 = vmul.f32 %v3820, %v4425
      %v4490 = vmul.f32 %v3822, %v4426
      %v4491 = vmul.f32 %v3824, %v4427
      %v4492 = vmul.f32 %v3826, %v4428
      %v4493 = vmul.f32 %v3828, %v4429
      %v4494 = vmul.f32 %v3830, %v4430
      %v4495 = vmul.f32 %v3832, %v4431
      %v4496 = vmul.f32 %v3834, %v4432
      %v4497 = vmul.f32 %v3836, %v4433
      %v4498 = vmul.f32 %v3838, %v4434
      %v4499 = vmul.f32 %v3840, %v4435
      %v4500 = vmul.f32 %v3842, %v4436
      %v4501 = vmul.f32 %v3844, %v4437
      %v4502 = vmul.f32 %v3846, %v4438
      %v4503 = vmul.f32 %v3848, %v4439
      %v4504 = vmul.f32 %v3850, %v4440
      %v4505 = vmul.f32 %v3852, %v4441
      %v4506 = vmul.f32 %v3854, %v4442
      %v4507 = vmul.f32 %v3856, %v4443
      %v4508 = vmul.f32 %v3858, %v4444
      %v4509 = vmul.f32 %v3860, %v4445
      %v4510 = vmul.f32 %v3862, %v4446
      %v4511 = vmul.f32 %v3864, %v4447
      %v4512 = vmul.f32 %v3866, %v4448
      %v4513 = vmul.f32 %v3868, %v4449
      %v4514 = vmul.f32 %v3870, %v4450
      %v4515 = vmul.f32 %v3872, %v4451
      %v4516 = vmul.f32 %v3874, %v4452
      %v4517 = vmul.f32 %v3876, %v4453
      %v4518 = vmul.f32 %v3878, %v4454
      %v4527 = vlaneseq
      %v4528 = vshrl.u32 %v4527, 7
      %v4529 = vsub.s32 0, %v4528
      %v4530 = vrot.slane %v735, %v4529
      %v4531 = vlaneseq
      %v4532 = vshrl.u32 %v4531, 7
      %v4533 = vsub.s32 0, %v4532
      %v4534 = vrot.slane %v736, %v4533
      %v4535 = vlaneseq
      %v4536 = vshrl.u32 %v4535, 7
      %v4537 = vsub.s32 0, %v4536
      %v4538 = vrot.slane %v737, %v4537
      %v4539 = vlaneseq
      %v4540 = vshrl.u32 %v4539, 7
      %v4541 = vsub.s32 0, %v4540
      %v4542 = vrot.slane %v738, %v4541
      %v4543 = vlaneseq
      %v4544 = vshrl.u32 %v4543, 7
      %v4545 = vsub.s32 0, %v4544
      %v4546 = vrot.slane %v739, %v4545
      %v4547 = vlaneseq
      %v4548 = vshrl.u32 %v4547, 7
      %v4549 = vsub.s32 0, %v4548
      %v4550 = vrot.slane %v740, %v4549
      %v4551 = vlaneseq
      %v4552 = vshrl.u32 %v4551, 7
      %v4553 = vsub.s32 0, %v4552
      %v4554 = vrot.slane %v741, %v4553
      %v4555 = vlaneseq
      %v4556 = vshrl.u32 %v4555, 7
      %v4557 = vsub.s32 0, %v4556
      %v4558 = vrot.slane %v742, %v4557
      %4559 = vset.pattern.permute.xlu0 0
      %4560 = vperm.xlu0 %4559, %v4530
      %v4561 = vpop.permute.xlu0 %4560
      %4563 = vset.pattern.permute.xlu0 0
      %4564 = vperm.xlu0 %4563, %v4534
      %v4565 = vpop.permute.xlu0 %4564
      %4567 = vset.pattern.permute.xlu0 0
      %4568 = vperm.xlu0 %4567, %v4538
      %v4569 = vpop.permute.xlu0 %4568
      %4571 = vset.pattern.permute.xlu0 0
      %4572 = vperm.xlu0 %4571, %v4542
      %v4573 = vpop.permute.xlu0 %4572
      %4575 = vset.pattern.permute.xlu0 0
      %4576 = vperm.xlu0 %4575, %v4546
      %v4577 = vpop.permute.xlu0 %4576
      %4579 = vset.pattern.permute.xlu0 0
      %4580 = vperm.xlu0 %4579, %v4550
      %v4581 = vpop.permute.xlu0 %4580
      %4583 = vset.pattern.permute.xlu0 0
      %4584 = vperm.xlu0 %4583, %v4554
      %v4585 = vpop.permute.xlu0 %4584
      %4587 = vset.pattern.permute.xlu0 0
      %4588 = vperm.xlu0 %4587, %v4558
      %v4589 = vpop.permute.xlu0 %4588
      %v4591 = vmul.f32 %v4561, %v4455
      %v4592 = vmul.f32 %v4561, %v4456
      %v4593 = vmul.f32 %v4561, %v4457
      %v4594 = vmul.f32 %v4561, %v4458
      %v4595 = vmul.f32 %v4561, %v4459
      %v4596 = vmul.f32 %v4561, %v4460
      %v4597 = vmul.f32 %v4561, %v4461
      %v4598 = vmul.f32 %v4561, %v4462
      %v4599 = vmul.f32 %v4565, %v4463
      %v4600 = vmul.f32 %v4565, %v4464
      %v4601 = vmul.f32 %v4565, %v4465
      %v4602 = vmul.f32 %v4565, %v4466
      %v4603 = vmul.f32 %v4565, %v4467
      %v4604 = vmul.f32 %v4565, %v4468
      %v4605 = vmul.f32 %v4565, %v4469
      %v4606 = vmul.f32 %v4565, %v4470
      %v4607 = vmul.f32 %v4569, %v4471
      %v4608 = vmul.f32 %v4569, %v4472
      %v4609 = vmul.f32 %v4569, %v4473
      %v4610 = vmul.f32 %v4569, %v4474
      %v4611 = vmul.f32 %v4569, %v4475
      %v4612 = vmul.f32 %v4569, %v4476
      %v4613 = vmul.f32 %v4569, %v4477
      %v4614 = vmul.f32 %v4569, %v4478
      %v4615 = vmul.f32 %v4573, %v4479
      %v4616 = vmul.f32 %v4573, %v4480
      %v4617 = vmul.f32 %v4573, %v4481
      %v4618 = vmul.f32 %v4573, %v4482
      %v4619 = vmul.f32 %v4573, %v4483
      %v4620 = vmul.f32 %v4573, %v4484
      %v4621 = vmul.f32 %v4573, %v4485
      %v4622 = vmul.f32 %v4573, %v4486
      %v4623 = vmul.f32 %v4577, %v4487
      %v4624 = vmul.f32 %v4577, %v4488
      %v4625 = vmul.f32 %v4577, %v4489
      %v4626 = vmul.f32 %v4577, %v4490
      %v4627 = vmul.f32 %v4577, %v4491
      %v4628 = vmul.f32 %v4577, %v4492
      %v4629 = vmul.f32 %v4577, %v4493
      %v4630 = vmul.f32 %v4577, %v4494
      %v4631 = vmul.f32 %v4581, %v4495
      %v4632 = vmul.f32 %v4581, %v4496
      %v4633 = vmul.f32 %v4581, %v4497
      %v4634 = vmul.f32 %v4581, %v4498
      %v4635 = vmul.f32 %v4581, %v4499
      %v4636 = vmul.f32 %v4581, %v4500
      %v4637 = vmul.f32 %v4581, %v4501
      %v4638 = vmul.f32 %v4581, %v4502
      %v4639 = vmul.f32 %v4585, %v4503
      %v4640 = vmul.f32 %v4585, %v4504
      %v4641 = vmul.f32 %v4585, %v4505
      %v4642 = vmul.f32 %v4585, %v4506
      %v4643 = vmul.f32 %v4585, %v4507
      %v4644 = vmul.f32 %v4585, %v4508
      %v4645 = vmul.f32 %v4585, %v4509
      %v4646 = vmul.f32 %v4585, %v4510
      %v4647 = vmul.f32 %v4589, %v4511
      %v4648 = vmul.f32 %v4589, %v4512
      %v4649 = vmul.f32 %v4589, %v4513
      %v4650 = vmul.f32 %v4589, %v4514
      %v4651 = vmul.f32 %v4589, %v4515
      %v4652 = vmul.f32 %v4589, %v4516
      %v4653 = vmul.f32 %v4589, %v4517
      %v4654 = vmul.f32 %v4589, %v4518
      %v4655 = vsub.f32 %v4135, %v4591
      %v4656 = vsub.f32 %v4136, %v4592
      %v4657 = vsub.f32 %v4137, %v4593
      %v4658 = vsub.f32 %v4138, %v4594
      %v4659 = vsub.f32 %v4139, %v4595
      %v4660 = vsub.f32 %v4140, %v4596
      %v4661 = vsub.f32 %v4141, %v4597
      %v4662 = vsub.f32 %v4142, %v4598
      %v4663 = vsub.f32 %v4143, %v4599
      %v4664 = vsub.f32 %v4144, %v4600
      %v4665 = vsub.f32 %v4145, %v4601
      %v4666 = vsub.f32 %v4146, %v4602
      %v4667 = vsub.f32 %v4147, %v4603
      %v4668 = vsub.f32 %v4148, %v4604
      %v4669 = vsub.f32 %v4149, %v4605
      %v4670 = vsub.f32 %v4150, %v4606
      %v4671 = vsub.f32 %v4151, %v4607
      %v4672 = vsub.f32 %v4152, %v4608
      %v4673 = vsub.f32 %v4153, %v4609
      %v4674 = vsub.f32 %v4154, %v4610
      %v4675 = vsub.f32 %v4155, %v4611
      %v4676 = vsub.f32 %v4156, %v4612
      %v4677 = vsub.f32 %v4157, %v4613
      %v4678 = vsub.f32 %v4158, %v4614
      %v4679 = vsub.f32 %v4159, %v4615
      %v4680 = vsub.f32 %v4160, %v4616
      %v4681 = vsub.f32 %v4161, %v4617
      %v4682 = vsub.f32 %v4162, %v4618
      %v4683 = vsub.f32 %v4163, %v4619
      %v4684 = vsub.f32 %v4164, %v4620
      %v4685 = vsub.f32 %v4165, %v4621
      %v4686 = vsub.f32 %v4166, %v4622
      %v4687 = vsub.f32 %v4167, %v4623
      %v4688 = vsub.f32 %v4168, %v4624
      %v4689 = vsub.f32 %v4169, %v4625
      %v4690 = vsub.f32 %v4170, %v4626
      %v4691 = vsub.f32 %v4171, %v4627
      %v4692 = vsub.f32 %v4172, %v4628
      %v4693 = vsub.f32 %v4173, %v4629
      %v4694 = vsub.f32 %v4174, %v4630
      %v4695 = vsub.f32 %v4175, %v4631
      %v4696 = vsub.f32 %v4176, %v4632
      %v4697 = vsub.f32 %v4177, %v4633
      %v4698 = vsub.f32 %v4178, %v4634
      %v4699 = vsub.f32 %v4179, %v4635
      %v4700 = vsub.f32 %v4180, %v4636
      %v4701 = vsub.f32 %v4181, %v4637
      %v4702 = vsub.f32 %v4182, %v4638
      %v4703 = vsub.f32 %v4183, %v4639
      %v4704 = vsub.f32 %v4184, %v4640
      %v4705 = vsub.f32 %v4185, %v4641
      %v4706 = vsub.f32 %v4186, %v4642
      %v4707 = vsub.f32 %v4187, %v4643
      %v4708 = vsub.f32 %v4188, %v4644
      %v4709 = vsub.f32 %v4189, %v4645
      %v4710 = vsub.f32 %v4190, %v4646
      %v4711 = vsub.f32 %v4191, %v4647
      %v4712 = vsub.f32 %v4192, %v4648
      %v4713 = vsub.f32 %v4193, %v4649
      %v4714 = vsub.f32 %v4194, %v4650
      %v4715 = vsub.f32 %v4195, %v4651
      %v4716 = vsub.f32 %v4196, %v4652
      %v4717 = vsub.f32 %v4197, %v4653
      %v4718 = vsub.f32 %v4198, %v4654
      %v4719 = vpack.c.bf16 %v4656, %v4655
      %v4720 = vpack.c.bf16 %v4658, %v4657
      %v4721 = vpack.c.bf16 %v4660, %v4659
      %v4722 = vpack.c.bf16 %v4662, %v4661
      %v4723 = vpack.c.bf16 %v4664, %v4663
      %v4724 = vpack.c.bf16 %v4666, %v4665
      %v4725 = vpack.c.bf16 %v4668, %v4667
      %v4726 = vpack.c.bf16 %v4670, %v4669
      %v4727 = vpack.c.bf16 %v4672, %v4671
      %v4728 = vpack.c.bf16 %v4674, %v4673
      %v4729 = vpack.c.bf16 %v4676, %v4675
      %v4730 = vpack.c.bf16 %v4678, %v4677
      %v4731 = vpack.c.bf16 %v4680, %v4679
      %v4732 = vpack.c.bf16 %v4682, %v4681
      %v4733 = vpack.c.bf16 %v4684, %v4683
      %v4734 = vpack.c.bf16 %v4686, %v4685
      %v4735 = vpack.c.bf16 %v4688, %v4687
      %v4736 = vpack.c.bf16 %v4690, %v4689
      %v4737 = vpack.c.bf16 %v4692, %v4691
      %v4738 = vpack.c.bf16 %v4694, %v4693
      %v4739 = vpack.c.bf16 %v4696, %v4695
      %v4740 = vpack.c.bf16 %v4698, %v4697
      %v4741 = vpack.c.bf16 %v4700, %v4699
      %v4742 = vpack.c.bf16 %v4702, %v4701
      %v4743 = vpack.c.bf16 %v4704, %v4703
      %v4744 = vpack.c.bf16 %v4706, %v4705
      %v4745 = vpack.c.bf16 %v4708, %v4707
      %v4746 = vpack.c.bf16 %v4710, %v4709
      %v4747 = vpack.c.bf16 %v4712, %v4711
      %v4748 = vpack.c.bf16 %v4714, %v4713
      %v4749 = vpack.c.bf16 %v4716, %v4715
      %v4750 = vpack.c.bf16 %v4718, %v4717
      %v4759 = vunpack.c.l.b16 %v671
      %v4760 = vunpack.c.l.b16 %v672
      %v4761 = vunpack.c.l.b16 %v673
      %v4762 = vunpack.c.l.b16 %v674
      %v4763 = vunpack.c.l.b16 %v675
      %v4764 = vunpack.c.l.b16 %v676
      %v4765 = vunpack.c.l.b16 %v677
      %v4766 = vunpack.c.l.b16 %v678
      %v4767 = vpack.c.b16 %v4760, %v4759
      %v4768 = vpack.c.b16 %v4762, %v4761
      %v4769 = vpack.c.b16 %v4764, %v4763
      %v4770 = vpack.c.b16 %v4766, %v4765
      %v4776 = vsel %vm3110, %v4719, 0
      %v4779 = vsel %vm3110, %v4720, 0
      %v4782 = vsel %vm3110, %v4721, 0
      %v4785 = vsel %vm3110, %v4722, 0
      %4787 = vmatprep.subr.bf16.mxu0 0
      %4788 = vmatpush1.bf16.msra.mxu0 0
      %4789 = vmatprep.subr.bf16.mxu0 0
      %4790 = vmatpush1.bf16.msra.mxu0 0
      %4791 = vmatprep.subr.bf16.mxu0 0
      %4792 = vmatpush1.bf16.msra.mxu0 0
      %4793 = vmatprep.subr.bf16.mxu0 0
      %4794 = vmatpush1.bf16.msra.mxu0 0
      %4795 = vmatprep.subr.bf16.mxu0 0
      %4796 = vmatpush1.bf16.msra.mxu0 %v4770
      %4797 = vmatprep.subr.bf16.mxu0 0
      %4798 = vmatpush1.bf16.msra.mxu0 %v4769
      %4799 = vmatprep.subr.bf16.mxu0 0
      %4800 = vmatpush1.bf16.msra.mxu0 %v4768
      %4801 = vmatprep.subr.bf16.mxu0 0
      %4802 = vmatpush1.bf16.msra.mxu0 %v4767
      %4803 = vmatprep.subr.bf16.mxu0 0
      %4804 = vmatpush2.bf16.msra.mxu0 0
      %4805 = vmatprep.subr.bf16.mxu0 0
      %4806 = vmatpush2.bf16.msra.mxu0 0
      %4807 = vmatprep.subr.bf16.mxu0 0
      %4808 = vmatpush2.bf16.msra.mxu0 0
      %4809 = vmatprep.subr.bf16.mxu0 0
      %4810 = vmatpush2.bf16.msra.mxu0 0
      %4811 = vmatprep.subr.bf16.mxu0 0
      %4812 = vmatpush2.bf16.msra.mxu0 0
      %4813 = vmatprep.subr.bf16.mxu0 0
      %4814 = vmatpush2.bf16.msra.mxu0 0
      %4815 = vmatprep.subr.bf16.mxu0 0
      %4816 = vmatpush2.bf16.msra.mxu0 0
      %4817 = vmatprep.subr.bf16.mxu0 0
      %4818 = vmatpush2.bf16.msra.mxu0 0
      %4819 = vmatprep.mubr.bf16.mxu0 0
      %4820 = vmatmul.mubr.bf16.gmra.mxu0 %v4776
      %v4821 = vpop.f32.mrf.mxu0
      %v4822 = vadd.f32 0.0, %v4821
      %v4823 = vpop.f32.mrf.mxu0
      %v4824 = vpop.f32.mrf.mxu0
      %v4825 = vadd.f32 0.0, %v4824
      %v4826 = vpop.f32.mrf.mxu0
      %4827 = vmatprep.mubr.bf16.mxu0 0
      %4828 = vmatmul.mubr.bf16.gmra.mxu0 %v4779
      %v4829 = vpop.f32.mrf.mxu0
      %v4830 = vadd.f32 0.0, %v4829
      %v4831 = vpop.f32.mrf.mxu0
      %v4832 = vpop.f32.mrf.mxu0
      %v4833 = vadd.f32 0.0, %v4832
      %v4834 = vpop.f32.mrf.mxu0
      %4835 = vmatprep.mubr.bf16.mxu0 0
      %4836 = vmatmul.mubr.bf16.gmra.mxu0 %v4782
      %v4837 = vpop.f32.mrf.mxu0
      %v4838 = vadd.f32 0.0, %v4837
      %v4839 = vpop.f32.mrf.mxu0
      %v4840 = vpop.f32.mrf.mxu0
      %v4841 = vadd.f32 0.0, %v4840
      %v4842 = vpop.f32.mrf.mxu0
      %4843 = vmatprep.mubr.bf16.mxu0 0
      %4844 = vmatmul.mubr.bf16.gmra.mxu0 %v4785
      %v4845 = vpop.f32.mrf.mxu0
      %v4846 = vadd.f32 0.0, %v4845
      %v4847 = vpop.f32.mrf.mxu0
      %v4848 = vpop.f32.mrf.mxu0
      %v4849 = vadd.f32 0.0, %v4848
      %v4850 = vpop.f32.mrf.mxu0
      %4851 = vdwg.mxu0
      %v4860 = vunpack.c.l.b16 %v679
      %v4861 = vunpack.c.l.b16 %v680
      %v4862 = vunpack.c.l.b16 %v681
      %v4863 = vunpack.c.l.b16 %v682
      %v4864 = vunpack.c.l.b16 %v683
      %v4865 = vunpack.c.l.b16 %v684
      %v4866 = vunpack.c.l.b16 %v685
      %v4867 = vunpack.c.l.b16 %v686
      %v4868 = vpack.c.b16 %v4861, %v4860
      %v4869 = vpack.c.b16 %v4863, %v4862
      %v4870 = vpack.c.b16 %v4865, %v4864
      %v4871 = vpack.c.b16 %v4867, %v4866
      %v4877 = vsel %vm3110, %v4723, 0
      %v4880 = vsel %vm3110, %v4724, 0
      %v4883 = vsel %vm3110, %v4725, 0
      %v4886 = vsel %vm3110, %v4726, 0
      %4888 = vmatprep.subr.bf16.mxu0 0
      %4889 = vmatpush1.bf16.msra.mxu0 0
      %4890 = vmatprep.subr.bf16.mxu0 0
      %4891 = vmatpush1.bf16.msra.mxu0 0
      %4892 = vmatprep.subr.bf16.mxu0 0
      %4893 = vmatpush1.bf16.msra.mxu0 0
      %4894 = vmatprep.subr.bf16.mxu0 0
      %4895 = vmatpush1.bf16.msra.mxu0 0
      %4896 = vmatprep.subr.bf16.mxu0 0
      %4897 = vmatpush1.bf16.msra.mxu0 %v4871
      %4898 = vmatprep.subr.bf16.mxu0 0
      %4899 = vmatpush1.bf16.msra.mxu0 %v4870
      %4900 = vmatprep.subr.bf16.mxu0 0
      %4901 = vmatpush1.bf16.msra.mxu0 %v4869
      %4902 = vmatprep.subr.bf16.mxu0 0
      %4903 = vmatpush1.bf16.msra.mxu0 %v4868
      %4904 = vmatprep.subr.bf16.mxu0 0
      %4905 = vmatpush2.bf16.msra.mxu0 0
      %4906 = vmatprep.subr.bf16.mxu0 0
      %4907 = vmatpush2.bf16.msra.mxu0 0
      %4908 = vmatprep.subr.bf16.mxu0 0
      %4909 = vmatpush2.bf16.msra.mxu0 0
      %4910 = vmatprep.subr.bf16.mxu0 0
      %4911 = vmatpush2.bf16.msra.mxu0 0
      %4912 = vmatprep.subr.bf16.mxu0 0
      %4913 = vmatpush2.bf16.msra.mxu0 0
      %4914 = vmatprep.subr.bf16.mxu0 0
      %4915 = vmatpush2.bf16.msra.mxu0 0
      %4916 = vmatprep.subr.bf16.mxu0 0
      %4917 = vmatpush2.bf16.msra.mxu0 0
      %4918 = vmatprep.subr.bf16.mxu0 0
      %4919 = vmatpush2.bf16.msra.mxu0 0
      %4920 = vmatprep.mubr.bf16.mxu0 0
      %4921 = vmatmul.mubr.bf16.gmra.mxu0 %v4877
      %v4922 = vpop.f32.mrf.mxu0
      %v4923 = vadd.f32 0.0, %v4922
      %v4924 = vpop.f32.mrf.mxu0
      %v4925 = vpop.f32.mrf.mxu0
      %v4926 = vadd.f32 0.0, %v4925
      %v4927 = vpop.f32.mrf.mxu0
      %4928 = vmatprep.mubr.bf16.mxu0 0
      %4929 = vmatmul.mubr.bf16.gmra.mxu0 %v4880
      %v4930 = vpop.f32.mrf.mxu0
      %v4931 = vadd.f32 0.0, %v4930
      %v4932 = vpop.f32.mrf.mxu0
      %v4933 = vpop.f32.mrf.mxu0
      %v4934 = vadd.f32 0.0, %v4933
      %v4935 = vpop.f32.mrf.mxu0
      %4936 = vmatprep.mubr.bf16.mxu0 0
      %4937 = vmatmul.mubr.bf16.gmra.mxu0 %v4883
      %v4938 = vpop.f32.mrf.mxu0
      %v4939 = vadd.f32 0.0, %v4938
      %v4940 = vpop.f32.mrf.mxu0
      %v4941 = vpop.f32.mrf.mxu0
      %v4942 = vadd.f32 0.0, %v4941
      %v4943 = vpop.f32.mrf.mxu0
      %4944 = vmatprep.mubr.bf16.mxu0 0
      %4945 = vmatmul.mubr.bf16.gmra.mxu0 %v4886
      %v4946 = vpop.f32.mrf.mxu0
      %v4947 = vadd.f32 0.0, %v4946
      %v4948 = vpop.f32.mrf.mxu0
      %v4949 = vpop.f32.mrf.mxu0
      %v4950 = vadd.f32 0.0, %v4949
      %v4951 = vpop.f32.mrf.mxu0
      %4952 = vdwg.mxu0
      %v4961 = vunpack.c.l.b16 %v687
      %v4962 = vunpack.c.l.b16 %v688
      %v4963 = vunpack.c.l.b16 %v689
      %v4964 = vunpack.c.l.b16 %v690
      %v4965 = vunpack.c.l.b16 %v691
      %v4966 = vunpack.c.l.b16 %v692
      %v4967 = vunpack.c.l.b16 %v693
      %v4968 = vunpack.c.l.b16 %v694
      %v4969 = vpack.c.b16 %v4962, %v4961
      %v4970 = vpack.c.b16 %v4964, %v4963
      %v4971 = vpack.c.b16 %v4966, %v4965
      %v4972 = vpack.c.b16 %v4968, %v4967
      %v4978 = vsel %vm3110, %v4727, 0
      %v4981 = vsel %vm3110, %v4728, 0
      %v4984 = vsel %vm3110, %v4729, 0
      %v4987 = vsel %vm3110, %v4730, 0
      %4989 = vmatprep.subr.bf16.mxu0 0
      %4990 = vmatpush1.bf16.msra.mxu0 0
      %4991 = vmatprep.subr.bf16.mxu0 0
      %4992 = vmatpush1.bf16.msra.mxu0 0
      %4993 = vmatprep.subr.bf16.mxu0 0
      %4994 = vmatpush1.bf16.msra.mxu0 0
      %4995 = vmatprep.subr.bf16.mxu0 0
      %4996 = vmatpush1.bf16.msra.mxu0 0
      %4997 = vmatprep.subr.bf16.mxu0 0
      %4998 = vmatpush1.bf16.msra.mxu0 %v4972
      %4999 = vmatprep.subr.bf16.mxu0 0
      %5000 = vmatpush1.bf16.msra.mxu0 %v4971
      %5001 = vmatprep.subr.bf16.mxu0 0
      %5002 = vmatpush1.bf16.msra.mxu0 %v4970
      %5003 = vmatprep.subr.bf16.mxu0 0
      %5004 = vmatpush1.bf16.msra.mxu0 %v4969
      %5005 = vmatprep.subr.bf16.mxu0 0
      %5006 = vmatpush2.bf16.msra.mxu0 0
      %5007 = vmatprep.subr.bf16.mxu0 0
      %5008 = vmatpush2.bf16.msra.mxu0 0
      %5009 = vmatprep.subr.bf16.mxu0 0
      %5010 = vmatpush2.bf16.msra.mxu0 0
      %5011 = vmatprep.subr.bf16.mxu0 0
      %5012 = vmatpush2.bf16.msra.mxu0 0
      %5013 = vmatprep.subr.bf16.mxu0 0
      %5014 = vmatpush2.bf16.msra.mxu0 0
      %5015 = vmatprep.subr.bf16.mxu0 0
      %5016 = vmatpush2.bf16.msra.mxu0 0
      %5017 = vmatprep.subr.bf16.mxu0 0
      %5018 = vmatpush2.bf16.msra.mxu0 0
      %5019 = vmatprep.subr.bf16.mxu0 0
      %5020 = vmatpush2.bf16.msra.mxu0 0
      %5021 = vmatprep.mubr.bf16.mxu0 0
      %5022 = vmatmul.mubr.bf16.gmra.mxu0 %v4978
      %v5023 = vpop.f32.mrf.mxu0
      %v5024 = vadd.f32 0.0, %v5023
      %v5025 = vpop.f32.mrf.mxu0
      %v5026 = vpop.f32.mrf.mxu0
      %v5027 = vadd.f32 0.0, %v5026
      %v5028 = vpop.f32.mrf.mxu0
      %5029 = vmatprep.mubr.bf16.mxu0 0
      %5030 = vmatmul.mubr.bf16.gmra.mxu0 %v4981
      %v5031 = vpop.f32.mrf.mxu0
      %v5032 = vadd.f32 0.0, %v5031
      %v5033 = vpop.f32.mrf.mxu0
      %v5034 = vpop.f32.mrf.mxu0
      %v5035 = vadd.f32 0.0, %v5034
      %v5036 = vpop.f32.mrf.mxu0
      %5037 = vmatprep.mubr.bf16.mxu0 0
      %5038 = vmatmul.mubr.bf16.gmra.mxu0 %v4984
      %v5039 = vpop.f32.mrf.mxu0
      %v5040 = vadd.f32 0.0, %v5039
      %v5041 = vpop.f32.mrf.mxu0
      %v5042 = vpop.f32.mrf.mxu0
      %v5043 = vadd.f32 0.0, %v5042
      %v5044 = vpop.f32.mrf.mxu0
      %5045 = vmatprep.mubr.bf16.mxu0 0
      %5046 = vmatmul.mubr.bf16.gmra.mxu0 %v4987
      %v5047 = vpop.f32.mrf.mxu0
      %v5048 = vadd.f32 0.0, %v5047
      %v5049 = vpop.f32.mrf.mxu0
      %v5050 = vpop.f32.mrf.mxu0
      %v5051 = vadd.f32 0.0, %v5050
      %v5052 = vpop.f32.mrf.mxu0
      %5053 = vdwg.mxu0
      %v5062 = vunpack.c.l.b16 %v695
      %v5063 = vunpack.c.l.b16 %v696
      %v5064 = vunpack.c.l.b16 %v697
      %v5065 = vunpack.c.l.b16 %v698
      %v5066 = vunpack.c.l.b16 %v699
      %v5067 = vunpack.c.l.b16 %v700
      %v5068 = vunpack.c.l.b16 %v701
      %v5069 = vunpack.c.l.b16 %v702
      %v5070 = vpack.c.b16 %v5063, %v5062
      %v5071 = vpack.c.b16 %v5065, %v5064
      %v5072 = vpack.c.b16 %v5067, %v5066
      %v5073 = vpack.c.b16 %v5069, %v5068
      %v5079 = vsel %vm3110, %v4731, 0
      %v5082 = vsel %vm3110, %v4732, 0
      %v5085 = vsel %vm3110, %v4733, 0
      %v5088 = vsel %vm3110, %v4734, 0
      %5090 = vmatprep.subr.bf16.mxu0 0
      %5091 = vmatpush1.bf16.msra.mxu0 0
      %5092 = vmatprep.subr.bf16.mxu0 0
      %5093 = vmatpush1.bf16.msra.mxu0 0
      %5094 = vmatprep.subr.bf16.mxu0 0
      %5095 = vmatpush1.bf16.msra.mxu0 0
      %5096 = vmatprep.subr.bf16.mxu0 0
      %5097 = vmatpush1.bf16.msra.mxu0 0
      %5098 = vmatprep.subr.bf16.mxu0 0
      %5099 = vmatpush1.bf16.msra.mxu0 %v5073
      %5100 = vmatprep.subr.bf16.mxu0 0
      %5101 = vmatpush1.bf16.msra.mxu0 %v5072
      %5102 = vmatprep.subr.bf16.mxu0 0
      %5103 = vmatpush1.bf16.msra.mxu0 %v5071
      %5104 = vmatprep.subr.bf16.mxu0 0
      %5105 = vmatpush1.bf16.msra.mxu0 %v5070
      %5106 = vmatprep.subr.bf16.mxu0 0
      %5107 = vmatpush2.bf16.msra.mxu0 0
      %5108 = vmatprep.subr.bf16.mxu0 0
      %5109 = vmatpush2.bf16.msra.mxu0 0
      %5110 = vmatprep.subr.bf16.mxu0 0
      %5111 = vmatpush2.bf16.msra.mxu0 0
      %5112 = vmatprep.subr.bf16.mxu0 0
      %5113 = vmatpush2.bf16.msra.mxu0 0
      %5114 = vmatprep.subr.bf16.mxu0 0
      %5115 = vmatpush2.bf16.msra.mxu0 0
      %5116 = vmatprep.subr.bf16.mxu0 0
      %5117 = vmatpush2.bf16.msra.mxu0 0
      %5118 = vmatprep.subr.bf16.mxu0 0
      %5119 = vmatpush2.bf16.msra.mxu0 0
      %5120 = vmatprep.subr.bf16.mxu0 0
      %5121 = vmatpush2.bf16.msra.mxu0 0
      %5122 = vmatprep.mubr.bf16.mxu0 0
      %5123 = vmatmul.mubr.bf16.gmra.mxu0 %v5079
      %v5124 = vpop.f32.mrf.mxu0
      %v5125 = vadd.f32 0.0, %v5124
      %v5126 = vpop.f32.mrf.mxu0
      %v5127 = vpop.f32.mrf.mxu0
      %v5128 = vadd.f32 0.0, %v5127
      %v5129 = vpop.f32.mrf.mxu0
      %5130 = vmatprep.mubr.bf16.mxu0 0
      %5131 = vmatmul.mubr.bf16.gmra.mxu0 %v5082
      %v5132 = vpop.f32.mrf.mxu0
      %v5133 = vadd.f32 0.0, %v5132
      %v5134 = vpop.f32.mrf.mxu0
      %v5135 = vpop.f32.mrf.mxu0
      %v5136 = vadd.f32 0.0, %v5135
      %v5137 = vpop.f32.mrf.mxu0
      %5138 = vmatprep.mubr.bf16.mxu0 0
      %5139 = vmatmul.mubr.bf16.gmra.mxu0 %v5085
      %v5140 = vpop.f32.mrf.mxu0
      %v5141 = vadd.f32 0.0, %v5140
      %v5142 = vpop.f32.mrf.mxu0
      %v5143 = vpop.f32.mrf.mxu0
      %v5144 = vadd.f32 0.0, %v5143
      %v5145 = vpop.f32.mrf.mxu0
      %5146 = vmatprep.mubr.bf16.mxu0 0
      %5147 = vmatmul.mubr.bf16.gmra.mxu0 %v5088
      %v5148 = vpop.f32.mrf.mxu0
      %v5149 = vadd.f32 0.0, %v5148
      %v5150 = vpop.f32.mrf.mxu0
      %v5151 = vpop.f32.mrf.mxu0
      %v5152 = vadd.f32 0.0, %v5151
      %v5153 = vpop.f32.mrf.mxu0
      %5154 = vdwg.mxu0
      %v5163 = vunpack.c.l.b16 %v703
      %v5164 = vunpack.c.l.b16 %v704
      %v5165 = vunpack.c.l.b16 %v705
      %v5166 = vunpack.c.l.b16 %v706
      %v5167 = vunpack.c.l.b16 %v707
      %v5168 = vunpack.c.l.b16 %v708
      %v5169 = vunpack.c.l.b16 %v709
      %v5170 = vunpack.c.l.b16 %v710
      %v5171 = vpack.c.b16 %v5164, %v5163
      %v5172 = vpack.c.b16 %v5166, %v5165
      %v5173 = vpack.c.b16 %v5168, %v5167
      %v5174 = vpack.c.b16 %v5170, %v5169
      %v5180 = vsel %vm3110, %v4735, 0
      %v5183 = vsel %vm3110, %v4736, 0
      %v5186 = vsel %vm3110, %v4737, 0
      %v5189 = vsel %vm3110, %v4738, 0
      %5191 = vmatprep.subr.bf16.mxu0 0
      %5192 = vmatpush1.bf16.msra.mxu0 0
      %5193 = vmatprep.subr.bf16.mxu0 0
      %5194 = vmatpush1.bf16.msra.mxu0 0
      %5195 = vmatprep.subr.bf16.mxu0 0
      %5196 = vmatpush1.bf16.msra.mxu0 0
      %5197 = vmatprep.subr.bf16.mxu0 0
      %5198 = vmatpush1.bf16.msra.mxu0 0
      %5199 = vmatprep.subr.bf16.mxu0 0
      %5200 = vmatpush1.bf16.msra.mxu0 %v5174
      %5201 = vmatprep.subr.bf16.mxu0 0
      %5202 = vmatpush1.bf16.msra.mxu0 %v5173
      %5203 = vmatprep.subr.bf16.mxu0 0
      %5204 = vmatpush1.bf16.msra.mxu0 %v5172
      %5205 = vmatprep.subr.bf16.mxu0 0
      %5206 = vmatpush1.bf16.msra.mxu0 %v5171
      %5207 = vmatprep.subr.bf16.mxu0 0
      %5208 = vmatpush2.bf16.msra.mxu0 0
      %5209 = vmatprep.subr.bf16.mxu0 0
      %5210 = vmatpush2.bf16.msra.mxu0 0
      %5211 = vmatprep.subr.bf16.mxu0 0
      %5212 = vmatpush2.bf16.msra.mxu0 0
      %5213 = vmatprep.subr.bf16.mxu0 0
      %5214 = vmatpush2.bf16.msra.mxu0 0
      %5215 = vmatprep.subr.bf16.mxu0 0
      %5216 = vmatpush2.bf16.msra.mxu0 0
      %5217 = vmatprep.subr.bf16.mxu0 0
      %5218 = vmatpush2.bf16.msra.mxu0 0
      %5219 = vmatprep.subr.bf16.mxu0 0
      %5220 = vmatpush2.bf16.msra.mxu0 0
      %5221 = vmatprep.subr.bf16.mxu0 0
      %5222 = vmatpush2.bf16.msra.mxu0 0
      %5223 = vmatprep.mubr.bf16.mxu0 0
      %5224 = vmatmul.mubr.bf16.gmra.mxu0 %v5180
      %v5225 = vpop.f32.mrf.mxu0
      %v5226 = vadd.f32 0.0, %v5225
      %v5227 = vpop.f32.mrf.mxu0
      %v5228 = vpop.f32.mrf.mxu0
      %v5229 = vadd.f32 0.0, %v5228
      %v5230 = vpop.f32.mrf.mxu0
      %5231 = vmatprep.mubr.bf16.mxu0 0
      %5232 = vmatmul.mubr.bf16.gmra.mxu0 %v5183
      %v5233 = vpop.f32.mrf.mxu0
      %v5234 = vadd.f32 0.0, %v5233
      %v5235 = vpop.f32.mrf.mxu0
      %v5236 = vpop.f32.mrf.mxu0
      %v5237 = vadd.f32 0.0, %v5236
      %v5238 = vpop.f32.mrf.mxu0
      %5239 = vmatprep.mubr.bf16.mxu0 0
      %5240 = vmatmul.mubr.bf16.gmra.mxu0 %v5186
      %v5241 = vpop.f32.mrf.mxu0
      %v5242 = vadd.f32 0.0, %v5241
      %v5243 = vpop.f32.mrf.mxu0
      %v5244 = vpop.f32.mrf.mxu0
      %v5245 = vadd.f32 0.0, %v5244
      %v5246 = vpop.f32.mrf.mxu0
      %5247 = vmatprep.mubr.bf16.mxu0 0
      %5248 = vmatmul.mubr.bf16.gmra.mxu0 %v5189
      %v5249 = vpop.f32.mrf.mxu0
      %v5250 = vadd.f32 0.0, %v5249
      %v5251 = vpop.f32.mrf.mxu0
      %v5252 = vpop.f32.mrf.mxu0
      %v5253 = vadd.f32 0.0, %v5252
      %v5254 = vpop.f32.mrf.mxu0
      %5255 = vdwg.mxu0
      %v5264 = vunpack.c.l.b16 %v711
      %v5265 = vunpack.c.l.b16 %v712
      %v5266 = vunpack.c.l.b16 %v713
      %v5267 = vunpack.c.l.b16 %v714
      %v5268 = vunpack.c.l.b16 %v715
      %v5269 = vunpack.c.l.b16 %v716
      %v5270 = vunpack.c.l.b16 %v717
      %v5271 = vunpack.c.l.b16 %v718
      %v5272 = vpack.c.b16 %v5265, %v5264
      %v5273 = vpack.c.b16 %v5267, %v5266
      %v5274 = vpack.c.b16 %v5269, %v5268
      %v5275 = vpack.c.b16 %v5271, %v5270
      %v5281 = vsel %vm3110, %v4739, 0
      %v5284 = vsel %vm3110, %v4740, 0
      %v5287 = vsel %vm3110, %v4741, 0
      %v5290 = vsel %vm3110, %v4742, 0
      %5292 = vmatprep.subr.bf16.mxu0 0
      %5293 = vmatpush1.bf16.msra.mxu0 0
      %5294 = vmatprep.subr.bf16.mxu0 0
      %5295 = vmatpush1.bf16.msra.mxu0 0
      %5296 = vmatprep.subr.bf16.mxu0 0
      %5297 = vmatpush1.bf16.msra.mxu0 0
      %5298 = vmatprep.subr.bf16.mxu0 0
      %5299 = vmatpush1.bf16.msra.mxu0 0
      %5300 = vmatprep.subr.bf16.mxu0 0
      %5301 = vmatpush1.bf16.msra.mxu0 %v5275
      %5302 = vmatprep.subr.bf16.mxu0 0
      %5303 = vmatpush1.bf16.msra.mxu0 %v5274
      %5304 = vmatprep.subr.bf16.mxu0 0
      %5305 = vmatpush1.bf16.msra.mxu0 %v5273
      %5306 = vmatprep.subr.bf16.mxu0 0
      %5307 = vmatpush1.bf16.msra.mxu0 %v5272
      %5308 = vmatprep.subr.bf16.mxu0 0
      %5309 = vmatpush2.bf16.msra.mxu0 0
      %5310 = vmatprep.subr.bf16.mxu0 0
      %5311 = vmatpush2.bf16.msra.mxu0 0
      %5312 = vmatprep.subr.bf16.mxu0 0
      %5313 = vmatpush2.bf16.msra.mxu0 0
      %5314 = vmatprep.subr.bf16.mxu0 0
      %5315 = vmatpush2.bf16.msra.mxu0 0
      %5316 = vmatprep.subr.bf16.mxu0 0
      %5317 = vmatpush2.bf16.msra.mxu0 0
      %5318 = vmatprep.subr.bf16.mxu0 0
      %5319 = vmatpush2.bf16.msra.mxu0 0
      %5320 = vmatprep.subr.bf16.mxu0 0
      %5321 = vmatpush2.bf16.msra.mxu0 0
      %5322 = vmatprep.subr.bf16.mxu0 0
      %5323 = vmatpush2.bf16.msra.mxu0 0
      %5324 = vmatprep.mubr.bf16.mxu0 0
      %5325 = vmatmul.mubr.bf16.gmra.mxu0 %v5281
      %v5326 = vpop.f32.mrf.mxu0
      %v5327 = vadd.f32 0.0, %v5326
      %v5328 = vpop.f32.mrf.mxu0
      %v5329 = vpop.f32.mrf.mxu0
      %v5330 = vadd.f32 0.0, %v5329
      %v5331 = vpop.f32.mrf.mxu0
      %5332 = vmatprep.mubr.bf16.mxu0 0
      %5333 = vmatmul.mubr.bf16.gmra.mxu0 %v5284
      %v5334 = vpop.f32.mrf.mxu0
      %v5335 = vadd.f32 0.0, %v5334
      %v5336 = vpop.f32.mrf.mxu0
      %v5337 = vpop.f32.mrf.mxu0
      %v5338 = vadd.f32 0.0, %v5337
      %v5339 = vpop.f32.mrf.mxu0
      %5340 = vmatprep.mubr.bf16.mxu0 0
      %5341 = vmatmul.mubr.bf16.gmra.mxu0 %v5287
      %v5342 = vpop.f32.mrf.mxu0
      %v5343 = vadd.f32 0.0, %v5342
      %v5344 = vpop.f32.mrf.mxu0
      %v5345 = vpop.f32.mrf.mxu0
      %v5346 = vadd.f32 0.0, %v5345
      %v5347 = vpop.f32.mrf.mxu0
      %5348 = vmatprep.mubr.bf16.mxu0 0
      %5349 = vmatmul.mubr.bf16.gmra.mxu0 %v5290
      %v5350 = vpop.f32.mrf.mxu0
      %v5351 = vadd.f32 0.0, %v5350
      %v5352 = vpop.f32.mrf.mxu0
      %v5353 = vpop.f32.mrf.mxu0
      %v5354 = vadd.f32 0.0, %v5353
      %v5355 = vpop.f32.mrf.mxu0
      %5356 = vdwg.mxu0
      %v5365 = vunpack.c.l.b16 %v719
      %v5366 = vunpack.c.l.b16 %v720
      %v5367 = vunpack.c.l.b16 %v721
      %v5368 = vunpack.c.l.b16 %v722
      %v5369 = vunpack.c.l.b16 %v723
      %v5370 = vunpack.c.l.b16 %v724
      %v5371 = vunpack.c.l.b16 %v725
      %v5372 = vunpack.c.l.b16 %v726
      %v5373 = vpack.c.b16 %v5366, %v5365
      %v5374 = vpack.c.b16 %v5368, %v5367
      %v5375 = vpack.c.b16 %v5370, %v5369
      %v5376 = vpack.c.b16 %v5372, %v5371
      %v5382 = vsel %vm3110, %v4743, 0
      %v5385 = vsel %vm3110, %v4744, 0
      %v5388 = vsel %vm3110, %v4745, 0
      %v5391 = vsel %vm3110, %v4746, 0
      %5393 = vmatprep.subr.bf16.mxu0 0
      %5394 = vmatpush1.bf16.msra.mxu0 0
      %5395 = vmatprep.subr.bf16.mxu0 0
      %5396 = vmatpush1.bf16.msra.mxu0 0
      %5397 = vmatprep.subr.bf16.mxu0 0
      %5398 = vmatpush1.bf16.msra.mxu0 0
      %5399 = vmatprep.subr.bf16.mxu0 0
      %5400 = vmatpush1.bf16.msra.mxu0 0
      %5401 = vmatprep.subr.bf16.mxu0 0
      %5402 = vmatpush1.bf16.msra.mxu0 %v5376
      %5403 = vmatprep.subr.bf16.mxu0 0
      %5404 = vmatpush1.bf16.msra.mxu0 %v5375
      %5405 = vmatprep.subr.bf16.mxu0 0
      %5406 = vmatpush1.bf16.msra.mxu0 %v5374
      %5407 = vmatprep.subr.bf16.mxu0 0
      %5408 = vmatpush1.bf16.msra.mxu0 %v5373
      %5409 = vmatprep.subr.bf16.mxu0 0
      %5410 = vmatpush2.bf16.msra.mxu0 0
      %5411 = vmatprep.subr.bf16.mxu0 0
      %5412 = vmatpush2.bf16.msra.mxu0 0
      %5413 = vmatprep.subr.bf16.mxu0 0
      %5414 = vmatpush2.bf16.msra.mxu0 0
      %5415 = vmatprep.subr.bf16.mxu0 0
      %5416 = vmatpush2.bf16.msra.mxu0 0
      %5417 = vmatprep.subr.bf16.mxu0 0
      %5418 = vmatpush2.bf16.msra.mxu0 0
      %5419 = vmatprep.subr.bf16.mxu0 0
      %5420 = vmatpush2.bf16.msra.mxu0 0
      %5421 = vmatprep.subr.bf16.mxu0 0
      %5422 = vmatpush2.bf16.msra.mxu0 0
      %5423 = vmatprep.subr.bf16.mxu0 0
      %5424 = vmatpush2.bf16.msra.mxu0 0
      %5425 = vmatprep.mubr.bf16.mxu0 0
      %5426 = vmatmul.mubr.bf16.gmra.mxu0 %v5382
      %v5427 = vpop.f32.mrf.mxu0
      %v5428 = vadd.f32 0.0, %v5427
      %v5429 = vpop.f32.mrf.mxu0
      %v5430 = vpop.f32.mrf.mxu0
      %v5431 = vadd.f32 0.0, %v5430
      %v5432 = vpop.f32.mrf.mxu0
      %5433 = vmatprep.mubr.bf16.mxu0 0
      %5434 = vmatmul.mubr.bf16.gmra.mxu0 %v5385
      %v5435 = vpop.f32.mrf.mxu0
      %v5436 = vadd.f32 0.0, %v5435
      %v5437 = vpop.f32.mrf.mxu0
      %v5438 = vpop.f32.mrf.mxu0
      %v5439 = vadd.f32 0.0, %v5438
      %v5440 = vpop.f32.mrf.mxu0
      %5441 = vmatprep.mubr.bf16.mxu0 0
      %5442 = vmatmul.mubr.bf16.gmra.mxu0 %v5388
      %v5443 = vpop.f32.mrf.mxu0
      %v5444 = vadd.f32 0.0, %v5443
      %v5445 = vpop.f32.mrf.mxu0
      %v5446 = vpop.f32.mrf.mxu0
      %v5447 = vadd.f32 0.0, %v5446
      %v5448 = vpop.f32.mrf.mxu0
      %5449 = vmatprep.mubr.bf16.mxu0 0
      %5450 = vmatmul.mubr.bf16.gmra.mxu0 %v5391
      %v5451 = vpop.f32.mrf.mxu0
      %v5452 = vadd.f32 0.0, %v5451
      %v5453 = vpop.f32.mrf.mxu0
      %v5454 = vpop.f32.mrf.mxu0
      %v5455 = vadd.f32 0.0, %v5454
      %v5456 = vpop.f32.mrf.mxu0
      %5457 = vdwg.mxu0
      %v5466 = vunpack.c.l.b16 %v727
      %v5467 = vunpack.c.l.b16 %v728
      %v5468 = vunpack.c.l.b16 %v729
      %v5469 = vunpack.c.l.b16 %v730
      %v5470 = vunpack.c.l.b16 %v731
      %v5471 = vunpack.c.l.b16 %v732
      %v5472 = vunpack.c.l.b16 %v733
      %v5473 = vunpack.c.l.b16 %v734
      %v5474 = vpack.c.b16 %v5467, %v5466
      %v5475 = vpack.c.b16 %v5469, %v5468
      %v5476 = vpack.c.b16 %v5471, %v5470
      %v5477 = vpack.c.b16 %v5473, %v5472
      %v5483 = vsel %vm3110, %v4747, 0
      %v5486 = vsel %vm3110, %v4748, 0
      %v5489 = vsel %vm3110, %v4749, 0
      %v5492 = vsel %vm3110, %v4750, 0
      %5494 = vmatprep.subr.bf16.mxu0 0
      %5495 = vmatpush1.bf16.msra.mxu0 0
      %5496 = vmatprep.subr.bf16.mxu0 0
      %5497 = vmatpush1.bf16.msra.mxu0 0
      %5498 = vmatprep.subr.bf16.mxu0 0
      %5499 = vmatpush1.bf16.msra.mxu0 0
      %5500 = vmatprep.subr.bf16.mxu0 0
      %5501 = vmatpush1.bf16.msra.mxu0 0
      %5502 = vmatprep.subr.bf16.mxu0 0
      %5503 = vmatpush1.bf16.msra.mxu0 %v5477
      %5504 = vmatprep.subr.bf16.mxu0 0
      %5505 = vmatpush1.bf16.msra.mxu0 %v5476
      %5506 = vmatprep.subr.bf16.mxu0 0
      %5507 = vmatpush1.bf16.msra.mxu0 %v5475
      %5508 = vmatprep.subr.bf16.mxu0 0
      %5509 = vmatpush1.bf16.msra.mxu0 %v5474
      %5510 = vmatprep.subr.bf16.mxu0 0
      %5511 = vmatpush2.bf16.msra.mxu0 0
      %5512 = vmatprep.subr.bf16.mxu0 0
      %5513 = vmatpush2.bf16.msra.mxu0 0
      %5514 = vmatprep.subr.bf16.mxu0 0
      %5515 = vmatpush2.bf16.msra.mxu0 0
      %5516 = vmatprep.subr.bf16.mxu0 0
      %5517 = vmatpush2.bf16.msra.mxu0 0
      %5518 = vmatprep.subr.bf16.mxu0 0
      %5519 = vmatpush2.bf16.msra.mxu0 0
      %5520 = vmatprep.subr.bf16.mxu0 0
      %5521 = vmatpush2.bf16.msra.mxu0 0
      %5522 = vmatprep.subr.bf16.mxu0 0
      %5523 = vmatpush2.bf16.msra.mxu0 0
      %5524 = vmatprep.subr.bf16.mxu0 0
      %5525 = vmatpush2.bf16.msra.mxu0 0
      %5526 = vmatprep.mubr.bf16.mxu0 0
      %5527 = vmatmul.mubr.bf16.gmra.mxu0 %v5483
      %v5528 = vpop.f32.mrf.mxu0
      %v5529 = vadd.f32 0.0, %v5528
      %v5530 = vpop.f32.mrf.mxu0
      %v5531 = vpop.f32.mrf.mxu0
      %v5532 = vadd.f32 0.0, %v5531
      %v5533 = vpop.f32.mrf.mxu0
      %5534 = vmatprep.mubr.bf16.mxu0 0
      %5535 = vmatmul.mubr.bf16.gmra.mxu0 %v5486
      %v5536 = vpop.f32.mrf.mxu0
      %v5537 = vadd.f32 0.0, %v5536
      %v5538 = vpop.f32.mrf.mxu0
      %v5539 = vpop.f32.mrf.mxu0
      %v5540 = vadd.f32 0.0, %v5539
      %v5541 = vpop.f32.mrf.mxu0
      %5542 = vmatprep.mubr.bf16.mxu0 0
      %5543 = vmatmul.mubr.bf16.gmra.mxu0 %v5489
      %v5544 = vpop.f32.mrf.mxu0
      %v5545 = vadd.f32 0.0, %v5544
      %v5546 = vpop.f32.mrf.mxu0
      %v5547 = vpop.f32.mrf.mxu0
      %v5548 = vadd.f32 0.0, %v5547
      %v5549 = vpop.f32.mrf.mxu0
      %5550 = vmatprep.mubr.bf16.mxu0 0
      %5551 = vmatmul.mubr.bf16.gmra.mxu0 %v5492
      %v5552 = vpop.f32.mrf.mxu0
      %v5553 = vadd.f32 0.0, %v5552
      %v5554 = vpop.f32.mrf.mxu0
      %v5555 = vpop.f32.mrf.mxu0
      %v5556 = vadd.f32 0.0, %v5555
      %v5557 = vpop.f32.mrf.mxu0
      %5558 = vdwg.mxu0
      %v5559 = vmul.f32 %v4822, %v4822
      %v5560 = vmul.f32 %v4825, %v4825
      %v5561 = vmul.f32 %v4830, %v4830
      %v5562 = vmul.f32 %v4833, %v4833
      %v5563 = vmul.f32 %v4838, %v4838
      %v5564 = vmul.f32 %v4841, %v4841
      %v5565 = vmul.f32 %v4846, %v4846
      %v5566 = vmul.f32 %v4849, %v4849
      %v5567 = vmul.f32 %v4923, %v4923
      %v5568 = vmul.f32 %v4926, %v4926
      %v5569 = vmul.f32 %v4931, %v4931
      %v5570 = vmul.f32 %v4934, %v4934
      %v5571 = vmul.f32 %v4939, %v4939
      %v5572 = vmul.f32 %v4942, %v4942
      %v5573 = vmul.f32 %v4947, %v4947
      %v5574 = vmul.f32 %v4950, %v4950
      %v5575 = vmul.f32 %v5024, %v5024
      %v5576 = vmul.f32 %v5027, %v5027
      %v5577 = vmul.f32 %v5032, %v5032
      %v5578 = vmul.f32 %v5035, %v5035
      %v5579 = vmul.f32 %v5040, %v5040
      %v5580 = vmul.f32 %v5043, %v5043
      %v5581 = vmul.f32 %v5048, %v5048
      %v5582 = vmul.f32 %v5051, %v5051
      %v5583 = vmul.f32 %v5125, %v5125
      %v5584 = vmul.f32 %v5128, %v5128
      %v5585 = vmul.f32 %v5133, %v5133
      %v5586 = vmul.f32 %v5136, %v5136
      %v5587 = vmul.f32 %v5141, %v5141
      %v5588 = vmul.f32 %v5144, %v5144
      %v5589 = vmul.f32 %v5149, %v5149
      %v5590 = vmul.f32 %v5152, %v5152
      %v5591 = vmul.f32 %v5226, %v5226
      %v5592 = vmul.f32 %v5229, %v5229
      %v5593 = vmul.f32 %v5234, %v5234
      %v5594 = vmul.f32 %v5237, %v5237
      %v5595 = vmul.f32 %v5242, %v5242
      %v5596 = vmul.f32 %v5245, %v5245
      %v5597 = vmul.f32 %v5250, %v5250
      %v5598 = vmul.f32 %v5253, %v5253
      %v5599 = vmul.f32 %v5327, %v5327
      %v5600 = vmul.f32 %v5330, %v5330
      %v5601 = vmul.f32 %v5335, %v5335
      %v5602 = vmul.f32 %v5338, %v5338
      %v5603 = vmul.f32 %v5343, %v5343
      %v5604 = vmul.f32 %v5346, %v5346
      %v5605 = vmul.f32 %v5351, %v5351
      %v5606 = vmul.f32 %v5354, %v5354
      %v5607 = vmul.f32 %v5428, %v5428
      %v5608 = vmul.f32 %v5431, %v5431
      %v5609 = vmul.f32 %v5436, %v5436
      %v5610 = vmul.f32 %v5439, %v5439
      %v5611 = vmul.f32 %v5444, %v5444
      %v5612 = vmul.f32 %v5447, %v5447
      %v5613 = vmul.f32 %v5452, %v5452
      %v5614 = vmul.f32 %v5455, %v5455
      %v5615 = vmul.f32 %v5529, %v5529
      %v5616 = vmul.f32 %v5532, %v5532
      %v5617 = vmul.f32 %v5537, %v5537
      %v5618 = vmul.f32 %v5540, %v5540
      %v5619 = vmul.f32 %v5545, %v5545
      %v5620 = vmul.f32 %v5548, %v5548
      %v5621 = vmul.f32 %v5553, %v5553
      %v5622 = vmul.f32 %v5556, %v5556
      %vm5623 = vcmask 31744
      %v5624 = vsel %vm5623, %v5559, 0.0
      %5625 = vadd.xlane.f32.xlu0 %v5624
      %v5626 = vpop.xlane.xlu0 %5625
      %v5627 = vsel %vm5623, %v5560, 0.0
      %5628 = vadd.xlane.f32.xlu0 %v5627
      %v5629 = vpop.xlane.xlu0 %5628
      %v5630 = vsel %vm5623, %v5561, 0.0
      %5631 = vadd.xlane.f32.xlu0 %v5630
      %v5632 = vpop.xlane.xlu0 %5631
      %v5633 = vsel %vm5623, %v5562, 0.0
      %5634 = vadd.xlane.f32.xlu0 %v5633
      %v5635 = vpop.xlane.xlu0 %5634
      %v5636 = vsel %vm5623, %v5563, 0.0
      %5637 = vadd.xlane.f32.xlu0 %v5636
      %v5638 = vpop.xlane.xlu0 %5637
      %v5639 = vsel %vm5623, %v5564, 0.0
      %5640 = vadd.xlane.f32.xlu0 %v5639
      %v5641 = vpop.xlane.xlu0 %5640
      %v5642 = vsel %vm5623, %v5565, 0.0
      %5643 = vadd.xlane.f32.xlu0 %v5642
      %v5644 = vpop.xlane.xlu0 %5643
      %v5645 = vsel %vm5623, %v5566, 0.0
      %5646 = vadd.xlane.f32.xlu0 %v5645
      %v5647 = vpop.xlane.xlu0 %5646
      %v5648 = vsel %vm5623, %v5567, 0.0
      %5649 = vadd.xlane.f32.xlu0 %v5648
      %v5650 = vpop.xlane.xlu0 %5649
      %v5651 = vsel %vm5623, %v5568, 0.0
      %5652 = vadd.xlane.f32.xlu0 %v5651
      %v5653 = vpop.xlane.xlu0 %5652
      %v5654 = vsel %vm5623, %v5569, 0.0
      %5655 = vadd.xlane.f32.xlu0 %v5654
      %v5656 = vpop.xlane.xlu0 %5655
      %v5657 = vsel %vm5623, %v5570, 0.0
      %5658 = vadd.xlane.f32.xlu0 %v5657
      %v5659 = vpop.xlane.xlu0 %5658
      %v5660 = vsel %vm5623, %v5571, 0.0
      %5661 = vadd.xlane.f32.xlu0 %v5660
      %v5662 = vpop.xlane.xlu0 %5661
      %v5663 = vsel %vm5623, %v5572, 0.0
      %5664 = vadd.xlane.f32.xlu0 %v5663
      %v5665 = vpop.xlane.xlu0 %5664
      %v5666 = vsel %vm5623, %v5573, 0.0
      %5667 = vadd.xlane.f32.xlu0 %v5666
      %v5668 = vpop.xlane.xlu0 %5667
      %v5669 = vsel %vm5623, %v5574, 0.0
      %5670 = vadd.xlane.f32.xlu0 %v5669
      %v5671 = vpop.xlane.xlu0 %5670
      %v5672 = vsel %vm5623, %v5575, 0.0
      %5673 = vadd.xlane.f32.xlu0 %v5672
      %v5674 = vpop.xlane.xlu0 %5673
      %v5675 = vsel %vm5623, %v5576, 0.0
      %5676 = vadd.xlane.f32.xlu0 %v5675
      %v5677 = vpop.xlane.xlu0 %5676
      %v5678 = vsel %vm5623, %v5577, 0.0
      %5679 = vadd.xlane.f32.xlu0 %v5678
      %v5680 = vpop.xlane.xlu0 %5679
      %v5681 = vsel %vm5623, %v5578, 0.0
      %5682 = vadd.xlane.f32.xlu0 %v5681
      %v5683 = vpop.xlane.xlu0 %5682
      %v5684 = vsel %vm5623, %v5579, 0.0
      %5685 = vadd.xlane.f32.xlu0 %v5684
      %v5686 = vpop.xlane.xlu0 %5685
      %v5687 = vsel %vm5623, %v5580, 0.0
      %5688 = vadd.xlane.f32.xlu0 %v5687
      %v5689 = vpop.xlane.xlu0 %5688
      %v5690 = vsel %vm5623, %v5581, 0.0
      %5691 = vadd.xlane.f32.xlu0 %v5690
      %v5692 = vpop.xlane.xlu0 %5691
      %v5693 = vsel %vm5623, %v5582, 0.0
      %5694 = vadd.xlane.f32.xlu0 %v5693
      %v5695 = vpop.xlane.xlu0 %5694
      %v5696 = vsel %vm5623, %v5583, 0.0
      %5697 = vadd.xlane.f32.xlu0 %v5696
      %v5698 = vpop.xlane.xlu0 %5697
      %v5699 = vsel %vm5623, %v5584, 0.0
      %5700 = vadd.xlane.f32.xlu0 %v5699
      %v5701 = vpop.xlane.xlu0 %5700
      %v5702 = vsel %vm5623, %v5585, 0.0
      %5703 = vadd.xlane.f32.xlu0 %v5702
      %v5704 = vpop.xlane.xlu0 %5703
      %v5705 = vsel %vm5623, %v5586, 0.0
      %5706 = vadd.xlane.f32.xlu0 %v5705
      %v5707 = vpop.xlane.xlu0 %5706
      %v5708 = vsel %vm5623, %v5587, 0.0
      %5709 = vadd.xlane.f32.xlu0 %v5708
      %v5710 = vpop.xlane.xlu0 %5709
      %v5711 = vsel %vm5623, %v5588, 0.0
      %5712 = vadd.xlane.f32.xlu0 %v5711
      %v5713 = vpop.xlane.xlu0 %5712
      %v5714 = vsel %vm5623, %v5589, 0.0
      %5715 = vadd.xlane.f32.xlu0 %v5714
      %v5716 = vpop.xlane.xlu0 %5715
      %v5717 = vsel %vm5623, %v5590, 0.0
      %5718 = vadd.xlane.f32.xlu0 %v5717
      %v5719 = vpop.xlane.xlu0 %5718
      %v5720 = vsel %vm5623, %v5591, 0.0
      %5721 = vadd.xlane.f32.xlu0 %v5720
      %v5722 = vpop.xlane.xlu0 %5721
      %v5723 = vsel %vm5623, %v5592, 0.0
      %5724 = vadd.xlane.f32.xlu0 %v5723
      %v5725 = vpop.xlane.xlu0 %5724
      %v5726 = vsel %vm5623, %v5593, 0.0
      %5727 = vadd.xlane.f32.xlu0 %v5726
      %v5728 = vpop.xlane.xlu0 %5727
      %v5729 = vsel %vm5623, %v5594, 0.0
      %5730 = vadd.xlane.f32.xlu0 %v5729
      %v5731 = vpop.xlane.xlu0 %5730
      %v5732 = vsel %vm5623, %v5595, 0.0
      %5733 = vadd.xlane.f32.xlu0 %v5732
      %v5734 = vpop.xlane.xlu0 %5733
      %v5735 = vsel %vm5623, %v5596, 0.0
      %5736 = vadd.xlane.f32.xlu0 %v5735
      %v5737 = vpop.xlane.xlu0 %5736
      %v5738 = vsel %vm5623, %v5597, 0.0
      %5739 = vadd.xlane.f32.xlu0 %v5738
      %v5740 = vpop.xlane.xlu0 %5739
      %v5741 = vsel %vm5623, %v5598, 0.0
      %5742 = vadd.xlane.f32.xlu0 %v5741
      %v5743 = vpop.xlane.xlu0 %5742
      %v5744 = vsel %vm5623, %v5599, 0.0
      %5745 = vadd.xlane.f32.xlu0 %v5744
      %v5746 = vpop.xlane.xlu0 %5745
      %v5747 = vsel %vm5623, %v5600, 0.0
      %5748 = vadd.xlane.f32.xlu0 %v5747
      %v5749 = vpop.xlane.xlu0 %5748
      %v5750 = vsel %vm5623, %v5601, 0.0
      %5751 = vadd.xlane.f32.xlu0 %v5750
      %v5752 = vpop.xlane.xlu0 %5751
      %v5753 = vsel %vm5623, %v5602, 0.0
      %5754 = vadd.xlane.f32.xlu0 %v5753
      %v5755 = vpop.xlane.xlu0 %5754
      %v5756 = vsel %vm5623, %v5603, 0.0
      %5757 = vadd.xlane.f32.xlu0 %v5756
      %v5758 = vpop.xlane.xlu0 %5757
      %v5759 = vsel %vm5623, %v5604, 0.0
      %5760 = vadd.xlane.f32.xlu0 %v5759
      %v5761 = vpop.xlane.xlu0 %5760
      %v5762 = vsel %vm5623, %v5605, 0.0
      %5763 = vadd.xlane.f32.xlu0 %v5762
      %v5764 = vpop.xlane.xlu0 %5763
      %v5765 = vsel %vm5623, %v5606, 0.0
      %5766 = vadd.xlane.f32.xlu0 %v5765
      %v5767 = vpop.xlane.xlu0 %5766
      %v5768 = vsel %vm5623, %v5607, 0.0
      %5769 = vadd.xlane.f32.xlu0 %v5768
      %v5770 = vpop.xlane.xlu0 %5769
      %v5771 = vsel %vm5623, %v5608, 0.0
      %5772 = vadd.xlane.f32.xlu0 %v5771
      %v5773 = vpop.xlane.xlu0 %5772
      %v5774 = vsel %vm5623, %v5609, 0.0
      %5775 = vadd.xlane.f32.xlu0 %v5774
      %v5776 = vpop.xlane.xlu0 %5775
      %v5777 = vsel %vm5623, %v5610, 0.0
      %5778 = vadd.xlane.f32.xlu0 %v5777
      %v5779 = vpop.xlane.xlu0 %5778
      %v5780 = vsel %vm5623, %v5611, 0.0
      %5781 = vadd.xlane.f32.xlu0 %v5780
      %v5782 = vpop.xlane.xlu0 %5781
      %v5783 = vsel %vm5623, %v5612, 0.0
      %5784 = vadd.xlane.f32.xlu0 %v5783
      %v5785 = vpop.xlane.xlu0 %5784
      %v5786 = vsel %vm5623, %v5613, 0.0
      %5787 = vadd.xlane.f32.xlu0 %v5786
      %v5788 = vpop.xlane.xlu0 %5787
      %v5789 = vsel %vm5623, %v5614, 0.0
      %5790 = vadd.xlane.f32.xlu0 %v5789
      %v5791 = vpop.xlane.xlu0 %5790
      %v5792 = vsel %vm5623, %v5615, 0.0
      %5793 = vadd.xlane.f32.xlu0 %v5792
      %v5794 = vpop.xlane.xlu0 %5793
      %v5795 = vsel %vm5623, %v5616, 0.0
      %5796 = vadd.xlane.f32.xlu0 %v5795
      %v5797 = vpop.xlane.xlu0 %5796
      %v5798 = vsel %vm5623, %v5617, 0.0
      %5799 = vadd.xlane.f32.xlu0 %v5798
      %v5800 = vpop.xlane.xlu0 %5799
      %v5801 = vsel %vm5623, %v5618, 0.0
      %5802 = vadd.xlane.f32.xlu0 %v5801
      %v5803 = vpop.xlane.xlu0 %5802
      %v5804 = vsel %vm5623, %v5619, 0.0
      %5805 = vadd.xlane.f32.xlu0 %v5804
      %v5806 = vpop.xlane.xlu0 %5805
      %v5807 = vsel %vm5623, %v5620, 0.0
      %5808 = vadd.xlane.f32.xlu0 %v5807
      %v5809 = vpop.xlane.xlu0 %5808
      %v5810 = vsel %vm5623, %v5621, 0.0
      %5811 = vadd.xlane.f32.xlu0 %v5810
      %v5812 = vpop.xlane.xlu0 %5811
      %v5813 = vsel %vm5623, %v5622, 0.0
      %5814 = vadd.xlane.f32.xlu0 %v5813
      %v5815 = vpop.xlane.xlu0 %5814
      %v5816 = vrcp.pop 4.0
      %v5817 = vmul.f32 %v5626, %v5816
      %v5818 = vmul.f32 %v5629, %v5816
      %v5819 = vmul.f32 %v5632, %v5816
      %v5820 = vmul.f32 %v5635, %v5816
      %v5821 = vmul.f32 %v5638, %v5816
      %v5822 = vmul.f32 %v5641, %v5816
      %v5823 = vmul.f32 %v5644, %v5816
      %v5824 = vmul.f32 %v5647, %v5816
      %v5825 = vmul.f32 %v5650, %v5816
      %v5826 = vmul.f32 %v5653, %v5816
      %v5827 = vmul.f32 %v5656, %v5816
      %v5828 = vmul.f32 %v5659, %v5816
      %v5829 = vmul.f32 %v5662, %v5816
      %v5830 = vmul.f32 %v5665, %v5816
      %v5831 = vmul.f32 %v5668, %v5816
      %v5832 = vmul.f32 %v5671, %v5816
      %v5833 = vmul.f32 %v5674, %v5816
      %v5834 = vmul.f32 %v5677, %v5816
      %v5835 = vmul.f32 %v5680, %v5816
      %v5836 = vmul.f32 %v5683, %v5816
      %v5837 = vmul.f32 %v5686, %v5816
      %v5838 = vmul.f32 %v5689, %v5816
      %v5839 = vmul.f32 %v5692, %v5816
      %v5840 = vmul.f32 %v5695, %v5816
      %v5841 = vmul.f32 %v5698, %v5816
      %v5842 = vmul.f32 %v5701, %v5816
      %v5843 = vmul.f32 %v5704, %v5816
      %v5844 = vmul.f32 %v5707, %v5816
      %v5845 = vmul.f32 %v5710, %v5816
      %v5846 = vmul.f32 %v5713, %v5816
      %v5847 = vmul.f32 %v5716, %v5816
      %v5848 = vmul.f32 %v5719, %v5816
      %v5849 = vmul.f32 %v5722, %v5816
      %v5850 = vmul.f32 %v5725, %v5816
      %v5851 = vmul.f32 %v5728, %v5816
      %v5852 = vmul.f32 %v5731, %v5816
      %v5853 = vmul.f32 %v5734, %v5816
      %v5854 = vmul.f32 %v5737, %v5816
      %v5855 = vmul.f32 %v5740, %v5816
      %v5856 = vmul.f32 %v5743, %v5816
      %v5857 = vmul.f32 %v5746, %v5816
      %v5858 = vmul.f32 %v5749, %v5816
      %v5859 = vmul.f32 %v5752, %v5816
      %v5860 = vmul.f32 %v5755, %v5816
      %v5861 = vmul.f32 %v5758, %v5816
      %v5862 = vmul.f32 %v5761, %v5816
      %v5863 = vmul.f32 %v5764, %v5816
      %v5864 = vmul.f32 %v5767, %v5816
      %v5865 = vmul.f32 %v5770, %v5816
      %v5866 = vmul.f32 %v5773, %v5816
      %v5867 = vmul.f32 %v5776, %v5816
      %v5868 = vmul.f32 %v5779, %v5816
      %v5869 = vmul.f32 %v5782, %v5816
      %v5870 = vmul.f32 %v5785, %v5816
      %v5871 = vmul.f32 %v5788, %v5816
      %v5872 = vmul.f32 %v5791, %v5816
      %v5873 = vmul.f32 %v5794, %v5816
      %v5874 = vmul.f32 %v5797, %v5816
      %v5875 = vmul.f32 %v5800, %v5816
      %v5876 = vmul.f32 %v5803, %v5816
      %v5877 = vmul.f32 %v5806, %v5816
      %v5878 = vmul.f32 %v5809, %v5816
      %v5879 = vmul.f32 %v5812, %v5816
      %v5880 = vmul.f32 %v5815, %v5816
      %v5881 = vadd.f32 %v5817, 1e-05
      %v5882 = vadd.f32 %v5818, 1e-05
      %v5883 = vadd.f32 %v5819, 1e-05
      %v5884 = vadd.f32 %v5820, 1e-05
      %v5885 = vadd.f32 %v5821, 1e-05
      %v5886 = vadd.f32 %v5822, 1e-05
      %v5887 = vadd.f32 %v5823, 1e-05
      %v5888 = vadd.f32 %v5824, 1e-05
      %v5889 = vadd.f32 %v5825, 1e-05
      %v5890 = vadd.f32 %v5826, 1e-05
      %v5891 = vadd.f32 %v5827, 1e-05
      %v5892 = vadd.f32 %v5828, 1e-05
      %v5893 = vadd.f32 %v5829, 1e-05
      %v5894 = vadd.f32 %v5830, 1e-05
      %v5895 = vadd.f32 %v5831, 1e-05
      %v5896 = vadd.f32 %v5832, 1e-05
      %v5897 = vadd.f32 %v5833, 1e-05
      %v5898 = vadd.f32 %v5834, 1e-05
      %v5899 = vadd.f32 %v5835, 1e-05
      %v5900 = vadd.f32 %v5836, 1e-05
      %v5901 = vadd.f32 %v5837, 1e-05
      %v5902 = vadd.f32 %v5838, 1e-05
      %v5903 = vadd.f32 %v5839, 1e-05
      %v5904 = vadd.f32 %v5840, 1e-05
      %v5905 = vadd.f32 %v5841, 1e-05
      %v5906 = vadd.f32 %v5842, 1e-05
      %v5907 = vadd.f32 %v5843, 1e-05
      %v5908 = vadd.f32 %v5844, 1e-05
      %v5909 = vadd.f32 %v5845, 1e-05
      %v5910 = vadd.f32 %v5846, 1e-05
      %v5911 = vadd.f32 %v5847, 1e-05
      %v5912 = vadd.f32 %v5848, 1e-05
      %v5913 = vadd.f32 %v5849, 1e-05
      %v5914 = vadd.f32 %v5850, 1e-05
      %v5915 = vadd.f32 %v5851, 1e-05
      %v5916 = vadd.f32 %v5852, 1e-05
      %v5917 = vadd.f32 %v5853, 1e-05
      %v5918 = vadd.f32 %v5854, 1e-05
      %v5919 = vadd.f32 %v5855, 1e-05
      %v5920 = vadd.f32 %v5856, 1e-05
      %v5921 = vadd.f32 %v5857, 1e-05
      %v5922 = vadd.f32 %v5858, 1e-05
      %v5923 = vadd.f32 %v5859, 1e-05
      %v5924 = vadd.f32 %v5860, 1e-05
      %v5925 = vadd.f32 %v5861, 1e-05
      %v5926 = vadd.f32 %v5862, 1e-05
      %v5927 = vadd.f32 %v5863, 1e-05
      %v5928 = vadd.f32 %v5864, 1e-05
      %v5929 = vadd.f32 %v5865, 1e-05
      %v5930 = vadd.f32 %v5866, 1e-05
      %v5931 = vadd.f32 %v5867, 1e-05
      %v5932 = vadd.f32 %v5868, 1e-05
      %v5933 = vadd.f32 %v5869, 1e-05
      %v5934 = vadd.f32 %v5870, 1e-05
      %v5935 = vadd.f32 %v5871, 1e-05
      %v5936 = vadd.f32 %v5872, 1e-05
      %v5937 = vadd.f32 %v5873, 1e-05
      %v5938 = vadd.f32 %v5874, 1e-05
      %v5939 = vadd.f32 %v5875, 1e-05
      %v5940 = vadd.f32 %v5876, 1e-05
      %v5941 = vadd.f32 %v5877, 1e-05
      %v5942 = vadd.f32 %v5878, 1e-05
      %v5943 = vadd.f32 %v5879, 1e-05
      %v5944 = vadd.f32 %v5880, 1e-05
      %v5945 = vrsqrt.pop %v5881
      %v5946 = vrsqrt.pop %v5882
      %v5947 = vrsqrt.pop %v5883
      %v5948 = vrsqrt.pop %v5884
      %v5949 = vrsqrt.pop %v5885
      %v5950 = vrsqrt.pop %v5886
      %v5951 = vrsqrt.pop %v5887
      %v5952 = vrsqrt.pop %v5888
      %v5953 = vrsqrt.pop %v5889
      %v5954 = vrsqrt.pop %v5890
      %v5955 = vrsqrt.pop %v5891
      %v5956 = vrsqrt.pop %v5892
      %v5957 = vrsqrt.pop %v5893
      %v5958 = vrsqrt.pop %v5894
      %v5959 = vrsqrt.pop %v5895
      %v5960 = vrsqrt.pop %v5896
      %v5961 = vrsqrt.pop %v5897
      %v5962 = vrsqrt.pop %v5898
      %v5963 = vrsqrt.pop %v5899
      %v5964 = vrsqrt.pop %v5900
      %v5965 = vrsqrt.pop %v5901
      %v5966 = vrsqrt.pop %v5902
      %v5967 = vrsqrt.pop %v5903
      %v5968 = vrsqrt.pop %v5904
      %v5969 = vrsqrt.pop %v5905
      %v5970 = vrsqrt.pop %v5906
      %v5971 = vrsqrt.pop %v5907
      %v5972 = vrsqrt.pop %v5908
      %v5973 = vrsqrt.pop %v5909
      %v5974 = vrsqrt.pop %v5910
      %v5975 = vrsqrt.pop %v5911
      %v5976 = vrsqrt.pop %v5912
      %v5977 = vrsqrt.pop %v5913
      %v5978 = vrsqrt.pop %v5914
      %v5979 = vrsqrt.pop %v5915
      %v5980 = vrsqrt.pop %v5916
      %v5981 = vrsqrt.pop %v5917
      %v5982 = vrsqrt.pop %v5918
      %v5983 = vrsqrt.pop %v5919
      %v5984 = vrsqrt.pop %v5920
      %v5985 = vrsqrt.pop %v5921
      %v5986 = vrsqrt.pop %v5922
      %v5987 = vrsqrt.pop %v5923
      %v5988 = vrsqrt.pop %v5924
      %v5989 = vrsqrt.pop %v5925
      %v5990 = vrsqrt.pop %v5926
      %v5991 = vrsqrt.pop %v5927
      %v5992 = vrsqrt.pop %v5928
      %v5993 = vrsqrt.pop %v5929
      %v5994 = vrsqrt.pop %v5930
      %v5995 = vrsqrt.pop %v5931
      %v5996 = vrsqrt.pop %v5932
      %v5997 = vrsqrt.pop %v5933
      %v5998 = vrsqrt.pop %v5934
      %v5999 = vrsqrt.pop %v5935
      %v6000 = vrsqrt.pop %v5936
      %v6001 = vrsqrt.pop %v5937
      %v6002 = vrsqrt.pop %v5938
      %v6003 = vrsqrt.pop %v5939
      %v6004 = vrsqrt.pop %v5940
      %v6005 = vrsqrt.pop %v5941
      %v6006 = vrsqrt.pop %v5942
      %v6007 = vrsqrt.pop %v5943
      %v6008 = vrsqrt.pop %v5944
      %v6009 = vmul.f32 %v4822, %v5945
      %v6010 = vmul.f32 %v4825, %v5946
      %v6011 = vmul.f32 %v4830, %v5947
      %v6012 = vmul.f32 %v4833, %v5948
      %v6013 = vmul.f32 %v4838, %v5949
      %v6014 = vmul.f32 %v4841, %v5950
      %v6015 = vmul.f32 %v4846, %v5951
      %v6016 = vmul.f32 %v4849, %v5952
      %v6017 = vmul.f32 %v4923, %v5953
      %v6018 = vmul.f32 %v4926, %v5954
      %v6019 = vmul.f32 %v4931, %v5955
      %v6020 = vmul.f32 %v4934, %v5956
      %v6021 = vmul.f32 %v4939, %v5957
      %v6022 = vmul.f32 %v4942, %v5958
      %v6023 = vmul.f32 %v4947, %v5959
      %v6024 = vmul.f32 %v4950, %v5960
      %v6025 = vmul.f32 %v5024, %v5961
      %v6026 = vmul.f32 %v5027, %v5962
      %v6027 = vmul.f32 %v5032, %v5963
      %v6028 = vmul.f32 %v5035, %v5964
      %v6029 = vmul.f32 %v5040, %v5965
      %v6030 = vmul.f32 %v5043, %v5966
      %v6031 = vmul.f32 %v5048, %v5967
      %v6032 = vmul.f32 %v5051, %v5968
      %v6033 = vmul.f32 %v5125, %v5969
      %v6034 = vmul.f32 %v5128, %v5970
      %v6035 = vmul.f32 %v5133, %v5971
      %v6036 = vmul.f32 %v5136, %v5972
      %v6037 = vmul.f32 %v5141, %v5973
      %v6038 = vmul.f32 %v5144, %v5974
      %v6039 = vmul.f32 %v5149, %v5975
      %v6040 = vmul.f32 %v5152, %v5976
      %v6041 = vmul.f32 %v5226, %v5977
      %v6042 = vmul.f32 %v5229, %v5978
      %v6043 = vmul.f32 %v5234, %v5979
      %v6044 = vmul.f32 %v5237, %v5980
      %v6045 = vmul.f32 %v5242, %v5981
      %v6046 = vmul.f32 %v5245, %v5982
      %v6047 = vmul.f32 %v5250, %v5983
      %v6048 = vmul.f32 %v5253, %v5984
      %v6049 = vmul.f32 %v5327, %v5985
      %v6050 = vmul.f32 %v5330, %v5986
      %v6051 = vmul.f32 %v5335, %v5987
      %v6052 = vmul.f32 %v5338, %v5988
      %v6053 = vmul.f32 %v5343, %v5989
      %v6054 = vmul.f32 %v5346, %v5990
      %v6055 = vmul.f32 %v5351, %v5991
      %v6056 = vmul.f32 %v5354, %v5992
      %v6057 = vmul.f32 %v5428, %v5993
      %v6058 = vmul.f32 %v5431, %v5994
      %v6059 = vmul.f32 %v5436, %v5995
      %v6060 = vmul.f32 %v5439, %v5996
      %v6061 = vmul.f32 %v5444, %v5997
      %v6062 = vmul.f32 %v5447, %v5998
      %v6063 = vmul.f32 %v5452, %v5999
      %v6064 = vmul.f32 %v5455, %v6000
      %v6065 = vmul.f32 %v5529, %v6001
      %v6066 = vmul.f32 %v5532, %v6002
      %v6067 = vmul.f32 %v5537, %v6003
      %v6068 = vmul.f32 %v5540, %v6004
      %v6069 = vmul.f32 %v5545, %v6005
      %v6070 = vmul.f32 %v5548, %v6006
      %v6071 = vmul.f32 %v5553, %v6007
      %v6072 = vmul.f32 %v5556, %v6008
      %v6074 = vlaneseq
      %v6075 = vshrl.u32 %v6074, 7
      %v6076 = vsub.s32 0, %v6075
      %v6077 = vrot.slane %v743, %v6076
      %v6079 = vmul.f32 %v6009, %v6077
      %v6080 = vmul.f32 %v6010, %v6077
      %v6081 = vmul.f32 %v6011, %v6077
      %v6082 = vmul.f32 %v6012, %v6077
      %v6083 = vmul.f32 %v6013, %v6077
      %v6084 = vmul.f32 %v6014, %v6077
      %v6085 = vmul.f32 %v6015, %v6077
      %v6086 = vmul.f32 %v6016, %v6077
      %v6087 = vmul.f32 %v6017, %v6077
      %v6088 = vmul.f32 %v6018, %v6077
      %v6089 = vmul.f32 %v6019, %v6077
      %v6090 = vmul.f32 %v6020, %v6077
      %v6091 = vmul.f32 %v6021, %v6077
      %v6092 = vmul.f32 %v6022, %v6077
      %v6093 = vmul.f32 %v6023, %v6077
      %v6094 = vmul.f32 %v6024, %v6077
      %v6095 = vmul.f32 %v6025, %v6077
      %v6096 = vmul.f32 %v6026, %v6077
      %v6097 = vmul.f32 %v6027, %v6077
      %v6098 = vmul.f32 %v6028, %v6077
      %v6099 = vmul.f32 %v6029, %v6077
      %v6100 = vmul.f32 %v6030, %v6077
      %v6101 = vmul.f32 %v6031, %v6077
      %v6102 = vmul.f32 %v6032, %v6077
      %v6103 = vmul.f32 %v6033, %v6077
      %v6104 = vmul.f32 %v6034, %v6077
      %v6105 = vmul.f32 %v6035, %v6077
      %v6106 = vmul.f32 %v6036, %v6077
      %v6107 = vmul.f32 %v6037, %v6077
      %v6108 = vmul.f32 %v6038, %v6077
      %v6109 = vmul.f32 %v6039, %v6077
      %v6110 = vmul.f32 %v6040, %v6077
      %v6111 = vmul.f32 %v6041, %v6077
      %v6112 = vmul.f32 %v6042, %v6077
      %v6113 = vmul.f32 %v6043, %v6077
      %v6114 = vmul.f32 %v6044, %v6077
      %v6115 = vmul.f32 %v6045, %v6077
      %v6116 = vmul.f32 %v6046, %v6077
      %v6117 = vmul.f32 %v6047, %v6077
      %v6118 = vmul.f32 %v6048, %v6077
      %v6119 = vmul.f32 %v6049, %v6077
      %v6120 = vmul.f32 %v6050, %v6077
      %v6121 = vmul.f32 %v6051, %v6077
      %v6122 = vmul.f32 %v6052, %v6077
      %v6123 = vmul.f32 %v6053, %v6077
      %v6124 = vmul.f32 %v6054, %v6077
      %v6125 = vmul.f32 %v6055, %v6077
      %v6126 = vmul.f32 %v6056, %v6077
      %v6127 = vmul.f32 %v6057, %v6077
      %v6128 = vmul.f32 %v6058, %v6077
      %v6129 = vmul.f32 %v6059, %v6077
      %v6130 = vmul.f32 %v6060, %v6077
      %v6131 = vmul.f32 %v6061, %v6077
      %v6132 = vmul.f32 %v6062, %v6077
      %v6133 = vmul.f32 %v6063, %v6077
      %v6134 = vmul.f32 %v6064, %v6077
      %v6135 = vmul.f32 %v6065, %v6077
      %v6136 = vmul.f32 %v6066, %v6077
      %v6137 = vmul.f32 %v6067, %v6077
      %v6138 = vmul.f32 %v6068, %v6077
      %v6139 = vmul.f32 %v6069, %v6077
      %v6140 = vmul.f32 %v6070, %v6077
      %v6141 = vmul.f32 %v6071, %v6077
      %v6142 = vmul.f32 %v6072, %v6077
      %v6143 = vmul.f32 %v6079, 0.2
      %v6144 = vmul.f32 %v6080, 0.2
      %v6145 = vmul.f32 %v6081, 0.2
      %v6146 = vmul.f32 %v6082, 0.2
      %v6147 = vmul.f32 %v6083, 0.2
      %v6148 = vmul.f32 %v6084, 0.2
      %v6149 = vmul.f32 %v6085, 0.2
      %v6150 = vmul.f32 %v6086, 0.2
      %v6151 = vmul.f32 %v6087, 0.2
      %v6152 = vmul.f32 %v6088, 0.2
      %v6153 = vmul.f32 %v6089, 0.2
      %v6154 = vmul.f32 %v6090, 0.2
      %v6155 = vmul.f32 %v6091, 0.2
      %v6156 = vmul.f32 %v6092, 0.2
      %v6157 = vmul.f32 %v6093, 0.2
      %v6158 = vmul.f32 %v6094, 0.2
      %v6159 = vmul.f32 %v6095, 0.2
      %v6160 = vmul.f32 %v6096, 0.2
      %v6161 = vmul.f32 %v6097, 0.2
      %v6162 = vmul.f32 %v6098, 0.2
      %v6163 = vmul.f32 %v6099, 0.2
      %v6164 = vmul.f32 %v6100, 0.2
      %v6165 = vmul.f32 %v6101, 0.2
      %v6166 = vmul.f32 %v6102, 0.2
      %v6167 = vmul.f32 %v6103, 0.2
      %v6168 = vmul.f32 %v6104, 0.2
      %v6169 = vmul.f32 %v6105, 0.2
      %v6170 = vmul.f32 %v6106, 0.2
      %v6171 = vmul.f32 %v6107, 0.2
      %v6172 = vmul.f32 %v6108, 0.2
      %v6173 = vmul.f32 %v6109, 0.2
      %v6174 = vmul.f32 %v6110, 0.2
      %v6175 = vmul.f32 %v6111, 0.2
      %v6176 = vmul.f32 %v6112, 0.2
      %v6177 = vmul.f32 %v6113, 0.2
      %v6178 = vmul.f32 %v6114, 0.2
      %v6179 = vmul.f32 %v6115, 0.2
      %v6180 = vmul.f32 %v6116, 0.2
      %v6181 = vmul.f32 %v6117, 0.2
      %v6182 = vmul.f32 %v6118, 0.2
      %v6183 = vmul.f32 %v6119, 0.2
      %v6184 = vmul.f32 %v6120, 0.2
      %v6185 = vmul.f32 %v6121, 0.2
      %v6186 = vmul.f32 %v6122, 0.2
      %v6187 = vmul.f32 %v6123, 0.2
      %v6188 = vmul.f32 %v6124, 0.2
      %v6189 = vmul.f32 %v6125, 0.2
      %v6190 = vmul.f32 %v6126, 0.2
      %v6191 = vmul.f32 %v6127, 0.2
      %v6192 = vmul.f32 %v6128, 0.2
      %v6193 = vmul.f32 %v6129, 0.2
      %v6194 = vmul.f32 %v6130, 0.2
      %v6195 = vmul.f32 %v6131, 0.2
      %v6196 = vmul.f32 %v6132, 0.2
      %v6197 = vmul.f32 %v6133, 0.2
      %v6198 = vmul.f32 %v6134, 0.2
      %v6199 = vmul.f32 %v6135, 0.2
      %v6200 = vmul.f32 %v6136, 0.2
      %v6201 = vmul.f32 %v6137, 0.2
      %v6202 = vmul.f32 %v6138, 0.2
      %v6203 = vmul.f32 %v6139, 0.2
      %v6204 = vmul.f32 %v6140, 0.2
      %v6205 = vmul.f32 %v6141, 0.2
      %v6206 = vmul.f32 %v6142, 0.2
      %v6207 = vpack.c.bf16 %v6144, %v6143
      %v6208 = vpack.c.bf16 %v6146, %v6145
      %v6209 = vpack.c.bf16 %v6148, %v6147
      %v6210 = vpack.c.bf16 %v6150, %v6149
      %v6211 = vpack.c.bf16 %v6152, %v6151
      %v6212 = vpack.c.bf16 %v6154, %v6153
      %v6213 = vpack.c.bf16 %v6156, %v6155
      %v6214 = vpack.c.bf16 %v6158, %v6157
      %v6215 = vpack.c.bf16 %v6160, %v6159
      %v6216 = vpack.c.bf16 %v6162, %v6161
      %v6217 = vpack.c.bf16 %v6164, %v6163
      %v6218 = vpack.c.bf16 %v6166, %v6165
      %v6219 = vpack.c.bf16 %v6168, %v6167
      %v6220 = vpack.c.bf16 %v6170, %v6169
      %v6221 = vpack.c.bf16 %v6172, %v6171
      %v6222 = vpack.c.bf16 %v6174, %v6173
      %v6223 = vpack.c.bf16 %v6176, %v6175
      %v6224 = vpack.c.bf16 %v6178, %v6177
      %v6225 = vpack.c.bf16 %v6180, %v6179
      %v6226 = vpack.c.bf16 %v6182, %v6181
      %v6227 = vpack.c.bf16 %v6184, %v6183
      %v6228 = vpack.c.bf16 %v6186, %v6185
      %v6229 = vpack.c.bf16 %v6188, %v6187
      %v6230 = vpack.c.bf16 %v6190, %v6189
      %v6231 = vpack.c.bf16 %v6192, %v6191
      %v6232 = vpack.c.bf16 %v6194, %v6193
      %v6233 = vpack.c.bf16 %v6196, %v6195
      %v6234 = vpack.c.bf16 %v6198, %v6197
      %v6235 = vpack.c.bf16 %v6200, %v6199
      %v6236 = vpack.c.bf16 %v6202, %v6201
      %v6237 = vpack.c.bf16 %v6204, %v6203
      %v6238 = vpack.c.bf16 %v6206, %v6205
      %v6271 = vunpack.c.l.b16 %v6207
      %v6272 = vunpack.c.h.b16 %v6207
      %v6273 = vunpack.c.l.b16 %v6208
      %v6274 = vunpack.c.h.b16 %v6208
      %v6275 = vunpack.c.l.b16 %v6209
      %v6276 = vunpack.c.h.b16 %v6209
      %v6277 = vunpack.c.l.b16 %v6210
      %v6278 = vunpack.c.h.b16 %v6210
      %v6279 = vunpack.c.l.b16 %v6211
      %v6280 = vunpack.c.h.b16 %v6211
      %v6281 = vunpack.c.l.b16 %v6212
      %v6282 = vunpack.c.h.b16 %v6212
      %v6283 = vunpack.c.l.b16 %v6213
      %v6284 = vunpack.c.h.b16 %v6213
      %v6285 = vunpack.c.l.b16 %v6214
      %v6286 = vunpack.c.h.b16 %v6214
      %v6287 = vunpack.c.l.b16 %v6215
      %v6288 = vunpack.c.h.b16 %v6215
      %v6289 = vunpack.c.l.b16 %v6216
      %v6290 = vunpack.c.h.b16 %v6216
      %v6291 = vunpack.c.l.b16 %v6217
      %v6292 = vunpack.c.h.b16 %v6217
      %v6293 = vunpack.c.l.b16 %v6218
      %v6294 = vunpack.c.h.b16 %v6218
      %v6295 = vunpack.c.l.b16 %v6219
      %v6296 = vunpack.c.h.b16 %v6219
      %v6297 = vunpack.c.l.b16 %v6220
      %v6298 = vunpack.c.h.b16 %v6220
      %v6299 = vunpack.c.l.b16 %v6221
      %v6300 = vunpack.c.h.b16 %v6221
      %v6301 = vunpack.c.l.b16 %v6222
      %v6302 = vunpack.c.h.b16 %v6222
      %v6303 = vunpack.c.l.b16 %v6223
      %v6304 = vunpack.c.h.b16 %v6223
      %v6305 = vunpack.c.l.b16 %v6224
      %v6306 = vunpack.c.h.b16 %v6224
      %v6307 = vunpack.c.l.b16 %v6225
      %v6308 = vunpack.c.h.b16 %v6225
      %v6309 = vunpack.c.l.b16 %v6226
      %v6310 = vunpack.c.h.b16 %v6226
      %v6311 = vunpack.c.l.b16 %v6227
      %v6312 = vunpack.c.h.b16 %v6227
      %v6313 = vunpack.c.l.b16 %v6228
      %v6314 = vunpack.c.h.b16 %v6228
      %v6315 = vunpack.c.l.b16 %v6229
      %v6316 = vunpack.c.h.b16 %v6229
      %v6317 = vunpack.c.l.b16 %v6230
      %v6318 = vunpack.c.h.b16 %v6230
      %v6319 = vunpack.c.l.b16 %v6231
      %v6320 = vunpack.c.h.b16 %v6231
      %v6321 = vunpack.c.l.b16 %v6232
      %v6322 = vunpack.c.h.b16 %v6232
      %v6323 = vunpack.c.l.b16 %v6233
      %v6324 = vunpack.c.h.b16 %v6233
      %v6325 = vunpack.c.l.b16 %v6234
      %v6326 = vunpack.c.h.b16 %v6234
      %v6327 = vunpack.c.l.b16 %v6235
      %v6328 = vunpack.c.h.b16 %v6235
      %v6329 = vunpack.c.l.b16 %v6236
      %v6330 = vunpack.c.h.b16 %v6236
      %v6331 = vunpack.c.l.b16 %v6237
      %v6332 = vunpack.c.h.b16 %v6237
      %v6333 = vunpack.c.l.b16 %v6238
      %v6334 = vunpack.c.h.b16 %v6238
      %v6335 = vpack.c.b16 %v6271, %v6271
      %v6336 = vpack.c.b16 %v6272, %v6272
      %v6337 = vpack.c.b16 %v6273, %v6273
      %v6338 = vpack.c.b16 %v6274, %v6274
      %v6339 = vpack.c.b16 %v6275, %v6275
      %v6340 = vpack.c.b16 %v6276, %v6276
      %v6341 = vpack.c.b16 %v6277, %v6277
      %v6342 = vpack.c.b16 %v6278, %v6278
      %v6343 = vpack.c.b16 %v6279, %v6279
      %v6344 = vpack.c.b16 %v6280, %v6280
      %v6345 = vpack.c.b16 %v6281, %v6281
      %v6346 = vpack.c.b16 %v6282, %v6282
      %v6347 = vpack.c.b16 %v6283, %v6283
      %v6348 = vpack.c.b16 %v6284, %v6284
      %v6349 = vpack.c.b16 %v6285, %v6285
      %v6350 = vpack.c.b16 %v6286, %v6286
      %v6351 = vpack.c.b16 %v6287, %v6287
      %v6352 = vpack.c.b16 %v6288, %v6288
      %v6353 = vpack.c.b16 %v6289, %v6289
      %v6354 = vpack.c.b16 %v6290, %v6290
      %v6355 = vpack.c.b16 %v6291, %v6291
      %v6356 = vpack.c.b16 %v6292, %v6292
      %v6357 = vpack.c.b16 %v6293, %v6293
      %v6358 = vpack.c.b16 %v6294, %v6294
      %v6359 = vpack.c.b16 %v6295, %v6295
      %v6360 = vpack.c.b16 %v6296, %v6296
      %v6361 = vpack.c.b16 %v6297, %v6297
      %v6362 = vpack.c.b16 %v6298, %v6298
      %v6363 = vpack.c.b16 %v6299, %v6299
      %v6364 = vpack.c.b16 %v6300, %v6300
      %v6365 = vpack.c.b16 %v6301, %v6301
      %v6366 = vpack.c.b16 %v6302, %v6302
      %v6367 = vpack.c.b16 %v6303, %v6303
      %v6368 = vpack.c.b16 %v6304, %v6304
      %v6369 = vpack.c.b16 %v6305, %v6305
      %v6370 = vpack.c.b16 %v6306, %v6306
      %v6371 = vpack.c.b16 %v6307, %v6307
      %v6372 = vpack.c.b16 %v6308, %v6308
      %v6373 = vpack.c.b16 %v6309, %v6309
      %v6374 = vpack.c.b16 %v6310, %v6310
      %v6375 = vpack.c.b16 %v6311, %v6311
      %v6376 = vpack.c.b16 %v6312, %v6312
      %v6377 = vpack.c.b16 %v6313, %v6313
      %v6378 = vpack.c.b16 %v6314, %v6314
      %v6379 = vpack.c.b16 %v6315, %v6315
      %v6380 = vpack.c.b16 %v6316, %v6316
      %v6381 = vpack.c.b16 %v6317, %v6317
      %v6382 = vpack.c.b16 %v6318, %v6318
      %v6383 = vpack.c.b16 %v6319, %v6319
      %v6384 = vpack.c.b16 %v6320, %v6320
      %v6385 = vpack.c.b16 %v6321, %v6321
      %v6386 = vpack.c.b16 %v6322, %v6322
      %v6387 = vpack.c.b16 %v6323, %v6323
      %v6388 = vpack.c.b16 %v6324, %v6324
      %v6389 = vpack.c.b16 %v6325, %v6325
      %v6390 = vpack.c.b16 %v6326, %v6326
      %v6391 = vpack.c.b16 %v6327, %v6327
      %v6392 = vpack.c.b16 %v6328, %v6328
      %v6393 = vpack.c.b16 %v6329, %v6329
      %v6394 = vpack.c.b16 %v6330, %v6330
      %v6395 = vpack.c.b16 %v6331, %v6331
      %v6396 = vpack.c.b16 %v6332, %v6332
      %v6397 = vpack.c.b16 %v6333, %v6333
      %v6398 = vpack.c.b16 %v6334, %v6334
      %vm6463 = vcmask 27648
      %6464 = vst.msk [vmem:[%s412] sm:$0xf] %vm6463, %v6335
      %6465 = vst.msk [vmem:[%s412 + $0x4] sm:$0xf] %vm6463, %v6336
      %6466 = vst.msk [vmem:[%s412 + $0x8] sm:$0xf] %vm6463, %v6337
      %6467 = vst.msk [vmem:[%s412 + $0xc] sm:$0xf] %vm6463, %v6338
      %6468 = vst.msk [vmem:[%s412 + $0x10] sm:$0xf] %vm6463, %v6339
      %6469 = vst.msk [vmem:[%s412 + $0x14] sm:$0xf] %vm6463, %v6340
      %6470 = vst.msk [vmem:[%s412 + $0x18] sm:$0xf] %vm6463, %v6341
      %6471 = vst.msk [vmem:[%s412 + $0x1c] sm:$0xf] %vm6463, %v6342
      %6472 = vst.msk [vmem:[%s412 + $0x20] sm:$0xf] %vm6463, %v6343
      %6473 = vst.msk [vmem:[%s412 + $0x24] sm:$0xf] %vm6463, %v6344
      %6474 = vst.msk [vmem:[%s412 + $0x28] sm:$0xf] %vm6463, %v6345
      %6475 = vst.msk [vmem:[%s412 + $0x2c] sm:$0xf] %vm6463, %v6346
      %6476 = vst.msk [vmem:[%s412 + $0x30] sm:$0xf] %vm6463, %v6347
      %6477 = vst.msk [vmem:[%s412 + $0x34] sm:$0xf] %vm6463, %v6348
      %6478 = vst.msk [vmem:[%s412 + $0x38] sm:$0xf] %vm6463, %v6349
      %6479 = vst.msk [vmem:[%s412 + $0x3c] sm:$0xf] %vm6463, %v6350
      %6480 = vst.msk [vmem:[%s412 + $0x40] sm:$0xf] %vm6463, %v6351
      %6481 = vst.msk [vmem:[%s412 + $0x44] sm:$0xf] %vm6463, %v6352
      %6482 = vst.msk [vmem:[%s412 + $0x48] sm:$0xf] %vm6463, %v6353
      %6483 = vst.msk [vmem:[%s412 + $0x4c] sm:$0xf] %vm6463, %v6354
      %6484 = vst.msk [vmem:[%s412 + $0x50] sm:$0xf] %vm6463, %v6355
      %6485 = vst.msk [vmem:[%s412 + $0x54] sm:$0xf] %vm6463, %v6356
      %6486 = vst.msk [vmem:[%s412 + $0x58] sm:$0xf] %vm6463, %v6357
      %6487 = vst.msk [vmem:[%s412 + $0x5c] sm:$0xf] %vm6463, %v6358
      %6488 = vst.msk [vmem:[%s412 + $0x60] sm:$0xf] %vm6463, %v6359
      %6489 = vst.msk [vmem:[%s412 + $0x64] sm:$0xf] %vm6463, %v6360
      %6490 = vst.msk [vmem:[%s412 + $0x68] sm:$0xf] %vm6463, %v6361
      %6491 = vst.msk [vmem:[%s412 + $0x6c] sm:$0xf] %vm6463, %v6362
      %6492 = vst.msk [vmem:[%s412 + $0x70] sm:$0xf] %vm6463, %v6363
      %6493 = vst.msk [vmem:[%s412 + $0x74] sm:$0xf] %vm6463, %v6364
      %6494 = vst.msk [vmem:[%s412 + $0x78] sm:$0xf] %vm6463, %v6365
      %6495 = vst.msk [vmem:[%s412 + $0x7c] sm:$0xf] %vm6463, %v6366
      %6496 = vst.msk [vmem:[%s412 + $0x80] sm:$0xf] %vm6463, %v6367
      %6497 = vst.msk [vmem:[%s412 + $0x84] sm:$0xf] %vm6463, %v6368
      %6498 = vst.msk [vmem:[%s412 + $0x88] sm:$0xf] %vm6463, %v6369
      %6499 = vst.msk [vmem:[%s412 + $0x8c] sm:$0xf] %vm6463, %v6370
      %6500 = vst.msk [vmem:[%s412 + $0x90] sm:$0xf] %vm6463, %v6371
      %6501 = vst.msk [vmem:[%s412 + $0x94] sm:$0xf] %vm6463, %v6372
      %6502 = vst.msk [vmem:[%s412 + $0x98] sm:$0xf] %vm6463, %v6373
      %6503 = vst.msk [vmem:[%s412 + $0x9c] sm:$0xf] %vm6463, %v6374
      %6504 = vst.msk [vmem:[%s412 + $0xa0] sm:$0xf] %vm6463, %v6375
      %6505 = vst.msk [vmem:[%s412 + $0xa4] sm:$0xf] %vm6463, %v6376
      %6506 = vst.msk [vmem:[%s412 + $0xa8] sm:$0xf] %vm6463, %v6377
      %6507 = vst.msk [vmem:[%s412 + $0xac] sm:$0xf] %vm6463, %v6378
      %6508 = vst.msk [vmem:[%s412 + $0xb0] sm:$0xf] %vm6463, %v6379
      %6509 = vst.msk [vmem:[%s412 + $0xb4] sm:$0xf] %vm6463, %v6380
      %6510 = vst.msk [vmem:[%s412 + $0xb8] sm:$0xf] %vm6463, %v6381
      %6511 = vst.msk [vmem:[%s412 + $0xbc] sm:$0xf] %vm6463, %v6382
      %6512 = vst.msk [vmem:[%s412 + $0xc0] sm:$0xf] %vm6463, %v6383
      %6513 = vst.msk [vmem:[%s412 + $0xc4] sm:$0xf] %vm6463, %v6384
      %6514 = vst.msk [vmem:[%s412 + $0xc8] sm:$0xf] %vm6463, %v6385
      %6515 = vst.msk [vmem:[%s412 + $0xcc] sm:$0xf] %vm6463, %v6386
      %6516 = vst.msk [vmem:[%s412 + $0xd0] sm:$0xf] %vm6463, %v6387
      %6517 = vst.msk [vmem:[%s412 + $0xd4] sm:$0xf] %vm6463, %v6388
      %6518 = vst.msk [vmem:[%s412 + $0xd8] sm:$0xf] %vm6463, %v6389
      %6519 = vst.msk [vmem:[%s412 + $0xdc] sm:$0xf] %vm6463, %v6390
      %6520 = vst.msk [vmem:[%s412 + $0xe0] sm:$0xf] %vm6463, %v6391
      %6521 = vst.msk [vmem:[%s412 + $0xe4] sm:$0xf] %vm6463, %v6392
      %6522 = vst.msk [vmem:[%s412 + $0xe8] sm:$0xf] %vm6463, %v6393
      %6523 = vst.msk [vmem:[%s412 + $0xec] sm:$0xf] %vm6463, %v6394
      %6524 = vst.msk [vmem:[%s412 + $0xf0] sm:$0xf] %vm6463, %v6395
      %6525 = vst.msk [vmem:[%s412 + $0xf4] sm:$0xf] %vm6463, %v6396
      %6526 = vst.msk [vmem:[%s412 + $0xf8] sm:$0xf] %vm6463, %v6397
      %6527 = vst.msk [vmem:[%s412 + $0xfc] sm:$0xf] %vm6463, %v6398
      %s6528 = smul.u32 8, %s23
      %p6529 = scmp.lt.s32.totalorder %s22, 1
      %s6530 = scalar_select %p6529, %s22, 1
      %p6531 = scmp.lt.s32.totalorder %s6528, 7
      %s6532 = scalar_select %p6531, %s6528, 7
      %s6533 = smul.addr %s6530, 64
      %s6534 = sadd.s32 %s6532, %s6533
      %s6535 = smul.addr %s6534, 4
      %s6536 = scalar_lea.vmem %s7, %s6535
      // Predicated region
      $region49: #{c2f_mhda_forward.11} parent=47 // pred_check
        %p6537 = pneg %p226
      $region50: #{c2f_mhda_forward.11} parent=47 // pred_check_branch
        %6539 = sbr.rel (%p6537) target = $region52
      $region51: #{c2f_mhda_forward.11} parent=47 // pred_region
        %s6540 = smul.u32 8, %s23
      $region52: #{c2f_mhda_forward.11} parent=47 // pred_fallthru
        _
    $region48: #{c2f_mhda_forward.11} parent=5 // pred_fallthru
      _
    %p6541 = scmp.le.s32.totalorder 2, %s13
    // Predicated region
    $region53: #{c2f_mhda_forward.11} parent=5 // pred_check
      %p6542 = pneg %p6541
    $region54: #{c2f_mhda_forward.11} parent=5 // pred_check_branch
      %6544 = sbr.rel (%p6542) target = $region56
    $region55: #{c2f_mhda_forward.11} parent=5 // pred_region
      %s6545 = ssub.s32 %s13, 2
      // Predicated region
      $region57: #{c2f_mhda_forward.11} parent=55 // pred_check
        %p6546 = pneg %p232
      $region58: #{c2f_mhda_forward.11} parent=55 // pred_check_branch
        %6548 = sbr.rel (%p6546) target = $region60
      $region59: #{c2f_mhda_forward.11} parent=55 // pred_region
        %s6549 = smul.u32 8, %s25
        %p6550 = scmp.lt.s32.totalorder %s24, 1
        %s6551 = scalar_select %p6550, %s24, 1
        %p6552 = scmp.lt.s32.totalorder %s6549, 7
        %s6553 = scalar_select %p6552, %s6549, 7
        %s6554 = smul.addr %s6551, 64
        %s6555 = sadd.s32 %s6553, %s6554
        %s6556 = smul.addr %s6555, 4
        %s6557 = scalar_lea.vmem %s7, %s6556
      $region60: #{c2f_mhda_forward.11} parent=55 // pred_fallthru
        _
    $region56: #{c2f_mhda_forward.11} parent=5 // pred_fallthru
      _
  $region6: #{c2f_mhda_forward.11} parent=0 // loop_footer
    %s17 = sadd.s32 1, %s13
  $region7: #{c2f_mhda_forward.11} parent=0 // loop_footer_branch
    %12 = sbr.rel target = $region3
  $region8: #{c2f_mhda_forward.11} parent=0 // loop_exit
    _

</llo_original>
